<compile_context>
chip_gen: v7x
topology: tpu7x:2x2x1
jax: 0.10.0
libtpu: 0.0.40
codegen_flags: <defaults>
</compile_context>

<pallas_src>
import numpy as np
import jax
import jax.numpy as jnp
from jax.experimental import pallas as pl
from jax.experimental.pallas import tpu as pltpu


# ----------------------------------------------------------------------------
# static problem dimensions (kernel is specialized to this small test config)
# ----------------------------------------------------------------------------
B = 2                        # batch
H0, W0 = 20, 29              # input spatial size (torch input before unsqueeze(1))
W0P = 32                     # padded row stride (multiple of 8)
C1, C2, C3 = 25, 50, 100     # conv channel widths
KH1, KW1 = 3, 2
KH2, KW2 = 4, 3
KH3, KW3 = 3, 3
H1, W1 = H0 - KH1 + 1, W0 - KW1 + 1          # 18, 28
H1P, W1P = H1 // 2, W1 // 2                  # 9, 14   (MaxPool2d(2,2))
W1PP = 16                                    # padded pooled-1 row stride
H2, W2 = H1P - KH2 + 1, W1P - KW2 + 1        # 6, 12
H2P, W2P = H2 // 2, W2 // 2                  # 3, 6
W2PP = 8                                     # padded pooled-2 row stride
H3, W3 = H2P - KH3 + 1, W2P - KW3 + 1        # 1, 4
assert H3 == 1, "height must collapse to 1 (torch .squeeze(2))"
T = W3                       # GRU sequence length
HID = 32                     # GRU hidden size (small stand-in for the default 70)
NLAYERS = 2
NCLS = 6
NPAD = 128                   # lane-dense head output width

# ---- flattened (rows, channels) layout sizes -------------------------------
R1C = B * H0 * W0P                          # 1280 conv1 rows computed
IMROWS = H0 * W0P                           # 640 act1 rows per image
TAP1 = [di * W0P + dj for di in range(KH1) for dj in range(KW1)]   # [0,1,32,33,64,65]
XTAIL = 72                                  # flat-x zero tail (>= max(TAP1)=65)
K1P = 8                                     # conv1 im2col K padded 6 -> 8
CONV1_CHUNK = 256                           # 1280 = 5 * 256

MH1 = 544                                   # pool1 shifted-max rows per image (>= 64*8+2*13+1)
MH1_CHUNK = 136                             # 544 = 4 * 136
P1R = H1P * W1PP                            # 144 pooled-1 rows per image
ACT2R = B * P1R + 8                         # 296  (conv2 tap-read headroom, zero padded)

C2ROWS = H2 * W1PP                          # 96 conv2 rows computed per image (qi < 6)
C2R = 248                                   # 144 (b=0 block) + 96 (b=1 rows) + 8 pad

MH2 = 80                                    # pool2 shifted-max rows per image (>= 32*2+2*5+1)
P2R = H2P * W2PP                            # 24 pooled-2 rows per image
ACT3R = B * P2R + 24                        # 72   (conv3 tap-read headroom, zero padded)
R3C = B * P2R                               # 48 conv3 rows computed


def _fullspec(shape):
    nd = len(shape)
    return pl.BlockSpec(shape, lambda i, nd=nd: (0,) * nd)


def _selectors():
    """0/1 decimation matrices for the stride-2 pooling (built once, host side)."""
    s1 = np.zeros((P1R, MH1), np.float32)
    for pi in range(H1P):
        for pj in range(W1P):
            s1[pi * W1PP + pj, pi * 2 * W0P + 2 * pj] = 1.0
    s2 = np.zeros((P2R, MH2), np.float32)
    for ri in range(H2P):
        for rj in range(W2P):
            s2[ri * W2PP + rj, ri * 2 * W1PP + 2 * rj] = 1.0
    return jnp.asarray(s1, jnp.bfloat16), jnp.asarray(s2, jnp.bfloat16)


# ----------------------------------------------------------------------------
# the single fused kernel
# ----------------------------------------------------------------------------
def crnn_kernel(xim_ref, w1_ref, b1_ref, s1sel_ref,
                w2_ref, b2_ref, s2sel_ref,
                w3_ref, s3_ref, tb3_ref,
                wi1_ref, wh1_ref, bi1_ref, bhn1_ref,
                wi2_ref, wh2_ref, bi2_ref, bhn2_ref,
                wfc_ref, bfc_ref,
                o_ref,
                act1_ref, mh1_ref, act2_ref, c2_ref, act3_ref):
    f32 = jnp.float32
    bf16 = jnp.bfloat16

    # Zero the pad/tail regions once so the downstream selection matmuls and
    # tap reads never see uninitialized VMEM (0 * NaN would poison them).
    act2_ref[...] = jnp.zeros_like(act2_ref)
    c2_ref[...] = jnp.zeros_like(c2_ref)
    act3_ref[...] = jnp.zeros_like(act3_ref)

    # ---- conv1 [3,2] as a single im2col MXU matmul (bf16 in / f32 acc) ----
    b1 = b1_ref[...]
    w1 = w1_ref[...]
    for c in range(0, R1C, CONV1_CHUNK):
        a = jnp.dot(xim_ref[c:c + CONV1_CHUNK, :], w1, preferred_element_type=f32)
        act1_ref[c:c + CONV1_CHUNK, :] = jnp.maximum(a + b1, 0.0)

    # ---- maxpool1 2x2/2: slab-wide shifted maxes (0, +1, +W0P, +W0P+1), then
    #      one batched 0/1 selection matmul per image for the stride-2 decimation
    for b in range(B):
        abase = b * IMROWS
        mbase = b * MH1
        for c in range(0, MH1, MH1_CHUNK):
            n = MH1_CHUNK
            m = act1_ref[abase + c:abase + c + n, :]
            m = jnp.maximum(m, act1_ref[abase + c + 1:abase + c + 1 + n, :])
            m = jnp.maximum(m, act1_ref[abase + c + W0P:abase + c + W0P + n, :])
            m = jnp.maximum(m, act1_ref[abase + c + W0P + 1:abase + c + W0P + 1 + n, :])
            mh1_ref[mbase + c:mbase + c + n, :] = m.astype(bf16)
    s1sel = s1sel_ref[...]
    for b in range(B):
        p1 = jnp.dot(s1sel, mh1_ref[b * MH1:(b + 1) * MH1, :],
                     preferred_element_type=f32)
        act2_ref[b * P1R:(b + 1) * P1R, :] = p1.astype(bf16)

    # ---- conv2 [4,3]: per-tap row-shifted MXU matmuls on bf16 activations,
    #      chunked per image so the f32 accumulator stays small ----
    b2 = b2_ref[...]
    for b in range(B):
        base = b * P1R
        acc = jnp.zeros((C2ROWS, C2), f32)
        k = 0
        for di in range(KH2):
            for dj in range(KW2):
                off = di * W1PP + dj
                acc = acc + jnp.dot(act2_ref[base + off:base + off + C2ROWS, :],
                                    w2_ref[k], preferred_element_type=f32)
                k += 1
        c2_ref[base:base + C2ROWS, :] = jnp.maximum(acc + b2, 0.0)

    # ---- maxpool2 2x2/2: same structure as pool1 (fits in registers) ----
    s2sel = s2sel_ref[...]
    for b in range(B):
        base = b * P1R
        m = c2_ref[base:base + MH2, :]
        m = jnp.maximum(m, c2_ref[base + 1:base + 1 + MH2, :])
        m = jnp.maximum(m, c2_ref[base + W1PP:base + W1PP + MH2, :])
        m = jnp.maximum(m, c2_ref[base + W1PP + 1:base + W1PP + 1 + MH2, :])
        p2 = jnp.dot(s2sel, m.astype(bf16), preferred_element_type=f32)
        act3_ref[b * P2R:(b + 1) * P2R, :] = p2.astype(bf16)

    # ---- conv3 3x3 + folded BatchNorm(eval) + ReLU ----
    acc3 = jnp.zeros((R3C, C3), f32)
    k = 0
    for di in range(KH3):
        for dj in range(KW3):
            off = di * W2PP + dj
            acc3 = acc3 + jnp.dot(act3_ref[off:off + R3C, :], w3_ref[k],
                                  preferred_element_type=f32)
            k += 1
    h3 = jnp.maximum(acc3 * s3_ref[...] + tb3_ref[...], 0.0)         # (R3C, C3) f32

    # ---- 2-layer GRU: layers interleaved per step; time-step gather folded
    #      into the hoisted layer-1 input projection; bf16 MXU operands ----
    # TODO(synk): nn.GRU inter-layer dropout(0.5) is train-mode only; eval forward here.
    xp1 = jnp.dot(h3.astype(bf16), wi1_ref[...], preferred_element_type=f32) + bi1_ref[...]
    wh1 = wh1_ref[...]
    wi2 = wi2_ref[...]
    wh2 = wh2_ref[...]
    bi2 = bi2_ref[...]
    bhn1 = bhn1_ref[...]
    bhn2 = bhn2_ref[...]

    def gru_gates(gx, gh, h_prev, bhn):
        r = jax.nn.sigmoid(gx[:, 0:HID] + gh[:, 0:HID])
        z = jax.nn.sigmoid(gx[:, HID:2 * HID] + gh[:, HID:2 * HID])
        n = jnp.tanh(gx[:, 2 * HID:] + r * (gh[:, 2 * HID:] + bhn))
        return (1.0 - z) * n + z * h_prev

    zeros_g = jnp.zeros((B, 3 * HID), f32)
    h1 = jnp.zeros((B, HID), f32)
    h2 = jnp.zeros((B, HID), f32)
    hmax = jnp.full((B, HID), -jnp.inf, f32)
    for t in range(T):
        # GRU input at (batch b, time t) is conv3 output row b*P2R + t.
        gx1 = jnp.concatenate([xp1[t:t + 1, :], xp1[P2R + t:P2R + t + 1, :]], axis=0)
        gh1 = zeros_g if t == 0 else jnp.dot(h1.astype(bf16), wh1,
                                             preferred_element_type=f32)
        h1 = gru_gates(gx1, gh1, h1, bhn1)
        gx2 = jnp.dot(h1.astype(bf16), wi2, preferred_element_type=f32) + bi2
        gh2 = zeros_g if t == 0 else jnp.dot(h2.astype(bf16), wh2,
                                             preferred_element_type=f32)
        h2 = gru_gates(gx2, gh2, h2, bhn2)
        hmax = jnp.maximum(hmax, h2)

    # ---- max-over-time -> fc1; one full (8,128) unmasked store ----
    hmax8 = jnp.concatenate([hmax, jnp.zeros((8 - B, HID), f32)], axis=0)
    o_ref[...] = jnp.dot(hmax8, wfc_ref[...], preferred_element_type=f32) + bfc_ref[...]


# ----------------------------------------------------------------------------
# parameters (deterministic synthetic init, PyTorch-style uniform bounds)
# ----------------------------------------------------------------------------
def init_params(key):
    keys = iter(jax.random.split(key, 20))

    def u(shape, fan_in):
        bound = 1.0 / (float(fan_in) ** 0.5)
        return jax.random.uniform(next(keys), shape, jnp.float32, -bound, bound)

    p = {}
    # Conv weights in tap-major layout:
    #   torch Conv2d weight (Cout, Cin, kh, kw) -> permute(2,3,1,0) -> (kh*kw, Cin, Cout).
    # conv1 has Cin=1 so its tap-major weight is stored directly as (kh*kw, Cout).
    p["w1"] = u((KH1 * KW1, C1), 1 * KH1 * KW1)
    p["b1"] = u((1, C1), 1 * KH1 * KW1)
    p["w2"] = u((KH2 * KW2, C1, C2), C1 * KH2 * KW2)
    p["b2"] = u((1, C2), C1 * KH2 * KW2)
    p["w3"] = u((KH3 * KW3, C2, C3), C2 * KH3 * KW3)
    b3 = u((1, C3), C2 * KH3 * KW3)

    # BatchNorm2d(100) eval-mode running stats folded into scale / shift.
    eps = 1e-5
    gamma = jnp.ones((1, C3), jnp.float32)
    beta = jnp.zeros((1, C3), jnp.float32)
    rmean = jnp.zeros((1, C3), jnp.float32)
    rvar = jnp.ones((1, C3), jnp.float32)
    s3 = gamma * jax.lax.rsqrt(rvar + eps)
    p["s3"] = s3
    p["tb3"] = (b3 - rmean) * s3 + beta     # ReLU((conv+b3-mean)*s3+beta) == ReLU(conv*s3+tb3)

    # GRU: torch weight_ih_l{k} is (3H, In) with gate order (r, z, n); ours is its
    # transpose. r/z biases pre-summed (b_ih + b_hh); b_hn stays inside r * (...).
    p["gru"] = []
    insz = C3
    for _ in range(NLAYERS):
        wi = u((insz, 3 * HID), HID)
        wh = u((HID, 3 * HID), HID)
        b_ih = u((1, 3 * HID), HID)
        b_hh = u((1, 3 * HID), HID)
        bi = b_ih.at[:, :2 * HID].add(b_hh[:, :2 * HID])
        p["gru"].append(dict(wi=wi, wh=wh, bi=bi, bhn=b_hh[:, 2 * HID:]))
        insz = HID

    # fc1: torch Linear(HID, 6); zero-padded to 128 lanes for a dense store.
    wfc = u((HID, NCLS), HID)
    bfc = u((1, NCLS), HID)
    p["wfc"] = jnp.zeros((HID, NPAD), jnp.float32).at[:, :NCLS].set(wfc)
    p["bfc"] = jnp.zeros((1, NPAD), jnp.float32).at[:, :NCLS].set(bfc)

    # pooling stride-2 decimation selectors (static 0/1 matrices)
    p["s1sel"], p["s2sel"] = _selectors()
    return p


# ----------------------------------------------------------------------------
# forward wrapper (single pallas_call)
# ----------------------------------------------------------------------------
def crnn_forward(x, p):
    assert x.shape == (B, H0, W0), "kernel is specialized to this input size"
    f32, bf16 = jnp.float32, jnp.bfloat16

    # lane-dense conv1 im2col built in the wrapper (layout plumbing only)
    xpad = jnp.pad(x.astype(f32), ((0, 0), (0, 0), (0, W0P - W0)))     # (B,H0,32)
    xf = jnp.pad(xpad.reshape(-1), (0, XTAIL))                         # flat + zero tail
    xim = jnp.stack([xf[o:o + R1C] for o in TAP1], axis=1)             # (R1C, 6)
    xim = jnp.pad(xim, ((0, 0), (0, K1P - len(TAP1)))).astype(bf16)    # (R1C, 8)

    w1m = jnp.pad(p["w1"], ((0, K1P - KH1 * KW1), (0, 0))).astype(bf16)  # (8, C1)

    g1, g2 = p["gru"]
    args = (
        xim, w1m, p["b1"], p["s1sel"],
        p["w2"].astype(bf16), p["b2"], p["s2sel"],
        p["w3"].astype(bf16), p["s3"], p["tb3"],
        g1["wi"].astype(bf16), g1["wh"].astype(bf16), g1["bi"], g1["bhn"],
        g2["wi"].astype(bf16), g2["wh"].astype(bf16), g2["bi"], g2["bhn"],
        p["wfc"], p["bfc"],
    )

    out = pl.pallas_call(
        crnn_kernel,
        out_shape=jax.ShapeDtypeStruct((8, NPAD), jnp.float32),
        grid=(1,),
        in_specs=[_fullspec(a.shape) for a in args],
        out_specs=_fullspec((8, NPAD)),
        scratch_shapes=[
            pltpu.VMEM((R1C, C1), jnp.float32),        # conv1 output (flattened rows)
            pltpu.VMEM((B * MH1, C1), jnp.bfloat16),   # pool1 shifted-max slab
            pltpu.VMEM((ACT2R, C1), jnp.bfloat16),     # pooled-1 activation (+ tap pad)
            pltpu.VMEM((C2R, C2), jnp.float32),        # conv2 output (+ pad)
            pltpu.VMEM((ACT3R, C2), jnp.bfloat16),     # pooled-2 activation (+ tap pad)
        ],
        compiler_params=pltpu.CompilerParams(
            dimension_semantics=("arbitrary",),
        ),
    )(*args)
    return out[:B, :NCLS]


# ----------------------------------------------------------------------------
if __name__ == "__main__":
    key = jax.random.PRNGKey(0)
    k_param, k_x = jax.random.split(key)

    # B=2, H=20, W=29 -> conv/pool chain collapses H to 1 and gives T=4 steps
    x = jax.random.normal(k_x, (B, H0, W0), jnp.float32)
    params = init_params(k_param)

    out = jax.jit(crnn_forward)(x, params)
    out = jax.block_until_ready(out)
    assert out.shape == (B, NCLS) and out.dtype == jnp.float32
    print("KERNEL_OK")
</pallas_src>

<mosaic_0001>
module attributes {stable_mosaic.version = 11 : i64} {
  func.func @crnn_kernel(%arg0: i32, %arg1: memref<1280x8xbf16, #tpu.memory_space<vmem>>, %arg2: memref<8x25xbf16, #tpu.memory_space<vmem>>, %arg3: memref<1x25xf32, #tpu.memory_space<vmem>>, %arg4: memref<144x544xbf16, #tpu.memory_space<vmem>>, %arg5: memref<12x25x50xbf16, #tpu.memory_space<vmem>>, %arg6: memref<1x50xf32, #tpu.memory_space<vmem>>, %arg7: memref<24x80xbf16, #tpu.memory_space<vmem>>, %arg8: memref<9x50x100xbf16, #tpu.memory_space<vmem>>, %arg9: memref<1x100xf32, #tpu.memory_space<vmem>>, %arg10: memref<1x100xf32, #tpu.memory_space<vmem>>, %arg11: memref<100x96xbf16, #tpu.memory_space<vmem>>, %arg12: memref<32x96xbf16, #tpu.memory_space<vmem>>, %arg13: memref<1x96xf32, #tpu.memory_space<vmem>>, %arg14: memref<1x32xf32, #tpu.memory_space<vmem>>, %arg15: memref<32x96xbf16, #tpu.memory_space<vmem>>, %arg16: memref<32x96xbf16, #tpu.memory_space<vmem>>, %arg17: memref<1x96xf32, #tpu.memory_space<vmem>>, %arg18: memref<1x32xf32, #tpu.memory_space<vmem>>, %arg19: memref<32x128xf32, #tpu.memory_space<vmem>>, %arg20: memref<1x128xf32, #tpu.memory_space<vmem>>, %arg21: memref<8x128xf32, #tpu.memory_space<vmem>>, %arg22: memref<1280x25xf32, #tpu.memory_space<vmem>>, %arg23: memref<1088x25xbf16, #tpu.memory_space<vmem>>, %arg24: memref<296x25xbf16, #tpu.memory_space<vmem>>, %arg25: memref<248x50xf32, #tpu.memory_space<vmem>>, %arg26: memref<72x50xbf16, #tpu.memory_space<vmem>>) attributes {dimension_semantics = [#tpu.dimension_semantics<arbitrary>], iteration_bounds = array<i64: 1>, scalar_prefetch = 0 : i64, scratch_operands = 5 : i64, tpu.core_type = #tpu.core_type<tc>, window_params = [{pipeline_mode = #tpu.pipeline_mode<synchronous>, transform_indices = @transform_0, window_bounds = array<i64: 1280, 8>}, {pipeline_mode = #tpu.pipeline_mode<synchronous>, transform_indices = @transform_1, window_bounds = array<i64: 8, 25>}, {pipeline_mode = #tpu.pipeline_mode<synchronous>, transform_indices = @transform_2, window_bounds = array<i64: 1, 25>}, {pipeline_mode = #tpu.pipeline_mode<synchronous>, transform_indices = @transform_3, window_bounds = array<i64: 144, 544>}, {pipeline_mode = #tpu.pipeline_mode<synchronous>, transform_indices = @transform_4, window_bounds = array<i64: 12, 25, 50>}, {pipeline_mode = #tpu.pipeline_mode<synchronous>, transform_indices = @transform_5, window_bounds = array<i64: 1, 50>}, {pipeline_mode = #tpu.pipeline_mode<synchronous>, transform_indices = @transform_6, window_bounds = array<i64: 24, 80>}, {pipeline_mode = #tpu.pipeline_mode<synchronous>, transform_indices = @transform_7, window_bounds = array<i64: 9, 50, 100>}, {pipeline_mode = #tpu.pipeline_mode<synchronous>, transform_indices = @transform_8, window_bounds = array<i64: 1, 100>}, {pipeline_mode = #tpu.pipeline_mode<synchronous>, transform_indices = @transform_9, window_bounds = array<i64: 1, 100>}, {pipeline_mode = #tpu.pipeline_mode<synchronous>, transform_indices = @transform_10, window_bounds = array<i64: 100, 96>}, {pipeline_mode = #tpu.pipeline_mode<synchronous>, transform_indices = @transform_11, window_bounds = array<i64: 32, 96>}, {pipeline_mode = #tpu.pipeline_mode<synchronous>, transform_indices = @transform_12, window_bounds = array<i64: 1, 96>}, {pipeline_mode = #tpu.pipeline_mode<synchronous>, transform_indices = @transform_13, window_bounds = array<i64: 1, 32>}, {pipeline_mode = #tpu.pipeline_mode<synchronous>, transform_indices = @transform_14, window_bounds = array<i64: 32, 96>}, {pipeline_mode = #tpu.pipeline_mode<synchronous>, transform_indices = @transform_15, window_bounds = array<i64: 32, 96>}, {pipeline_mode = #tpu.pipeline_mode<synchronous>, transform_indices = @transform_16, window_bounds = array<i64: 1, 96>}, {pipeline_mode = #tpu.pipeline_mode<synchronous>, transform_indices = @transform_17, window_bounds = array<i64: 1, 32>}, {pipeline_mode = #tpu.pipeline_mode<synchronous>, transform_indices = @transform_18, window_bounds = array<i64: 32, 128>}, {pipeline_mode = #tpu.pipeline_mode<synchronous>, transform_indices = @transform_19, window_bounds = array<i64: 1, 128>}, {pipeline_mode = #tpu.pipeline_mode<synchronous>, transform_indices = @transform_20, window_bounds = array<i64: 8, 128>}]} {
    %cst = arith.constant 0.000000e+00 : bf16
    %0 = vector.broadcast %cst : bf16 to vector<296x25xbf16>
    %c0 = arith.constant 0 : index
    %c0_0 = arith.constant 0 : index
    %1 = vector.load %arg24[%c0, %c0_0] : memref<296x25xbf16, #tpu.memory_space<vmem>>, vector<296x25xbf16>
    tpu.vector_store %arg24[%c0, %c0_0], %0 {strides = array<i32>} : memref<296x25xbf16, #tpu.memory_space<vmem>>, vector<296x25xbf16>,
    %cst_1 = arith.constant 0.000000e+00 : f32
    %2 = vector.broadcast %cst_1 : f32 to vector<248x50xf32>
    %c0_2 = arith.constant 0 : index
    %c0_3 = arith.constant 0 : index
    %3 = vector.load %arg25[%c0_2, %c0_3] : memref<248x50xf32, #tpu.memory_space<vmem>>, vector<248x50xf32>
    tpu.vector_store %arg25[%c0_2, %c0_3], %2 {strides = array<i32>} : memref<248x50xf32, #tpu.memory_space<vmem>>, vector<248x50xf32>,
    %cst_4 = arith.constant 0.000000e+00 : bf16
    %4 = vector.broadcast %cst_4 : bf16 to vector<72x50xbf16>
    %c0_5 = arith.constant 0 : index
    %c0_6 = arith.constant 0 : index
    %5 = vector.load %arg26[%c0_5, %c0_6] : memref<72x50xbf16, #tpu.memory_space<vmem>>, vector<72x50xbf16>
    tpu.vector_store %arg26[%c0_5, %c0_6], %4 {strides = array<i32>} : memref<72x50xbf16, #tpu.memory_space<vmem>>, vector<72x50xbf16>,
    %c0_7 = arith.constant 0 : index
    %c0_8 = arith.constant 0 : index
    %6 = vector.load %arg3[%c0_7, %c0_8] : memref<1x25xf32, #tpu.memory_space<vmem>>, vector<1x25xf32>
    %c0_9 = arith.constant 0 : index
    %c0_10 = arith.constant 0 : index
    %7 = vector.load %arg2[%c0_9, %c0_10] : memref<8x25xbf16, #tpu.memory_space<vmem>>, vector<8x25xbf16>
    %c0_11 = arith.constant 0 : index
    %c0_12 = arith.constant 0 : index
    %8 = vector.load %arg1[%c0_11, %c0_12] : memref<1280x8xbf16, #tpu.memory_space<vmem>>, vector<256x8xbf16>
    %cst_13 = arith.constant dense<0.000000e+00> : vector<256x25xf32>
    %9 = tpu.matmul %8, %7, %cst_13 {dimension_numbers = #tpu.dot_dimension_numbers<[1], [0], [0], [1], [0, 0, 1, 1], [], []>} : vector<256x8xbf16>, vector<8x25xbf16>, vector<256x25xf32> -> vector<256x25xf32>
    %10 = vector.broadcast %6 : vector<1x25xf32> to vector<256x25xf32>
    %11 = arith.addf %9, %10 : vector<256x25xf32>
    %cst_14 = arith.constant 0.000000e+00 : f32
    %12 = vector.broadcast %cst_14 : f32 to vector<256x25xf32>
    %13 = arith.maximumf %11, %12 : vector<256x25xf32>
    %c0_15 = arith.constant 0 : index
    %c0_16 = arith.constant 0 : index
    %14 = vector.load %arg22[%c0_15, %c0_16] : memref<1280x25xf32, #tpu.memory_space<vmem>>, vector<256x25xf32>
    tpu.vector_store %arg22[%c0_15, %c0_16], %13 {strides = array<i32>} : memref<1280x25xf32, #tpu.memory_space<vmem>>, vector<256x25xf32>,
    %c256 = arith.constant 256 : index
    %c0_17 = arith.constant 0 : index
    %15 = vector.load %arg1[%c256, %c0_17] : memref<1280x8xbf16, #tpu.memory_space<vmem>>, vector<256x8xbf16>
    %cst_18 = arith.constant dense<0.000000e+00> : vector<256x25xf32>
    %16 = tpu.matmul %15, %7, %cst_18 {dimension_numbers = #tpu.dot_dimension_numbers<[1], [0], [0], [1], [0, 0, 1, 1], [], []>} : vector<256x8xbf16>, vector<8x25xbf16>, vector<256x25xf32> -> vector<256x25xf32>
    %17 = vector.broadcast %6 : vector<1x25xf32> to vector<256x25xf32>
    %18 = arith.addf %16, %17 : vector<256x25xf32>
    %cst_19 = arith.constant 0.000000e+00 : f32
    %19 = vector.broadcast %cst_19 : f32 to vector<256x25xf32>
    %20 = arith.maximumf %18, %19 : vector<256x25xf32>
    %c256_20 = arith.constant 256 : index
    %c0_21 = arith.constant 0 : index
    %21 = vector.load %arg22[%c256_20, %c0_21] : memref<1280x25xf32, #tpu.memory_space<vmem>>, vector<256x25xf32>
    tpu.vector_store %arg22[%c256_20, %c0_21], %20 {strides = array<i32>} : memref<1280x25xf32, #tpu.memory_space<vmem>>, vector<256x25xf32>,
    %c512 = arith.constant 512 : index
    %c0_22 = arith.constant 0 : index
    %22 = vector.load %arg1[%c512, %c0_22] : memref<1280x8xbf16, #tpu.memory_space<vmem>>, vector<256x8xbf16>
    %cst_23 = arith.constant dense<0.000000e+00> : vector<256x25xf32>
    %23 = tpu.matmul %22, %7, %cst_23 {dimension_numbers = #tpu.dot_dimension_numbers<[1], [0], [0], [1], [0, 0, 1, 1], [], []>} : vector<256x8xbf16>, vector<8x25xbf16>, vector<256x25xf32> -> vector<256x25xf32>
    %24 = vector.broadcast %6 : vector<1x25xf32> to vector<256x25xf32>
    %25 = arith.addf %23, %24 : vector<256x25xf32>
    %cst_24 = arith.constant 0.000000e+00 : f32
    %26 = vector.broadcast %cst_24 : f32 to vector<256x25xf32>
    %27 = arith.maximumf %25, %26 : vector<256x25xf32>
    %c512_25 = arith.constant 512 : index
    %c0_26 = arith.constant 0 : index
    %28 = vector.load %arg22[%c512_25, %c0_26] : memref<1280x25xf32, #tpu.memory_space<vmem>>, vector<256x25xf32>
    tpu.vector_store %arg22[%c512_25, %c0_26], %27 {strides = array<i32>} : memref<1280x25xf32, #tpu.memory_space<vmem>>, vector<256x25xf32>,
    %c768 = arith.constant 768 : index
    %c0_27 = arith.constant 0 : index
    %29 = vector.load %arg1[%c768, %c0_27] : memref<1280x8xbf16, #tpu.memory_space<vmem>>, vector<256x8xbf16>
    %cst_28 = arith.constant dense<0.000000e+00> : vector<256x25xf32>
    %30 = tpu.matmul %29, %7, %cst_28 {dimension_numbers = #tpu.dot_dimension_numbers<[1], [0], [0], [1], [0, 0, 1, 1], [], []>} : vector<256x8xbf16>, vector<8x25xbf16>, vector<256x25xf32> -> vector<256x25xf32>
    %31 = vector.broadcast %6 : vector<1x25xf32> to vector<256x25xf32>
    %32 = arith.addf %30, %31 : vector<256x25xf32>
    %cst_29 = arith.constant 0.000000e+00 : f32
    %33 = vector.broadcast %cst_29 : f32 to vector<256x25xf32>
    %34 = arith.maximumf %32, %33 : vector<256x25xf32>
    %c768_30 = arith.constant 768 : index
    %c0_31 = arith.constant 0 : index
    %35 = vector.load %arg22[%c768_30, %c0_31] : memref<1280x25xf32, #tpu.memory_space<vmem>>, vector<256x25xf32>
    tpu.vector_store %arg22[%c768_30, %c0_31], %34 {strides = array<i32>} : memref<1280x25xf32, #tpu.memory_space<vmem>>, vector<256x25xf32>,
    %c1024 = arith.constant 1024 : index
    %c0_32 = arith.constant 0 : index
    %36 = vector.load %arg1[%c1024, %c0_32] : memref<1280x8xbf16, #tpu.memory_space<vmem>>, vector<256x8xbf16>
    %cst_33 = arith.constant dense<0.000000e+00> : vector<256x25xf32>
    %37 = tpu.matmul %36, %7, %cst_33 {dimension_numbers = #tpu.dot_dimension_numbers<[1], [0], [0], [1], [0, 0, 1, 1], [], []>} : vector<256x8xbf16>, vector<8x25xbf16>, vector<256x25xf32> -> vector<256x25xf32>
    %38 = vector.broadcast %6 : vector<1x25xf32> to vector<256x25xf32>
    %39 = arith.addf %37, %38 : vector<256x25xf32>
    %cst_34 = arith.constant 0.000000e+00 : f32
    %40 = vector.broadcast %cst_34 : f32 to vector<256x25xf32>
    %41 = arith.maximumf %39, %40 : vector<256x25xf32>
    %c1024_35 = arith.constant 1024 : index
    %c0_36 = arith.constant 0 : index
    %42 = vector.load %arg22[%c1024_35, %c0_36] : memref<1280x25xf32, #tpu.memory_space<vmem>>, vector<256x25xf32>
    tpu.vector_store %arg22[%c1024_35, %c0_36], %41 {strides = array<i32>} : memref<1280x25xf32, #tpu.memory_space<vmem>>, vector<256x25xf32>,
    %c0_37 = arith.constant 0 : index
    %c0_38 = arith.constant 0 : index
    %43 = vector.load %arg22[%c0_37, %c0_38] : memref<1280x25xf32, #tpu.memory_space<vmem>>, vector<136x25xf32>
    %c1 = arith.constant 1 : index
    %c0_39 = arith.constant 0 : index
    %44 = vector.load %arg22[%c1, %c0_39] : memref<1280x25xf32, #tpu.memory_space<vmem>>, vector<136x25xf32>
    %45 = arith.maximumf %43, %44 : vector<136x25xf32>
    %c32 = arith.constant 32 : index
    %c0_40 = arith.constant 0 : index
    %46 = vector.load %arg22[%c32, %c0_40] : memref<1280x25xf32, #tpu.memory_space<vmem>>, vector<136x25xf32>
    %47 = arith.maximumf %45, %46 : vector<136x25xf32>
    %c33 = arith.constant 33 : index
    %c0_41 = arith.constant 0 : index
    %48 = vector.load %arg22[%c33, %c0_41] : memref<1280x25xf32, #tpu.memory_space<vmem>>, vector<136x25xf32>
    %49 = arith.maximumf %47, %48 : vector<136x25xf32>
    %50 = arith.truncf %49 : vector<136x25xf32> to vector<136x25xbf16>
    %c0_42 = arith.constant 0 : index
    %c0_43 = arith.constant 0 : index
    %51 = vector.load %arg23[%c0_42, %c0_43] : memref<1088x25xbf16, #tpu.memory_space<vmem>>, vector<136x25xbf16>
    tpu.vector_store %arg23[%c0_42, %c0_43], %50 {strides = array<i32>} : memref<1088x25xbf16, #tpu.memory_space<vmem>>, vector<136x25xbf16>,
    %c136 = arith.constant 136 : index
    %c0_44 = arith.constant 0 : index
    %52 = vector.load %arg22[%c136, %c0_44] : memref<1280x25xf32, #tpu.memory_space<vmem>>, vector<136x25xf32>
    %c137 = arith.constant 137 : index
    %c0_45 = arith.constant 0 : index
    %53 = vector.load %arg22[%c137, %c0_45] : memref<1280x25xf32, #tpu.memory_space<vmem>>, vector<136x25xf32>
    %54 = arith.maximumf %52, %53 : vector<136x25xf32>
    %c168 = arith.constant 168 : index
    %c0_46 = arith.constant 0 : index
    %55 = vector.load %arg22[%c168, %c0_46] : memref<1280x25xf32, #tpu.memory_space<vmem>>, vector<136x25xf32>
    %56 = arith.maximumf %54, %55 : vector<136x25xf32>
    %c169 = arith.constant 169 : index
    %c0_47 = arith.constant 0 : index
    %57 = vector.load %arg22[%c169, %c0_47] : memref<1280x25xf32, #tpu.memory_space<vmem>>, vector<136x25xf32>
    %58 = arith.maximumf %56, %57 : vector<136x25xf32>
    %59 = arith.truncf %58 : vector<136x25xf32> to vector<136x25xbf16>
    %c136_48 = arith.constant 136 : index
    %c0_49 = arith.constant 0 : index
    %60 = vector.load %arg23[%c136_48, %c0_49] : memref<1088x25xbf16, #tpu.memory_space<vmem>>, vector<136x25xbf16>
    tpu.vector_store %arg23[%c136_48, %c0_49], %59 {strides = array<i32>} : memref<1088x25xbf16, #tpu.memory_space<vmem>>, vector<136x25xbf16>,
    %c272 = arith.constant 272 : index
    %c0_50 = arith.constant 0 : index
    %61 = vector.load %arg22[%c272, %c0_50] : memref<1280x25xf32, #tpu.memory_space<vmem>>, vector<136x25xf32>
    %c273 = arith.constant 273 : index
    %c0_51 = arith.constant 0 : index
    %62 = vector.load %arg22[%c273, %c0_51] : memref<1280x25xf32, #tpu.memory_space<vmem>>, vector<136x25xf32>
    %63 = arith.maximumf %61, %62 : vector<136x25xf32>
    %c304 = arith.constant 304 : index
    %c0_52 = arith.constant 0 : index
    %64 = vector.load %arg22[%c304, %c0_52] : memref<1280x25xf32, #tpu.memory_space<vmem>>, vector<136x25xf32>
    %65 = arith.maximumf %63, %64 : vector<136x25xf32>
    %c305 = arith.constant 305 : index
    %c0_53 = arith.constant 0 : index
    %66 = vector.load %arg22[%c305, %c0_53] : memref<1280x25xf32, #tpu.memory_space<vmem>>, vector<136x25xf32>
    %67 = arith.maximumf %65, %66 : vector<136x25xf32>
    %68 = arith.truncf %67 : vector<136x25xf32> to vector<136x25xbf16>
    %c272_54 = arith.constant 272 : index
    %c0_55 = arith.constant 0 : index
    %69 = vector.load %arg23[%c272_54, %c0_55] : memref<1088x25xbf16, #tpu.memory_space<vmem>>, vector<136x25xbf16>
    tpu.vector_store %arg23[%c272_54, %c0_55], %68 {strides = array<i32>} : memref<1088x25xbf16, #tpu.memory_space<vmem>>, vector<136x25xbf16>,
    %c408 = arith.constant 408 : index
    %c0_56 = arith.constant 0 : index
    %70 = vector.load %arg22[%c408, %c0_56] : memref<1280x25xf32, #tpu.memory_space<vmem>>, vector<136x25xf32>
    %c409 = arith.constant 409 : index
    %c0_57 = arith.constant 0 : index
    %71 = vector.load %arg22[%c409, %c0_57] : memref<1280x25xf32, #tpu.memory_space<vmem>>, vector<136x25xf32>
    %72 = arith.maximumf %70, %71 : vector<136x25xf32>
    %c440 = arith.constant 440 : index
    %c0_58 = arith.constant 0 : index
    %73 = vector.load %arg22[%c440, %c0_58] : memref<1280x25xf32, #tpu.memory_space<vmem>>, vector<136x25xf32>
    %74 = arith.maximumf %72, %73 : vector<136x25xf32>
    %c441 = arith.constant 441 : index
    %c0_59 = arith.constant 0 : index
    %75 = vector.load %arg22[%c441, %c0_59] : memref<1280x25xf32, #tpu.memory_space<vmem>>, vector<136x25xf32>
    %76 = arith.maximumf %74, %75 : vector<136x25xf32>
    %77 = arith.truncf %76 : vector<136x25xf32> to vector<136x25xbf16>
    %c408_60 = arith.constant 408 : index
    %c0_61 = arith.constant 0 : index
    %78 = vector.load %arg23[%c408_60, %c0_61] : memref<1088x25xbf16, #tpu.memory_space<vmem>>, vector<136x25xbf16>
    tpu.vector_store %arg23[%c408_60, %c0_61], %77 {strides = array<i32>} : memref<1088x25xbf16, #tpu.memory_space<vmem>>, vector<136x25xbf16>,
    %c640 = arith.constant 640 : index
    %c0_62 = arith.constant 0 : index
    %79 = vector.load %arg22[%c640, %c0_62] : memref<1280x25xf32, #tpu.memory_space<vmem>>, vector<136x25xf32>
    %c641 = arith.constant 641 : index
    %c0_63 = arith.constant 0 : index
    %80 = vector.load %arg22[%c641, %c0_63] : memref<1280x25xf32, #tpu.memory_space<vmem>>, vector<136x25xf32>
    %81 = arith.maximumf %79, %80 : vector<136x25xf32>
    %c672 = arith.constant 672 : index
    %c0_64 = arith.constant 0 : index
    %82 = vector.load %arg22[%c672, %c0_64] : memref<1280x25xf32, #tpu.memory_space<vmem>>, vector<136x25xf32>
    %83 = arith.maximumf %81, %82 : vector<136x25xf32>
    %c673 = arith.constant 673 : index
    %c0_65 = arith.constant 0 : index
    %84 = vector.load %arg22[%c673, %c0_65] : memref<1280x25xf32, #tpu.memory_space<vmem>>, vector<136x25xf32>
    %85 = arith.maximumf %83, %84 : vector<136x25xf32>
    %86 = arith.truncf %85 : vector<136x25xf32> to vector<136x25xbf16>
    %c544 = arith.constant 544 : index
    %c0_66 = arith.constant 0 : index
    %87 = vector.load %arg23[%c544, %c0_66] : memref<1088x25xbf16, #tpu.memory_space<vmem>>, vector<136x25xbf16>
    tpu.vector_store %arg23[%c544, %c0_66], %86 {strides = array<i32>} : memref<1088x25xbf16, #tpu.memory_space<vmem>>, vector<136x25xbf16>,
    %c776 = arith.constant 776 : index
    %c0_67 = arith.constant 0 : index
    %88 = vector.load %arg22[%c776, %c0_67] : memref<1280x25xf32, #tpu.memory_space<vmem>>, vector<136x25xf32>
    %c777 = arith.constant 777 : index
    %c0_68 = arith.constant 0 : index
    %89 = vector.load %arg22[%c777, %c0_68] : memref<1280x25xf32, #tpu.memory_space<vmem>>, vector<136x25xf32>
    %90 = arith.maximumf %88, %89 : vector<136x25xf32>
    %c808 = arith.constant 808 : index
    %c0_69 = arith.constant 0 : index
    %91 = vector.load %arg22[%c808, %c0_69] : memref<1280x25xf32, #tpu.memory_space<vmem>>, vector<136x25xf32>
    %92 = arith.maximumf %90, %91 : vector<136x25xf32>
    %c809 = arith.constant 809 : index
    %c0_70 = arith.constant 0 : index
    %93 = vector.load %arg22[%c809, %c0_70] : memref<1280x25xf32, #tpu.memory_space<vmem>>, vector<136x25xf32>
    %94 = arith.maximumf %92, %93 : vector<136x25xf32>
    %95 = arith.truncf %94 : vector<136x25xf32> to vector<136x25xbf16>
    %c680 = arith.constant 680 : index
    %c0_71 = arith.constant 0 : index
    %96 = vector.load %arg23[%c680, %c0_71] : memref<1088x25xbf16, #tpu.memory_space<vmem>>, vector<136x25xbf16>
    tpu.vector_store %arg23[%c680, %c0_71], %95 {strides = array<i32>} : memref<1088x25xbf16, #tpu.memory_space<vmem>>, vector<136x25xbf16>,
    %c912 = arith.constant 912 : index
    %c0_72 = arith.constant 0 : index
    %97 = vector.load %arg22[%c912, %c0_72] : memref<1280x25xf32, #tpu.memory_space<vmem>>, vector<136x25xf32>
    %c913 = arith.constant 913 : index
    %c0_73 = arith.constant 0 : index
    %98 = vector.load %arg22[%c913, %c0_73] : memref<1280x25xf32, #tpu.memory_space<vmem>>, vector<136x25xf32>
    %99 = arith.maximumf %97, %98 : vector<136x25xf32>
    %c944 = arith.constant 944 : index
    %c0_74 = arith.constant 0 : index
    %100 = vector.load %arg22[%c944, %c0_74] : memref<1280x25xf32, #tpu.memory_space<vmem>>, vector<136x25xf32>
    %101 = arith.maximumf %99, %100 : vector<136x25xf32>
    %c945 = arith.constant 945 : index
    %c0_75 = arith.constant 0 : index
    %102 = vector.load %arg22[%c945, %c0_75] : memref<1280x25xf32, #tpu.memory_space<vmem>>, vector<136x25xf32>
    %103 = arith.maximumf %101, %102 : vector<136x25xf32>
    %104 = arith.truncf %103 : vector<136x25xf32> to vector<136x25xbf16>
    %c816 = arith.constant 816 : index
    %c0_76 = arith.constant 0 : index
    %105 = vector.load %arg23[%c816, %c0_76] : memref<1088x25xbf16, #tpu.memory_space<vmem>>, vector<136x25xbf16>
    tpu.vector_store %arg23[%c816, %c0_76], %104 {strides = array<i32>} : memref<1088x25xbf16, #tpu.memory_space<vmem>>, vector<136x25xbf16>,
    %c1048 = arith.constant 1048 : index
    %c0_77 = arith.constant 0 : index
    %106 = vector.load %arg22[%c1048, %c0_77] : memref<1280x25xf32, #tpu.memory_space<vmem>>, vector<136x25xf32>
    %c1049 = arith.constant 1049 : index
    %c0_78 = arith.constant 0 : index
    %107 = vector.load %arg22[%c1049, %c0_78] : memref<1280x25xf32, #tpu.memory_space<vmem>>, vector<136x25xf32>
    %108 = arith.maximumf %106, %107 : vector<136x25xf32>
    %c1080 = arith.constant 1080 : index
    %c0_79 = arith.constant 0 : index
    %109 = vector.load %arg22[%c1080, %c0_79] : memref<1280x25xf32, #tpu.memory_space<vmem>>, vector<136x25xf32>
    %110 = arith.maximumf %108, %109 : vector<136x25xf32>
    %c1081 = arith.constant 1081 : index
    %c0_80 = arith.constant 0 : index
    %111 = vector.load %arg22[%c1081, %c0_80] : memref<1280x25xf32, #tpu.memory_space<vmem>>, vector<136x25xf32>
    %112 = arith.maximumf %110, %111 : vector<136x25xf32>
    %113 = arith.truncf %112 : vector<136x25xf32> to vector<136x25xbf16>
    %c952 = arith.constant 952 : index
    %c0_81 = arith.constant 0 : index
    %114 = vector.load %arg23[%c952, %c0_81] : memref<1088x25xbf16, #tpu.memory_space<vmem>>, vector<136x25xbf16>
    tpu.vector_store %arg23[%c952, %c0_81], %113 {strides = array<i32>} : memref<1088x25xbf16, #tpu.memory_space<vmem>>, vector<136x25xbf16>,
    %c0_82 = arith.constant 0 : index
    %c0_83 = arith.constant 0 : index
    %115 = vector.load %arg4[%c0_82, %c0_83] : memref<144x544xbf16, #tpu.memory_space<vmem>>, vector<144x544xbf16>
    %c0_84 = arith.constant 0 : index
    %c0_85 = arith.constant 0 : index
    %116 = vector.load %arg23[%c0_84, %c0_85] : memref<1088x25xbf16, #tpu.memory_space<vmem>>, vector<544x25xbf16>
    %cst_86 = arith.constant dense<0.000000e+00> : vector<144x25xf32>
    %117 = tpu.matmul %115, %116, %cst_86 {dimension_numbers = #tpu.dot_dimension_numbers<[1], [0], [0], [1], [0, 0, 1, 1], [], []>} : vector<144x544xbf16>, vector<544x25xbf16>, vector<144x25xf32> -> vector<144x25xf32>
    %118 = arith.truncf %117 : vector<144x25xf32> to vector<144x25xbf16>
    %c0_87 = arith.constant 0 : index
    %c0_88 = arith.constant 0 : index
    %119 = vector.load %arg24[%c0_87, %c0_88] : memref<296x25xbf16, #tpu.memory_space<vmem>>, vector<144x25xbf16>
    tpu.vector_store %arg24[%c0_87, %c0_88], %118 {strides = array<i32>} : memref<296x25xbf16, #tpu.memory_space<vmem>>, vector<144x25xbf16>,
    %c544_89 = arith.constant 544 : index
    %c0_90 = arith.constant 0 : index
    %120 = vector.load %arg23[%c544_89, %c0_90] : memref<1088x25xbf16, #tpu.memory_space<vmem>>, vector<544x25xbf16>
    %cst_91 = arith.constant dense<0.000000e+00> : vector<144x25xf32>
    %121 = tpu.matmul %115, %120, %cst_91 {dimension_numbers = #tpu.dot_dimension_numbers<[1], [0], [0], [1], [0, 0, 1, 1], [], []>} : vector<144x544xbf16>, vector<544x25xbf16>, vector<144x25xf32> -> vector<144x25xf32>
    %122 = arith.truncf %121 : vector<144x25xf32> to vector<144x25xbf16>
    %c144 = arith.constant 144 : index
    %c0_92 = arith.constant 0 : index
    %123 = vector.load %arg24[%c144, %c0_92] : memref<296x25xbf16, #tpu.memory_space<vmem>>, vector<144x25xbf16>
    tpu.vector_store %arg24[%c144, %c0_92], %122 {strides = array<i32>} : memref<296x25xbf16, #tpu.memory_space<vmem>>, vector<144x25xbf16>,
    %c0_93 = arith.constant 0 : index
    %c0_94 = arith.constant 0 : index
    %124 = vector.load %arg6[%c0_93, %c0_94] : memref<1x50xf32, #tpu.memory_space<vmem>>, vector<1x50xf32>
    %cst_95 = arith.constant 0.000000e+00 : f32
    %125 = vector.broadcast %cst_95 : f32 to vector<96x50xf32>
    %c0_96 = arith.constant 0 : index
    %c0_97 = arith.constant 0 : index
    %126 = vector.load %arg24[%c0_96, %c0_97] : memref<296x25xbf16, #tpu.memory_space<vmem>>, vector<96x25xbf16>
    %c0_98 = arith.constant 0 : index
    %c0_99 = arith.constant 0 : index
    %c0_100 = arith.constant 0 : index
    %127 = vector.load %arg5[%c0_98, %c0_99, %c0_100] : memref<12x25x50xbf16, #tpu.memory_space<vmem>>, vector<1x25x50xbf16>
    %128 = vector.shape_cast %127 : vector<1x25x50xbf16> to vector<25x50xbf16>
    %cst_101 = arith.constant dense<0.000000e+00> : vector<96x50xf32>
    %129 = tpu.matmul %126, %128, %cst_101 {dimension_numbers = #tpu.dot_dimension_numbers<[1], [0], [0], [1], [0, 0, 1, 1], [], []>} : vector<96x25xbf16>, vector<25x50xbf16>, vector<96x50xf32> -> vector<96x50xf32>
    %130 = arith.addf %125, %129 : vector<96x50xf32>
    %c1_102 = arith.constant 1 : index
    %c0_103 = arith.constant 0 : index
    %131 = vector.load %arg24[%c1_102, %c0_103] : memref<296x25xbf16, #tpu.memory_space<vmem>>, vector<96x25xbf16>
    %c1_104 = arith.constant 1 : index
    %c0_105 = arith.constant 0 : index
    %c0_106 = arith.constant 0 : index
    %132 = vector.load %arg5[%c1_104, %c0_105, %c0_106] : memref<12x25x50xbf16, #tpu.memory_space<vmem>>, vector<1x25x50xbf16>
    %133 = vector.shape_cast %132 : vector<1x25x50xbf16> to vector<25x50xbf16>
    %cst_107 = arith.constant dense<0.000000e+00> : vector<96x50xf32>
    %134 = tpu.matmul %131, %133, %cst_107 {dimension_numbers = #tpu.dot_dimension_numbers<[1], [0], [0], [1], [0, 0, 1, 1], [], []>} : vector<96x25xbf16>, vector<25x50xbf16>, vector<96x50xf32> -> vector<96x50xf32>
    %135 = arith.addf %130, %134 : vector<96x50xf32>
    %c2 = arith.constant 2 : index
    %c0_108 = arith.constant 0 : index
    %136 = vector.load %arg24[%c2, %c0_108] : memref<296x25xbf16, #tpu.memory_space<vmem>>, vector<96x25xbf16>
    %c2_109 = arith.constant 2 : index
    %c0_110 = arith.constant 0 : index
    %c0_111 = arith.constant 0 : index
    %137 = vector.load %arg5[%c2_109, %c0_110, %c0_111] : memref<12x25x50xbf16, #tpu.memory_space<vmem>>, vector<1x25x50xbf16>
    %138 = vector.shape_cast %137 : vector<1x25x50xbf16> to vector<25x50xbf16>
    %cst_112 = arith.constant dense<0.000000e+00> : vector<96x50xf32>
    %139 = tpu.matmul %136, %138, %cst_112 {dimension_numbers = #tpu.dot_dimension_numbers<[1], [0], [0], [1], [0, 0, 1, 1], [], []>} : vector<96x25xbf16>, vector<25x50xbf16>, vector<96x50xf32> -> vector<96x50xf32>
    %140 = arith.addf %135, %139 : vector<96x50xf32>
    %c16 = arith.constant 16 : index
    %c0_113 = arith.constant 0 : index
    %141 = vector.load %arg24[%c16, %c0_113] : memref<296x25xbf16, #tpu.memory_space<vmem>>, vector<96x25xbf16>
    %c3 = arith.constant 3 : index
    %c0_114 = arith.constant 0 : index
    %c0_115 = arith.constant 0 : index
    %142 = vector.load %arg5[%c3, %c0_114, %c0_115] : memref<12x25x50xbf16, #tpu.memory_space<vmem>>, vector<1x25x50xbf16>
    %143 = vector.shape_cast %142 : vector<1x25x50xbf16> to vector<25x50xbf16>
    %cst_116 = arith.constant dense<0.000000e+00> : vector<96x50xf32>
    %144 = tpu.matmul %141, %143, %cst_116 {dimension_numbers = #tpu.dot_dimension_numbers<[1], [0], [0], [1], [0, 0, 1, 1], [], []>} : vector<96x25xbf16>, vector<25x50xbf16>, vector<96x50xf32> -> vector<96x50xf32>
    %145 = arith.addf %140, %144 : vector<96x50xf32>
    %c17 = arith.constant 17 : index
    %c0_117 = arith.constant 0 : index
    %146 = vector.load %arg24[%c17, %c0_117] : memref<296x25xbf16, #tpu.memory_space<vmem>>, vector<96x25xbf16>
    %c4 = arith.constant 4 : index
    %c0_118 = arith.constant 0 : index
    %c0_119 = arith.constant 0 : index
    %147 = vector.load %arg5[%c4, %c0_118, %c0_119] : memref<12x25x50xbf16, #tpu.memory_space<vmem>>, vector<1x25x50xbf16>
    %148 = vector.shape_cast %147 : vector<1x25x50xbf16> to vector<25x50xbf16>
    %cst_120 = arith.constant dense<0.000000e+00> : vector<96x50xf32>
    %149 = tpu.matmul %146, %148, %cst_120 {dimension_numbers = #tpu.dot_dimension_numbers<[1], [0], [0], [1], [0, 0, 1, 1], [], []>} : vector<96x25xbf16>, vector<25x50xbf16>, vector<96x50xf32> -> vector<96x50xf32>
    %150 = arith.addf %145, %149 : vector<96x50xf32>
    %c18 = arith.constant 18 : index
    %c0_121 = arith.constant 0 : index
    %151 = vector.load %arg24[%c18, %c0_121] : memref<296x25xbf16, #tpu.memory_space<vmem>>, vector<96x25xbf16>
    %c5 = arith.constant 5 : index
    %c0_122 = arith.constant 0 : index
    %c0_123 = arith.constant 0 : index
    %152 = vector.load %arg5[%c5, %c0_122, %c0_123] : memref<12x25x50xbf16, #tpu.memory_space<vmem>>, vector<1x25x50xbf16>
    %153 = vector.shape_cast %152 : vector<1x25x50xbf16> to vector<25x50xbf16>
    %cst_124 = arith.constant dense<0.000000e+00> : vector<96x50xf32>
    %154 = tpu.matmul %151, %153, %cst_124 {dimension_numbers = #tpu.dot_dimension_numbers<[1], [0], [0], [1], [0, 0, 1, 1], [], []>} : vector<96x25xbf16>, vector<25x50xbf16>, vector<96x50xf32> -> vector<96x50xf32>
    %155 = arith.addf %150, %154 : vector<96x50xf32>
    %c32_125 = arith.constant 32 : index
    %c0_126 = arith.constant 0 : index
    %156 = vector.load %arg24[%c32_125, %c0_126] : memref<296x25xbf16, #tpu.memory_space<vmem>>, vector<96x25xbf16>
    %c6 = arith.constant 6 : index
    %c0_127 = arith.constant 0 : index
    %c0_128 = arith.constant 0 : index
    %157 = vector.load %arg5[%c6, %c0_127, %c0_128] : memref<12x25x50xbf16, #tpu.memory_space<vmem>>, vector<1x25x50xbf16>
    %158 = vector.shape_cast %157 : vector<1x25x50xbf16> to vector<25x50xbf16>
    %cst_129 = arith.constant dense<0.000000e+00> : vector<96x50xf32>
    %159 = tpu.matmul %156, %158, %cst_129 {dimension_numbers = #tpu.dot_dimension_numbers<[1], [0], [0], [1], [0, 0, 1, 1], [], []>} : vector<96x25xbf16>, vector<25x50xbf16>, vector<96x50xf32> -> vector<96x50xf32>
    %160 = arith.addf %155, %159 : vector<96x50xf32>
    %c33_130 = arith.constant 33 : index
    %c0_131 = arith.constant 0 : index
    %161 = vector.load %arg24[%c33_130, %c0_131] : memref<296x25xbf16, #tpu.memory_space<vmem>>, vector<96x25xbf16>
    %c7 = arith.constant 7 : index
    %c0_132 = arith.constant 0 : index
    %c0_133 = arith.constant 0 : index
    %162 = vector.load %arg5[%c7, %c0_132, %c0_133] : memref<12x25x50xbf16, #tpu.memory_space<vmem>>, vector<1x25x50xbf16>
    %163 = vector.shape_cast %162 : vector<1x25x50xbf16> to vector<25x50xbf16>
    %cst_134 = arith.constant dense<0.000000e+00> : vector<96x50xf32>
    %164 = tpu.matmul %161, %163, %cst_134 {dimension_numbers = #tpu.dot_dimension_numbers<[1], [0], [0], [1], [0, 0, 1, 1], [], []>} : vector<96x25xbf16>, vector<25x50xbf16>, vector<96x50xf32> -> vector<96x50xf32>
    %165 = arith.addf %160, %164 : vector<96x50xf32>
    %c34 = arith.constant 34 : index
    %c0_135 = arith.constant 0 : index
    %166 = vector.load %arg24[%c34, %c0_135] : memref<296x25xbf16, #tpu.memory_space<vmem>>, vector<96x25xbf16>
    %c8 = arith.constant 8 : index
    %c0_136 = arith.constant 0 : index
    %c0_137 = arith.constant 0 : index
    %167 = vector.load %arg5[%c8, %c0_136, %c0_137] : memref<12x25x50xbf16, #tpu.memory_space<vmem>>, vector<1x25x50xbf16>
    %168 = vector.shape_cast %167 : vector<1x25x50xbf16> to vector<25x50xbf16>
    %cst_138 = arith.constant dense<0.000000e+00> : vector<96x50xf32>
    %169 = tpu.matmul %166, %168, %cst_138 {dimension_numbers = #tpu.dot_dimension_numbers<[1], [0], [0], [1], [0, 0, 1, 1], [], []>} : vector<96x25xbf16>, vector<25x50xbf16>, vector<96x50xf32> -> vector<96x50xf32>
    %170 = arith.addf %165, %169 : vector<96x50xf32>
    %c48 = arith.constant 48 : index
    %c0_139 = arith.constant 0 : index
    %171 = vector.load %arg24[%c48, %c0_139] : memref<296x25xbf16, #tpu.memory_space<vmem>>, vector<96x25xbf16>
    %c9 = arith.constant 9 : index
    %c0_140 = arith.constant 0 : index
    %c0_141 = arith.constant 0 : index
    %172 = vector.load %arg5[%c9, %c0_140, %c0_141] : memref<12x25x50xbf16, #tpu.memory_space<vmem>>, vector<1x25x50xbf16>
    %173 = vector.shape_cast %172 : vector<1x25x50xbf16> to vector<25x50xbf16>
    %cst_142 = arith.constant dense<0.000000e+00> : vector<96x50xf32>
    %174 = tpu.matmul %171, %173, %cst_142 {dimension_numbers = #tpu.dot_dimension_numbers<[1], [0], [0], [1], [0, 0, 1, 1], [], []>} : vector<96x25xbf16>, vector<25x50xbf16>, vector<96x50xf32> -> vector<96x50xf32>
    %175 = arith.addf %170, %174 : vector<96x50xf32>
    %c49 = arith.constant 49 : index
    %c0_143 = arith.constant 0 : index
    %176 = vector.load %arg24[%c49, %c0_143] : memref<296x25xbf16, #tpu.memory_space<vmem>>, vector<96x25xbf16>
    %c10 = arith.constant 10 : index
    %c0_144 = arith.constant 0 : index
    %c0_145 = arith.constant 0 : index
    %177 = vector.load %arg5[%c10, %c0_144, %c0_145] : memref<12x25x50xbf16, #tpu.memory_space<vmem>>, vector<1x25x50xbf16>
    %178 = vector.shape_cast %177 : vector<1x25x50xbf16> to vector<25x50xbf16>
    %cst_146 = arith.constant dense<0.000000e+00> : vector<96x50xf32>
    %179 = tpu.matmul %176, %178, %cst_146 {dimension_numbers = #tpu.dot_dimension_numbers<[1], [0], [0], [1], [0, 0, 1, 1], [], []>} : vector<96x25xbf16>, vector<25x50xbf16>, vector<96x50xf32> -> vector<96x50xf32>
    %180 = arith.addf %175, %179 : vector<96x50xf32>
    %c50 = arith.constant 50 : index
    %c0_147 = arith.constant 0 : index
    %181 = vector.load %arg24[%c50, %c0_147] : memref<296x25xbf16, #tpu.memory_space<vmem>>, vector<96x25xbf16>
    %c11 = arith.constant 11 : index
    %c0_148 = arith.constant 0 : index
    %c0_149 = arith.constant 0 : index
    %182 = vector.load %arg5[%c11, %c0_148, %c0_149] : memref<12x25x50xbf16, #tpu.memory_space<vmem>>, vector<1x25x50xbf16>
    %183 = vector.shape_cast %182 : vector<1x25x50xbf16> to vector<25x50xbf16>
    %cst_150 = arith.constant dense<0.000000e+00> : vector<96x50xf32>
    %184 = tpu.matmul %181, %183, %cst_150 {dimension_numbers = #tpu.dot_dimension_numbers<[1], [0], [0], [1], [0, 0, 1, 1], [], []>} : vector<96x25xbf16>, vector<25x50xbf16>, vector<96x50xf32> -> vector<96x50xf32>
    %185 = arith.addf %180, %184 : vector<96x50xf32>
    %186 = vector.broadcast %124 : vector<1x50xf32> to vector<96x50xf32>
    %187 = arith.addf %185, %186 : vector<96x50xf32>
    %cst_151 = arith.constant 0.000000e+00 : f32
    %188 = vector.broadcast %cst_151 : f32 to vector<96x50xf32>
    %189 = arith.maximumf %187, %188 : vector<96x50xf32>
    %c0_152 = arith.constant 0 : index
    %c0_153 = arith.constant 0 : index
    %190 = vector.load %arg25[%c0_152, %c0_153] : memref<248x50xf32, #tpu.memory_space<vmem>>, vector<96x50xf32>
    tpu.vector_store %arg25[%c0_152, %c0_153], %189 {strides = array<i32>} : memref<248x50xf32, #tpu.memory_space<vmem>>, vector<96x50xf32>,
    %cst_154 = arith.constant 0.000000e+00 : f32
    %191 = vector.broadcast %cst_154 : f32 to vector<96x50xf32>
    %c144_155 = arith.constant 144 : index
    %c0_156 = arith.constant 0 : index
    %192 = vector.load %arg24[%c144_155, %c0_156] : memref<296x25xbf16, #tpu.memory_space<vmem>>, vector<96x25xbf16>
    %c0_157 = arith.constant 0 : index
    %c0_158 = arith.constant 0 : index
    %c0_159 = arith.constant 0 : index
    %193 = vector.load %arg5[%c0_157, %c0_158, %c0_159] : memref<12x25x50xbf16, #tpu.memory_space<vmem>>, vector<1x25x50xbf16>
    %194 = vector.shape_cast %193 : vector<1x25x50xbf16> to vector<25x50xbf16>
    %cst_160 = arith.constant dense<0.000000e+00> : vector<96x50xf32>
    %195 = tpu.matmul %192, %194, %cst_160 {dimension_numbers = #tpu.dot_dimension_numbers<[1], [0], [0], [1], [0, 0, 1, 1], [], []>} : vector<96x25xbf16>, vector<25x50xbf16>, vector<96x50xf32> -> vector<96x50xf32>
    %196 = arith.addf %191, %195 : vector<96x50xf32>
    %c145 = arith.constant 145 : index
    %c0_161 = arith.constant 0 : index
    %197 = vector.load %arg24[%c145, %c0_161] : memref<296x25xbf16, #tpu.memory_space<vmem>>, vector<96x25xbf16>
    %c1_162 = arith.constant 1 : index
    %c0_163 = arith.constant 0 : index
    %c0_164 = arith.constant 0 : index
    %198 = vector.load %arg5[%c1_162, %c0_163, %c0_164] : memref<12x25x50xbf16, #tpu.memory_space<vmem>>, vector<1x25x50xbf16>
    %199 = vector.shape_cast %198 : vector<1x25x50xbf16> to vector<25x50xbf16>
    %cst_165 = arith.constant dense<0.000000e+00> : vector<96x50xf32>
    %200 = tpu.matmul %197, %199, %cst_165 {dimension_numbers = #tpu.dot_dimension_numbers<[1], [0], [0], [1], [0, 0, 1, 1], [], []>} : vector<96x25xbf16>, vector<25x50xbf16>, vector<96x50xf32> -> vector<96x50xf32>
    %201 = arith.addf %196, %200 : vector<96x50xf32>
    %c146 = arith.constant 146 : index
    %c0_166 = arith.constant 0 : index
    %202 = vector.load %arg24[%c146, %c0_166] : memref<296x25xbf16, #tpu.memory_space<vmem>>, vector<96x25xbf16>
    %c2_167 = arith.constant 2 : index
    %c0_168 = arith.constant 0 : index
    %c0_169 = arith.constant 0 : index
    %203 = vector.load %arg5[%c2_167, %c0_168, %c0_169] : memref<12x25x50xbf16, #tpu.memory_space<vmem>>, vector<1x25x50xbf16>
    %204 = vector.shape_cast %203 : vector<1x25x50xbf16> to vector<25x50xbf16>
    %cst_170 = arith.constant dense<0.000000e+00> : vector<96x50xf32>
    %205 = tpu.matmul %202, %204, %cst_170 {dimension_numbers = #tpu.dot_dimension_numbers<[1], [0], [0], [1], [0, 0, 1, 1], [], []>} : vector<96x25xbf16>, vector<25x50xbf16>, vector<96x50xf32> -> vector<96x50xf32>
    %206 = arith.addf %201, %205 : vector<96x50xf32>
    %c160 = arith.constant 160 : index
    %c0_171 = arith.constant 0 : index
    %207 = vector.load %arg24[%c160, %c0_171] : memref<296x25xbf16, #tpu.memory_space<vmem>>, vector<96x25xbf16>
    %c3_172 = arith.constant 3 : index
    %c0_173 = arith.constant 0 : index
    %c0_174 = arith.constant 0 : index
    %208 = vector.load %arg5[%c3_172, %c0_173, %c0_174] : memref<12x25x50xbf16, #tpu.memory_space<vmem>>, vector<1x25x50xbf16>
    %209 = vector.shape_cast %208 : vector<1x25x50xbf16> to vector<25x50xbf16>
    %cst_175 = arith.constant dense<0.000000e+00> : vector<96x50xf32>
    %210 = tpu.matmul %207, %209, %cst_175 {dimension_numbers = #tpu.dot_dimension_numbers<[1], [0], [0], [1], [0, 0, 1, 1], [], []>} : vector<96x25xbf16>, vector<25x50xbf16>, vector<96x50xf32> -> vector<96x50xf32>
    %211 = arith.addf %206, %210 : vector<96x50xf32>
    %c161 = arith.constant 161 : index
    %c0_176 = arith.constant 0 : index
    %212 = vector.load %arg24[%c161, %c0_176] : memref<296x25xbf16, #tpu.memory_space<vmem>>, vector<96x25xbf16>
    %c4_177 = arith.constant 4 : index
    %c0_178 = arith.constant 0 : index
    %c0_179 = arith.constant 0 : index
    %213 = vector.load %arg5[%c4_177, %c0_178, %c0_179] : memref<12x25x50xbf16, #tpu.memory_space<vmem>>, vector<1x25x50xbf16>
    %214 = vector.shape_cast %213 : vector<1x25x50xbf16> to vector<25x50xbf16>
    %cst_180 = arith.constant dense<0.000000e+00> : vector<96x50xf32>
    %215 = tpu.matmul %212, %214, %cst_180 {dimension_numbers = #tpu.dot_dimension_numbers<[1], [0], [0], [1], [0, 0, 1, 1], [], []>} : vector<96x25xbf16>, vector<25x50xbf16>, vector<96x50xf32> -> vector<96x50xf32>
    %216 = arith.addf %211, %215 : vector<96x50xf32>
    %c162 = arith.constant 162 : index
    %c0_181 = arith.constant 0 : index
    %217 = vector.load %arg24[%c162, %c0_181] : memref<296x25xbf16, #tpu.memory_space<vmem>>, vector<96x25xbf16>
    %c5_182 = arith.constant 5 : index
    %c0_183 = arith.constant 0 : index
    %c0_184 = arith.constant 0 : index
    %218 = vector.load %arg5[%c5_182, %c0_183, %c0_184] : memref<12x25x50xbf16, #tpu.memory_space<vmem>>, vector<1x25x50xbf16>
    %219 = vector.shape_cast %218 : vector<1x25x50xbf16> to vector<25x50xbf16>
    %cst_185 = arith.constant dense<0.000000e+00> : vector<96x50xf32>
    %220 = tpu.matmul %217, %219, %cst_185 {dimension_numbers = #tpu.dot_dimension_numbers<[1], [0], [0], [1], [0, 0, 1, 1], [], []>} : vector<96x25xbf16>, vector<25x50xbf16>, vector<96x50xf32> -> vector<96x50xf32>
    %221 = arith.addf %216, %220 : vector<96x50xf32>
    %c176 = arith.constant 176 : index
    %c0_186 = arith.constant 0 : index
    %222 = vector.load %arg24[%c176, %c0_186] : memref<296x25xbf16, #tpu.memory_space<vmem>>, vector<96x25xbf16>
    %c6_187 = arith.constant 6 : index
    %c0_188 = arith.constant 0 : index
    %c0_189 = arith.constant 0 : index
    %223 = vector.load %arg5[%c6_187, %c0_188, %c0_189] : memref<12x25x50xbf16, #tpu.memory_space<vmem>>, vector<1x25x50xbf16>
    %224 = vector.shape_cast %223 : vector<1x25x50xbf16> to vector<25x50xbf16>
    %cst_190 = arith.constant dense<0.000000e+00> : vector<96x50xf32>
    %225 = tpu.matmul %222, %224, %cst_190 {dimension_numbers = #tpu.dot_dimension_numbers<[1], [0], [0], [1], [0, 0, 1, 1], [], []>} : vector<96x25xbf16>, vector<25x50xbf16>, vector<96x50xf32> -> vector<96x50xf32>
    %226 = arith.addf %221, %225 : vector<96x50xf32>
    %c177 = arith.constant 177 : index
    %c0_191 = arith.constant 0 : index
    %227 = vector.load %arg24[%c177, %c0_191] : memref<296x25xbf16, #tpu.memory_space<vmem>>, vector<96x25xbf16>
    %c7_192 = arith.constant 7 : index
    %c0_193 = arith.constant 0 : index
    %c0_194 = arith.constant 0 : index
    %228 = vector.load %arg5[%c7_192, %c0_193, %c0_194] : memref<12x25x50xbf16, #tpu.memory_space<vmem>>, vector<1x25x50xbf16>
    %229 = vector.shape_cast %228 : vector<1x25x50xbf16> to vector<25x50xbf16>
    %cst_195 = arith.constant dense<0.000000e+00> : vector<96x50xf32>
    %230 = tpu.matmul %227, %229, %cst_195 {dimension_numbers = #tpu.dot_dimension_numbers<[1], [0], [0], [1], [0, 0, 1, 1], [], []>} : vector<96x25xbf16>, vector<25x50xbf16>, vector<96x50xf32> -> vector<96x50xf32>
    %231 = arith.addf %226, %230 : vector<96x50xf32>
    %c178 = arith.constant 178 : index
    %c0_196 = arith.constant 0 : index
    %232 = vector.load %arg24[%c178, %c0_196] : memref<296x25xbf16, #tpu.memory_space<vmem>>, vector<96x25xbf16>
    %c8_197 = arith.constant 8 : index
    %c0_198 = arith.constant 0 : index
    %c0_199 = arith.constant 0 : index
    %233 = vector.load %arg5[%c8_197, %c0_198, %c0_199] : memref<12x25x50xbf16, #tpu.memory_space<vmem>>, vector<1x25x50xbf16>
    %234 = vector.shape_cast %233 : vector<1x25x50xbf16> to vector<25x50xbf16>
    %cst_200 = arith.constant dense<0.000000e+00> : vector<96x50xf32>
    %235 = tpu.matmul %232, %234, %cst_200 {dimension_numbers = #tpu.dot_dimension_numbers<[1], [0], [0], [1], [0, 0, 1, 1], [], []>} : vector<96x25xbf16>, vector<25x50xbf16>, vector<96x50xf32> -> vector<96x50xf32>
    %236 = arith.addf %231, %235 : vector<96x50xf32>
    %c192 = arith.constant 192 : index
    %c0_201 = arith.constant 0 : index
    %237 = vector.load %arg24[%c192, %c0_201] : memref<296x25xbf16, #tpu.memory_space<vmem>>, vector<96x25xbf16>
    %c9_202 = arith.constant 9 : index
    %c0_203 = arith.constant 0 : index
    %c0_204 = arith.constant 0 : index
    %238 = vector.load %arg5[%c9_202, %c0_203, %c0_204] : memref<12x25x50xbf16, #tpu.memory_space<vmem>>, vector<1x25x50xbf16>
    %239 = vector.shape_cast %238 : vector<1x25x50xbf16> to vector<25x50xbf16>
    %cst_205 = arith.constant dense<0.000000e+00> : vector<96x50xf32>
    %240 = tpu.matmul %237, %239, %cst_205 {dimension_numbers = #tpu.dot_dimension_numbers<[1], [0], [0], [1], [0, 0, 1, 1], [], []>} : vector<96x25xbf16>, vector<25x50xbf16>, vector<96x50xf32> -> vector<96x50xf32>
    %241 = arith.addf %236, %240 : vector<96x50xf32>
    %c193 = arith.constant 193 : index
    %c0_206 = arith.constant 0 : index
    %242 = vector.load %arg24[%c193, %c0_206] : memref<296x25xbf16, #tpu.memory_space<vmem>>, vector<96x25xbf16>
    %c10_207 = arith.constant 10 : index
    %c0_208 = arith.constant 0 : index
    %c0_209 = arith.constant 0 : index
    %243 = vector.load %arg5[%c10_207, %c0_208, %c0_209] : memref<12x25x50xbf16, #tpu.memory_space<vmem>>, vector<1x25x50xbf16>
    %244 = vector.shape_cast %243 : vector<1x25x50xbf16> to vector<25x50xbf16>
    %cst_210 = arith.constant dense<0.000000e+00> : vector<96x50xf32>
    %245 = tpu.matmul %242, %244, %cst_210 {dimension_numbers = #tpu.dot_dimension_numbers<[1], [0], [0], [1], [0, 0, 1, 1], [], []>} : vector<96x25xbf16>, vector<25x50xbf16>, vector<96x50xf32> -> vector<96x50xf32>
    %246 = arith.addf %241, %245 : vector<96x50xf32>
    %c194 = arith.constant 194 : index
    %c0_211 = arith.constant 0 : index
    %247 = vector.load %arg24[%c194, %c0_211] : memref<296x25xbf16, #tpu.memory_space<vmem>>, vector<96x25xbf16>
    %c11_212 = arith.constant 11 : index
    %c0_213 = arith.constant 0 : index
    %c0_214 = arith.constant 0 : index
    %248 = vector.load %arg5[%c11_212, %c0_213, %c0_214] : memref<12x25x50xbf16, #tpu.memory_space<vmem>>, vector<1x25x50xbf16>
    %249 = vector.shape_cast %248 : vector<1x25x50xbf16> to vector<25x50xbf16>
    %cst_215 = arith.constant dense<0.000000e+00> : vector<96x50xf32>
    %250 = tpu.matmul %247, %249, %cst_215 {dimension_numbers = #tpu.dot_dimension_numbers<[1], [0], [0], [1], [0, 0, 1, 1], [], []>} : vector<96x25xbf16>, vector<25x50xbf16>, vector<96x50xf32> -> vector<96x50xf32>
    %251 = arith.addf %246, %250 : vector<96x50xf32>
    %252 = vector.broadcast %124 : vector<1x50xf32> to vector<96x50xf32>
    %253 = arith.addf %251, %252 : vector<96x50xf32>
    %cst_216 = arith.constant 0.000000e+00 : f32
    %254 = vector.broadcast %cst_216 : f32 to vector<96x50xf32>
    %255 = arith.maximumf %253, %254 : vector<96x50xf32>
    %c144_217 = arith.constant 144 : index
    %c0_218 = arith.constant 0 : index
    %256 = vector.load %arg25[%c144_217, %c0_218] : memref<248x50xf32, #tpu.memory_space<vmem>>, vector<96x50xf32>
    tpu.vector_store %arg25[%c144_217, %c0_218], %255 {strides = array<i32>} : memref<248x50xf32, #tpu.memory_space<vmem>>, vector<96x50xf32>,
    %c0_219 = arith.constant 0 : index
    %c0_220 = arith.constant 0 : index
    %257 = vector.load %arg7[%c0_219, %c0_220] : memref<24x80xbf16, #tpu.memory_space<vmem>>, vector<24x80xbf16>
    %c0_221 = arith.constant 0 : index
    %c0_222 = arith.constant 0 : index
    %258 = vector.load %arg25[%c0_221, %c0_222] : memref<248x50xf32, #tpu.memory_space<vmem>>, vector<80x50xf32>
    %c1_223 = arith.constant 1 : index
    %c0_224 = arith.constant 0 : index
    %259 = vector.load %arg25[%c1_223, %c0_224] : memref<248x50xf32, #tpu.memory_space<vmem>>, vector<80x50xf32>
    %260 = arith.maximumf %258, %259 : vector<80x50xf32>
    %c16_225 = arith.constant 16 : index
    %c0_226 = arith.constant 0 : index
    %261 = vector.load %arg25[%c16_225, %c0_226] : memref<248x50xf32, #tpu.memory_space<vmem>>, vector<80x50xf32>
    %262 = arith.maximumf %260, %261 : vector<80x50xf32>
    %c17_227 = arith.constant 17 : index
    %c0_228 = arith.constant 0 : index
    %263 = vector.load %arg25[%c17_227, %c0_228] : memref<248x50xf32, #tpu.memory_space<vmem>>, vector<80x50xf32>
    %264 = arith.maximumf %262, %263 : vector<80x50xf32>
    %265 = arith.truncf %264 : vector<80x50xf32> to vector<80x50xbf16>
    %cst_229 = arith.constant dense<0.000000e+00> : vector<24x50xf32>
    %266 = tpu.matmul %257, %265, %cst_229 {dimension_numbers = #tpu.dot_dimension_numbers<[1], [0], [0], [1], [0, 0, 1, 1], [], []>} : vector<24x80xbf16>, vector<80x50xbf16>, vector<24x50xf32> -> vector<24x50xf32>
    %267 = arith.truncf %266 : vector<24x50xf32> to vector<24x50xbf16>
    %c0_230 = arith.constant 0 : index
    %c0_231 = arith.constant 0 : index
    %268 = vector.load %arg26[%c0_230, %c0_231] : memref<72x50xbf16, #tpu.memory_space<vmem>>, vector<24x50xbf16>
    tpu.vector_store %arg26[%c0_230, %c0_231], %267 {strides = array<i32>} : memref<72x50xbf16, #tpu.memory_space<vmem>>, vector<24x50xbf16>,
    %c144_232 = arith.constant 144 : index
    %c0_233 = arith.constant 0 : index
    %269 = vector.load %arg25[%c144_232, %c0_233] : memref<248x50xf32, #tpu.memory_space<vmem>>, vector<80x50xf32>
    %c145_234 = arith.constant 145 : index
    %c0_235 = arith.constant 0 : index
    %270 = vector.load %arg25[%c145_234, %c0_235] : memref<248x50xf32, #tpu.memory_space<vmem>>, vector<80x50xf32>
    %271 = arith.maximumf %269, %270 : vector<80x50xf32>
    %c160_236 = arith.constant 160 : index
    %c0_237 = arith.constant 0 : index
    %272 = vector.load %arg25[%c160_236, %c0_237] : memref<248x50xf32, #tpu.memory_space<vmem>>, vector<80x50xf32>
    %273 = arith.maximumf %271, %272 : vector<80x50xf32>
    %c161_238 = arith.constant 161 : index
    %c0_239 = arith.constant 0 : index
    %274 = vector.load %arg25[%c161_238, %c0_239] : memref<248x50xf32, #tpu.memory_space<vmem>>, vector<80x50xf32>
    %275 = arith.maximumf %273, %274 : vector<80x50xf32>
    %276 = arith.truncf %275 : vector<80x50xf32> to vector<80x50xbf16>
    %cst_240 = arith.constant dense<0.000000e+00> : vector<24x50xf32>
    %277 = tpu.matmul %257, %276, %cst_240 {dimension_numbers = #tpu.dot_dimension_numbers<[1], [0], [0], [1], [0, 0, 1, 1], [], []>} : vector<24x80xbf16>, vector<80x50xbf16>, vector<24x50xf32> -> vector<24x50xf32>
    %278 = arith.truncf %277 : vector<24x50xf32> to vector<24x50xbf16>
    %c24 = arith.constant 24 : index
    %c0_241 = arith.constant 0 : index
    %279 = vector.load %arg26[%c24, %c0_241] : memref<72x50xbf16, #tpu.memory_space<vmem>>, vector<24x50xbf16>
    tpu.vector_store %arg26[%c24, %c0_241], %278 {strides = array<i32>} : memref<72x50xbf16, #tpu.memory_space<vmem>>, vector<24x50xbf16>,
    %cst_242 = arith.constant 0.000000e+00 : f32
    %280 = vector.broadcast %cst_242 : f32 to vector<48x100xf32>
    %c0_243 = arith.constant 0 : index
    %c0_244 = arith.constant 0 : index
    %281 = vector.load %arg26[%c0_243, %c0_244] : memref<72x50xbf16, #tpu.memory_space<vmem>>, vector<48x50xbf16>
    %c0_245 = arith.constant 0 : index
    %c0_246 = arith.constant 0 : index
    %c0_247 = arith.constant 0 : index
    %282 = vector.load %arg8[%c0_245, %c0_246, %c0_247] : memref<9x50x100xbf16, #tpu.memory_space<vmem>>, vector<1x50x100xbf16>
    %283 = vector.shape_cast %282 : vector<1x50x100xbf16> to vector<50x100xbf16>
    %cst_248 = arith.constant dense<0.000000e+00> : vector<48x100xf32>
    %284 = tpu.matmul %281, %283, %cst_248 {dimension_numbers = #tpu.dot_dimension_numbers<[1], [0], [0], [1], [0, 0, 1, 1], [], []>} : vector<48x50xbf16>, vector<50x100xbf16>, vector<48x100xf32> -> vector<48x100xf32>
    %285 = arith.addf %280, %284 : vector<48x100xf32>
    %c1_249 = arith.constant 1 : index
    %c0_250 = arith.constant 0 : index
    %286 = vector.load %arg26[%c1_249, %c0_250] : memref<72x50xbf16, #tpu.memory_space<vmem>>, vector<48x50xbf16>
    %c1_251 = arith.constant 1 : index
    %c0_252 = arith.constant 0 : index
    %c0_253 = arith.constant 0 : index
    %287 = vector.load %arg8[%c1_251, %c0_252, %c0_253] : memref<9x50x100xbf16, #tpu.memory_space<vmem>>, vector<1x50x100xbf16>
    %288 = vector.shape_cast %287 : vector<1x50x100xbf16> to vector<50x100xbf16>
    %cst_254 = arith.constant dense<0.000000e+00> : vector<48x100xf32>
    %289 = tpu.matmul %286, %288, %cst_254 {dimension_numbers = #tpu.dot_dimension_numbers<[1], [0], [0], [1], [0, 0, 1, 1], [], []>} : vector<48x50xbf16>, vector<50x100xbf16>, vector<48x100xf32> -> vector<48x100xf32>
    %290 = arith.addf %285, %289 : vector<48x100xf32>
    %c2_255 = arith.constant 2 : index
    %c0_256 = arith.constant 0 : index
    %291 = vector.load %arg26[%c2_255, %c0_256] : memref<72x50xbf16, #tpu.memory_space<vmem>>, vector<48x50xbf16>
    %c2_257 = arith.constant 2 : index
    %c0_258 = arith.constant 0 : index
    %c0_259 = arith.constant 0 : index
    %292 = vector.load %arg8[%c2_257, %c0_258, %c0_259] : memref<9x50x100xbf16, #tpu.memory_space<vmem>>, vector<1x50x100xbf16>
    %293 = vector.shape_cast %292 : vector<1x50x100xbf16> to vector<50x100xbf16>
    %cst_260 = arith.constant dense<0.000000e+00> : vector<48x100xf32>
    %294 = tpu.matmul %291, %293, %cst_260 {dimension_numbers = #tpu.dot_dimension_numbers<[1], [0], [0], [1], [0, 0, 1, 1], [], []>} : vector<48x50xbf16>, vector<50x100xbf16>, vector<48x100xf32> -> vector<48x100xf32>
    %295 = arith.addf %290, %294 : vector<48x100xf32>
    %c8_261 = arith.constant 8 : index
    %c0_262 = arith.constant 0 : index
    %296 = vector.load %arg26[%c8_261, %c0_262] : memref<72x50xbf16, #tpu.memory_space<vmem>>, vector<48x50xbf16>
    %c3_263 = arith.constant 3 : index
    %c0_264 = arith.constant 0 : index
    %c0_265 = arith.constant 0 : index
    %297 = vector.load %arg8[%c3_263, %c0_264, %c0_265] : memref<9x50x100xbf16, #tpu.memory_space<vmem>>, vector<1x50x100xbf16>
    %298 = vector.shape_cast %297 : vector<1x50x100xbf16> to vector<50x100xbf16>
    %cst_266 = arith.constant dense<0.000000e+00> : vector<48x100xf32>
    %299 = tpu.matmul %296, %298, %cst_266 {dimension_numbers = #tpu.dot_dimension_numbers<[1], [0], [0], [1], [0, 0, 1, 1], [], []>} : vector<48x50xbf16>, vector<50x100xbf16>, vector<48x100xf32> -> vector<48x100xf32>
    %300 = arith.addf %295, %299 : vector<48x100xf32>
    %c9_267 = arith.constant 9 : index
    %c0_268 = arith.constant 0 : index
    %301 = vector.load %arg26[%c9_267, %c0_268] : memref<72x50xbf16, #tpu.memory_space<vmem>>, vector<48x50xbf16>
    %c4_269 = arith.constant 4 : index
    %c0_270 = arith.constant 0 : index
    %c0_271 = arith.constant 0 : index
    %302 = vector.load %arg8[%c4_269, %c0_270, %c0_271] : memref<9x50x100xbf16, #tpu.memory_space<vmem>>, vector<1x50x100xbf16>
    %303 = vector.shape_cast %302 : vector<1x50x100xbf16> to vector<50x100xbf16>
    %cst_272 = arith.constant dense<0.000000e+00> : vector<48x100xf32>
    %304 = tpu.matmul %301, %303, %cst_272 {dimension_numbers = #tpu.dot_dimension_numbers<[1], [0], [0], [1], [0, 0, 1, 1], [], []>} : vector<48x50xbf16>, vector<50x100xbf16>, vector<48x100xf32> -> vector<48x100xf32>
    %305 = arith.addf %300, %304 : vector<48x100xf32>
    %c10_273 = arith.constant 10 : index
    %c0_274 = arith.constant 0 : index
    %306 = vector.load %arg26[%c10_273, %c0_274] : memref<72x50xbf16, #tpu.memory_space<vmem>>, vector<48x50xbf16>
    %c5_275 = arith.constant 5 : index
    %c0_276 = arith.constant 0 : index
    %c0_277 = arith.constant 0 : index
    %307 = vector.load %arg8[%c5_275, %c0_276, %c0_277] : memref<9x50x100xbf16, #tpu.memory_space<vmem>>, vector<1x50x100xbf16>
    %308 = vector.shape_cast %307 : vector<1x50x100xbf16> to vector<50x100xbf16>
    %cst_278 = arith.constant dense<0.000000e+00> : vector<48x100xf32>
    %309 = tpu.matmul %306, %308, %cst_278 {dimension_numbers = #tpu.dot_dimension_numbers<[1], [0], [0], [1], [0, 0, 1, 1], [], []>} : vector<48x50xbf16>, vector<50x100xbf16>, vector<48x100xf32> -> vector<48x100xf32>
    %310 = arith.addf %305, %309 : vector<48x100xf32>
    %c16_279 = arith.constant 16 : index
    %c0_280 = arith.constant 0 : index
    %311 = vector.load %arg26[%c16_279, %c0_280] : memref<72x50xbf16, #tpu.memory_space<vmem>>, vector<48x50xbf16>
    %c6_281 = arith.constant 6 : index
    %c0_282 = arith.constant 0 : index
    %c0_283 = arith.constant 0 : index
    %312 = vector.load %arg8[%c6_281, %c0_282, %c0_283] : memref<9x50x100xbf16, #tpu.memory_space<vmem>>, vector<1x50x100xbf16>
    %313 = vector.shape_cast %312 : vector<1x50x100xbf16> to vector<50x100xbf16>
    %cst_284 = arith.constant dense<0.000000e+00> : vector<48x100xf32>
    %314 = tpu.matmul %311, %313, %cst_284 {dimension_numbers = #tpu.dot_dimension_numbers<[1], [0], [0], [1], [0, 0, 1, 1], [], []>} : vector<48x50xbf16>, vector<50x100xbf16>, vector<48x100xf32> -> vector<48x100xf32>
    %315 = arith.addf %310, %314 : vector<48x100xf32>
    %c17_285 = arith.constant 17 : index
    %c0_286 = arith.constant 0 : index
    %316 = vector.load %arg26[%c17_285, %c0_286] : memref<72x50xbf16, #tpu.memory_space<vmem>>, vector<48x50xbf16>
    %c7_287 = arith.constant 7 : index
    %c0_288 = arith.constant 0 : index
    %c0_289 = arith.constant 0 : index
    %317 = vector.load %arg8[%c7_287, %c0_288, %c0_289] : memref<9x50x100xbf16, #tpu.memory_space<vmem>>, vector<1x50x100xbf16>
    %318 = vector.shape_cast %317 : vector<1x50x100xbf16> to vector<50x100xbf16>
    %cst_290 = arith.constant dense<0.000000e+00> : vector<48x100xf32>
    %319 = tpu.matmul %316, %318, %cst_290 {dimension_numbers = #tpu.dot_dimension_numbers<[1], [0], [0], [1], [0, 0, 1, 1], [], []>} : vector<48x50xbf16>, vector<50x100xbf16>, vector<48x100xf32> -> vector<48x100xf32>
    %320 = arith.addf %315, %319 : vector<48x100xf32>
    %c18_291 = arith.constant 18 : index
    %c0_292 = arith.constant 0 : index
    %321 = vector.load %arg26[%c18_291, %c0_292] : memref<72x50xbf16, #tpu.memory_space<vmem>>, vector<48x50xbf16>
    %c8_293 = arith.constant 8 : index
    %c0_294 = arith.constant 0 : index
    %c0_295 = arith.constant 0 : index
    %322 = vector.load %arg8[%c8_293, %c0_294, %c0_295] : memref<9x50x100xbf16, #tpu.memory_space<vmem>>, vector<1x50x100xbf16>
    %323 = vector.shape_cast %322 : vector<1x50x100xbf16> to vector<50x100xbf16>
    %cst_296 = arith.constant dense<0.000000e+00> : vector<48x100xf32>
    %324 = tpu.matmul %321, %323, %cst_296 {dimension_numbers = #tpu.dot_dimension_numbers<[1], [0], [0], [1], [0, 0, 1, 1], [], []>} : vector<48x50xbf16>, vector<50x100xbf16>, vector<48x100xf32> -> vector<48x100xf32>
    %325 = arith.addf %320, %324 : vector<48x100xf32>
    %c0_297 = arith.constant 0 : index
    %c0_298 = arith.constant 0 : index
    %326 = vector.load %arg9[%c0_297, %c0_298] : memref<1x100xf32, #tpu.memory_space<vmem>>, vector<1x100xf32>
    %327 = vector.broadcast %326 : vector<1x100xf32> to vector<48x100xf32>
    %328 = arith.mulf %325, %327 : vector<48x100xf32>
    %c0_299 = arith.constant 0 : index
    %c0_300 = arith.constant 0 : index
    %329 = vector.load %arg10[%c0_299, %c0_300] : memref<1x100xf32, #tpu.memory_space<vmem>>, vector<1x100xf32>
    %330 = vector.broadcast %329 : vector<1x100xf32> to vector<48x100xf32>
    %331 = arith.addf %328, %330 : vector<48x100xf32>
    %cst_301 = arith.constant 0.000000e+00 : f32
    %332 = vector.broadcast %cst_301 : f32 to vector<48x100xf32>
    %333 = arith.maximumf %331, %332 : vector<48x100xf32>
    %334 = arith.truncf %333 : vector<48x100xf32> to vector<48x100xbf16>
    %c0_302 = arith.constant 0 : index
    %c0_303 = arith.constant 0 : index
    %335 = vector.load %arg11[%c0_302, %c0_303] : memref<100x96xbf16, #tpu.memory_space<vmem>>, vector<100x96xbf16>
    %cst_304 = arith.constant dense<0.000000e+00> : vector<48x96xf32>
    %336 = tpu.matmul %334, %335, %cst_304 {dimension_numbers = #tpu.dot_dimension_numbers<[1], [0], [0], [1], [0, 0, 1, 1], [], []>} : vector<48x100xbf16>, vector<100x96xbf16>, vector<48x96xf32> -> vector<48x96xf32>
    %c0_305 = arith.constant 0 : index
    %c0_306 = arith.constant 0 : index
    %337 = vector.load %arg13[%c0_305, %c0_306] : memref<1x96xf32, #tpu.memory_space<vmem>>, vector<1x96xf32>
    %338 = vector.broadcast %337 : vector<1x96xf32> to vector<48x96xf32>
    %339 = arith.addf %336, %338 : vector<48x96xf32>
    %c0_307 = arith.constant 0 : index
    %c0_308 = arith.constant 0 : index
    %340 = vector.load %arg12[%c0_307, %c0_308] : memref<32x96xbf16, #tpu.memory_space<vmem>>, vector<32x96xbf16>
    %c0_309 = arith.constant 0 : index
    %c0_310 = arith.constant 0 : index
    %341 = vector.load %arg15[%c0_309, %c0_310] : memref<32x96xbf16, #tpu.memory_space<vmem>>, vector<32x96xbf16>
    %c0_311 = arith.constant 0 : index
    %c0_312 = arith.constant 0 : index
    %342 = vector.load %arg16[%c0_311, %c0_312] : memref<32x96xbf16, #tpu.memory_space<vmem>>, vector<32x96xbf16>
    %c0_313 = arith.constant 0 : index
    %c0_314 = arith.constant 0 : index
    %343 = vector.load %arg17[%c0_313, %c0_314] : memref<1x96xf32, #tpu.memory_space<vmem>>, vector<1x96xf32>
    %c0_315 = arith.constant 0 : index
    %c0_316 = arith.constant 0 : index
    %344 = vector.load %arg14[%c0_315, %c0_316] : memref<1x32xf32, #tpu.memory_space<vmem>>, vector<1x32xf32>
    %c0_317 = arith.constant 0 : index
    %c0_318 = arith.constant 0 : index
    %345 = vector.load %arg18[%c0_317, %c0_318] : memref<1x32xf32, #tpu.memory_space<vmem>>, vector<1x32xf32>
    %cst_319 = arith.constant 0.000000e+00 : f32
    %346 = vector.broadcast %cst_319 : f32 to vector<2x96xf32>
    %cst_320 = arith.constant 0.000000e+00 : f32
    %347 = vector.broadcast %cst_320 : f32 to vector<2x32xf32>
    %cst_321 = arith.constant 0.000000e+00 : f32
    %348 = vector.broadcast %cst_321 : f32 to vector<2x32xf32>
    %cst_322 = arith.constant 0xFF800000 : f32
    %349 = vector.broadcast %cst_322 : f32 to vector<2x32xf32>
    %350 = vector.extract_strided_slice %339 {offsets = [0, 0], sizes = [1, 96], strides = [1, 1]} : vector<48x96xf32> to vector<1x96xf32>
    %351 = vector.extract_strided_slice %339 {offsets = [24, 0], sizes = [1, 96], strides = [1, 1]} : vector<48x96xf32> to vector<1x96xf32>
    %352 = tpu.concatenate %350, %351 in 0 : vector<1x96xf32>, vector<1x96xf32> -> vector<2x96xf32>
    %353 = vector.extract_strided_slice %352 {offsets = [0, 0], sizes = [2, 32], strides = [1, 1]} : vector<2x96xf32> to vector<2x32xf32>
    %354 = vector.extract_strided_slice %346 {offsets = [0, 0], sizes = [2, 32], strides = [1, 1]} : vector<2x96xf32> to vector<2x32xf32>
    %355 = arith.addf %353, %354 : vector<2x32xf32>
    %356 = arith.negf %355 : vector<2x32xf32>
    %357 = math.exp %356 : vector<2x32xf32>
    %cst_323 = arith.constant 1.000000e+00 : f32
    %358 = vector.broadcast %cst_323 : f32 to vector<2x32xf32>
    %359 = arith.addf %358, %357 : vector<2x32xf32>
    %360 = arith.divf %358, %359 : vector<2x32xf32>
    %361 = vector.extract_strided_slice %352 {offsets = [0, 32], sizes = [2, 32], strides = [1, 1]} : vector<2x96xf32> to vector<2x32xf32>
    %362 = vector.extract_strided_slice %346 {offsets = [0, 32], sizes = [2, 32], strides = [1, 1]} : vector<2x96xf32> to vector<2x32xf32>
    %363 = arith.addf %361, %362 : vector<2x32xf32>
    %364 = arith.negf %363 : vector<2x32xf32>
    %365 = math.exp %364 : vector<2x32xf32>
    %cst_324 = arith.constant 1.000000e+00 : f32
    %366 = vector.broadcast %cst_324 : f32 to vector<2x32xf32>
    %367 = arith.addf %366, %365 : vector<2x32xf32>
    %368 = arith.divf %366, %367 : vector<2x32xf32>
    %369 = vector.extract_strided_slice %352 {offsets = [0, 64], sizes = [2, 32], strides = [1, 1]} : vector<2x96xf32> to vector<2x32xf32>
    %370 = vector.extract_strided_slice %346 {offsets = [0, 64], sizes = [2, 32], strides = [1, 1]} : vector<2x96xf32> to vector<2x32xf32>
    %371 = vector.broadcast %344 : vector<1x32xf32> to vector<2x32xf32>
    %372 = arith.addf %370, %371 : vector<2x32xf32>
    %373 = arith.mulf %360, %372 : vector<2x32xf32>
    %374 = arith.addf %369, %373 : vector<2x32xf32>
    %375 = math.tanh %374 : vector<2x32xf32>
    %cst_325 = arith.constant 1.000000e+00 : f32
    %376 = vector.broadcast %cst_325 : f32 to vector<2x32xf32>
    %377 = arith.subf %376, %368 : vector<2x32xf32>
    %378 = arith.mulf %377, %375 : vector<2x32xf32>
    %379 = arith.mulf %368, %347 : vector<2x32xf32>
    %380 = arith.addf %378, %379 : vector<2x32xf32>
    %381 = arith.truncf %380 : vector<2x32xf32> to vector<2x32xbf16>
    %cst_326 = arith.constant dense<0.000000e+00> : vector<2x96xf32>
    %382 = tpu.matmul %381, %341, %cst_326 {dimension_numbers = #tpu.dot_dimension_numbers<[1], [0], [0], [1], [0, 0, 1, 1], [], []>} : vector<2x32xbf16>, vector<32x96xbf16>, vector<2x96xf32> -> vector<2x96xf32>
    %383 = vector.broadcast %343 : vector<1x96xf32> to vector<2x96xf32>
    %384 = arith.addf %382, %383 : vector<2x96xf32>
    %385 = vector.extract_strided_slice %384 {offsets = [0, 0], sizes = [2, 32], strides = [1, 1]} : vector<2x96xf32> to vector<2x32xf32>
    %386 = vector.extract_strided_slice %346 {offsets = [0, 0], sizes = [2, 32], strides = [1, 1]} : vector<2x96xf32> to vector<2x32xf32>
    %387 = arith.addf %385, %386 : vector<2x32xf32>
    %388 = arith.negf %387 : vector<2x32xf32>
    %389 = math.exp %388 : vector<2x32xf32>
    %cst_327 = arith.constant 1.000000e+00 : f32
    %390 = vector.broadcast %cst_327 : f32 to vector<2x32xf32>
    %391 = arith.addf %390, %389 : vector<2x32xf32>
    %392 = arith.divf %390, %391 : vector<2x32xf32>
    %393 = vector.extract_strided_slice %384 {offsets = [0, 32], sizes = [2, 32], strides = [1, 1]} : vector<2x96xf32> to vector<2x32xf32>
    %394 = vector.extract_strided_slice %346 {offsets = [0, 32], sizes = [2, 32], strides = [1, 1]} : vector<2x96xf32> to vector<2x32xf32>
    %395 = arith.addf %393, %394 : vector<2x32xf32>
    %396 = arith.negf %395 : vector<2x32xf32>
    %397 = math.exp %396 : vector<2x32xf32>
    %cst_328 = arith.constant 1.000000e+00 : f32
    %398 = vector.broadcast %cst_328 : f32 to vector<2x32xf32>
    %399 = arith.addf %398, %397 : vector<2x32xf32>
    %400 = arith.divf %398, %399 : vector<2x32xf32>
    %401 = vector.extract_strided_slice %384 {offsets = [0, 64], sizes = [2, 32], strides = [1, 1]} : vector<2x96xf32> to vector<2x32xf32>
    %402 = vector.extract_strided_slice %346 {offsets = [0, 64], sizes = [2, 32], strides = [1, 1]} : vector<2x96xf32> to vector<2x32xf32>
    %403 = vector.broadcast %345 : vector<1x32xf32> to vector<2x32xf32>
    %404 = arith.addf %402, %403 : vector<2x32xf32>
    %405 = arith.mulf %392, %404 : vector<2x32xf32>
    %406 = arith.addf %401, %405 : vector<2x32xf32>
    %407 = math.tanh %406 : vector<2x32xf32>
    %cst_329 = arith.constant 1.000000e+00 : f32
    %408 = vector.broadcast %cst_329 : f32 to vector<2x32xf32>
    %409 = arith.subf %408, %400 : vector<2x32xf32>
    %410 = arith.mulf %409, %407 : vector<2x32xf32>
    %411 = arith.mulf %400, %348 : vector<2x32xf32>
    %412 = arith.addf %410, %411 : vector<2x32xf32>
    %413 = arith.maximumf %349, %412 : vector<2x32xf32>
    %414 = vector.extract_strided_slice %339 {offsets = [1, 0], sizes = [1, 96], strides = [1, 1]} : vector<48x96xf32> to vector<1x96xf32>
    %415 = vector.extract_strided_slice %339 {offsets = [25, 0], sizes = [1, 96], strides = [1, 1]} : vector<48x96xf32> to vector<1x96xf32>
    %416 = tpu.concatenate %414, %415 in 0 : vector<1x96xf32>, vector<1x96xf32> -> vector<2x96xf32>
    %417 = arith.truncf %380 : vector<2x32xf32> to vector<2x32xbf16>
    %cst_330 = arith.constant dense<0.000000e+00> : vector<2x96xf32>
    %418 = tpu.matmul %417, %340, %cst_330 {dimension_numbers = #tpu.dot_dimension_numbers<[1], [0], [0], [1], [0, 0, 1, 1], [], []>} : vector<2x32xbf16>, vector<32x96xbf16>, vector<2x96xf32> -> vector<2x96xf32>
    %419 = vector.extract_strided_slice %416 {offsets = [0, 0], sizes = [2, 32], strides = [1, 1]} : vector<2x96xf32> to vector<2x32xf32>
    %420 = vector.extract_strided_slice %418 {offsets = [0, 0], sizes = [2, 32], strides = [1, 1]} : vector<2x96xf32> to vector<2x32xf32>
    %421 = arith.addf %419, %420 : vector<2x32xf32>
    %422 = arith.negf %421 : vector<2x32xf32>
    %423 = math.exp %422 : vector<2x32xf32>
    %cst_331 = arith.constant 1.000000e+00 : f32
    %424 = vector.broadcast %cst_331 : f32 to vector<2x32xf32>
    %425 = arith.addf %424, %423 : vector<2x32xf32>
    %426 = arith.divf %424, %425 : vector<2x32xf32>
    %427 = vector.extract_strided_slice %416 {offsets = [0, 32], sizes = [2, 32], strides = [1, 1]} : vector<2x96xf32> to vector<2x32xf32>
    %428 = vector.extract_strided_slice %418 {offsets = [0, 32], sizes = [2, 32], strides = [1, 1]} : vector<2x96xf32> to vector<2x32xf32>
    %429 = arith.addf %427, %428 : vector<2x32xf32>
    %430 = arith.negf %429 : vector<2x32xf32>
    %431 = math.exp %430 : vector<2x32xf32>
    %cst_332 = arith.constant 1.000000e+00 : f32
    %432 = vector.broadcast %cst_332 : f32 to vector<2x32xf32>
    %433 = arith.addf %432, %431 : vector<2x32xf32>
    %434 = arith.divf %432, %433 : vector<2x32xf32>
    %435 = vector.extract_strided_slice %416 {offsets = [0, 64], sizes = [2, 32], strides = [1, 1]} : vector<2x96xf32> to vector<2x32xf32>
    %436 = vector.extract_strided_slice %418 {offsets = [0, 64], sizes = [2, 32], strides = [1, 1]} : vector<2x96xf32> to vector<2x32xf32>
    %437 = vector.broadcast %344 : vector<1x32xf32> to vector<2x32xf32>
    %438 = arith.addf %436, %437 : vector<2x32xf32>
    %439 = arith.mulf %426, %438 : vector<2x32xf32>
    %440 = arith.addf %435, %439 : vector<2x32xf32>
    %441 = math.tanh %440 : vector<2x32xf32>
    %cst_333 = arith.constant 1.000000e+00 : f32
    %442 = vector.broadcast %cst_333 : f32 to vector<2x32xf32>
    %443 = arith.subf %442, %434 : vector<2x32xf32>
    %444 = arith.mulf %443, %441 : vector<2x32xf32>
    %445 = arith.mulf %434, %380 : vector<2x32xf32>
    %446 = arith.addf %444, %445 : vector<2x32xf32>
    %447 = arith.truncf %446 : vector<2x32xf32> to vector<2x32xbf16>
    %cst_334 = arith.constant dense<0.000000e+00> : vector<2x96xf32>
    %448 = tpu.matmul %447, %341, %cst_334 {dimension_numbers = #tpu.dot_dimension_numbers<[1], [0], [0], [1], [0, 0, 1, 1], [], []>} : vector<2x32xbf16>, vector<32x96xbf16>, vector<2x96xf32> -> vector<2x96xf32>
    %449 = vector.broadcast %343 : vector<1x96xf32> to vector<2x96xf32>
    %450 = arith.addf %448, %449 : vector<2x96xf32>
    %451 = arith.truncf %412 : vector<2x32xf32> to vector<2x32xbf16>
    %cst_335 = arith.constant dense<0.000000e+00> : vector<2x96xf32>
    %452 = tpu.matmul %451, %342, %cst_335 {dimension_numbers = #tpu.dot_dimension_numbers<[1], [0], [0], [1], [0, 0, 1, 1], [], []>} : vector<2x32xbf16>, vector<32x96xbf16>, vector<2x96xf32> -> vector<2x96xf32>
    %453 = vector.extract_strided_slice %450 {offsets = [0, 0], sizes = [2, 32], strides = [1, 1]} : vector<2x96xf32> to vector<2x32xf32>
    %454 = vector.extract_strided_slice %452 {offsets = [0, 0], sizes = [2, 32], strides = [1, 1]} : vector<2x96xf32> to vector<2x32xf32>
    %455 = arith.addf %453, %454 : vector<2x32xf32>
    %456 = arith.negf %455 : vector<2x32xf32>
    %457 = math.exp %456 : vector<2x32xf32>
    %cst_336 = arith.constant 1.000000e+00 : f32
    %458 = vector.broadcast %cst_336 : f32 to vector<2x32xf32>
    %459 = arith.addf %458, %457 : vector<2x32xf32>
    %460 = arith.divf %458, %459 : vector<2x32xf32>
    %461 = vector.extract_strided_slice %450 {offsets = [0, 32], sizes = [2, 32], strides = [1, 1]} : vector<2x96xf32> to vector<2x32xf32>
    %462 = vector.extract_strided_slice %452 {offsets = [0, 32], sizes = [2, 32], strides = [1, 1]} : vector<2x96xf32> to vector<2x32xf32>
    %463 = arith.addf %461, %462 : vector<2x32xf32>
    %464 = arith.negf %463 : vector<2x32xf32>
    %465 = math.exp %464 : vector<2x32xf32>
    %cst_337 = arith.constant 1.000000e+00 : f32
    %466 = vector.broadcast %cst_337 : f32 to vector<2x32xf32>
    %467 = arith.addf %466, %465 : vector<2x32xf32>
    %468 = arith.divf %466, %467 : vector<2x32xf32>
    %469 = vector.extract_strided_slice %450 {offsets = [0, 64], sizes = [2, 32], strides = [1, 1]} : vector<2x96xf32> to vector<2x32xf32>
    %470 = vector.extract_strided_slice %452 {offsets = [0, 64], sizes = [2, 32], strides = [1, 1]} : vector<2x96xf32> to vector<2x32xf32>
    %471 = vector.broadcast %345 : vector<1x32xf32> to vector<2x32xf32>
    %472 = arith.addf %470, %471 : vector<2x32xf32>
    %473 = arith.mulf %460, %472 : vector<2x32xf32>
    %474 = arith.addf %469, %473 : vector<2x32xf32>
    %475 = math.tanh %474 : vector<2x32xf32>
    %cst_338 = arith.constant 1.000000e+00 : f32
    %476 = vector.broadcast %cst_338 : f32 to vector<2x32xf32>
    %477 = arith.subf %476, %468 : vector<2x32xf32>
    %478 = arith.mulf %477, %475 : vector<2x32xf32>
    %479 = arith.mulf %468, %412 : vector<2x32xf32>
    %480 = arith.addf %478, %479 : vector<2x32xf32>
    %481 = arith.maximumf %413, %480 : vector<2x32xf32>
    %482 = vector.extract_strided_slice %339 {offsets = [2, 0], sizes = [1, 96], strides = [1, 1]} : vector<48x96xf32> to vector<1x96xf32>
    %483 = vector.extract_strided_slice %339 {offsets = [26, 0], sizes = [1, 96], strides = [1, 1]} : vector<48x96xf32> to vector<1x96xf32>
    %484 = tpu.concatenate %482, %483 in 0 : vector<1x96xf32>, vector<1x96xf32> -> vector<2x96xf32>
    %485 = arith.truncf %446 : vector<2x32xf32> to vector<2x32xbf16>
    %cst_339 = arith.constant dense<0.000000e+00> : vector<2x96xf32>
    %486 = tpu.matmul %485, %340, %cst_339 {dimension_numbers = #tpu.dot_dimension_numbers<[1], [0], [0], [1], [0, 0, 1, 1], [], []>} : vector<2x32xbf16>, vector<32x96xbf16>, vector<2x96xf32> -> vector<2x96xf32>
    %487 = vector.extract_strided_slice %484 {offsets = [0, 0], sizes = [2, 32], strides = [1, 1]} : vector<2x96xf32> to vector<2x32xf32>
    %488 = vector.extract_strided_slice %486 {offsets = [0, 0], sizes = [2, 32], strides = [1, 1]} : vector<2x96xf32> to vector<2x32xf32>
    %489 = arith.addf %487, %488 : vector<2x32xf32>
    %490 = arith.negf %489 : vector<2x32xf32>
    %491 = math.exp %490 : vector<2x32xf32>
    %cst_340 = arith.constant 1.000000e+00 : f32
    %492 = vector.broadcast %cst_340 : f32 to vector<2x32xf32>
    %493 = arith.addf %492, %491 : vector<2x32xf32>
    %494 = arith.divf %492, %493 : vector<2x32xf32>
    %495 = vector.extract_strided_slice %484 {offsets = [0, 32], sizes = [2, 32], strides = [1, 1]} : vector<2x96xf32> to vector<2x32xf32>
    %496 = vector.extract_strided_slice %486 {offsets = [0, 32], sizes = [2, 32], strides = [1, 1]} : vector<2x96xf32> to vector<2x32xf32>
    %497 = arith.addf %495, %496 : vector<2x32xf32>
    %498 = arith.negf %497 : vector<2x32xf32>
    %499 = math.exp %498 : vector<2x32xf32>
    %cst_341 = arith.constant 1.000000e+00 : f32
    %500 = vector.broadcast %cst_341 : f32 to vector<2x32xf32>
    %501 = arith.addf %500, %499 : vector<2x32xf32>
    %502 = arith.divf %500, %501 : vector<2x32xf32>
    %503 = vector.extract_strided_slice %484 {offsets = [0, 64], sizes = [2, 32], strides = [1, 1]} : vector<2x96xf32> to vector<2x32xf32>
    %504 = vector.extract_strided_slice %486 {offsets = [0, 64], sizes = [2, 32], strides = [1, 1]} : vector<2x96xf32> to vector<2x32xf32>
    %505 = vector.broadcast %344 : vector<1x32xf32> to vector<2x32xf32>
    %506 = arith.addf %504, %505 : vector<2x32xf32>
    %507 = arith.mulf %494, %506 : vector<2x32xf32>
    %508 = arith.addf %503, %507 : vector<2x32xf32>
    %509 = math.tanh %508 : vector<2x32xf32>
    %cst_342 = arith.constant 1.000000e+00 : f32
    %510 = vector.broadcast %cst_342 : f32 to vector<2x32xf32>
    %511 = arith.subf %510, %502 : vector<2x32xf32>
    %512 = arith.mulf %511, %509 : vector<2x32xf32>
    %513 = arith.mulf %502, %446 : vector<2x32xf32>
    %514 = arith.addf %512, %513 : vector<2x32xf32>
    %515 = arith.truncf %514 : vector<2x32xf32> to vector<2x32xbf16>
    %cst_343 = arith.constant dense<0.000000e+00> : vector<2x96xf32>
    %516 = tpu.matmul %515, %341, %cst_343 {dimension_numbers = #tpu.dot_dimension_numbers<[1], [0], [0], [1], [0, 0, 1, 1], [], []>} : vector<2x32xbf16>, vector<32x96xbf16>, vector<2x96xf32> -> vector<2x96xf32>
    %517 = vector.broadcast %343 : vector<1x96xf32> to vector<2x96xf32>
    %518 = arith.addf %516, %517 : vector<2x96xf32>
    %519 = arith.truncf %480 : vector<2x32xf32> to vector<2x32xbf16>
    %cst_344 = arith.constant dense<0.000000e+00> : vector<2x96xf32>
    %520 = tpu.matmul %519, %342, %cst_344 {dimension_numbers = #tpu.dot_dimension_numbers<[1], [0], [0], [1], [0, 0, 1, 1], [], []>} : vector<2x32xbf16>, vector<32x96xbf16>, vector<2x96xf32> -> vector<2x96xf32>
    %521 = vector.extract_strided_slice %518 {offsets = [0, 0], sizes = [2, 32], strides = [1, 1]} : vector<2x96xf32> to vector<2x32xf32>
    %522 = vector.extract_strided_slice %520 {offsets = [0, 0], sizes = [2, 32], strides = [1, 1]} : vector<2x96xf32> to vector<2x32xf32>
    %523 = arith.addf %521, %522 : vector<2x32xf32>
    %524 = arith.negf %523 : vector<2x32xf32>
    %525 = math.exp %524 : vector<2x32xf32>
    %cst_345 = arith.constant 1.000000e+00 : f32
    %526 = vector.broadcast %cst_345 : f32 to vector<2x32xf32>
    %527 = arith.addf %526, %525 : vector<2x32xf32>
    %528 = arith.divf %526, %527 : vector<2x32xf32>
    %529 = vector.extract_strided_slice %518 {offsets = [0, 32], sizes = [2, 32], strides = [1, 1]} : vector<2x96xf32> to vector<2x32xf32>
    %530 = vector.extract_strided_slice %520 {offsets = [0, 32], sizes = [2, 32], strides = [1, 1]} : vector<2x96xf32> to vector<2x32xf32>
    %531 = arith.addf %529, %530 : vector<2x32xf32>
    %532 = arith.negf %531 : vector<2x32xf32>
    %533 = math.exp %532 : vector<2x32xf32>
    %cst_346 = arith.constant 1.000000e+00 : f32
    %534 = vector.broadcast %cst_346 : f32 to vector<2x32xf32>
    %535 = arith.addf %534, %533 : vector<2x32xf32>
    %536 = arith.divf %534, %535 : vector<2x32xf32>
    %537 = vector.extract_strided_slice %518 {offsets = [0, 64], sizes = [2, 32], strides = [1, 1]} : vector<2x96xf32> to vector<2x32xf32>
    %538 = vector.extract_strided_slice %520 {offsets = [0, 64], sizes = [2, 32], strides = [1, 1]} : vector<2x96xf32> to vector<2x32xf32>
    %539 = vector.broadcast %345 : vector<1x32xf32> to vector<2x32xf32>
    %540 = arith.addf %538, %539 : vector<2x32xf32>
    %541 = arith.mulf %528, %540 : vector<2x32xf32>
    %542 = arith.addf %537, %541 : vector<2x32xf32>
    %543 = math.tanh %542 : vector<2x32xf32>
    %cst_347 = arith.constant 1.000000e+00 : f32
    %544 = vector.broadcast %cst_347 : f32 to vector<2x32xf32>
    %545 = arith.subf %544, %536 : vector<2x32xf32>
    %546 = arith.mulf %545, %543 : vector<2x32xf32>
    %547 = arith.mulf %536, %480 : vector<2x32xf32>
    %548 = arith.addf %546, %547 : vector<2x32xf32>
    %549 = arith.maximumf %481, %548 : vector<2x32xf32>
    %550 = vector.extract_strided_slice %339 {offsets = [3, 0], sizes = [1, 96], strides = [1, 1]} : vector<48x96xf32> to vector<1x96xf32>
    %551 = vector.extract_strided_slice %339 {offsets = [27, 0], sizes = [1, 96], strides = [1, 1]} : vector<48x96xf32> to vector<1x96xf32>
    %552 = tpu.concatenate %550, %551 in 0 : vector<1x96xf32>, vector<1x96xf32> -> vector<2x96xf32>
    %553 = arith.truncf %514 : vector<2x32xf32> to vector<2x32xbf16>
    %cst_348 = arith.constant dense<0.000000e+00> : vector<2x96xf32>
    %554 = tpu.matmul %553, %340, %cst_348 {dimension_numbers = #tpu.dot_dimension_numbers<[1], [0], [0], [1], [0, 0, 1, 1], [], []>} : vector<2x32xbf16>, vector<32x96xbf16>, vector<2x96xf32> -> vector<2x96xf32>
    %555 = vector.extract_strided_slice %552 {offsets = [0, 0], sizes = [2, 32], strides = [1, 1]} : vector<2x96xf32> to vector<2x32xf32>
    %556 = vector.extract_strided_slice %554 {offsets = [0, 0], sizes = [2, 32], strides = [1, 1]} : vector<2x96xf32> to vector<2x32xf32>
    %557 = arith.addf %555, %556 : vector<2x32xf32>
    %558 = arith.negf %557 : vector<2x32xf32>
    %559 = math.exp %558 : vector<2x32xf32>
    %cst_349 = arith.constant 1.000000e+00 : f32
    %560 = vector.broadcast %cst_349 : f32 to vector<2x32xf32>
    %561 = arith.addf %560, %559 : vector<2x32xf32>
    %562 = arith.divf %560, %561 : vector<2x32xf32>
    %563 = vector.extract_strided_slice %552 {offsets = [0, 32], sizes = [2, 32], strides = [1, 1]} : vector<2x96xf32> to vector<2x32xf32>
    %564 = vector.extract_strided_slice %554 {offsets = [0, 32], sizes = [2, 32], strides = [1, 1]} : vector<2x96xf32> to vector<2x32xf32>
    %565 = arith.addf %563, %564 : vector<2x32xf32>
    %566 = arith.negf %565 : vector<2x32xf32>
    %567 = math.exp %566 : vector<2x32xf32>
    %cst_350 = arith.constant 1.000000e+00 : f32
    %568 = vector.broadcast %cst_350 : f32 to vector<2x32xf32>
    %569 = arith.addf %568, %567 : vector<2x32xf32>
    %570 = arith.divf %568, %569 : vector<2x32xf32>
    %571 = vector.extract_strided_slice %552 {offsets = [0, 64], sizes = [2, 32], strides = [1, 1]} : vector<2x96xf32> to vector<2x32xf32>
    %572 = vector.extract_strided_slice %554 {offsets = [0, 64], sizes = [2, 32], strides = [1, 1]} : vector<2x96xf32> to vector<2x32xf32>
    %573 = vector.broadcast %344 : vector<1x32xf32> to vector<2x32xf32>
    %574 = arith.addf %572, %573 : vector<2x32xf32>
    %575 = arith.mulf %562, %574 : vector<2x32xf32>
    %576 = arith.addf %571, %575 : vector<2x32xf32>
    %577 = math.tanh %576 : vector<2x32xf32>
    %cst_351 = arith.constant 1.000000e+00 : f32
    %578 = vector.broadcast %cst_351 : f32 to vector<2x32xf32>
    %579 = arith.subf %578, %570 : vector<2x32xf32>
    %580 = arith.mulf %579, %577 : vector<2x32xf32>
    %581 = arith.mulf %570, %514 : vector<2x32xf32>
    %582 = arith.addf %580, %581 : vector<2x32xf32>
    %583 = arith.truncf %582 : vector<2x32xf32> to vector<2x32xbf16>
    %cst_352 = arith.constant dense<0.000000e+00> : vector<2x96xf32>
    %584 = tpu.matmul %583, %341, %cst_352 {dimension_numbers = #tpu.dot_dimension_numbers<[1], [0], [0], [1], [0, 0, 1, 1], [], []>} : vector<2x32xbf16>, vector<32x96xbf16>, vector<2x96xf32> -> vector<2x96xf32>
    %585 = vector.broadcast %343 : vector<1x96xf32> to vector<2x96xf32>
    %586 = arith.addf %584, %585 : vector<2x96xf32>
    %587 = arith.truncf %548 : vector<2x32xf32> to vector<2x32xbf16>
    %cst_353 = arith.constant dense<0.000000e+00> : vector<2x96xf32>
    %588 = tpu.matmul %587, %342, %cst_353 {dimension_numbers = #tpu.dot_dimension_numbers<[1], [0], [0], [1], [0, 0, 1, 1], [], []>} : vector<2x32xbf16>, vector<32x96xbf16>, vector<2x96xf32> -> vector<2x96xf32>
    %589 = vector.extract_strided_slice %586 {offsets = [0, 0], sizes = [2, 32], strides = [1, 1]} : vector<2x96xf32> to vector<2x32xf32>
    %590 = vector.extract_strided_slice %588 {offsets = [0, 0], sizes = [2, 32], strides = [1, 1]} : vector<2x96xf32> to vector<2x32xf32>
    %591 = arith.addf %589, %590 : vector<2x32xf32>
    %592 = arith.negf %591 : vector<2x32xf32>
    %593 = math.exp %592 : vector<2x32xf32>
    %cst_354 = arith.constant 1.000000e+00 : f32
    %594 = vector.broadcast %cst_354 : f32 to vector<2x32xf32>
    %595 = arith.addf %594, %593 : vector<2x32xf32>
    %596 = arith.divf %594, %595 : vector<2x32xf32>
    %597 = vector.extract_strided_slice %586 {offsets = [0, 32], sizes = [2, 32], strides = [1, 1]} : vector<2x96xf32> to vector<2x32xf32>
    %598 = vector.extract_strided_slice %588 {offsets = [0, 32], sizes = [2, 32], strides = [1, 1]} : vector<2x96xf32> to vector<2x32xf32>
    %599 = arith.addf %597, %598 : vector<2x32xf32>
    %600 = arith.negf %599 : vector<2x32xf32>
    %601 = math.exp %600 : vector<2x32xf32>
    %cst_355 = arith.constant 1.000000e+00 : f32
    %602 = vector.broadcast %cst_355 : f32 to vector<2x32xf32>
    %603 = arith.addf %602, %601 : vector<2x32xf32>
    %604 = arith.divf %602, %603 : vector<2x32xf32>
    %605 = vector.extract_strided_slice %586 {offsets = [0, 64], sizes = [2, 32], strides = [1, 1]} : vector<2x96xf32> to vector<2x32xf32>
    %606 = vector.extract_strided_slice %588 {offsets = [0, 64], sizes = [2, 32], strides = [1, 1]} : vector<2x96xf32> to vector<2x32xf32>
    %607 = vector.broadcast %345 : vector<1x32xf32> to vector<2x32xf32>
    %608 = arith.addf %606, %607 : vector<2x32xf32>
    %609 = arith.mulf %596, %608 : vector<2x32xf32>
    %610 = arith.addf %605, %609 : vector<2x32xf32>
    %611 = math.tanh %610 : vector<2x32xf32>
    %cst_356 = arith.constant 1.000000e+00 : f32
    %612 = vector.broadcast %cst_356 : f32 to vector<2x32xf32>
    %613 = arith.subf %612, %604 : vector<2x32xf32>
    %614 = arith.mulf %613, %611 : vector<2x32xf32>
    %615 = arith.mulf %604, %548 : vector<2x32xf32>
    %616 = arith.addf %614, %615 : vector<2x32xf32>
    %617 = arith.maximumf %549, %616 : vector<2x32xf32>
    %cst_357 = arith.constant 0.000000e+00 : f32
    %618 = vector.broadcast %cst_357 : f32 to vector<6x32xf32>
    %619 = tpu.concatenate %617, %618 in 0 : vector<2x32xf32>, vector<6x32xf32> -> vector<8x32xf32>
    %c0_358 = arith.constant 0 : index
    %c0_359 = arith.constant 0 : index
    %620 = vector.load %arg19[%c0_358, %c0_359] : memref<32x128xf32, #tpu.memory_space<vmem>>, vector<32x128xf32>
    %cst_360 = arith.constant dense<0.000000e+00> : vector<8x128xf32>
    %621 = tpu.matmul %619, %620, %cst_360 {dimension_numbers = #tpu.dot_dimension_numbers<[1], [0], [0], [1], [0, 0, 1, 1], [], []>} : vector<8x32xf32>, vector<32x128xf32>, vector<8x128xf32> -> vector<8x128xf32>
    %c0_361 = arith.constant 0 : index
    %c0_362 = arith.constant 0 : index
    %622 = vector.load %arg20[%c0_361, %c0_362] : memref<1x128xf32, #tpu.memory_space<vmem>>, vector<1x128xf32>
    %623 = vector.broadcast %622 : vector<1x128xf32> to vector<8x128xf32>
    %624 = arith.addf %621, %623 : vector<8x128xf32>
    %c0_363 = arith.constant 0 : index
    %c0_364 = arith.constant 0 : index
    %625 = vector.load %arg21[%c0_363, %c0_364] : memref<8x128xf32, #tpu.memory_space<vmem>>, vector<8x128xf32>
    tpu.vector_store %arg21[%c0_363, %c0_364], %624 {strides = array<i32>} : memref<8x128xf32, #tpu.memory_space<vmem>>, vector<8x128xf32>,
    return
  }
  func.func @transform_0(%arg0: i32) -> (i32, i32) {
    %c0_i32 = arith.constant 0 : i32
    %c0_i32_0 = arith.constant 0 : i32
    %c0_i32_1 = arith.constant 0 : i32
    return %c0_i32, %c0_i32_0 : i32, i32
  }
  func.func @transform_1(%arg0: i32) -> (i32, i32) {
    %c0_i32 = arith.constant 0 : i32
    %c0_i32_0 = arith.constant 0 : i32
    %c0_i32_1 = arith.constant 0 : i32
    return %c0_i32, %c0_i32_0 : i32, i32
  }
  func.func @transform_2(%arg0: i32) -> (i32, i32) {
    %c0_i32 = arith.constant 0 : i32
    %c0_i32_0 = arith.constant 0 : i32
    %c0_i32_1 = arith.constant 0 : i32
    return %c0_i32, %c0_i32_0 : i32, i32
  }
  func.func @transform_3(%arg0: i32) -> (i32, i32) {
    %c0_i32 = arith.constant 0 : i32
    %c0_i32_0 = arith.constant 0 : i32
    %c0_i32_1 = arith.constant 0 : i32
    return %c0_i32, %c0_i32_0 : i32, i32
  }
  func.func @transform_4(%arg0: i32) -> (i32, i32, i32) {
    %c0_i32 = arith.constant 0 : i32
    %c0_i32_0 = arith.constant 0 : i32
    %c0_i32_1 = arith.constant 0 : i32
    %c0_i32_2 = arith.constant 0 : i32
    return %c0_i32, %c0_i32_0, %c0_i32_1 : i32, i32, i32
  }
  func.func @transform_5(%arg0: i32) -> (i32, i32) {
    %c0_i32 = arith.constant 0 : i32
    %c0_i32_0 = arith.constant 0 : i32
    %c0_i32_1 = arith.constant 0 : i32
    return %c0_i32, %c0_i32_0 : i32, i32
  }
  func.func @transform_6(%arg0: i32) -> (i32, i32) {
    %c0_i32 = arith.constant 0 : i32
    %c0_i32_0 = arith.constant 0 : i32
    %c0_i32_1 = arith.constant 0 : i32
    return %c0_i32, %c0_i32_0 : i32, i32
  }
  func.func @transform_7(%arg0: i32) -> (i32, i32, i32) {
    %c0_i32 = arith.constant 0 : i32
    %c0_i32_0 = arith.constant 0 : i32
    %c0_i32_1 = arith.constant 0 : i32
    %c0_i32_2 = arith.constant 0 : i32
    return %c0_i32, %c0_i32_0, %c0_i32_1 : i32, i32, i32
  }
  func.func @transform_8(%arg0: i32) -> (i32, i32) {
    %c0_i32 = arith.constant 0 : i32
    %c0_i32_0 = arith.constant 0 : i32
    %c0_i32_1 = arith.constant 0 : i32
    return %c0_i32, %c0_i32_0 : i32, i32
  }
  func.func @transform_9(%arg0: i32) -> (i32, i32) {
    %c0_i32 = arith.constant 0 : i32
    %c0_i32_0 = arith.constant 0 : i32
    %c0_i32_1 = arith.constant 0 : i32
    return %c0_i32, %c0_i32_0 : i32, i32
  }
  func.func @transform_10(%arg0: i32) -> (i32, i32) {
    %c0_i32 = arith.constant 0 : i32
    %c0_i32_0 = arith.constant 0 : i32
    %c0_i32_1 = arith.constant 0 : i32
    return %c0_i32, %c0_i32_0 : i32, i32
  }
  func.func @transform_11(%arg0: i32) -> (i32, i32) {
    %c0_i32 = arith.constant 0 : i32
    %c0_i32_0 = arith.constant 0 : i32
    %c0_i32_1 = arith.constant 0 : i32
    return %c0_i32, %c0_i32_0 : i32, i32
  }
  func.func @transform_12(%arg0: i32) -> (i32, i32) {
    %c0_i32 = arith.constant 0 : i32
    %c0_i32_0 = arith.constant 0 : i32
    %c0_i32_1 = arith.constant 0 : i32
    return %c0_i32, %c0_i32_0 : i32, i32
  }
  func.func @transform_13(%arg0: i32) -> (i32, i32) {
    %c0_i32 = arith.constant 0 : i32
    %c0_i32_0 = arith.constant 0 : i32
    %c0_i32_1 = arith.constant 0 : i32
    return %c0_i32, %c0_i32_0 : i32, i32
  }
  func.func @transform_14(%arg0: i32) -> (i32, i32) {
    %c0_i32 = arith.constant 0 : i32
    %c0_i32_0 = arith.constant 0 : i32
    %c0_i32_1 = arith.constant 0 : i32
    return %c0_i32, %c0_i32_0 : i32, i32
  }
  func.func @transform_15(%arg0: i32) -> (i32, i32) {
    %c0_i32 = arith.constant 0 : i32
    %c0_i32_0 = arith.constant 0 : i32
    %c0_i32_1 = arith.constant 0 : i32
    return %c0_i32, %c0_i32_0 : i32, i32
  }
  func.func @transform_16(%arg0: i32) -> (i32, i32) {
    %c0_i32 = arith.constant 0 : i32
    %c0_i32_0 = arith.constant 0 : i32
    %c0_i32_1 = arith.constant 0 : i32
    return %c0_i32, %c0_i32_0 : i32, i32
  }
  func.func @transform_17(%arg0: i32) -> (i32, i32) {
    %c0_i32 = arith.constant 0 : i32
    %c0_i32_0 = arith.constant 0 : i32
    %c0_i32_1 = arith.constant 0 : i32
    return %c0_i32, %c0_i32_0 : i32, i32
  }
  func.func @transform_18(%arg0: i32) -> (i32, i32) {
    %c0_i32 = arith.constant 0 : i32
    %c0_i32_0 = arith.constant 0 : i32
    %c0_i32_1 = arith.constant 0 : i32
    return %c0_i32, %c0_i32_0 : i32, i32
  }
  func.func @transform_19(%arg0: i32) -> (i32, i32) {
    %c0_i32 = arith.constant 0 : i32
    %c0_i32_0 = arith.constant 0 : i32
    %c0_i32_1 = arith.constant 0 : i32
    return %c0_i32, %c0_i32_0 : i32, i32
  }
  func.func @transform_20(%arg0: i32) -> (i32, i32) {
    %c0_i32 = arith.constant 0 : i32
    %c0_i32_0 = arith.constant 0 : i32
    %c0_i32_1 = arith.constant 0 : i32
    return %c0_i32, %c0_i32_0 : i32, i32
  }
}

</mosaic_0001>

<llo_original>
// kernel: crnn_forward.1
$region0: #{crnn_forward.1}
  #allocation0 [shape = 'u32[]', space=smem, size = 0x4, offset = 0x4, fixed_abs, tag = 'smem constant byte address 0x4 - core index']
  #allocation1 [shape = 'u32[144,128]{1,0:T(1,128)}', space=vmem, size = 0x12000, scoped, tag = 'internal scratch']
  #allocation2 [shape = 'f32[1280,25]{1,0:T(8,128)}', space=vmem, size = 0xa0000, scoped, tag = 'scratch operand']
  #allocation3 [shape = 'bf16[1088,25]{1,0:T(16,128)(2,1)}', space=vmem, size = 0x44000, scoped, tag = 'scratch operand']
  #allocation4 [shape = 'bf16[296,25]{1,0:T(8,128)(2,1)}', space=vmem, size = 0x12800, scoped, tag = 'scratch operand']
  #allocation5 [shape = 'f32[248,50]{1,0:T(8,128)}', space=vmem, size = 0x1f000, scoped, tag = 'scratch operand']
  #allocation6 [shape = 'bf16[72,50]{1,0:T(8,128)(2,1)}', space=vmem, size = 0x4800, scoped, tag = 'scratch operand']
  %s0 = inlined_call_operand.vmem [shape: bf16[1280,8], index: 0, kind: input, shape index: {}]
  %s1 = inlined_call_operand.vmem [shape: bf16[8,25], index: 1, kind: input, shape index: {}]
  %s2 = inlined_call_operand.vmem [shape: f32[1,25], index: 2, kind: input, shape index: {}]
  %s3 = inlined_call_operand.vmem [shape: bf16[144,544], index: 3, kind: input, shape index: {}]
  %s4 = inlined_call_operand.vmem [shape: bf16[12,25,50], index: 4, kind: input, shape index: {}]
  %s5 = inlined_call_operand.vmem [shape: f32[1,50], index: 5, kind: input, shape index: {}]
  %s6 = inlined_call_operand.vmem [shape: bf16[24,80], index: 6, kind: input, shape index: {}]
  %s7 = inlined_call_operand.vmem [shape: bf16[9,50,100], index: 7, kind: input, shape index: {}]
  %s8 = inlined_call_operand.vmem [shape: f32[1,100], index: 8, kind: input, shape index: {}]
  %s9 = inlined_call_operand.vmem [shape: f32[1,100], index: 9, kind: input, shape index: {}]
  %s10 = inlined_call_operand.vmem [shape: bf16[100,96], index: 10, kind: input, shape index: {}]
  %s11 = inlined_call_operand.vmem [shape: bf16[32,96], index: 11, kind: input, shape index: {}]
  %s12 = inlined_call_operand.vmem [shape: f32[1,96], index: 12, kind: input, shape index: {}]
  %s13 = inlined_call_operand.vmem [shape: f32[1,32], index: 13, kind: input, shape index: {}]
  %s14 = inlined_call_operand.vmem [shape: bf16[32,96], index: 14, kind: input, shape index: {}]
  %s15 = inlined_call_operand.vmem [shape: bf16[32,96], index: 15, kind: input, shape index: {}]
  %s16 = inlined_call_operand.vmem [shape: f32[1,96], index: 16, kind: input, shape index: {}]
  %s17 = inlined_call_operand.vmem [shape: f32[1,32], index: 17, kind: input, shape index: {}]
  %s18 = inlined_call_operand.vmem [shape: f32[32,128], index: 18, kind: input, shape index: {}]
  %s19 = inlined_call_operand.vmem [shape: f32[1,128], index: 19, kind: input, shape index: {}]
  %s20 = inlined_call_operand.vmem [shape: f32[8,128], index: 20, kind: output, shape index: {}]
  %s21 = sld [smem:[#allocation0]]
  $region90: #{crnn_forward.1} parent=0
    _
  %s23 = ssub.s32 1, %s21
  %s24 = scalar_select 0, %s23, %s21
  // Predicated region
  $region2: #{crnn_forward.1} parent=0 // pred_check
    _
  $region3: #{crnn_forward.1} parent=0 // pred_check_branch
    %26 = sbr.rel (0) target = $region5
  $region4: #{crnn_forward.1} parent=0 // pred_region
    _
  $region5: #{crnn_forward.1} parent=0 // pred_fallthru
    _
  // Predicated region
  $region6: #{crnn_forward.1} parent=0 // pred_check
    _
  $region7: #{crnn_forward.1} parent=0 // pred_check_branch
    %28 = sbr.rel (0) target = $region9
  $region8: #{crnn_forward.1} parent=0 // pred_region
    _
  $region9: #{crnn_forward.1} parent=0 // pred_fallthru
    _
  // Predicated region
  $region10: #{crnn_forward.1} parent=0 // pred_check
    _
  $region11: #{crnn_forward.1} parent=0 // pred_check_branch
    %30 = sbr.rel (0) target = $region13
  $region12: #{crnn_forward.1} parent=0 // pred_region
    _
  $region13: #{crnn_forward.1} parent=0 // pred_fallthru
    _
  // Predicated region
  $region14: #{crnn_forward.1} parent=0 // pred_check
    _
  $region15: #{crnn_forward.1} parent=0 // pred_check_branch
    %32 = sbr.rel (0) target = $region17
  $region16: #{crnn_forward.1} parent=0 // pred_region
    _
  $region17: #{crnn_forward.1} parent=0 // pred_fallthru
    _
  // Predicated region
  $region18: #{crnn_forward.1} parent=0 // pred_check
    _
  $region19: #{crnn_forward.1} parent=0 // pred_check_branch
    %34 = sbr.rel (0) target = $region21
  $region20: #{crnn_forward.1} parent=0 // pred_region
    _
  $region21: #{crnn_forward.1} parent=0 // pred_fallthru
    _
  // Predicated region
  $region22: #{crnn_forward.1} parent=0 // pred_check
    _
  $region23: #{crnn_forward.1} parent=0 // pred_check_branch
    %36 = sbr.rel (0) target = $region25
  $region24: #{crnn_forward.1} parent=0 // pred_region
    _
  $region25: #{crnn_forward.1} parent=0 // pred_fallthru
    _
  // Predicated region
  $region26: #{crnn_forward.1} parent=0 // pred_check
    _
  $region27: #{crnn_forward.1} parent=0 // pred_check_branch
    %38 = sbr.rel (0) target = $region29
  $region28: #{crnn_forward.1} parent=0 // pred_region
    _
  $region29: #{crnn_forward.1} parent=0 // pred_fallthru
    _
  // Predicated region
  $region30: #{crnn_forward.1} parent=0 // pred_check
    _
  $region31: #{crnn_forward.1} parent=0 // pred_check_branch
    %40 = sbr.rel (0) target = $region33
  $region32: #{crnn_forward.1} parent=0 // pred_region
    _
  $region33: #{crnn_forward.1} parent=0 // pred_fallthru
    _
  // Predicated region
  $region34: #{crnn_forward.1} parent=0 // pred_check
    _
  $region35: #{crnn_forward.1} parent=0 // pred_check_branch
    %42 = sbr.rel (0) target = $region37
  $region36: #{crnn_forward.1} parent=0 // pred_region
    _
  $region37: #{crnn_forward.1} parent=0 // pred_fallthru
    _
  // Predicated region
  $region38: #{crnn_forward.1} parent=0 // pred_check
    _
  $region39: #{crnn_forward.1} parent=0 // pred_check_branch
    %44 = sbr.rel (0) target = $region41
  $region40: #{crnn_forward.1} parent=0 // pred_region
    _
  $region41: #{crnn_forward.1} parent=0 // pred_fallthru
    _
  // Predicated region
  $region42: #{crnn_forward.1} parent=0 // pred_check
    _
  $region43: #{crnn_forward.1} parent=0 // pred_check_branch
    %46 = sbr.rel (0) target = $region45
  $region44: #{crnn_forward.1} parent=0 // pred_region
    _
  $region45: #{crnn_forward.1} parent=0 // pred_fallthru
    _
  // Predicated region
  $region46: #{crnn_forward.1} parent=0 // pred_check
    _
  $region47: #{crnn_forward.1} parent=0 // pred_check_branch
    %48 = sbr.rel (0) target = $region49
  $region48: #{crnn_forward.1} parent=0 // pred_region
    _
  $region49: #{crnn_forward.1} parent=0 // pred_fallthru
    _
  // Predicated region
  $region50: #{crnn_forward.1} parent=0 // pred_check
    _
  $region51: #{crnn_forward.1} parent=0 // pred_check_branch
    %50 = sbr.rel (0) target = $region53
  $region52: #{crnn_forward.1} parent=0 // pred_region
    _
  $region53: #{crnn_forward.1} parent=0 // pred_fallthru
    _
  // Predicated region
  $region54: #{crnn_forward.1} parent=0 // pred_check
    _
  $region55: #{crnn_forward.1} parent=0 // pred_check_branch
    %52 = sbr.rel (0) target = $region57
  $region56: #{crnn_forward.1} parent=0 // pred_region
    _
  $region57: #{crnn_forward.1} parent=0 // pred_fallthru
    _
  // Predicated region
  $region58: #{crnn_forward.1} parent=0 // pred_check
    _
  $region59: #{crnn_forward.1} parent=0 // pred_check_branch
    %54 = sbr.rel (0) target = $region61
  $region60: #{crnn_forward.1} parent=0 // pred_region
    _
  $region61: #{crnn_forward.1} parent=0 // pred_fallthru
    _
  // Predicated region
  $region62: #{crnn_forward.1} parent=0 // pred_check
    _
  $region63: #{crnn_forward.1} parent=0 // pred_check_branch
    %56 = sbr.rel (0) target = $region65
  $region64: #{crnn_forward.1} parent=0 // pred_region
    _
  $region65: #{crnn_forward.1} parent=0 // pred_fallthru
    _
  // Predicated region
  $region66: #{crnn_forward.1} parent=0 // pred_check
    _
  $region67: #{crnn_forward.1} parent=0 // pred_check_branch
    %58 = sbr.rel (0) target = $region69
  $region68: #{crnn_forward.1} parent=0 // pred_region
    _
  $region69: #{crnn_forward.1} parent=0 // pred_fallthru
    _
  // Predicated region
  $region70: #{crnn_forward.1} parent=0 // pred_check
    _
  $region71: #{crnn_forward.1} parent=0 // pred_check_branch
    %60 = sbr.rel (0) target = $region73
  $region72: #{crnn_forward.1} parent=0 // pred_region
    _
  $region73: #{crnn_forward.1} parent=0 // pred_fallthru
    _
  // Predicated region
  $region74: #{crnn_forward.1} parent=0 // pred_check
    _
  $region75: #{crnn_forward.1} parent=0 // pred_check_branch
    %62 = sbr.rel (0) target = $region77
  $region76: #{crnn_forward.1} parent=0 // pred_region
    _
  $region77: #{crnn_forward.1} parent=0 // pred_fallthru
    _
  // Predicated region
  $region78: #{crnn_forward.1} parent=0 // pred_check
    _
  $region79: #{crnn_forward.1} parent=0 // pred_check_branch
    %64 = sbr.rel (0) target = $region81
  $region80: #{crnn_forward.1} parent=0 // pred_region
    _
  $region81: #{crnn_forward.1} parent=0 // pred_fallthru
    _
  %vm66 = vcmask 199680
  %67 = vst.msk [vmem:[#allocation4] sm:$0xf] %vm66, 0
  %68 = vst.msk [vmem:[#allocation4 + $0x4] sm:$0xf] %vm66, 0
  %69 = vst.msk [vmem:[#allocation4 + $0x8] sm:$0xf] %vm66, 0
  %70 = vst.msk [vmem:[#allocation4 + $0xc] sm:$0xf] %vm66, 0
  %71 = vst.msk [vmem:[#allocation4 + $0x10] sm:$0xf] %vm66, 0
  %72 = vst.msk [vmem:[#allocation4 + $0x14] sm:$0xf] %vm66, 0
  %73 = vst.msk [vmem:[#allocation4 + $0x18] sm:$0xf] %vm66, 0
  %74 = vst.msk [vmem:[#allocation4 + $0x1c] sm:$0xf] %vm66, 0
  %75 = vst.msk [vmem:[#allocation4 + $0x20] sm:$0xf] %vm66, 0
  %76 = vst.msk [vmem:[#allocation4 + $0x24] sm:$0xf] %vm66, 0
  %77 = vst.msk [vmem:[#allocation4 + $0x28] sm:$0xf] %vm66, 0
  %78 = vst.msk [vmem:[#allocation4 + $0x2c] sm:$0xf] %vm66, 0
  %79 = vst.msk [vmem:[#allocation4 + $0x30] sm:$0xf] %vm66, 0
  %80 = vst.msk [vmem:[#allocation4 + $0x34] sm:$0xf] %vm66, 0
  %81 = vst.msk [vmem:[#allocation4 + $0x38] sm:$0xf] %vm66, 0
  %82 = vst.msk [vmem:[#allocation4 + $0x3c] sm:$0xf] %vm66, 0
  %83 = vst.msk [vmem:[#allocation4 + $0x40] sm:$0xf] %vm66, 0
  %84 = vst.msk [vmem:[#allocation4 + $0x44] sm:$0xf] %vm66, 0
  %85 = vst.msk [vmem:[#allocation4 + $0x48] sm:$0xf] %vm66, 0
  %86 = vst.msk [vmem:[#allocation4 + $0x4c] sm:$0xf] %vm66, 0
  %87 = vst.msk [vmem:[#allocation4 + $0x50] sm:$0xf] %vm66, 0
  %88 = vst.msk [vmem:[#allocation4 + $0x54] sm:$0xf] %vm66, 0
  %89 = vst.msk [vmem:[#allocation4 + $0x58] sm:$0xf] %vm66, 0
  %90 = vst.msk [vmem:[#allocation4 + $0x5c] sm:$0xf] %vm66, 0
  %91 = vst.msk [vmem:[#allocation4 + $0x60] sm:$0xf] %vm66, 0
  %92 = vst.msk [vmem:[#allocation4 + $0x64] sm:$0xf] %vm66, 0
  %93 = vst.msk [vmem:[#allocation4 + $0x68] sm:$0xf] %vm66, 0
  %94 = vst.msk [vmem:[#allocation4 + $0x6c] sm:$0xf] %vm66, 0
  %95 = vst.msk [vmem:[#allocation4 + $0x70] sm:$0xf] %vm66, 0
  %96 = vst.msk [vmem:[#allocation4 + $0x74] sm:$0xf] %vm66, 0
  %97 = vst.msk [vmem:[#allocation4 + $0x78] sm:$0xf] %vm66, 0
  %98 = vst.msk [vmem:[#allocation4 + $0x7c] sm:$0xf] %vm66, 0
  %99 = vst.msk [vmem:[#allocation4 + $0x80] sm:$0xf] %vm66, 0
  %100 = vst.msk [vmem:[#allocation4 + $0x84] sm:$0xf] %vm66, 0
  %101 = vst.msk [vmem:[#allocation4 + $0x88] sm:$0xf] %vm66, 0
  %102 = vst.msk [vmem:[#allocation4 + $0x8c] sm:$0xf] %vm66, 0
  %103 = vst.msk [vmem:[#allocation4 + $0x90] sm:$0xf] %vm66, 0
  %vm104 = vcmask 408576
  %105 = vst.msk [vmem:[#allocation5] sm:$0xff] %vm104, 0.0
  %106 = vst.msk [vmem:[#allocation5 + $0x8] sm:$0xff] %vm104, 0.0
  %107 = vst.msk [vmem:[#allocation5 + $0x10] sm:$0xff] %vm104, 0.0
  %108 = vst.msk [vmem:[#allocation5 + $0x18] sm:$0xff] %vm104, 0.0
  %109 = vst.msk [vmem:[#allocation5 + $0x20] sm:$0xff] %vm104, 0.0
  %110 = vst.msk [vmem:[#allocation5 + $0x28] sm:$0xff] %vm104, 0.0
  %111 = vst.msk [vmem:[#allocation5 + $0x30] sm:$0xff] %vm104, 0.0
  %112 = vst.msk [vmem:[#allocation5 + $0x38] sm:$0xff] %vm104, 0.0
  %113 = vst.msk [vmem:[#allocation5 + $0x40] sm:$0xff] %vm104, 0.0
  %114 = vst.msk [vmem:[#allocation5 + $0x48] sm:$0xff] %vm104, 0.0
  %115 = vst.msk [vmem:[#allocation5 + $0x50] sm:$0xff] %vm104, 0.0
  %116 = vst.msk [vmem:[#allocation5 + $0x58] sm:$0xff] %vm104, 0.0
  %117 = vst.msk [vmem:[#allocation5 + $0x60] sm:$0xff] %vm104, 0.0
  %118 = vst.msk [vmem:[#allocation5 + $0x68] sm:$0xff] %vm104, 0.0
  %119 = vst.msk [vmem:[#allocation5 + $0x70] sm:$0xff] %vm104, 0.0
  %120 = vst.msk [vmem:[#allocation5 + $0x78] sm:$0xff] %vm104, 0.0
  %121 = vst.msk [vmem:[#allocation5 + $0x80] sm:$0xff] %vm104, 0.0
  %122 = vst.msk [vmem:[#allocation5 + $0x88] sm:$0xff] %vm104, 0.0
  %123 = vst.msk [vmem:[#allocation5 + $0x90] sm:$0xff] %vm104, 0.0
  %124 = vst.msk [vmem:[#allocation5 + $0x98] sm:$0xff] %vm104, 0.0
  %125 = vst.msk [vmem:[#allocation5 + $0xa0] sm:$0xff] %vm104, 0.0
  %126 = vst.msk [vmem:[#allocation5 + $0xa8] sm:$0xff] %vm104, 0.0
  %127 = vst.msk [vmem:[#allocation5 + $0xb0] sm:$0xff] %vm104, 0.0
  %128 = vst.msk [vmem:[#allocation5 + $0xb8] sm:$0xff] %vm104, 0.0
  %129 = vst.msk [vmem:[#allocation5 + $0xc0] sm:$0xff] %vm104, 0.0
  %130 = vst.msk [vmem:[#allocation5 + $0xc8] sm:$0xff] %vm104, 0.0
  %131 = vst.msk [vmem:[#allocation5 + $0xd0] sm:$0xff] %vm104, 0.0
  %132 = vst.msk [vmem:[#allocation5 + $0xd8] sm:$0xff] %vm104, 0.0
  %133 = vst.msk [vmem:[#allocation5 + $0xe0] sm:$0xff] %vm104, 0.0
  %134 = vst.msk [vmem:[#allocation5 + $0xe8] sm:$0xff] %vm104, 0.0
  %135 = vst.msk [vmem:[#allocation5 + $0xf0] sm:$0xff] %vm104, 0.0
  %vm136 = vcmask 404480
  %137 = vst.msk [vmem:[#allocation6] sm:$0xf] %vm136, 0
  %138 = vst.msk [vmem:[#allocation6 + $0x4] sm:$0xf] %vm136, 0
  %139 = vst.msk [vmem:[#allocation6 + $0x8] sm:$0xf] %vm136, 0
  %140 = vst.msk [vmem:[#allocation6 + $0xc] sm:$0xf] %vm136, 0
  %141 = vst.msk [vmem:[#allocation6 + $0x10] sm:$0xf] %vm136, 0
  %142 = vst.msk [vmem:[#allocation6 + $0x14] sm:$0xf] %vm136, 0
  %143 = vst.msk [vmem:[#allocation6 + $0x18] sm:$0xf] %vm136, 0
  %144 = vst.msk [vmem:[#allocation6 + $0x1c] sm:$0xf] %vm136, 0
  %145 = vst.msk [vmem:[#allocation6 + $0x20] sm:$0xf] %vm136, 0
  %v146 = vld [vmem:[%s2] sm:$0x1]
  %v147 = vld [vmem:[%s1] sm:$0xf]
  %v148 = vld [vmem:[%s0] sm:$0xf]
  %v149 = vld [vmem:[%s0 + $0x4] sm:$0xf]
  %v150 = vld [vmem:[%s0 + $0x8] sm:$0xf]
  %v151 = vld [vmem:[%s0 + $0xc] sm:$0xf]
  %v152 = vld [vmem:[%s0 + $0x10] sm:$0xf]
  %v153 = vld [vmem:[%s0 + $0x14] sm:$0xf]
  %v154 = vld [vmem:[%s0 + $0x18] sm:$0xf]
  %v155 = vld [vmem:[%s0 + $0x1c] sm:$0xf]
  %v156 = vld [vmem:[%s0 + $0x20] sm:$0xf]
  %v157 = vld [vmem:[%s0 + $0x24] sm:$0xf]
  %v158 = vld [vmem:[%s0 + $0x28] sm:$0xf]
  %v159 = vld [vmem:[%s0 + $0x2c] sm:$0xf]
  %v160 = vld [vmem:[%s0 + $0x30] sm:$0xf]
  %v161 = vld [vmem:[%s0 + $0x34] sm:$0xf]
  %v162 = vld [vmem:[%s0 + $0x38] sm:$0xf]
  %v163 = vld [vmem:[%s0 + $0x3c] sm:$0xf]
  %v164 = vld [vmem:[%s0 + $0x40] sm:$0xf]
  %v165 = vld [vmem:[%s0 + $0x44] sm:$0xf]
  %v166 = vld [vmem:[%s0 + $0x48] sm:$0xf]
  %v167 = vld [vmem:[%s0 + $0x4c] sm:$0xf]
  %v168 = vld [vmem:[%s0 + $0x50] sm:$0xf]
  %v169 = vld [vmem:[%s0 + $0x54] sm:$0xf]
  %v170 = vld [vmem:[%s0 + $0x58] sm:$0xf]
  %v171 = vld [vmem:[%s0 + $0x5c] sm:$0xf]
  %v172 = vld [vmem:[%s0 + $0x60] sm:$0xf]
  %v173 = vld [vmem:[%s0 + $0x64] sm:$0xf]
  %v174 = vld [vmem:[%s0 + $0x68] sm:$0xf]
  %v175 = vld [vmem:[%s0 + $0x6c] sm:$0xf]
  %v176 = vld [vmem:[%s0 + $0x70] sm:$0xf]
  %v177 = vld [vmem:[%s0 + $0x74] sm:$0xf]
  %v178 = vld [vmem:[%s0 + $0x78] sm:$0xf]
  %v179 = vld [vmem:[%s0 + $0x7c] sm:$0xf]
  %v181 = vlaneseq
  %v182 = vshrl.u32 %v181, 7
  %v183 = vsub.s32 0, %v182
  %v184 = vrot.slane %v146, %v183
  %v218 = vunpack.c.l.b16 %v148
  %v219 = vunpack.c.l.b16 %v149
  %v220 = vunpack.c.l.b16 %v150
  %v221 = vunpack.c.l.b16 %v151
  %v222 = vunpack.c.l.b16 %v152
  %v223 = vunpack.c.l.b16 %v153
  %v224 = vunpack.c.l.b16 %v154
  %v225 = vunpack.c.l.b16 %v155
  %v226 = vunpack.c.l.b16 %v156
  %v227 = vunpack.c.l.b16 %v157
  %v228 = vunpack.c.l.b16 %v158
  %v229 = vunpack.c.l.b16 %v159
  %v230 = vunpack.c.l.b16 %v160
  %v231 = vunpack.c.l.b16 %v161
  %v232 = vunpack.c.l.b16 %v162
  %v233 = vunpack.c.l.b16 %v163
  %v234 = vunpack.c.l.b16 %v164
  %v235 = vunpack.c.l.b16 %v165
  %v236 = vunpack.c.l.b16 %v166
  %v237 = vunpack.c.l.b16 %v167
  %v238 = vunpack.c.l.b16 %v168
  %v239 = vunpack.c.l.b16 %v169
  %v240 = vunpack.c.l.b16 %v170
  %v241 = vunpack.c.l.b16 %v171
  %v242 = vunpack.c.l.b16 %v172
  %v243 = vunpack.c.l.b16 %v173
  %v244 = vunpack.c.l.b16 %v174
  %v245 = vunpack.c.l.b16 %v175
  %v246 = vunpack.c.l.b16 %v176
  %v247 = vunpack.c.l.b16 %v177
  %v248 = vunpack.c.l.b16 %v178
  %v249 = vunpack.c.l.b16 %v179
  %v250 = vpack.c.b16 %v219, %v218
  %v251 = vpack.c.b16 %v221, %v220
  %v252 = vpack.c.b16 %v223, %v222
  %v253 = vpack.c.b16 %v225, %v224
  %v254 = vpack.c.b16 %v227, %v226
  %v255 = vpack.c.b16 %v229, %v228
  %v256 = vpack.c.b16 %v231, %v230
  %v257 = vpack.c.b16 %v233, %v232
  %v258 = vpack.c.b16 %v235, %v234
  %v259 = vpack.c.b16 %v237, %v236
  %v260 = vpack.c.b16 %v239, %v238
  %v261 = vpack.c.b16 %v241, %v240
  %v262 = vpack.c.b16 %v243, %v242
  %v263 = vpack.c.b16 %v245, %v244
  %v264 = vpack.c.b16 %v247, %v246
  %v265 = vpack.c.b16 %v249, %v248
  %vm266 = vcmask 64512
  %v268 = vsel %vm266, %v250, 0
  %v271 = vsel %vm266, %v251, 0
  %v274 = vsel %vm266, %v252, 0
  %v277 = vsel %vm266, %v253, 0
  %v280 = vsel %vm266, %v254, 0
  %v283 = vsel %vm266, %v255, 0
  %v286 = vsel %vm266, %v256, 0
  %v289 = vsel %vm266, %v257, 0
  %v292 = vsel %vm266, %v258, 0
  %v295 = vsel %vm266, %v259, 0
  %v298 = vsel %vm266, %v260, 0
  %v301 = vsel %vm266, %v261, 0
  %v304 = vsel %vm266, %v262, 0
  %v307 = vsel %vm266, %v263, 0
  %v310 = vsel %vm266, %v264, 0
  %v313 = vsel %vm266, %v265, 0
  %vm315 = vcmask 1043456
  %v317 = vsel %vm315, %v147, 0
  %319 = vmatprep.subr.bf16.mxu0 0
  %320 = vmatpush1.bf16.msra.mxu0 %v317
  %321 = vmatprep.subr.bf16.mxu0 0
  %322 = vmatpush1.bf16.msra.mxu0 0
  %323 = vmatprep.subr.bf16.mxu0 0
  %324 = vmatpush1.bf16.msra.mxu0 0
  %325 = vmatprep.subr.bf16.mxu0 0
  %326 = vmatpush1.bf16.msra.mxu0 0
  %327 = vmatprep.subr.bf16.mxu0 0
  %328 = vmatpush1.bf16.msra.mxu0 0
  %329 = vmatprep.subr.bf16.mxu0 0
  %330 = vmatpush1.bf16.msra.mxu0 0
  %331 = vmatprep.subr.bf16.mxu0 0
  %332 = vmatpush1.bf16.msra.mxu0 0
  %333 = vmatprep.subr.bf16.mxu0 0
  %334 = vmatpush1.bf16.msra.mxu0 0
  %335 = vmatprep.subr.bf16.mxu0 0
  %336 = vmatpush1.bf16.msra.mxu0 0
  %337 = vmatprep.subr.bf16.mxu0 0
  %338 = vmatpush1.bf16.msra.mxu0 0
  %339 = vmatprep.subr.bf16.mxu0 0
  %340 = vmatpush1.bf16.msra.mxu0 0
  %341 = vmatprep.subr.bf16.mxu0 0
  %342 = vmatpush1.bf16.msra.mxu0 0
  %343 = vmatprep.subr.bf16.mxu0 0
  %344 = vmatpush1.bf16.msra.mxu0 0
  %345 = vmatprep.subr.bf16.mxu0 0
  %346 = vmatpush1.bf16.msra.mxu0 0
  %347 = vmatprep.subr.bf16.mxu0 0
  %348 = vmatpush1.bf16.msra.mxu0 0
  %349 = vmatprep.subr.bf16.mxu0 0
  %350 = vmatpush1.bf16.msra.mxu0 0
  %351 = vmatprep.mubr.bf16.mxu0 0
  %352 = vmatmul.mubr.bf16.gmra.mrb[0].mxu0 %v268
  %v353 = vpop.f32.mrb[0].mxu0
  %v354 = vadd.f32 %v184, %v353
  %v355 = vpop.f32.mrb[0].mxu0
  %v356 = vpop.f32.mrb[0].mxu0
  %v357 = vadd.f32 %v184, %v356
  %v358 = vpop.f32.mrb[0].mxu0
  %359 = vmatprep.mubr.bf16.mxu0 0
  %360 = vmatmul.mubr.bf16.gmra.mrb[0].mxu0 %v271
  %v361 = vpop.f32.mrb[0].mxu0
  %v362 = vadd.f32 %v184, %v361
  %v363 = vpop.f32.mrb[0].mxu0
  %v364 = vpop.f32.mrb[0].mxu0
  %v365 = vadd.f32 %v184, %v364
  %v366 = vpop.f32.mrb[0].mxu0
  %367 = vmatprep.mubr.bf16.mxu0 0
  %368 = vmatmul.mubr.bf16.gmra.mrb[0].mxu0 %v274
  %v369 = vpop.f32.mrb[0].mxu0
  %v370 = vadd.f32 %v184, %v369
  %v371 = vpop.f32.mrb[0].mxu0
  %v372 = vpop.f32.mrb[0].mxu0
  %v373 = vadd.f32 %v184, %v372
  %v374 = vpop.f32.mrb[0].mxu0
  %375 = vmatprep.mubr.bf16.mxu0 0
  %376 = vmatmul.mubr.bf16.gmra.mrb[0].mxu0 %v277
  %v377 = vpop.f32.mrb[0].mxu0
  %v378 = vadd.f32 %v184, %v377
  %v379 = vpop.f32.mrb[0].mxu0
  %v380 = vpop.f32.mrb[0].mxu0
  %v381 = vadd.f32 %v184, %v380
  %v382 = vpop.f32.mrb[0].mxu0
  %383 = vmatprep.mubr.bf16.mxu0 0
  %384 = vmatmul.mubr.bf16.gmra.mrb[0].mxu0 %v280
  %v385 = vpop.f32.mrb[0].mxu0
  %v386 = vadd.f32 %v184, %v385
  %v387 = vpop.f32.mrb[0].mxu0
  %v388 = vpop.f32.mrb[0].mxu0
  %v389 = vadd.f32 %v184, %v388
  %v390 = vpop.f32.mrb[0].mxu0
  %391 = vmatprep.mubr.bf16.mxu0 0
  %392 = vmatmul.mubr.bf16.gmra.mrb[0].mxu0 %v283
  %v393 = vpop.f32.mrb[0].mxu0
  %v394 = vadd.f32 %v184, %v393
  %v395 = vpop.f32.mrb[0].mxu0
  %v396 = vpop.f32.mrb[0].mxu0
  %v397 = vadd.f32 %v184, %v396
  %v398 = vpop.f32.mrb[0].mxu0
  %399 = vmatprep.mubr.bf16.mxu0 0
  %400 = vmatmul.mubr.bf16.gmra.mrb[0].mxu0 %v286
  %v401 = vpop.f32.mrb[0].mxu0
  %v402 = vadd.f32 %v184, %v401
  %v403 = vpop.f32.mrb[0].mxu0
  %v404 = vpop.f32.mrb[0].mxu0
  %v405 = vadd.f32 %v184, %v404
  %v406 = vpop.f32.mrb[0].mxu0
  %407 = vmatprep.mubr.bf16.mxu0 0
  %408 = vmatmul.mubr.bf16.gmra.mrb[0].mxu0 %v289
  %v409 = vpop.f32.mrb[0].mxu0
  %v410 = vadd.f32 %v184, %v409
  %v411 = vpop.f32.mrb[0].mxu0
  %v412 = vpop.f32.mrb[0].mxu0
  %v413 = vadd.f32 %v184, %v412
  %v414 = vpop.f32.mrb[0].mxu0
  %415 = vmatprep.mubr.bf16.mxu0 0
  %416 = vmatmul.mubr.bf16.gmra.mrb[0].mxu0 %v292
  %v417 = vpop.f32.mrb[0].mxu0
  %v418 = vadd.f32 %v184, %v417
  %v419 = vpop.f32.mrb[0].mxu0
  %v420 = vpop.f32.mrb[0].mxu0
  %v421 = vadd.f32 %v184, %v420
  %v422 = vpop.f32.mrb[0].mxu0
  %423 = vmatprep.mubr.bf16.mxu0 0
  %424 = vmatmul.mubr.bf16.gmra.mrb[0].mxu0 %v295
  %v425 = vpop.f32.mrb[0].mxu0
  %v426 = vadd.f32 %v184, %v425
  %v427 = vpop.f32.mrb[0].mxu0
  %v428 = vpop.f32.mrb[0].mxu0
  %v429 = vadd.f32 %v184, %v428
  %v430 = vpop.f32.mrb[0].mxu0
  %431 = vmatprep.mubr.bf16.mxu0 0
  %432 = vmatmul.mubr.bf16.gmra.mrb[0].mxu0 %v298
  %v433 = vpop.f32.mrb[0].mxu0
  %v434 = vadd.f32 %v184, %v433
  %v435 = vpop.f32.mrb[0].mxu0
  %v436 = vpop.f32.mrb[0].mxu0
  %v437 = vadd.f32 %v184, %v436
  %v438 = vpop.f32.mrb[0].mxu0
  %439 = vmatprep.mubr.bf16.mxu0 0
  %440 = vmatmul.mubr.bf16.gmra.mrb[0].mxu0 %v301
  %v441 = vpop.f32.mrb[0].mxu0
  %v442 = vadd.f32 %v184, %v441
  %v443 = vpop.f32.mrb[0].mxu0
  %v444 = vpop.f32.mrb[0].mxu0
  %v445 = vadd.f32 %v184, %v444
  %v446 = vpop.f32.mrb[0].mxu0
  %447 = vmatprep.mubr.bf16.mxu0 0
  %448 = vmatmul.mubr.bf16.gmra.mrb[0].mxu0 %v304
  %v449 = vpop.f32.mrb[0].mxu0
  %v450 = vadd.f32 %v184, %v449
  %v451 = vpop.f32.mrb[0].mxu0
  %v452 = vpop.f32.mrb[0].mxu0
  %v453 = vadd.f32 %v184, %v452
  %v454 = vpop.f32.mrb[0].mxu0
  %455 = vmatprep.mubr.bf16.mxu0 0
  %456 = vmatmul.mubr.bf16.gmra.mrb[0].mxu0 %v307
  %v457 = vpop.f32.mrb[0].mxu0
  %v458 = vadd.f32 %v184, %v457
  %v459 = vpop.f32.mrb[0].mxu0
  %v460 = vpop.f32.mrb[0].mxu0
  %v461 = vadd.f32 %v184, %v460
  %v462 = vpop.f32.mrb[0].mxu0
  %463 = vmatprep.mubr.bf16.mxu0 0
  %464 = vmatmul.mubr.bf16.gmra.mrb[0].mxu0 %v310
  %v465 = vpop.f32.mrb[0].mxu0
  %v466 = vadd.f32 %v184, %v465
  %v467 = vpop.f32.mrb[0].mxu0
  %v468 = vpop.f32.mrb[0].mxu0
  %v469 = vadd.f32 %v184, %v468
  %v470 = vpop.f32.mrb[0].mxu0
  %471 = vmatprep.mubr.bf16.mxu0 0
  %472 = vmatmul.mubr.bf16.gmra.mrb[0].mxu0 %v313
  %v473 = vpop.f32.mrb[0].mxu0
  %v474 = vadd.f32 %v184, %v473
  %v475 = vpop.f32.mrb[0].mxu0
  %v476 = vpop.f32.mrb[0].mxu0
  %v477 = vadd.f32 %v184, %v476
  %v478 = vpop.f32.mrb[0].mxu0
  %479 = vdwg.mxu0
  %v480 = vmax.f32 %v354, 0.0
  %v481 = vmax.f32 %v357, 0.0
  %v482 = vmax.f32 %v362, 0.0
  %v483 = vmax.f32 %v365, 0.0
  %v484 = vmax.f32 %v370, 0.0
  %v485 = vmax.f32 %v373, 0.0
  %v486 = vmax.f32 %v378, 0.0
  %v487 = vmax.f32 %v381, 0.0
  %v488 = vmax.f32 %v386, 0.0
  %v489 = vmax.f32 %v389, 0.0
  %v490 = vmax.f32 %v394, 0.0
  %v491 = vmax.f32 %v397, 0.0
  %v492 = vmax.f32 %v402, 0.0
  %v493 = vmax.f32 %v405, 0.0
  %v494 = vmax.f32 %v410, 0.0
  %v495 = vmax.f32 %v413, 0.0
  %v496 = vmax.f32 %v418, 0.0
  %v497 = vmax.f32 %v421, 0.0
  %v498 = vmax.f32 %v426, 0.0
  %v499 = vmax.f32 %v429, 0.0
  %v500 = vmax.f32 %v434, 0.0
  %v501 = vmax.f32 %v437, 0.0
  %v502 = vmax.f32 %v442, 0.0
  %v503 = vmax.f32 %v445, 0.0
  %v504 = vmax.f32 %v450, 0.0
  %v505 = vmax.f32 %v453, 0.0
  %v506 = vmax.f32 %v458, 0.0
  %v507 = vmax.f32 %v461, 0.0
  %v508 = vmax.f32 %v466, 0.0
  %v509 = vmax.f32 %v469, 0.0
  %v510 = vmax.f32 %v474, 0.0
  %v511 = vmax.f32 %v477, 0.0
  %vm512 = vcmask 203776
  %513 = vst.msk [vmem:[#allocation2] sm:$0xff] %vm512, %v480
  %514 = vst.msk [vmem:[#allocation2 + $0x8] sm:$0xff] %vm512, %v481
  %515 = vst.msk [vmem:[#allocation2 + $0x10] sm:$0xff] %vm512, %v482
  %516 = vst.msk [vmem:[#allocation2 + $0x18] sm:$0xff] %vm512, %v483
  %517 = vst.msk [vmem:[#allocation2 + $0x20] sm:$0xff] %vm512, %v484
  %518 = vst.msk [vmem:[#allocation2 + $0x28] sm:$0xff] %vm512, %v485
  %519 = vst.msk [vmem:[#allocation2 + $0x30] sm:$0xff] %vm512, %v486
  %520 = vst.msk [vmem:[#allocation2 + $0x38] sm:$0xff] %vm512, %v487
  %521 = vst.msk [vmem:[#allocation2 + $0x40] sm:$0xff] %vm512, %v488
  %522 = vst.msk [vmem:[#allocation2 + $0x48] sm:$0xff] %vm512, %v489
  %523 = vst.msk [vmem:[#allocation2 + $0x50] sm:$0xff] %vm512, %v490
  %524 = vst.msk [vmem:[#allocation2 + $0x58] sm:$0xff] %vm512, %v491
  %525 = vst.msk [vmem:[#allocation2 + $0x60] sm:$0xff] %vm512, %v492
  %526 = vst.msk [vmem:[#allocation2 + $0x68] sm:$0xff] %vm512, %v493
  %527 = vst.msk [vmem:[#allocation2 + $0x70] sm:$0xff] %vm512, %v494
  %528 = vst.msk [vmem:[#allocation2 + $0x78] sm:$0xff] %vm512, %v495
  %529 = vst.msk [vmem:[#allocation2 + $0x80] sm:$0xff] %vm512, %v496
  %530 = vst.msk [vmem:[#allocation2 + $0x88] sm:$0xff] %vm512, %v497
  %531 = vst.msk [vmem:[#allocation2 + $0x90] sm:$0xff] %vm512, %v498
  %532 = vst.msk [vmem:[#allocation2 + $0x98] sm:$0xff] %vm512, %v499
  %533 = vst.msk [vmem:[#allocation2 + $0xa0] sm:$0xff] %vm512, %v500
  %534 = vst.msk [vmem:[#allocation2 + $0xa8] sm:$0xff] %vm512, %v501
  %535 = vst.msk [vmem:[#allocation2 + $0xb0] sm:$0xff] %vm512, %v502
  %536 = vst.msk [vmem:[#allocation2 + $0xb8] sm:$0xff] %vm512, %v503
  %537 = vst.msk [vmem:[#allocation2 + $0xc0] sm:$0xff] %vm512, %v504
  %538 = vst.msk [vmem:[#allocation2 + $0xc8] sm:$0xff] %vm512, %v505
  %539 = vst.msk [vmem:[#allocation2 + $0xd0] sm:$0xff] %vm512, %v506
  %540 = vst.msk [vmem:[#allocation2 + $0xd8] sm:$0xff] %vm512, %v507
  %541 = vst.msk [vmem:[#allocation2 + $0xe0] sm:$0xff] %vm512, %v508
  %542 = vst.msk [vmem:[#allocation2 + $0xe8] sm:$0xff] %vm512, %v509
  %543 = vst.msk [vmem:[#allocation2 + $0xf0] sm:$0xff] %vm512, %v510
  %544 = vst.msk [vmem:[#allocation2 + $0xf8] sm:$0xff] %vm512, %v511
  %v545 = vld [vmem:[%s0 + $0x80] sm:$0xf]
  %v546 = vld [vmem:[%s0 + $0x84] sm:$0xf]
  %v547 = vld [vmem:[%s0 + $0x88] sm:$0xf]
  %v548 = vld [vmem:[%s0 + $0x8c] sm:$0xf]
  %v549 = vld [vmem:[%s0 + $0x90] sm:$0xf]
  %v550 = vld [vmem:[%s0 + $0x94] sm:$0xf]
  %v551 = vld [vmem:[%s0 + $0x98] sm:$0xf]
  %v552 = vld [vmem:[%s0 + $0x9c] sm:$0xf]
  %v553 = vld [vmem:[%s0 + $0xa0] sm:$0xf]
  %v554 = vld [vmem:[%s0 + $0xa4] sm:$0xf]
  %v555 = vld [vmem:[%s0 + $0xa8] sm:$0xf]
  %v556 = vld [vmem:[%s0 + $0xac] sm:$0xf]
  %v557 = vld [vmem:[%s0 + $0xb0] sm:$0xf]
  %v558 = vld [vmem:[%s0 + $0xb4] sm:$0xf]
  %v559 = vld [vmem:[%s0 + $0xb8] sm:$0xf]
  %v560 = vld [vmem:[%s0 + $0xbc] sm:$0xf]
  %v561 = vld [vmem:[%s0 + $0xc0] sm:$0xf]
  %v562 = vld [vmem:[%s0 + $0xc4] sm:$0xf]
  %v563 = vld [vmem:[%s0 + $0xc8] sm:$0xf]
  %v564 = vld [vmem:[%s0 + $0xcc] sm:$0xf]
  %v565 = vld [vmem:[%s0 + $0xd0] sm:$0xf]
  %v566 = vld [vmem:[%s0 + $0xd4] sm:$0xf]
  %v567 = vld [vmem:[%s0 + $0xd8] sm:$0xf]
  %v568 = vld [vmem:[%s0 + $0xdc] sm:$0xf]
  %v569 = vld [vmem:[%s0 + $0xe0] sm:$0xf]
  %v570 = vld [vmem:[%s0 + $0xe4] sm:$0xf]
  %v571 = vld [vmem:[%s0 + $0xe8] sm:$0xf]
  %v572 = vld [vmem:[%s0 + $0xec] sm:$0xf]
  %v573 = vld [vmem:[%s0 + $0xf0] sm:$0xf]
  %v574 = vld [vmem:[%s0 + $0xf4] sm:$0xf]
  %v575 = vld [vmem:[%s0 + $0xf8] sm:$0xf]
  %v576 = vld [vmem:[%s0 + $0xfc] sm:$0xf]
  %v609 = vunpack.c.l.b16 %v545
  %v610 = vunpack.c.l.b16 %v546
  %v611 = vunpack.c.l.b16 %v547
  %v612 = vunpack.c.l.b16 %v548
  %v613 = vunpack.c.l.b16 %v549
  %v614 = vunpack.c.l.b16 %v550
  %v615 = vunpack.c.l.b16 %v551
  %v616 = vunpack.c.l.b16 %v552
  %v617 = vunpack.c.l.b16 %v553
  %v618 = vunpack.c.l.b16 %v554
  %v619 = vunpack.c.l.b16 %v555
  %v620 = vunpack.c.l.b16 %v556
  %v621 = vunpack.c.l.b16 %v557
  %v622 = vunpack.c.l.b16 %v558
  %v623 = vunpack.c.l.b16 %v559
  %v624 = vunpack.c.l.b16 %v560
  %v625 = vunpack.c.l.b16 %v561
  %v626 = vunpack.c.l.b16 %v562
  %v627 = vunpack.c.l.b16 %v563
  %v628 = vunpack.c.l.b16 %v564
  %v629 = vunpack.c.l.b16 %v565
  %v630 = vunpack.c.l.b16 %v566
  %v631 = vunpack.c.l.b16 %v567
  %v632 = vunpack.c.l.b16 %v568
  %v633 = vunpack.c.l.b16 %v569
  %v634 = vunpack.c.l.b16 %v570
  %v635 = vunpack.c.l.b16 %v571
  %v636 = vunpack.c.l.b16 %v572
  %v637 = vunpack.c.l.b16 %v573
  %v638 = vunpack.c.l.b16 %v574
  %v639 = vunpack.c.l.b16 %v575
  %v640 = vunpack.c.l.b16 %v576
  %v641 = vpack.c.b16 %v610, %v609
  %v642 = vpack.c.b16 %v612, %v611
  %v643 = vpack.c.b16 %v614, %v613
  %v644 = vpack.c.b16 %v616, %v615
  %v645 = vpack.c.b16 %v618, %v617
  %v646 = vpack.c.b16 %v620, %v619
  %v647 = vpack.c.b16 %v622, %v621
  %v648 = vpack.c.b16 %v624, %v623
  %v649 = vpack.c.b16 %v626, %v625
  %v650 = vpack.c.b16 %v628, %v627
  %v651 = vpack.c.b16 %v630, %v629
  %v652 = vpack.c.b16 %v632, %v631
  %v653 = vpack.c.b16 %v634, %v633
  %v654 = vpack.c.b16 %v636, %v635
  %v655 = vpack.c.b16 %v638, %v637
  %v656 = vpack.c.b16 %v640, %v639
  %v658 = vsel %vm266, %v641, 0
  %v661 = vsel %vm266, %v642, 0
  %v664 = vsel %vm266, %v643, 0
  %v667 = vsel %vm266, %v644, 0
  %v670 = vsel %vm266, %v645, 0
  %v673 = vsel %vm266, %v646, 0
  %v676 = vsel %vm266, %v647, 0
  %v679 = vsel %vm266, %v648, 0
  %v682 = vsel %vm266, %v649, 0
  %v685 = vsel %vm266, %v650, 0
  %v688 = vsel %vm266, %v651, 0
  %v691 = vsel %vm266, %v652, 0
  %v694 = vsel %vm266, %v653, 0
  %v697 = vsel %vm266, %v654, 0
  %v700 = vsel %vm266, %v655, 0
  %v703 = vsel %vm266, %v656, 0
  %705 = vmatprep.subr.bf16.mxu0 0
  %706 = vmatpush1.bf16.msra.mxu0 %v317
  %707 = vmatprep.subr.bf16.mxu0 0
  %708 = vmatpush1.bf16.msra.mxu0 0
  %709 = vmatprep.subr.bf16.mxu0 0
  %710 = vmatpush1.bf16.msra.mxu0 0
  %711 = vmatprep.subr.bf16.mxu0 0
  %712 = vmatpush1.bf16.msra.mxu0 0
  %713 = vmatprep.subr.bf16.mxu0 0
  %714 = vmatpush1.bf16.msra.mxu0 0
  %715 = vmatprep.subr.bf16.mxu0 0
  %716 = vmatpush1.bf16.msra.mxu0 0
  %717 = vmatprep.subr.bf16.mxu0 0
  %718 = vmatpush1.bf16.msra.mxu0 0
  %719 = vmatprep.subr.bf16.mxu0 0
  %720 = vmatpush1.bf16.msra.mxu0 0
  %721 = vmatprep.subr.bf16.mxu0 0
  %722 = vmatpush1.bf16.msra.mxu0 0
  %723 = vmatprep.subr.bf16.mxu0 0
  %724 = vmatpush1.bf16.msra.mxu0 0
  %725 = vmatprep.subr.bf16.mxu0 0
  %726 = vmatpush1.bf16.msra.mxu0 0
  %727 = vmatprep.subr.bf16.mxu0 0
  %728 = vmatpush1.bf16.msra.mxu0 0
  %729 = vmatprep.subr.bf16.mxu0 0
  %730 = vmatpush1.bf16.msra.mxu0 0
  %731 = vmatprep.subr.bf16.mxu0 0
  %732 = vmatpush1.bf16.msra.mxu0 0
  %733 = vmatprep.subr.bf16.mxu0 0
  %734 = vmatpush1.bf16.msra.mxu0 0
  %735 = vmatprep.subr.bf16.mxu0 0
  %736 = vmatpush1.bf16.msra.mxu0 0
  %737 = vmatprep.mubr.bf16.mxu0 0
  %738 = vmatmul.mubr.bf16.gmra.mrb[0].mxu0 %v658
  %v739 = vpop.f32.mrb[0].mxu0
  %v740 = vadd.f32 %v184, %v739
  %v741 = vpop.f32.mrb[0].mxu0
  %v742 = vpop.f32.mrb[0].mxu0
  %v743 = vadd.f32 %v184, %v742
  %v744 = vpop.f32.mrb[0].mxu0
  %745 = vmatprep.mubr.bf16.mxu0 0
  %746 = vmatmul.mubr.bf16.gmra.mrb[0].mxu0 %v661
  %v747 = vpop.f32.mrb[0].mxu0
  %v748 = vadd.f32 %v184, %v747
  %v749 = vpop.f32.mrb[0].mxu0
  %v750 = vpop.f32.mrb[0].mxu0
  %v751 = vadd.f32 %v184, %v750
  %v752 = vpop.f32.mrb[0].mxu0
  %753 = vmatprep.mubr.bf16.mxu0 0
  %754 = vmatmul.mubr.bf16.gmra.mrb[0].mxu0 %v664
  %v755 = vpop.f32.mrb[0].mxu0
  %v756 = vadd.f32 %v184, %v755
  %v757 = vpop.f32.mrb[0].mxu0
  %v758 = vpop.f32.mrb[0].mxu0
  %v759 = vadd.f32 %v184, %v758
  %v760 = vpop.f32.mrb[0].mxu0
  %761 = vmatprep.mubr.bf16.mxu0 0
  %762 = vmatmul.mubr.bf16.gmra.mrb[0].mxu0 %v667
  %v763 = vpop.f32.mrb[0].mxu0
  %v764 = vadd.f32 %v184, %v763
  %v765 = vpop.f32.mrb[0].mxu0
  %v766 = vpop.f32.mrb[0].mxu0
  %v767 = vadd.f32 %v184, %v766
  %v768 = vpop.f32.mrb[0].mxu0
  %769 = vmatprep.mubr.bf16.mxu0 0
  %770 = vmatmul.mubr.bf16.gmra.mrb[0].mxu0 %v670
  %v771 = vpop.f32.mrb[0].mxu0
  %v772 = vadd.f32 %v184, %v771
  %v773 = vpop.f32.mrb[0].mxu0
  %v774 = vpop.f32.mrb[0].mxu0
  %v775 = vadd.f32 %v184, %v774
  %v776 = vpop.f32.mrb[0].mxu0
  %777 = vmatprep.mubr.bf16.mxu0 0
  %778 = vmatmul.mubr.bf16.gmra.mrb[0].mxu0 %v673
  %v779 = vpop.f32.mrb[0].mxu0
  %v780 = vadd.f32 %v184, %v779
  %v781 = vpop.f32.mrb[0].mxu0
  %v782 = vpop.f32.mrb[0].mxu0
  %v783 = vadd.f32 %v184, %v782
  %v784 = vpop.f32.mrb[0].mxu0
  %785 = vmatprep.mubr.bf16.mxu0 0
  %786 = vmatmul.mubr.bf16.gmra.mrb[0].mxu0 %v676
  %v787 = vpop.f32.mrb[0].mxu0
  %v788 = vadd.f32 %v184, %v787
  %v789 = vpop.f32.mrb[0].mxu0
  %v790 = vpop.f32.mrb[0].mxu0
  %v791 = vadd.f32 %v184, %v790
  %v792 = vpop.f32.mrb[0].mxu0
  %793 = vmatprep.mubr.bf16.mxu0 0
  %794 = vmatmul.mubr.bf16.gmra.mrb[0].mxu0 %v679
  %v795 = vpop.f32.mrb[0].mxu0
  %v796 = vadd.f32 %v184, %v795
  %v797 = vpop.f32.mrb[0].mxu0
  %v798 = vpop.f32.mrb[0].mxu0
  %v799 = vadd.f32 %v184, %v798
  %v800 = vpop.f32.mrb[0].mxu0
  %801 = vmatprep.mubr.bf16.mxu0 0
  %802 = vmatmul.mubr.bf16.gmra.mrb[0].mxu0 %v682
  %v803 = vpop.f32.mrb[0].mxu0
  %v804 = vadd.f32 %v184, %v803
  %v805 = vpop.f32.mrb[0].mxu0
  %v806 = vpop.f32.mrb[0].mxu0
  %v807 = vadd.f32 %v184, %v806
  %v808 = vpop.f32.mrb[0].mxu0
  %809 = vmatprep.mubr.bf16.mxu0 0
  %810 = vmatmul.mubr.bf16.gmra.mrb[0].mxu0 %v685
  %v811 = vpop.f32.mrb[0].mxu0
  %v812 = vadd.f32 %v184, %v811
  %v813 = vpop.f32.mrb[0].mxu0
  %v814 = vpop.f32.mrb[0].mxu0
  %v815 = vadd.f32 %v184, %v814
  %v816 = vpop.f32.mrb[0].mxu0
  %817 = vmatprep.mubr.bf16.mxu0 0
  %818 = vmatmul.mubr.bf16.gmra.mrb[0].mxu0 %v688
  %v819 = vpop.f32.mrb[0].mxu0
  %v820 = vadd.f32 %v184, %v819
  %v821 = vpop.f32.mrb[0].mxu0
  %v822 = vpop.f32.mrb[0].mxu0
  %v823 = vadd.f32 %v184, %v822
  %v824 = vpop.f32.mrb[0].mxu0
  %825 = vmatprep.mubr.bf16.mxu0 0
  %826 = vmatmul.mubr.bf16.gmra.mrb[0].mxu0 %v691
  %v827 = vpop.f32.mrb[0].mxu0
  %v828 = vadd.f32 %v184, %v827
  %v829 = vpop.f32.mrb[0].mxu0
  %v830 = vpop.f32.mrb[0].mxu0
  %v831 = vadd.f32 %v184, %v830
  %v832 = vpop.f32.mrb[0].mxu0
  %833 = vmatprep.mubr.bf16.mxu0 0
  %834 = vmatmul.mubr.bf16.gmra.mrb[0].mxu0 %v694
  %v835 = vpop.f32.mrb[0].mxu0
  %v836 = vadd.f32 %v184, %v835
  %v837 = vpop.f32.mrb[0].mxu0
  %v838 = vpop.f32.mrb[0].mxu0
  %v839 = vadd.f32 %v184, %v838
  %v840 = vpop.f32.mrb[0].mxu0
  %841 = vmatprep.mubr.bf16.mxu0 0
  %842 = vmatmul.mubr.bf16.gmra.mrb[0].mxu0 %v697
  %v843 = vpop.f32.mrb[0].mxu0
  %v844 = vadd.f32 %v184, %v843
  %v845 = vpop.f32.mrb[0].mxu0
  %v846 = vpop.f32.mrb[0].mxu0
  %v847 = vadd.f32 %v184, %v846
  %v848 = vpop.f32.mrb[0].mxu0
  %849 = vmatprep.mubr.bf16.mxu0 0
  %850 = vmatmul.mubr.bf16.gmra.mrb[0].mxu0 %v700
  %v851 = vpop.f32.mrb[0].mxu0
  %v852 = vadd.f32 %v184, %v851
  %v853 = vpop.f32.mrb[0].mxu0
  %v854 = vpop.f32.mrb[0].mxu0
  %v855 = vadd.f32 %v184, %v854
  %v856 = vpop.f32.mrb[0].mxu0
  %857 = vmatprep.mubr.bf16.mxu0 0
  %858 = vmatmul.mubr.bf16.gmra.mrb[0].mxu0 %v703
  %v859 = vpop.f32.mrb[0].mxu0
  %v860 = vadd.f32 %v184, %v859
  %v861 = vpop.f32.mrb[0].mxu0
  %v862 = vpop.f32.mrb[0].mxu0
  %v863 = vadd.f32 %v184, %v862
  %v864 = vpop.f32.mrb[0].mxu0
  %865 = vdwg.mxu0
  %v866 = vmax.f32 %v740, 0.0
  %v867 = vmax.f32 %v743, 0.0
  %v868 = vmax.f32 %v748, 0.0
  %v869 = vmax.f32 %v751, 0.0
  %v870 = vmax.f32 %v756, 0.0
  %v871 = vmax.f32 %v759, 0.0
  %v872 = vmax.f32 %v764, 0.0
  %v873 = vmax.f32 %v767, 0.0
  %v874 = vmax.f32 %v772, 0.0
  %v875 = vmax.f32 %v775, 0.0
  %v876 = vmax.f32 %v780, 0.0
  %v877 = vmax.f32 %v783, 0.0
  %v878 = vmax.f32 %v788, 0.0
  %v879 = vmax.f32 %v791, 0.0
  %v880 = vmax.f32 %v796, 0.0
  %v881 = vmax.f32 %v799, 0.0
  %v882 = vmax.f32 %v804, 0.0
  %v883 = vmax.f32 %v807, 0.0
  %v884 = vmax.f32 %v812, 0.0
  %v885 = vmax.f32 %v815, 0.0
  %v886 = vmax.f32 %v820, 0.0
  %v887 = vmax.f32 %v823, 0.0
  %v888 = vmax.f32 %v828, 0.0
  %v889 = vmax.f32 %v831, 0.0
  %v890 = vmax.f32 %v836, 0.0
  %v891 = vmax.f32 %v839, 0.0
  %v892 = vmax.f32 %v844, 0.0
  %v893 = vmax.f32 %v847, 0.0
  %v894 = vmax.f32 %v852, 0.0
  %v895 = vmax.f32 %v855, 0.0
  %v896 = vmax.f32 %v860, 0.0
  %v897 = vmax.f32 %v863, 0.0
  %898 = vst.msk [vmem:[#allocation2 + $0x100] sm:$0xff] %vm512, %v866
  %899 = vst.msk [vmem:[#allocation2 + $0x108] sm:$0xff] %vm512, %v867
  %900 = vst.msk [vmem:[#allocation2 + $0x110] sm:$0xff] %vm512, %v868
  %901 = vst.msk [vmem:[#allocation2 + $0x118] sm:$0xff] %vm512, %v869
  %902 = vst.msk [vmem:[#allocation2 + $0x120] sm:$0xff] %vm512, %v870
  %903 = vst.msk [vmem:[#allocation2 + $0x128] sm:$0xff] %vm512, %v871
  %904 = vst.msk [vmem:[#allocation2 + $0x130] sm:$0xff] %vm512, %v872
  %905 = vst.msk [vmem:[#allocation2 + $0x138] sm:$0xff] %vm512, %v873
  %906 = vst.msk [vmem:[#allocation2 + $0x140] sm:$0xff] %vm512, %v874
  %907 = vst.msk [vmem:[#allocation2 + $0x148] sm:$0xff] %vm512, %v875
  %908 = vst.msk [vmem:[#allocation2 + $0x150] sm:$0xff] %vm512, %v876
  %909 = vst.msk [vmem:[#allocation2 + $0x158] sm:$0xff] %vm512, %v877
  %910 = vst.msk [vmem:[#allocation2 + $0x160] sm:$0xff] %vm512, %v878
  %911 = vst.msk [vmem:[#allocation2 + $0x168] sm:$0xff] %vm512, %v879
  %912 = vst.msk [vmem:[#allocation2 + $0x170] sm:$0xff] %vm512, %v880
  %913 = vst.msk [vmem:[#allocation2 + $0x178] sm:$0xff] %vm512, %v881
  %914 = vst.msk [vmem:[#allocation2 + $0x180] sm:$0xff] %vm512, %v882
  %915 = vst.msk [vmem:[#allocation2 + $0x188] sm:$0xff] %vm512, %v883
  %916 = vst.msk [vmem:[#allocation2 + $0x190] sm:$0xff] %vm512, %v884
  %917 = vst.msk [vmem:[#allocation2 + $0x198] sm:$0xff] %vm512, %v885
  %918 = vst.msk [vmem:[#allocation2 + $0x1a0] sm:$0xff] %vm512, %v886
  %919 = vst.msk [vmem:[#allocation2 + $0x1a8] sm:$0xff] %vm512, %v887
  %920 = vst.msk [vmem:[#allocation2 + $0x1b0] sm:$0xff] %vm512, %v888
  %921 = vst.msk [vmem:[#allocation2 + $0x1b8] sm:$0xff] %vm512, %v889
  %922 = vst.msk [vmem:[#allocation2 + $0x1c0] sm:$0xff] %vm512, %v890
  %923 = vst.msk [vmem:[#allocation2 + $0x1c8] sm:$0xff] %vm512, %v891
  %924 = vst.msk [vmem:[#allocation2 + $0x1d0] sm:$0xff] %vm512, %v892
  %925 = vst.msk [vmem:[#allocation2 + $0x1d8] sm:$0xff] %vm512, %v893
  %926 = vst.msk [vmem:[#allocation2 + $0x1e0] sm:$0xff] %vm512, %v894
  %927 = vst.msk [vmem:[#allocation2 + $0x1e8] sm:$0xff] %vm512, %v895
  %928 = vst.msk [vmem:[#allocation2 + $0x1f0] sm:$0xff] %vm512, %v896
  %929 = vst.msk [vmem:[#allocation2 + $0x1f8] sm:$0xff] %vm512, %v897
  %v930 = vld [vmem:[%s0 + $0x100] sm:$0xf]
  %v931 = vld [vmem:[%s0 + $0x104] sm:$0xf]
  %v932 = vld [vmem:[%s0 + $0x108] sm:$0xf]
  %v933 = vld [vmem:[%s0 + $0x10c] sm:$0xf]
  %v934 = vld [vmem:[%s0 + $0x110] sm:$0xf]
  %v935 = vld [vmem:[%s0 + $0x114] sm:$0xf]
  %v936 = vld [vmem:[%s0 + $0x118] sm:$0xf]
  %v937 = vld [vmem:[%s0 + $0x11c] sm:$0xf]
  %v938 = vld [vmem:[%s0 + $0x120] sm:$0xf]
  %v939 = vld [vmem:[%s0 + $0x124] sm:$0xf]
  %v940 = vld [vmem:[%s0 + $0x128] sm:$0xf]
  %v941 = vld [vmem:[%s0 + $0x12c] sm:$0xf]
  %v942 = vld [vmem:[%s0 + $0x130] sm:$0xf]
  %v943 = vld [vmem:[%s0 + $0x134] sm:$0xf]
  %v944 = vld [vmem:[%s0 + $0x138] sm:$0xf]
  %v945 = vld [vmem:[%s0 + $0x13c] sm:$0xf]
  %v946 = vld [vmem:[%s0 + $0x140] sm:$0xf]
  %v947 = vld [vmem:[%s0 + $0x144] sm:$0xf]
  %v948 = vld [vmem:[%s0 + $0x148] sm:$0xf]
  %v949 = vld [vmem:[%s0 + $0x14c] sm:$0xf]
  %v950 = vld [vmem:[%s0 + $0x150] sm:$0xf]
  %v951 = vld [vmem:[%s0 + $0x154] sm:$0xf]
  %v952 = vld [vmem:[%s0 + $0x158] sm:$0xf]
  %v953 = vld [vmem:[%s0 + $0x15c] sm:$0xf]
  %v954 = vld [vmem:[%s0 + $0x160] sm:$0xf]
  %v955 = vld [vmem:[%s0 + $0x164] sm:$0xf]
  %v956 = vld [vmem:[%s0 + $0x168] sm:$0xf]
  %v957 = vld [vmem:[%s0 + $0x16c] sm:$0xf]
  %v958 = vld [vmem:[%s0 + $0x170] sm:$0xf]
  %v959 = vld [vmem:[%s0 + $0x174] sm:$0xf]
  %v960 = vld [vmem:[%s0 + $0x178] sm:$0xf]
  %v961 = vld [vmem:[%s0 + $0x17c] sm:$0xf]
  %v994 = vunpack.c.l.b16 %v930
  %v995 = vunpack.c.l.b16 %v931
  %v996 = vunpack.c.l.b16 %v932
  %v997 = vunpack.c.l.b16 %v933
  %v998 = vunpack.c.l.b16 %v934
  %v999 = vunpack.c.l.b16 %v935
  %v1000 = vunpack.c.l.b16 %v936
  %v1001 = vunpack.c.l.b16 %v937
  %v1002 = vunpack.c.l.b16 %v938
  %v1003 = vunpack.c.l.b16 %v939
  %v1004 = vunpack.c.l.b16 %v940
  %v1005 = vunpack.c.l.b16 %v941
  %v1006 = vunpack.c.l.b16 %v942
  %v1007 = vunpack.c.l.b16 %v943
  %v1008 = vunpack.c.l.b16 %v944
  %v1009 = vunpack.c.l.b16 %v945
  %v1010 = vunpack.c.l.b16 %v946
  %v1011 = vunpack.c.l.b16 %v947
  %v1012 = vunpack.c.l.b16 %v948
  %v1013 = vunpack.c.l.b16 %v949
  %v1014 = vunpack.c.l.b16 %v950
  %v1015 = vunpack.c.l.b16 %v951
  %v1016 = vunpack.c.l.b16 %v952
  %v1017 = vunpack.c.l.b16 %v953
  %v1018 = vunpack.c.l.b16 %v954
  %v1019 = vunpack.c.l.b16 %v955
  %v1020 = vunpack.c.l.b16 %v956
  %v1021 = vunpack.c.l.b16 %v957
  %v1022 = vunpack.c.l.b16 %v958
  %v1023 = vunpack.c.l.b16 %v959
  %v1024 = vunpack.c.l.b16 %v960
  %v1025 = vunpack.c.l.b16 %v961
  %v1026 = vpack.c.b16 %v995, %v994
  %v1027 = vpack.c.b16 %v997, %v996
  %v1028 = vpack.c.b16 %v999, %v998
  %v1029 = vpack.c.b16 %v1001, %v1000
  %v1030 = vpack.c.b16 %v1003, %v1002
  %v1031 = vpack.c.b16 %v1005, %v1004
  %v1032 = vpack.c.b16 %v1007, %v1006
  %v1033 = vpack.c.b16 %v1009, %v1008
  %v1034 = vpack.c.b16 %v1011, %v1010
  %v1035 = vpack.c.b16 %v1013, %v1012
  %v1036 = vpack.c.b16 %v1015, %v1014
  %v1037 = vpack.c.b16 %v1017, %v1016
  %v1038 = vpack.c.b16 %v1019, %v1018
  %v1039 = vpack.c.b16 %v1021, %v1020
  %v1040 = vpack.c.b16 %v1023, %v1022
  %v1041 = vpack.c.b16 %v1025, %v1024
  %v1043 = vsel %vm266, %v1026, 0
  %v1046 = vsel %vm266, %v1027, 0
  %v1049 = vsel %vm266, %v1028, 0
  %v1052 = vsel %vm266, %v1029, 0
  %v1055 = vsel %vm266, %v1030, 0
  %v1058 = vsel %vm266, %v1031, 0
  %v1061 = vsel %vm266, %v1032, 0
  %v1064 = vsel %vm266, %v1033, 0
  %v1067 = vsel %vm266, %v1034, 0
  %v1070 = vsel %vm266, %v1035, 0
  %v1073 = vsel %vm266, %v1036, 0
  %v1076 = vsel %vm266, %v1037, 0
  %v1079 = vsel %vm266, %v1038, 0
  %v1082 = vsel %vm266, %v1039, 0
  %v1085 = vsel %vm266, %v1040, 0
  %v1088 = vsel %vm266, %v1041, 0
  %1090 = vmatprep.subr.bf16.mxu0 0
  %1091 = vmatpush1.bf16.msra.mxu0 %v317
  %1092 = vmatprep.subr.bf16.mxu0 0
  %1093 = vmatpush1.bf16.msra.mxu0 0
  %1094 = vmatprep.subr.bf16.mxu0 0
  %1095 = vmatpush1.bf16.msra.mxu0 0
  %1096 = vmatprep.subr.bf16.mxu0 0
  %1097 = vmatpush1.bf16.msra.mxu0 0
  %1098 = vmatprep.subr.bf16.mxu0 0
  %1099 = vmatpush1.bf16.msra.mxu0 0
  %1100 = vmatprep.subr.bf16.mxu0 0
  %1101 = vmatpush1.bf16.msra.mxu0 0
  %1102 = vmatprep.subr.bf16.mxu0 0
  %1103 = vmatpush1.bf16.msra.mxu0 0
  %1104 = vmatprep.subr.bf16.mxu0 0
  %1105 = vmatpush1.bf16.msra.mxu0 0
  %1106 = vmatprep.subr.bf16.mxu0 0
  %1107 = vmatpush1.bf16.msra.mxu0 0
  %1108 = vmatprep.subr.bf16.mxu0 0
  %1109 = vmatpush1.bf16.msra.mxu0 0
  %1110 = vmatprep.subr.bf16.mxu0 0
  %1111 = vmatpush1.bf16.msra.mxu0 0
  %1112 = vmatprep.subr.bf16.mxu0 0
  %1113 = vmatpush1.bf16.msra.mxu0 0
  %1114 = vmatprep.subr.bf16.mxu0 0
  %1115 = vmatpush1.bf16.msra.mxu0 0
  %1116 = vmatprep.subr.bf16.mxu0 0
  %1117 = vmatpush1.bf16.msra.mxu0 0
  %1118 = vmatprep.subr.bf16.mxu0 0
  %1119 = vmatpush1.bf16.msra.mxu0 0
  %1120 = vmatprep.subr.bf16.mxu0 0
  %1121 = vmatpush1.bf16.msra.mxu0 0
  %1122 = vmatprep.mubr.bf16.mxu0 0
  %1123 = vmatmul.mubr.bf16.gmra.mrb[0].mxu0 %v1043
  %v1124 = vpop.f32.mrb[0].mxu0
  %v1125 = vadd.f32 %v184, %v1124
  %v1126 = vpop.f32.mrb[0].mxu0
  %v1127 = vpop.f32.mrb[0].mxu0
  %v1128 = vadd.f32 %v184, %v1127
  %v1129 = vpop.f32.mrb[0].mxu0
  %1130 = vmatprep.mubr.bf16.mxu0 0
  %1131 = vmatmul.mubr.bf16.gmra.mrb[0].mxu0 %v1046
  %v1132 = vpop.f32.mrb[0].mxu0
  %v1133 = vadd.f32 %v184, %v1132
  %v1134 = vpop.f32.mrb[0].mxu0
  %v1135 = vpop.f32.mrb[0].mxu0
  %v1136 = vadd.f32 %v184, %v1135
  %v1137 = vpop.f32.mrb[0].mxu0
  %1138 = vmatprep.mubr.bf16.mxu0 0
  %1139 = vmatmul.mubr.bf16.gmra.mrb[0].mxu0 %v1049
  %v1140 = vpop.f32.mrb[0].mxu0
  %v1141 = vadd.f32 %v184, %v1140
  %v1142 = vpop.f32.mrb[0].mxu0
  %v1143 = vpop.f32.mrb[0].mxu0
  %v1144 = vadd.f32 %v184, %v1143
  %v1145 = vpop.f32.mrb[0].mxu0
  %1146 = vmatprep.mubr.bf16.mxu0 0
  %1147 = vmatmul.mubr.bf16.gmra.mrb[0].mxu0 %v1052
  %v1148 = vpop.f32.mrb[0].mxu0
  %v1149 = vadd.f32 %v184, %v1148
  %v1150 = vpop.f32.mrb[0].mxu0
  %v1151 = vpop.f32.mrb[0].mxu0
  %v1152 = vadd.f32 %v184, %v1151
  %v1153 = vpop.f32.mrb[0].mxu0
  %1154 = vmatprep.mubr.bf16.mxu0 0
  %1155 = vmatmul.mubr.bf16.gmra.mrb[0].mxu0 %v1055
  %v1156 = vpop.f32.mrb[0].mxu0
  %v1157 = vadd.f32 %v184, %v1156
  %v1158 = vpop.f32.mrb[0].mxu0
  %v1159 = vpop.f32.mrb[0].mxu0
  %v1160 = vadd.f32 %v184, %v1159
  %v1161 = vpop.f32.mrb[0].mxu0
  %1162 = vmatprep.mubr.bf16.mxu0 0
  %1163 = vmatmul.mubr.bf16.gmra.mrb[0].mxu0 %v1058
  %v1164 = vpop.f32.mrb[0].mxu0
  %v1165 = vadd.f32 %v184, %v1164
  %v1166 = vpop.f32.mrb[0].mxu0
  %v1167 = vpop.f32.mrb[0].mxu0
  %v1168 = vadd.f32 %v184, %v1167
  %v1169 = vpop.f32.mrb[0].mxu0
  %1170 = vmatprep.mubr.bf16.mxu0 0
  %1171 = vmatmul.mubr.bf16.gmra.mrb[0].mxu0 %v1061
  %v1172 = vpop.f32.mrb[0].mxu0
  %v1173 = vadd.f32 %v184, %v1172
  %v1174 = vpop.f32.mrb[0].mxu0
  %v1175 = vpop.f32.mrb[0].mxu0
  %v1176 = vadd.f32 %v184, %v1175
  %v1177 = vpop.f32.mrb[0].mxu0
  %1178 = vmatprep.mubr.bf16.mxu0 0
  %1179 = vmatmul.mubr.bf16.gmra.mrb[0].mxu0 %v1064
  %v1180 = vpop.f32.mrb[0].mxu0
  %v1181 = vadd.f32 %v184, %v1180
  %v1182 = vpop.f32.mrb[0].mxu0
  %v1183 = vpop.f32.mrb[0].mxu0
  %v1184 = vadd.f32 %v184, %v1183
  %v1185 = vpop.f32.mrb[0].mxu0
  %1186 = vmatprep.mubr.bf16.mxu0 0
  %1187 = vmatmul.mubr.bf16.gmra.mrb[0].mxu0 %v1067
  %v1188 = vpop.f32.mrb[0].mxu0
  %v1189 = vadd.f32 %v184, %v1188
  %v1190 = vpop.f32.mrb[0].mxu0
  %v1191 = vpop.f32.mrb[0].mxu0
  %v1192 = vadd.f32 %v184, %v1191
  %v1193 = vpop.f32.mrb[0].mxu0
  %1194 = vmatprep.mubr.bf16.mxu0 0
  %1195 = vmatmul.mubr.bf16.gmra.mrb[0].mxu0 %v1070
  %v1196 = vpop.f32.mrb[0].mxu0
  %v1197 = vadd.f32 %v184, %v1196
  %v1198 = vpop.f32.mrb[0].mxu0
  %v1199 = vpop.f32.mrb[0].mxu0
  %v1200 = vadd.f32 %v184, %v1199
  %v1201 = vpop.f32.mrb[0].mxu0
  %1202 = vmatprep.mubr.bf16.mxu0 0
  %1203 = vmatmul.mubr.bf16.gmra.mrb[0].mxu0 %v1073
  %v1204 = vpop.f32.mrb[0].mxu0
  %v1205 = vadd.f32 %v184, %v1204
  %v1206 = vpop.f32.mrb[0].mxu0
  %v1207 = vpop.f32.mrb[0].mxu0
  %v1208 = vadd.f32 %v184, %v1207
  %v1209 = vpop.f32.mrb[0].mxu0
  %1210 = vmatprep.mubr.bf16.mxu0 0
  %1211 = vmatmul.mubr.bf16.gmra.mrb[0].mxu0 %v1076
  %v1212 = vpop.f32.mrb[0].mxu0
  %v1213 = vadd.f32 %v184, %v1212
  %v1214 = vpop.f32.mrb[0].mxu0
  %v1215 = vpop.f32.mrb[0].mxu0
  %v1216 = vadd.f32 %v184, %v1215
  %v1217 = vpop.f32.mrb[0].mxu0
  %1218 = vmatprep.mubr.bf16.mxu0 0
  %1219 = vmatmul.mubr.bf16.gmra.mrb[0].mxu0 %v1079
  %v1220 = vpop.f32.mrb[0].mxu0
  %v1221 = vadd.f32 %v184, %v1220
  %v1222 = vpop.f32.mrb[0].mxu0
  %v1223 = vpop.f32.mrb[0].mxu0
  %v1224 = vadd.f32 %v184, %v1223
  %v1225 = vpop.f32.mrb[0].mxu0
  %1226 = vmatprep.mubr.bf16.mxu0 0
  %1227 = vmatmul.mubr.bf16.gmra.mrb[0].mxu0 %v1082
  %v1228 = vpop.f32.mrb[0].mxu0
  %v1229 = vadd.f32 %v184, %v1228
  %v1230 = vpop.f32.mrb[0].mxu0
  %v1231 = vpop.f32.mrb[0].mxu0
  %v1232 = vadd.f32 %v184, %v1231
  %v1233 = vpop.f32.mrb[0].mxu0
  %1234 = vmatprep.mubr.bf16.mxu0 0
  %1235 = vmatmul.mubr.bf16.gmra.mrb[0].mxu0 %v1085
  %v1236 = vpop.f32.mrb[0].mxu0
  %v1237 = vadd.f32 %v184, %v1236
  %v1238 = vpop.f32.mrb[0].mxu0
  %v1239 = vpop.f32.mrb[0].mxu0
  %v1240 = vadd.f32 %v184, %v1239
  %v1241 = vpop.f32.mrb[0].mxu0
  %1242 = vmatprep.mubr.bf16.mxu0 0
  %1243 = vmatmul.mubr.bf16.gmra.mrb[0].mxu0 %v1088
  %v1244 = vpop.f32.mrb[0].mxu0
  %v1245 = vadd.f32 %v184, %v1244
  %v1246 = vpop.f32.mrb[0].mxu0
  %v1247 = vpop.f32.mrb[0].mxu0
  %v1248 = vadd.f32 %v184, %v1247
  %v1249 = vpop.f32.mrb[0].mxu0
  %1250 = vdwg.mxu0
  %v1251 = vmax.f32 %v1125, 0.0
  %v1252 = vmax.f32 %v1128, 0.0
  %v1253 = vmax.f32 %v1133, 0.0
  %v1254 = vmax.f32 %v1136, 0.0
  %v1255 = vmax.f32 %v1141, 0.0
  %v1256 = vmax.f32 %v1144, 0.0
  %v1257 = vmax.f32 %v1149, 0.0
  %v1258 = vmax.f32 %v1152, 0.0
  %v1259 = vmax.f32 %v1157, 0.0
  %v1260 = vmax.f32 %v1160, 0.0
  %v1261 = vmax.f32 %v1165, 0.0
  %v1262 = vmax.f32 %v1168, 0.0
  %v1263 = vmax.f32 %v1173, 0.0
  %v1264 = vmax.f32 %v1176, 0.0
  %v1265 = vmax.f32 %v1181, 0.0
  %v1266 = vmax.f32 %v1184, 0.0
  %v1267 = vmax.f32 %v1189, 0.0
  %v1268 = vmax.f32 %v1192, 0.0
  %v1269 = vmax.f32 %v1197, 0.0
  %v1270 = vmax.f32 %v1200, 0.0
  %v1271 = vmax.f32 %v1205, 0.0
  %v1272 = vmax.f32 %v1208, 0.0
  %v1273 = vmax.f32 %v1213, 0.0
  %v1274 = vmax.f32 %v1216, 0.0
  %v1275 = vmax.f32 %v1221, 0.0
  %v1276 = vmax.f32 %v1224, 0.0
  %v1277 = vmax.f32 %v1229, 0.0
  %v1278 = vmax.f32 %v1232, 0.0
  %v1279 = vmax.f32 %v1237, 0.0
  %v1280 = vmax.f32 %v1240, 0.0
  %v1281 = vmax.f32 %v1245, 0.0
  %v1282 = vmax.f32 %v1248, 0.0
  %1283 = vst.msk [vmem:[#allocation2 + $0x200] sm:$0xff] %vm512, %v1251
  %1284 = vst.msk [vmem:[#allocation2 + $0x208] sm:$0xff] %vm512, %v1252
  %1285 = vst.msk [vmem:[#allocation2 + $0x210] sm:$0xff] %vm512, %v1253
  %1286 = vst.msk [vmem:[#allocation2 + $0x218] sm:$0xff] %vm512, %v1254
  %1287 = vst.msk [vmem:[#allocation2 + $0x220] sm:$0xff] %vm512, %v1255
  %1288 = vst.msk [vmem:[#allocation2 + $0x228] sm:$0xff] %vm512, %v1256
  %1289 = vst.msk [vmem:[#allocation2 + $0x230] sm:$0xff] %vm512, %v1257
  %1290 = vst.msk [vmem:[#allocation2 + $0x238] sm:$0xff] %vm512, %v1258
  %1291 = vst.msk [vmem:[#allocation2 + $0x240] sm:$0xff] %vm512, %v1259
  %1292 = vst.msk [vmem:[#allocation2 + $0x248] sm:$0xff] %vm512, %v1260
  %1293 = vst.msk [vmem:[#allocation2 + $0x250] sm:$0xff] %vm512, %v1261
  %1294 = vst.msk [vmem:[#allocation2 + $0x258] sm:$0xff] %vm512, %v1262
  %1295 = vst.msk [vmem:[#allocation2 + $0x260] sm:$0xff] %vm512, %v1263
  %1296 = vst.msk [vmem:[#allocation2 + $0x268] sm:$0xff] %vm512, %v1264
  %1297 = vst.msk [vmem:[#allocation2 + $0x270] sm:$0xff] %vm512, %v1265
  %1298 = vst.msk [vmem:[#allocation2 + $0x278] sm:$0xff] %vm512, %v1266
  %1299 = vst.msk [vmem:[#allocation2 + $0x280] sm:$0xff] %vm512, %v1267
  %1300 = vst.msk [vmem:[#allocation2 + $0x288] sm:$0xff] %vm512, %v1268
  %1301 = vst.msk [vmem:[#allocation2 + $0x290] sm:$0xff] %vm512, %v1269
  %1302 = vst.msk [vmem:[#allocation2 + $0x298] sm:$0xff] %vm512, %v1270
  %1303 = vst.msk [vmem:[#allocation2 + $0x2a0] sm:$0xff] %vm512, %v1271
  %1304 = vst.msk [vmem:[#allocation2 + $0x2a8] sm:$0xff] %vm512, %v1272
  %1305 = vst.msk [vmem:[#allocation2 + $0x2b0] sm:$0xff] %vm512, %v1273
  %1306 = vst.msk [vmem:[#allocation2 + $0x2b8] sm:$0xff] %vm512, %v1274
  %1307 = vst.msk [vmem:[#allocation2 + $0x2c0] sm:$0xff] %vm512, %v1275
  %1308 = vst.msk [vmem:[#allocation2 + $0x2c8] sm:$0xff] %vm512, %v1276
  %1309 = vst.msk [vmem:[#allocation2 + $0x2d0] sm:$0xff] %vm512, %v1277
  %1310 = vst.msk [vmem:[#allocation2 + $0x2d8] sm:$0xff] %vm512, %v1278
  %1311 = vst.msk [vmem:[#allocation2 + $0x2e0] sm:$0xff] %vm512, %v1279
  %1312 = vst.msk [vmem:[#allocation2 + $0x2e8] sm:$0xff] %vm512, %v1280
  %1313 = vst.msk [vmem:[#allocation2 + $0x2f0] sm:$0xff] %vm512, %v1281
  %1314 = vst.msk [vmem:[#allocation2 + $0x2f8] sm:$0xff] %vm512, %v1282
  %v1315 = vld [vmem:[%s0 + $0x180] sm:$0xf]
  %v1316 = vld [vmem:[%s0 + $0x184] sm:$0xf]
  %v1317 = vld [vmem:[%s0 + $0x188] sm:$0xf]
  %v1318 = vld [vmem:[%s0 + $0x18c] sm:$0xf]
  %v1319 = vld [vmem:[%s0 + $0x190] sm:$0xf]
  %v1320 = vld [vmem:[%s0 + $0x194] sm:$0xf]
  %v1321 = vld [vmem:[%s0 + $0x198] sm:$0xf]
  %v1322 = vld [vmem:[%s0 + $0x19c] sm:$0xf]
  %v1323 = vld [vmem:[%s0 + $0x1a0] sm:$0xf]
  %v1324 = vld [vmem:[%s0 + $0x1a4] sm:$0xf]
  %v1325 = vld [vmem:[%s0 + $0x1a8] sm:$0xf]
  %v1326 = vld [vmem:[%s0 + $0x1ac] sm:$0xf]
  %v1327 = vld [vmem:[%s0 + $0x1b0] sm:$0xf]
  %v1328 = vld [vmem:[%s0 + $0x1b4] sm:$0xf]
  %v1329 = vld [vmem:[%s0 + $0x1b8] sm:$0xf]
  %v1330 = vld [vmem:[%s0 + $0x1bc] sm:$0xf]
  %v1331 = vld [vmem:[%s0 + $0x1c0] sm:$0xf]
  %v1332 = vld [vmem:[%s0 + $0x1c4] sm:$0xf]
  %v1333 = vld [vmem:[%s0 + $0x1c8] sm:$0xf]
  %v1334 = vld [vmem:[%s0 + $0x1cc] sm:$0xf]
  %v1335 = vld [vmem:[%s0 + $0x1d0] sm:$0xf]
  %v1336 = vld [vmem:[%s0 + $0x1d4] sm:$0xf]
  %v1337 = vld [vmem:[%s0 + $0x1d8] sm:$0xf]
  %v1338 = vld [vmem:[%s0 + $0x1dc] sm:$0xf]
  %v1339 = vld [vmem:[%s0 + $0x1e0] sm:$0xf]
  %v1340 = vld [vmem:[%s0 + $0x1e4] sm:$0xf]
  %v1341 = vld [vmem:[%s0 + $0x1e8] sm:$0xf]
  %v1342 = vld [vmem:[%s0 + $0x1ec] sm:$0xf]
  %v1343 = vld [vmem:[%s0 + $0x1f0] sm:$0xf]
  %v1344 = vld [vmem:[%s0 + $0x1f4] sm:$0xf]
  %v1345 = vld [vmem:[%s0 + $0x1f8] sm:$0xf]
  %v1346 = vld [vmem:[%s0 + $0x1fc] sm:$0xf]
  %v1379 = vunpack.c.l.b16 %v1315
  %v1380 = vunpack.c.l.b16 %v1316
  %v1381 = vunpack.c.l.b16 %v1317
  %v1382 = vunpack.c.l.b16 %v1318
  %v1383 = vunpack.c.l.b16 %v1319
  %v1384 = vunpack.c.l.b16 %v1320
  %v1385 = vunpack.c.l.b16 %v1321
  %v1386 = vunpack.c.l.b16 %v1322
  %v1387 = vunpack.c.l.b16 %v1323
  %v1388 = vunpack.c.l.b16 %v1324
  %v1389 = vunpack.c.l.b16 %v1325
  %v1390 = vunpack.c.l.b16 %v1326
  %v1391 = vunpack.c.l.b16 %v1327
  %v1392 = vunpack.c.l.b16 %v1328
  %v1393 = vunpack.c.l.b16 %v1329
  %v1394 = vunpack.c.l.b16 %v1330
  %v1395 = vunpack.c.l.b16 %v1331
  %v1396 = vunpack.c.l.b16 %v1332
  %v1397 = vunpack.c.l.b16 %v1333
  %v1398 = vunpack.c.l.b16 %v1334
  %v1399 = vunpack.c.l.b16 %v1335
  %v1400 = vunpack.c.l.b16 %v1336
  %v1401 = vunpack.c.l.b16 %v1337
  %v1402 = vunpack.c.l.b16 %v1338
  %v1403 = vunpack.c.l.b16 %v1339
  %v1404 = vunpack.c.l.b16 %v1340
  %v1405 = vunpack.c.l.b16 %v1341
  %v1406 = vunpack.c.l.b16 %v1342
  %v1407 = vunpack.c.l.b16 %v1343
  %v1408 = vunpack.c.l.b16 %v1344
  %v1409 = vunpack.c.l.b16 %v1345
  %v1410 = vunpack.c.l.b16 %v1346
  %v1411 = vpack.c.b16 %v1380, %v1379
  %v1412 = vpack.c.b16 %v1382, %v1381
  %v1413 = vpack.c.b16 %v1384, %v1383
  %v1414 = vpack.c.b16 %v1386, %v1385
  %v1415 = vpack.c.b16 %v1388, %v1387
  %v1416 = vpack.c.b16 %v1390, %v1389
  %v1417 = vpack.c.b16 %v1392, %v1391
  %v1418 = vpack.c.b16 %v1394, %v1393
  %v1419 = vpack.c.b16 %v1396, %v1395
  %v1420 = vpack.c.b16 %v1398, %v1397
  %v1421 = vpack.c.b16 %v1400, %v1399
  %v1422 = vpack.c.b16 %v1402, %v1401
  %v1423 = vpack.c.b16 %v1404, %v1403
  %v1424 = vpack.c.b16 %v1406, %v1405
  %v1425 = vpack.c.b16 %v1408, %v1407
  %v1426 = vpack.c.b16 %v1410, %v1409
  %v1428 = vsel %vm266, %v1411, 0
  %v1431 = vsel %vm266, %v1412, 0
  %v1434 = vsel %vm266, %v1413, 0
  %v1437 = vsel %vm266, %v1414, 0
  %v1440 = vsel %vm266, %v1415, 0
  %v1443 = vsel %vm266, %v1416, 0
  %v1446 = vsel %vm266, %v1417, 0
  %v1449 = vsel %vm266, %v1418, 0
  %v1452 = vsel %vm266, %v1419, 0
  %v1455 = vsel %vm266, %v1420, 0
  %v1458 = vsel %vm266, %v1421, 0
  %v1461 = vsel %vm266, %v1422, 0
  %v1464 = vsel %vm266, %v1423, 0
  %v1467 = vsel %vm266, %v1424, 0
  %v1470 = vsel %vm266, %v1425, 0
  %v1473 = vsel %vm266, %v1426, 0
  %1475 = vmatprep.subr.bf16.mxu0 0
  %1476 = vmatpush1.bf16.msra.mxu0 %v317
  %1477 = vmatprep.subr.bf16.mxu0 0
  %1478 = vmatpush1.bf16.msra.mxu0 0
  %1479 = vmatprep.subr.bf16.mxu0 0
  %1480 = vmatpush1.bf16.msra.mxu0 0
  %1481 = vmatprep.subr.bf16.mxu0 0
  %1482 = vmatpush1.bf16.msra.mxu0 0
  %1483 = vmatprep.subr.bf16.mxu0 0
  %1484 = vmatpush1.bf16.msra.mxu0 0
  %1485 = vmatprep.subr.bf16.mxu0 0
  %1486 = vmatpush1.bf16.msra.mxu0 0
  %1487 = vmatprep.subr.bf16.mxu0 0
  %1488 = vmatpush1.bf16.msra.mxu0 0
  %1489 = vmatprep.subr.bf16.mxu0 0
  %1490 = vmatpush1.bf16.msra.mxu0 0
  %1491 = vmatprep.subr.bf16.mxu0 0
  %1492 = vmatpush1.bf16.msra.mxu0 0
  %1493 = vmatprep.subr.bf16.mxu0 0
  %1494 = vmatpush1.bf16.msra.mxu0 0
  %1495 = vmatprep.subr.bf16.mxu0 0
  %1496 = vmatpush1.bf16.msra.mxu0 0
  %1497 = vmatprep.subr.bf16.mxu0 0
  %1498 = vmatpush1.bf16.msra.mxu0 0
  %1499 = vmatprep.subr.bf16.mxu0 0
  %1500 = vmatpush1.bf16.msra.mxu0 0
  %1501 = vmatprep.subr.bf16.mxu0 0
  %1502 = vmatpush1.bf16.msra.mxu0 0
  %1503 = vmatprep.subr.bf16.mxu0 0
  %1504 = vmatpush1.bf16.msra.mxu0 0
  %1505 = vmatprep.subr.bf16.mxu0 0
  %1506 = vmatpush1.bf16.msra.mxu0 0
  %1507 = vmatprep.mubr.bf16.mxu0 0
  %1508 = vmatmul.mubr.bf16.gmra.mrb[0].mxu0 %v1428
  %v1509 = vpop.f32.mrb[0].mxu0
  %v1510 = vadd.f32 %v184, %v1509
  %v1511 = vpop.f32.mrb[0].mxu0
  %v1512 = vpop.f32.mrb[0].mxu0
  %v1513 = vadd.f32 %v184, %v1512
  %v1514 = vpop.f32.mrb[0].mxu0
  %1515 = vmatprep.mubr.bf16.mxu0 0
  %1516 = vmatmul.mubr.bf16.gmra.mrb[0].mxu0 %v1431
  %v1517 = vpop.f32.mrb[0].mxu0
  %v1518 = vadd.f32 %v184, %v1517
  %v1519 = vpop.f32.mrb[0].mxu0
  %v1520 = vpop.f32.mrb[0].mxu0
  %v1521 = vadd.f32 %v184, %v1520
  %v1522 = vpop.f32.mrb[0].mxu0
  %1523 = vmatprep.mubr.bf16.mxu0 0
  %1524 = vmatmul.mubr.bf16.gmra.mrb[0].mxu0 %v1434
  %v1525 = vpop.f32.mrb[0].mxu0
  %v1526 = vadd.f32 %v184, %v1525
  %v1527 = vpop.f32.mrb[0].mxu0
  %v1528 = vpop.f32.mrb[0].mxu0
  %v1529 = vadd.f32 %v184, %v1528
  %v1530 = vpop.f32.mrb[0].mxu0
  %1531 = vmatprep.mubr.bf16.mxu0 0
  %1532 = vmatmul.mubr.bf16.gmra.mrb[0].mxu0 %v1437
  %v1533 = vpop.f32.mrb[0].mxu0
  %v1534 = vadd.f32 %v184, %v1533
  %v1535 = vpop.f32.mrb[0].mxu0
  %v1536 = vpop.f32.mrb[0].mxu0
  %v1537 = vadd.f32 %v184, %v1536
  %v1538 = vpop.f32.mrb[0].mxu0
  %1539 = vmatprep.mubr.bf16.mxu0 0
  %1540 = vmatmul.mubr.bf16.gmra.mrb[0].mxu0 %v1440
  %v1541 = vpop.f32.mrb[0].mxu0
  %v1542 = vadd.f32 %v184, %v1541
  %v1543 = vpop.f32.mrb[0].mxu0
  %v1544 = vpop.f32.mrb[0].mxu0
  %v1545 = vadd.f32 %v184, %v1544
  %v1546 = vpop.f32.mrb[0].mxu0
  %1547 = vmatprep.mubr.bf16.mxu0 0
  %1548 = vmatmul.mubr.bf16.gmra.mrb[0].mxu0 %v1443
  %v1549 = vpop.f32.mrb[0].mxu0
  %v1550 = vadd.f32 %v184, %v1549
  %v1551 = vpop.f32.mrb[0].mxu0
  %v1552 = vpop.f32.mrb[0].mxu0
  %v1553 = vadd.f32 %v184, %v1552
  %v1554 = vpop.f32.mrb[0].mxu0
  %1555 = vmatprep.mubr.bf16.mxu0 0
  %1556 = vmatmul.mubr.bf16.gmra.mrb[0].mxu0 %v1446
  %v1557 = vpop.f32.mrb[0].mxu0
  %v1558 = vadd.f32 %v184, %v1557
  %v1559 = vpop.f32.mrb[0].mxu0
  %v1560 = vpop.f32.mrb[0].mxu0
  %v1561 = vadd.f32 %v184, %v1560
  %v1562 = vpop.f32.mrb[0].mxu0
  %1563 = vmatprep.mubr.bf16.mxu0 0
  %1564 = vmatmul.mubr.bf16.gmra.mrb[0].mxu0 %v1449
  %v1565 = vpop.f32.mrb[0].mxu0
  %v1566 = vadd.f32 %v184, %v1565
  %v1567 = vpop.f32.mrb[0].mxu0
  %v1568 = vpop.f32.mrb[0].mxu0
  %v1569 = vadd.f32 %v184, %v1568
  %v1570 = vpop.f32.mrb[0].mxu0
  %1571 = vmatprep.mubr.bf16.mxu0 0
  %1572 = vmatmul.mubr.bf16.gmra.mrb[0].mxu0 %v1452
  %v1573 = vpop.f32.mrb[0].mxu0
  %v1574 = vadd.f32 %v184, %v1573
  %v1575 = vpop.f32.mrb[0].mxu0
  %v1576 = vpop.f32.mrb[0].mxu0
  %v1577 = vadd.f32 %v184, %v1576
  %v1578 = vpop.f32.mrb[0].mxu0
  %1579 = vmatprep.mubr.bf16.mxu0 0
  %1580 = vmatmul.mubr.bf16.gmra.mrb[0].mxu0 %v1455
  %v1581 = vpop.f32.mrb[0].mxu0
  %v1582 = vadd.f32 %v184, %v1581
  %v1583 = vpop.f32.mrb[0].mxu0
  %v1584 = vpop.f32.mrb[0].mxu0
  %v1585 = vadd.f32 %v184, %v1584
  %v1586 = vpop.f32.mrb[0].mxu0
  %1587 = vmatprep.mubr.bf16.mxu0 0
  %1588 = vmatmul.mubr.bf16.gmra.mrb[0].mxu0 %v1458
  %v1589 = vpop.f32.mrb[0].mxu0
  %v1590 = vadd.f32 %v184, %v1589
  %v1591 = vpop.f32.mrb[0].mxu0
  %v1592 = vpop.f32.mrb[0].mxu0
  %v1593 = vadd.f32 %v184, %v1592
  %v1594 = vpop.f32.mrb[0].mxu0
  %1595 = vmatprep.mubr.bf16.mxu0 0
  %1596 = vmatmul.mubr.bf16.gmra.mrb[0].mxu0 %v1461
  %v1597 = vpop.f32.mrb[0].mxu0
  %v1598 = vadd.f32 %v184, %v1597
  %v1599 = vpop.f32.mrb[0].mxu0
  %v1600 = vpop.f32.mrb[0].mxu0
  %v1601 = vadd.f32 %v184, %v1600
  %v1602 = vpop.f32.mrb[0].mxu0
  %1603 = vmatprep.mubr.bf16.mxu0 0
  %1604 = vmatmul.mubr.bf16.gmra.mrb[0].mxu0 %v1464
  %v1605 = vpop.f32.mrb[0].mxu0
  %v1606 = vadd.f32 %v184, %v1605
  %v1607 = vpop.f32.mrb[0].mxu0
  %v1608 = vpop.f32.mrb[0].mxu0
  %v1609 = vadd.f32 %v184, %v1608
  %v1610 = vpop.f32.mrb[0].mxu0
  %1611 = vmatprep.mubr.bf16.mxu0 0
  %1612 = vmatmul.mubr.bf16.gmra.mrb[0].mxu0 %v1467
  %v1613 = vpop.f32.mrb[0].mxu0
  %v1614 = vadd.f32 %v184, %v1613
  %v1615 = vpop.f32.mrb[0].mxu0
  %v1616 = vpop.f32.mrb[0].mxu0
  %v1617 = vadd.f32 %v184, %v1616
  %v1618 = vpop.f32.mrb[0].mxu0
  %1619 = vmatprep.mubr.bf16.mxu0 0
  %1620 = vmatmul.mubr.bf16.gmra.mrb[0].mxu0 %v1470
  %v1621 = vpop.f32.mrb[0].mxu0
  %v1622 = vadd.f32 %v184, %v1621
  %v1623 = vpop.f32.mrb[0].mxu0
  %v1624 = vpop.f32.mrb[0].mxu0
  %v1625 = vadd.f32 %v184, %v1624
  %v1626 = vpop.f32.mrb[0].mxu0
  %1627 = vmatprep.mubr.bf16.mxu0 0
  %1628 = vmatmul.mubr.bf16.gmra.mrb[0].mxu0 %v1473
  %v1629 = vpop.f32.mrb[0].mxu0
  %v1630 = vadd.f32 %v184, %v1629
  %v1631 = vpop.f32.mrb[0].mxu0
  %v1632 = vpop.f32.mrb[0].mxu0
  %v1633 = vadd.f32 %v184, %v1632
  %v1634 = vpop.f32.mrb[0].mxu0
  %1635 = vdwg.mxu0
  %v1636 = vmax.f32 %v1510, 0.0
  %v1637 = vmax.f32 %v1513, 0.0
  %v1638 = vmax.f32 %v1518, 0.0
  %v1639 = vmax.f32 %v1521, 0.0
  %v1640 = vmax.f32 %v1526, 0.0
  %v1641 = vmax.f32 %v1529, 0.0
  %v1642 = vmax.f32 %v1534, 0.0
  %v1643 = vmax.f32 %v1537, 0.0
  %v1644 = vmax.f32 %v1542, 0.0
  %v1645 = vmax.f32 %v1545, 0.0
  %v1646 = vmax.f32 %v1550, 0.0
  %v1647 = vmax.f32 %v1553, 0.0
  %v1648 = vmax.f32 %v1558, 0.0
  %v1649 = vmax.f32 %v1561, 0.0
  %v1650 = vmax.f32 %v1566, 0.0
  %v1651 = vmax.f32 %v1569, 0.0
  %v1652 = vmax.f32 %v1574, 0.0
  %v1653 = vmax.f32 %v1577, 0.0
  %v1654 = vmax.f32 %v1582, 0.0
  %v1655 = vmax.f32 %v1585, 0.0
  %v1656 = vmax.f32 %v1590, 0.0
  %v1657 = vmax.f32 %v1593, 0.0
  %v1658 = vmax.f32 %v1598, 0.0
  %v1659 = vmax.f32 %v1601, 0.0
  %v1660 = vmax.f32 %v1606, 0.0
  %v1661 = vmax.f32 %v1609, 0.0
  %v1662 = vmax.f32 %v1614, 0.0
  %v1663 = vmax.f32 %v1617, 0.0
  %v1664 = vmax.f32 %v1622, 0.0
  %v1665 = vmax.f32 %v1625, 0.0
  %v1666 = vmax.f32 %v1630, 0.0
  %v1667 = vmax.f32 %v1633, 0.0
  %1668 = vst.msk [vmem:[#allocation2 + $0x300] sm:$0xff] %vm512, %v1636
  %1669 = vst.msk [vmem:[#allocation2 + $0x308] sm:$0xff] %vm512, %v1637
  %1670 = vst.msk [vmem:[#allocation2 + $0x310] sm:$0xff] %vm512, %v1638
  %1671 = vst.msk [vmem:[#allocation2 + $0x318] sm:$0xff] %vm512, %v1639
  %1672 = vst.msk [vmem:[#allocation2 + $0x320] sm:$0xff] %vm512, %v1640
  %1673 = vst.msk [vmem:[#allocation2 + $0x328] sm:$0xff] %vm512, %v1641
  %1674 = vst.msk [vmem:[#allocation2 + $0x330] sm:$0xff] %vm512, %v1642
  %1675 = vst.msk [vmem:[#allocation2 + $0x338] sm:$0xff] %vm512, %v1643
  %1676 = vst.msk [vmem:[#allocation2 + $0x340] sm:$0xff] %vm512, %v1644
  %1677 = vst.msk [vmem:[#allocation2 + $0x348] sm:$0xff] %vm512, %v1645
  %1678 = vst.msk [vmem:[#allocation2 + $0x350] sm:$0xff] %vm512, %v1646
  %1679 = vst.msk [vmem:[#allocation2 + $0x358] sm:$0xff] %vm512, %v1647
  %1680 = vst.msk [vmem:[#allocation2 + $0x360] sm:$0xff] %vm512, %v1648
  %1681 = vst.msk [vmem:[#allocation2 + $0x368] sm:$0xff] %vm512, %v1649
  %1682 = vst.msk [vmem:[#allocation2 + $0x370] sm:$0xff] %vm512, %v1650
  %1683 = vst.msk [vmem:[#allocation2 + $0x378] sm:$0xff] %vm512, %v1651
  %1684 = vst.msk [vmem:[#allocation2 + $0x380] sm:$0xff] %vm512, %v1652
  %1685 = vst.msk [vmem:[#allocation2 + $0x388] sm:$0xff] %vm512, %v1653
  %1686 = vst.msk [vmem:[#allocation2 + $0x390] sm:$0xff] %vm512, %v1654
  %1687 = vst.msk [vmem:[#allocation2 + $0x398] sm:$0xff] %vm512, %v1655
  %1688 = vst.msk [vmem:[#allocation2 + $0x3a0] sm:$0xff] %vm512, %v1656
  %1689 = vst.msk [vmem:[#allocation2 + $0x3a8] sm:$0xff] %vm512, %v1657
  %1690 = vst.msk [vmem:[#allocation2 + $0x3b0] sm:$0xff] %vm512, %v1658
  %1691 = vst.msk [vmem:[#allocation2 + $0x3b8] sm:$0xff] %vm512, %v1659
  %1692 = vst.msk [vmem:[#allocation2 + $0x3c0] sm:$0xff] %vm512, %v1660
  %1693 = vst.msk [vmem:[#allocation2 + $0x3c8] sm:$0xff] %vm512, %v1661
  %1694 = vst.msk [vmem:[#allocation2 + $0x3d0] sm:$0xff] %vm512, %v1662
  %1695 = vst.msk [vmem:[#allocation2 + $0x3d8] sm:$0xff] %vm512, %v1663
  %1696 = vst.msk [vmem:[#allocation2 + $0x3e0] sm:$0xff] %vm512, %v1664
  %1697 = vst.msk [vmem:[#allocation2 + $0x3e8] sm:$0xff] %vm512, %v1665
  %1698 = vst.msk [vmem:[#allocation2 + $0x3f0] sm:$0xff] %vm512, %v1666
  %1699 = vst.msk [vmem:[#allocation2 + $0x3f8] sm:$0xff] %vm512, %v1667
  %v1700 = vld [vmem:[%s0 + $0x200] sm:$0xf]
  %v1701 = vld [vmem:[%s0 + $0x204] sm:$0xf]
  %v1702 = vld [vmem:[%s0 + $0x208] sm:$0xf]
  %v1703 = vld [vmem:[%s0 + $0x20c] sm:$0xf]
  %v1704 = vld [vmem:[%s0 + $0x210] sm:$0xf]
  %v1705 = vld [vmem:[%s0 + $0x214] sm:$0xf]
  %v1706 = vld [vmem:[%s0 + $0x218] sm:$0xf]
  %v1707 = vld [vmem:[%s0 + $0x21c] sm:$0xf]
  %v1708 = vld [vmem:[%s0 + $0x220] sm:$0xf]
  %v1709 = vld [vmem:[%s0 + $0x224] sm:$0xf]
  %v1710 = vld [vmem:[%s0 + $0x228] sm:$0xf]
  %v1711 = vld [vmem:[%s0 + $0x22c] sm:$0xf]
  %v1712 = vld [vmem:[%s0 + $0x230] sm:$0xf]
  %v1713 = vld [vmem:[%s0 + $0x234] sm:$0xf]
  %v1714 = vld [vmem:[%s0 + $0x238] sm:$0xf]
  %v1715 = vld [vmem:[%s0 + $0x23c] sm:$0xf]
  %v1716 = vld [vmem:[%s0 + $0x240] sm:$0xf]
  %v1717 = vld [vmem:[%s0 + $0x244] sm:$0xf]
  %v1718 = vld [vmem:[%s0 + $0x248] sm:$0xf]
  %v1719 = vld [vmem:[%s0 + $0x24c] sm:$0xf]
  %v1720 = vld [vmem:[%s0 + $0x250] sm:$0xf]
  %v1721 = vld [vmem:[%s0 + $0x254] sm:$0xf]
  %v1722 = vld [vmem:[%s0 + $0x258] sm:$0xf]
  %v1723 = vld [vmem:[%s0 + $0x25c] sm:$0xf]
  %v1724 = vld [vmem:[%s0 + $0x260] sm:$0xf]
  %v1725 = vld [vmem:[%s0 + $0x264] sm:$0xf]
  %v1726 = vld [vmem:[%s0 + $0x268] sm:$0xf]
  %v1727 = vld [vmem:[%s0 + $0x26c] sm:$0xf]
  %v1728 = vld [vmem:[%s0 + $0x270] sm:$0xf]
  %v1729 = vld [vmem:[%s0 + $0x274] sm:$0xf]
  %v1730 = vld [vmem:[%s0 + $0x278] sm:$0xf]
  %v1731 = vld [vmem:[%s0 + $0x27c] sm:$0xf]
  %v1764 = vunpack.c.l.b16 %v1700
  %v1765 = vunpack.c.l.b16 %v1701
  %v1766 = vunpack.c.l.b16 %v1702
  %v1767 = vunpack.c.l.b16 %v1703
  %v1768 = vunpack.c.l.b16 %v1704
  %v1769 = vunpack.c.l.b16 %v1705
  %v1770 = vunpack.c.l.b16 %v1706
  %v1771 = vunpack.c.l.b16 %v1707
  %v1772 = vunpack.c.l.b16 %v1708
  %v1773 = vunpack.c.l.b16 %v1709
  %v1774 = vunpack.c.l.b16 %v1710
  %v1775 = vunpack.c.l.b16 %v1711
  %v1776 = vunpack.c.l.b16 %v1712
  %v1777 = vunpack.c.l.b16 %v1713
  %v1778 = vunpack.c.l.b16 %v1714
  %v1779 = vunpack.c.l.b16 %v1715
  %v1780 = vunpack.c.l.b16 %v1716
  %v1781 = vunpack.c.l.b16 %v1717
  %v1782 = vunpack.c.l.b16 %v1718
  %v1783 = vunpack.c.l.b16 %v1719
  %v1784 = vunpack.c.l.b16 %v1720
  %v1785 = vunpack.c.l.b16 %v1721
  %v1786 = vunpack.c.l.b16 %v1722
  %v1787 = vunpack.c.l.b16 %v1723
  %v1788 = vunpack.c.l.b16 %v1724
  %v1789 = vunpack.c.l.b16 %v1725
  %v1790 = vunpack.c.l.b16 %v1726
  %v1791 = vunpack.c.l.b16 %v1727
  %v1792 = vunpack.c.l.b16 %v1728
  %v1793 = vunpack.c.l.b16 %v1729
  %v1794 = vunpack.c.l.b16 %v1730
  %v1795 = vunpack.c.l.b16 %v1731
  %v1796 = vpack.c.b16 %v1765, %v1764
  %v1797 = vpack.c.b16 %v1767, %v1766
  %v1798 = vpack.c.b16 %v1769, %v1768
  %v1799 = vpack.c.b16 %v1771, %v1770
  %v1800 = vpack.c.b16 %v1773, %v1772
  %v1801 = vpack.c.b16 %v1775, %v1774
  %v1802 = vpack.c.b16 %v1777, %v1776
  %v1803 = vpack.c.b16 %v1779, %v1778
  %v1804 = vpack.c.b16 %v1781, %v1780
  %v1805 = vpack.c.b16 %v1783, %v1782
  %v1806 = vpack.c.b16 %v1785, %v1784
  %v1807 = vpack.c.b16 %v1787, %v1786
  %v1808 = vpack.c.b16 %v1789, %v1788
  %v1809 = vpack.c.b16 %v1791, %v1790
  %v1810 = vpack.c.b16 %v1793, %v1792
  %v1811 = vpack.c.b16 %v1795, %v1794
  %v1813 = vsel %vm266, %v1796, 0
  %v1816 = vsel %vm266, %v1797, 0
  %v1819 = vsel %vm266, %v1798, 0
  %v1822 = vsel %vm266, %v1799, 0
  %v1825 = vsel %vm266, %v1800, 0
  %v1828 = vsel %vm266, %v1801, 0
  %v1831 = vsel %vm266, %v1802, 0
  %v1834 = vsel %vm266, %v1803, 0
  %v1837 = vsel %vm266, %v1804, 0
  %v1840 = vsel %vm266, %v1805, 0
  %v1843 = vsel %vm266, %v1806, 0
  %v1846 = vsel %vm266, %v1807, 0
  %v1849 = vsel %vm266, %v1808, 0
  %v1852 = vsel %vm266, %v1809, 0
  %v1855 = vsel %vm266, %v1810, 0
  %v1858 = vsel %vm266, %v1811, 0
  %1860 = vmatprep.subr.bf16.mxu0 0
  %1861 = vmatpush1.bf16.msra.mxu0 %v317
  %1862 = vmatprep.subr.bf16.mxu0 0
  %1863 = vmatpush1.bf16.msra.mxu0 0
  %1864 = vmatprep.subr.bf16.mxu0 0
  %1865 = vmatpush1.bf16.msra.mxu0 0
  %1866 = vmatprep.subr.bf16.mxu0 0
  %1867 = vmatpush1.bf16.msra.mxu0 0
  %1868 = vmatprep.subr.bf16.mxu0 0
  %1869 = vmatpush1.bf16.msra.mxu0 0
  %1870 = vmatprep.subr.bf16.mxu0 0
  %1871 = vmatpush1.bf16.msra.mxu0 0
  %1872 = vmatprep.subr.bf16.mxu0 0
  %1873 = vmatpush1.bf16.msra.mxu0 0
  %1874 = vmatprep.subr.bf16.mxu0 0
  %1875 = vmatpush1.bf16.msra.mxu0 0
  %1876 = vmatprep.subr.bf16.mxu0 0
  %1877 = vmatpush1.bf16.msra.mxu0 0
  %1878 = vmatprep.subr.bf16.mxu0 0
  %1879 = vmatpush1.bf16.msra.mxu0 0
  %1880 = vmatprep.subr.bf16.mxu0 0
  %1881 = vmatpush1.bf16.msra.mxu0 0
  %1882 = vmatprep.subr.bf16.mxu0 0
  %1883 = vmatpush1.bf16.msra.mxu0 0
  %1884 = vmatprep.subr.bf16.mxu0 0
  %1885 = vmatpush1.bf16.msra.mxu0 0
  %1886 = vmatprep.subr.bf16.mxu0 0
  %1887 = vmatpush1.bf16.msra.mxu0 0
  %1888 = vmatprep.subr.bf16.mxu0 0
  %1889 = vmatpush1.bf16.msra.mxu0 0
  %1890 = vmatprep.subr.bf16.mxu0 0
  %1891 = vmatpush1.bf16.msra.mxu0 0
  %1892 = vmatprep.mubr.bf16.mxu0 0
  %1893 = vmatmul.mubr.bf16.gmra.mrb[0].mxu0 %v1813
  %v1894 = vpop.f32.mrb[0].mxu0
  %v1895 = vadd.f32 %v184, %v1894
  %v1896 = vpop.f32.mrb[0].mxu0
  %v1897 = vpop.f32.mrb[0].mxu0
  %v1898 = vadd.f32 %v184, %v1897
  %v1899 = vpop.f32.mrb[0].mxu0
  %1900 = vmatprep.mubr.bf16.mxu0 0
  %1901 = vmatmul.mubr.bf16.gmra.mrb[0].mxu0 %v1816
  %v1902 = vpop.f32.mrb[0].mxu0
  %v1903 = vadd.f32 %v184, %v1902
  %v1904 = vpop.f32.mrb[0].mxu0
  %v1905 = vpop.f32.mrb[0].mxu0
  %v1906 = vadd.f32 %v184, %v1905
  %v1907 = vpop.f32.mrb[0].mxu0
  %1908 = vmatprep.mubr.bf16.mxu0 0
  %1909 = vmatmul.mubr.bf16.gmra.mrb[0].mxu0 %v1819
  %v1910 = vpop.f32.mrb[0].mxu0
  %v1911 = vadd.f32 %v184, %v1910
  %v1912 = vpop.f32.mrb[0].mxu0
  %v1913 = vpop.f32.mrb[0].mxu0
  %v1914 = vadd.f32 %v184, %v1913
  %v1915 = vpop.f32.mrb[0].mxu0
  %1916 = vmatprep.mubr.bf16.mxu0 0
  %1917 = vmatmul.mubr.bf16.gmra.mrb[0].mxu0 %v1822
  %v1918 = vpop.f32.mrb[0].mxu0
  %v1919 = vadd.f32 %v184, %v1918
  %v1920 = vpop.f32.mrb[0].mxu0
  %v1921 = vpop.f32.mrb[0].mxu0
  %v1922 = vadd.f32 %v184, %v1921
  %v1923 = vpop.f32.mrb[0].mxu0
  %1924 = vmatprep.mubr.bf16.mxu0 0
  %1925 = vmatmul.mubr.bf16.gmra.mrb[0].mxu0 %v1825
  %v1926 = vpop.f32.mrb[0].mxu0
  %v1927 = vadd.f32 %v184, %v1926
  %v1928 = vpop.f32.mrb[0].mxu0
  %v1929 = vpop.f32.mrb[0].mxu0
  %v1930 = vadd.f32 %v184, %v1929
  %v1931 = vpop.f32.mrb[0].mxu0
  %1932 = vmatprep.mubr.bf16.mxu0 0
  %1933 = vmatmul.mubr.bf16.gmra.mrb[0].mxu0 %v1828
  %v1934 = vpop.f32.mrb[0].mxu0
  %v1935 = vadd.f32 %v184, %v1934
  %v1936 = vpop.f32.mrb[0].mxu0
  %v1937 = vpop.f32.mrb[0].mxu0
  %v1938 = vadd.f32 %v184, %v1937
  %v1939 = vpop.f32.mrb[0].mxu0
  %1940 = vmatprep.mubr.bf16.mxu0 0
  %1941 = vmatmul.mubr.bf16.gmra.mrb[0].mxu0 %v1831
  %v1942 = vpop.f32.mrb[0].mxu0
  %v1943 = vadd.f32 %v184, %v1942
  %v1944 = vpop.f32.mrb[0].mxu0
  %v1945 = vpop.f32.mrb[0].mxu0
  %v1946 = vadd.f32 %v184, %v1945
  %v1947 = vpop.f32.mrb[0].mxu0
  %1948 = vmatprep.mubr.bf16.mxu0 0
  %1949 = vmatmul.mubr.bf16.gmra.mrb[0].mxu0 %v1834
  %v1950 = vpop.f32.mrb[0].mxu0
  %v1951 = vadd.f32 %v184, %v1950
  %v1952 = vpop.f32.mrb[0].mxu0
  %v1953 = vpop.f32.mrb[0].mxu0
  %v1954 = vadd.f32 %v184, %v1953
  %v1955 = vpop.f32.mrb[0].mxu0
  %1956 = vmatprep.mubr.bf16.mxu0 0
  %1957 = vmatmul.mubr.bf16.gmra.mrb[0].mxu0 %v1837
  %v1958 = vpop.f32.mrb[0].mxu0
  %v1959 = vadd.f32 %v184, %v1958
  %v1960 = vpop.f32.mrb[0].mxu0
  %v1961 = vpop.f32.mrb[0].mxu0
  %v1962 = vadd.f32 %v184, %v1961
  %v1963 = vpop.f32.mrb[0].mxu0
  %1964 = vmatprep.mubr.bf16.mxu0 0
  %1965 = vmatmul.mubr.bf16.gmra.mrb[0].mxu0 %v1840
  %v1966 = vpop.f32.mrb[0].mxu0
  %v1967 = vadd.f32 %v184, %v1966
  %v1968 = vpop.f32.mrb[0].mxu0
  %v1969 = vpop.f32.mrb[0].mxu0
  %v1970 = vadd.f32 %v184, %v1969
  %v1971 = vpop.f32.mrb[0].mxu0
  %1972 = vmatprep.mubr.bf16.mxu0 0
  %1973 = vmatmul.mubr.bf16.gmra.mrb[0].mxu0 %v1843
  %v1974 = vpop.f32.mrb[0].mxu0
  %v1975 = vadd.f32 %v184, %v1974
  %v1976 = vpop.f32.mrb[0].mxu0
  %v1977 = vpop.f32.mrb[0].mxu0
  %v1978 = vadd.f32 %v184, %v1977
  %v1979 = vpop.f32.mrb[0].mxu0
  %1980 = vmatprep.mubr.bf16.mxu0 0
  %1981 = vmatmul.mubr.bf16.gmra.mrb[0].mxu0 %v1846
  %v1982 = vpop.f32.mrb[0].mxu0
  %v1983 = vadd.f32 %v184, %v1982
  %v1984 = vpop.f32.mrb[0].mxu0
  %v1985 = vpop.f32.mrb[0].mxu0
  %v1986 = vadd.f32 %v184, %v1985
  %v1987 = vpop.f32.mrb[0].mxu0
  %1988 = vmatprep.mubr.bf16.mxu0 0
  %1989 = vmatmul.mubr.bf16.gmra.mrb[0].mxu0 %v1849
  %v1990 = vpop.f32.mrb[0].mxu0
  %v1991 = vadd.f32 %v184, %v1990
  %v1992 = vpop.f32.mrb[0].mxu0
  %v1993 = vpop.f32.mrb[0].mxu0
  %v1994 = vadd.f32 %v184, %v1993
  %v1995 = vpop.f32.mrb[0].mxu0
  %1996 = vmatprep.mubr.bf16.mxu0 0
  %1997 = vmatmul.mubr.bf16.gmra.mrb[0].mxu0 %v1852
  %v1998 = vpop.f32.mrb[0].mxu0
  %v1999 = vadd.f32 %v184, %v1998
  %v2000 = vpop.f32.mrb[0].mxu0
  %v2001 = vpop.f32.mrb[0].mxu0
  %v2002 = vadd.f32 %v184, %v2001
  %v2003 = vpop.f32.mrb[0].mxu0
  %2004 = vmatprep.mubr.bf16.mxu0 0
  %2005 = vmatmul.mubr.bf16.gmra.mrb[0].mxu0 %v1855
  %v2006 = vpop.f32.mrb[0].mxu0
  %v2007 = vadd.f32 %v184, %v2006
  %v2008 = vpop.f32.mrb[0].mxu0
  %v2009 = vpop.f32.mrb[0].mxu0
  %v2010 = vadd.f32 %v184, %v2009
  %v2011 = vpop.f32.mrb[0].mxu0
  %2012 = vmatprep.mubr.bf16.mxu0 0
  %2013 = vmatmul.mubr.bf16.gmra.mrb[0].mxu0 %v1858
  %v2014 = vpop.f32.mrb[0].mxu0
  %v2015 = vadd.f32 %v184, %v2014
  %v2016 = vpop.f32.mrb[0].mxu0
  %v2017 = vpop.f32.mrb[0].mxu0
  %v2018 = vadd.f32 %v184, %v2017
  %v2019 = vpop.f32.mrb[0].mxu0
  %2020 = vdwg.mxu0
  %v2021 = vmax.f32 %v1895, 0.0
  %v2022 = vmax.f32 %v1898, 0.0
  %v2023 = vmax.f32 %v1903, 0.0
  %v2024 = vmax.f32 %v1906, 0.0
  %v2025 = vmax.f32 %v1911, 0.0
  %v2026 = vmax.f32 %v1914, 0.0
  %v2027 = vmax.f32 %v1919, 0.0
  %v2028 = vmax.f32 %v1922, 0.0
  %v2029 = vmax.f32 %v1927, 0.0
  %v2030 = vmax.f32 %v1930, 0.0
  %v2031 = vmax.f32 %v1935, 0.0
  %v2032 = vmax.f32 %v1938, 0.0
  %v2033 = vmax.f32 %v1943, 0.0
  %v2034 = vmax.f32 %v1946, 0.0
  %v2035 = vmax.f32 %v1951, 0.0
  %v2036 = vmax.f32 %v1954, 0.0
  %v2037 = vmax.f32 %v1959, 0.0
  %v2038 = vmax.f32 %v1962, 0.0
  %v2039 = vmax.f32 %v1967, 0.0
  %v2040 = vmax.f32 %v1970, 0.0
  %v2041 = vmax.f32 %v1975, 0.0
  %v2042 = vmax.f32 %v1978, 0.0
  %v2043 = vmax.f32 %v1983, 0.0
  %v2044 = vmax.f32 %v1986, 0.0
  %v2045 = vmax.f32 %v1991, 0.0
  %v2046 = vmax.f32 %v1994, 0.0
  %v2047 = vmax.f32 %v1999, 0.0
  %v2048 = vmax.f32 %v2002, 0.0
  %v2049 = vmax.f32 %v2007, 0.0
  %v2050 = vmax.f32 %v2010, 0.0
  %v2051 = vmax.f32 %v2015, 0.0
  %v2052 = vmax.f32 %v2018, 0.0
  %2053 = vst.msk [vmem:[#allocation2 + $0x400] sm:$0xff] %vm512, %v2021
  %2054 = vst.msk [vmem:[#allocation2 + $0x408] sm:$0xff] %vm512, %v2022
  %2055 = vst.msk [vmem:[#allocation2 + $0x410] sm:$0xff] %vm512, %v2023
  %2056 = vst.msk [vmem:[#allocation2 + $0x418] sm:$0xff] %vm512, %v2024
  %2057 = vst.msk [vmem:[#allocation2 + $0x420] sm:$0xff] %vm512, %v2025
  %2058 = vst.msk [vmem:[#allocation2 + $0x428] sm:$0xff] %vm512, %v2026
  %2059 = vst.msk [vmem:[#allocation2 + $0x430] sm:$0xff] %vm512, %v2027
  %2060 = vst.msk [vmem:[#allocation2 + $0x438] sm:$0xff] %vm512, %v2028
  %2061 = vst.msk [vmem:[#allocation2 + $0x440] sm:$0xff] %vm512, %v2029
  %2062 = vst.msk [vmem:[#allocation2 + $0x448] sm:$0xff] %vm512, %v2030
  %2063 = vst.msk [vmem:[#allocation2 + $0x450] sm:$0xff] %vm512, %v2031
  %2064 = vst.msk [vmem:[#allocation2 + $0x458] sm:$0xff] %vm512, %v2032
  %2065 = vst.msk [vmem:[#allocation2 + $0x460] sm:$0xff] %vm512, %v2033
  %2066 = vst.msk [vmem:[#allocation2 + $0x468] sm:$0xff] %vm512, %v2034
  %2067 = vst.msk [vmem:[#allocation2 + $0x470] sm:$0xff] %vm512, %v2035
  %2068 = vst.msk [vmem:[#allocation2 + $0x478] sm:$0xff] %vm512, %v2036
  %2069 = vst.msk [vmem:[#allocation2 + $0x480] sm:$0xff] %vm512, %v2037
  %2070 = vst.msk [vmem:[#allocation2 + $0x488] sm:$0xff] %vm512, %v2038
  %2071 = vst.msk [vmem:[#allocation2 + $0x490] sm:$0xff] %vm512, %v2039
  %2072 = vst.msk [vmem:[#allocation2 + $0x498] sm:$0xff] %vm512, %v2040
  %2073 = vst.msk [vmem:[#allocation2 + $0x4a0] sm:$0xff] %vm512, %v2041
  %2074 = vst.msk [vmem:[#allocation2 + $0x4a8] sm:$0xff] %vm512, %v2042
  %2075 = vst.msk [vmem:[#allocation2 + $0x4b0] sm:$0xff] %vm512, %v2043
  %2076 = vst.msk [vmem:[#allocation2 + $0x4b8] sm:$0xff] %vm512, %v2044
  %2077 = vst.msk [vmem:[#allocation2 + $0x4c0] sm:$0xff] %vm512, %v2045
  %2078 = vst.msk [vmem:[#allocation2 + $0x4c8] sm:$0xff] %vm512, %v2046
  %2079 = vst.msk [vmem:[#allocation2 + $0x4d0] sm:$0xff] %vm512, %v2047
  %2080 = vst.msk [vmem:[#allocation2 + $0x4d8] sm:$0xff] %vm512, %v2048
  %2081 = vst.msk [vmem:[#allocation2 + $0x4e0] sm:$0xff] %vm512, %v2049
  %2082 = vst.msk [vmem:[#allocation2 + $0x4e8] sm:$0xff] %vm512, %v2050
  %2083 = vst.msk [vmem:[#allocation2 + $0x4f0] sm:$0xff] %vm512, %v2051
  %2084 = vst.msk [vmem:[#allocation2 + $0x4f8] sm:$0xff] %vm512, %v2052
  %v2085 = vld [vmem:[#allocation2] sm:$0xff]
  %v2086 = vld [vmem:[#allocation2 + $0x8] sm:$0xff]
  %v2087 = vld [vmem:[#allocation2 + $0x10] sm:$0xff]
  %v2088 = vld [vmem:[#allocation2 + $0x18] sm:$0xff]
  %v2089 = vld [vmem:[#allocation2 + $0x20] sm:$0xff]
  %v2090 = vld [vmem:[#allocation2 + $0x28] sm:$0xff]
  %v2091 = vld [vmem:[#allocation2 + $0x30] sm:$0xff]
  %v2092 = vld [vmem:[#allocation2 + $0x38] sm:$0xff]
  %v2093 = vld [vmem:[#allocation2 + $0x40] sm:$0xff]
  %v2094 = vld [vmem:[#allocation2 + $0x48] sm:$0xff]
  %v2095 = vld [vmem:[#allocation2 + $0x50] sm:$0xff]
  %v2096 = vld [vmem:[#allocation2 + $0x58] sm:$0xff]
  %v2097 = vld [vmem:[#allocation2 + $0x60] sm:$0xff]
  %v2098 = vld [vmem:[#allocation2 + $0x68] sm:$0xff]
  %v2099 = vld [vmem:[#allocation2 + $0x70] sm:$0xff]
  %v2100 = vld [vmem:[#allocation2 + $0x78] sm:$0xff]
  %v2101 = vld [vmem:[#allocation2 + $0x80] sm:$0xff]
  %v2102 = vld [vmem:[#allocation2 + $0x1] sm:$0xff]
  %v2103 = vld [vmem:[#allocation2 + $0x9] sm:$0xff]
  %v2104 = vld [vmem:[#allocation2 + $0x11] sm:$0xff]
  %v2105 = vld [vmem:[#allocation2 + $0x19] sm:$0xff]
  %v2106 = vld [vmem:[#allocation2 + $0x21] sm:$0xff]
  %v2107 = vld [vmem:[#allocation2 + $0x29] sm:$0xff]
  %v2108 = vld [vmem:[#allocation2 + $0x31] sm:$0xff]
  %v2109 = vld [vmem:[#allocation2 + $0x39] sm:$0xff]
  %v2110 = vld [vmem:[#allocation2 + $0x41] sm:$0xff]
  %v2111 = vld [vmem:[#allocation2 + $0x49] sm:$0xff]
  %v2112 = vld [vmem:[#allocation2 + $0x51] sm:$0xff]
  %v2113 = vld [vmem:[#allocation2 + $0x59] sm:$0xff]
  %v2114 = vld [vmem:[#allocation2 + $0x61] sm:$0xff]
  %v2115 = vld [vmem:[#allocation2 + $0x69] sm:$0xff]
  %v2116 = vld [vmem:[#allocation2 + $0x71] sm:$0xff]
  %v2117 = vld [vmem:[#allocation2 + $0x79] sm:$0xff]
  %v2118 = vld [vmem:[#allocation2 + $0x81] sm:$0xff]
  %v2119 = vmax.f32 %v2085, %v2102
  %v2120 = vmax.f32 %v2086, %v2103
  %v2121 = vmax.f32 %v2087, %v2104
  %v2122 = vmax.f32 %v2088, %v2105
  %v2123 = vmax.f32 %v2089, %v2106
  %v2124 = vmax.f32 %v2090, %v2107
  %v2125 = vmax.f32 %v2091, %v2108
  %v2126 = vmax.f32 %v2092, %v2109
  %v2127 = vmax.f32 %v2093, %v2110
  %v2128 = vmax.f32 %v2094, %v2111
  %v2129 = vmax.f32 %v2095, %v2112
  %v2130 = vmax.f32 %v2096, %v2113
  %v2131 = vmax.f32 %v2097, %v2114
  %v2132 = vmax.f32 %v2098, %v2115
  %v2133 = vmax.f32 %v2099, %v2116
  %v2134 = vmax.f32 %v2100, %v2117
  %v2135 = vmax.f32 %v2101, %v2118
  %v2136 = vld [vmem:[#allocation2 + $0x88] sm:$0xff]
  %v2137 = vld [vmem:[#allocation2 + $0x90] sm:$0xff]
  %v2138 = vld [vmem:[#allocation2 + $0x98] sm:$0xff]
  %v2139 = vld [vmem:[#allocation2 + $0xa0] sm:$0xff]
  %v2140 = vmax.f32 %v2119, %v2089
  %v2141 = vmax.f32 %v2120, %v2090
  %v2142 = vmax.f32 %v2121, %v2091
  %v2143 = vmax.f32 %v2122, %v2092
  %v2144 = vmax.f32 %v2123, %v2093
  %v2145 = vmax.f32 %v2124, %v2094
  %v2146 = vmax.f32 %v2125, %v2095
  %v2147 = vmax.f32 %v2126, %v2096
  %v2148 = vmax.f32 %v2127, %v2097
  %v2149 = vmax.f32 %v2128, %v2098
  %v2150 = vmax.f32 %v2129, %v2099
  %v2151 = vmax.f32 %v2130, %v2100
  %v2152 = vmax.f32 %v2131, %v2101
  %v2153 = vmax.f32 %v2132, %v2136
  %v2154 = vmax.f32 %v2133, %v2137
  %v2155 = vmax.f32 %v2134, %v2138
  %v2156 = vmax.f32 %v2135, %v2139
  %v2157 = vld [vmem:[#allocation2 + $0x89] sm:$0xff]
  %v2158 = vld [vmem:[#allocation2 + $0x91] sm:$0xff]
  %v2159 = vld [vmem:[#allocation2 + $0x99] sm:$0xff]
  %v2160 = vld [vmem:[#allocation2 + $0xa1] sm:$0xff]
  %v2161 = vmax.f32 %v2140, %v2106
  %v2162 = vmax.f32 %v2141, %v2107
  %v2163 = vmax.f32 %v2142, %v2108
  %v2164 = vmax.f32 %v2143, %v2109
  %v2165 = vmax.f32 %v2144, %v2110
  %v2166 = vmax.f32 %v2145, %v2111
  %v2167 = vmax.f32 %v2146, %v2112
  %v2168 = vmax.f32 %v2147, %v2113
  %v2169 = vmax.f32 %v2148, %v2114
  %v2170 = vmax.f32 %v2149, %v2115
  %v2171 = vmax.f32 %v2150, %v2116
  %v2172 = vmax.f32 %v2151, %v2117
  %v2173 = vmax.f32 %v2152, %v2118
  %v2174 = vmax.f32 %v2153, %v2157
  %v2175 = vmax.f32 %v2154, %v2158
  %v2176 = vmax.f32 %v2155, %v2159
  %v2177 = vmax.f32 %v2156, %v2160
  %v2178 = vpack.c.bf16 %v2162, %v2161
  %v2179 = vpack.c.bf16 %v2164, %v2163
  %v2180 = vpack.c.bf16 %v2166, %v2165
  %v2181 = vpack.c.bf16 %v2168, %v2167
  %v2182 = vpack.c.bf16 %v2170, %v2169
  %v2183 = vpack.c.bf16 %v2172, %v2171
  %v2184 = vpack.c.bf16 %v2174, %v2173
  %v2185 = vpack.c.bf16 %v2176, %v2175
  %v2186 = vpack.c.bf16 %v2177, %v2177
  %2187 = vst.msk [vmem:[#allocation3] sm:$0xff] %vm512, %v2178
  %2188 = vst.msk [vmem:[#allocation3 + $0x8] sm:$0xff] %vm512, %v2179
  %2189 = vst.msk [vmem:[#allocation3 + $0x10] sm:$0xff] %vm512, %v2180
  %2190 = vst.msk [vmem:[#allocation3 + $0x18] sm:$0xff] %vm512, %v2181
  %2191 = vst.msk [vmem:[#allocation3 + $0x20] sm:$0xff] %vm512, %v2182
  %2192 = vst.msk [vmem:[#allocation3 + $0x28] sm:$0xff] %vm512, %v2183
  %2193 = vst.msk [vmem:[#allocation3 + $0x30] sm:$0xff] %vm512, %v2184
  %2194 = vst.msk [vmem:[#allocation3 + $0x38] sm:$0xff] %vm512, %v2185
  %2195 = vst.msk [vmem:[#allocation3 + $0x40] sm:$0xf] %vm66, %v2186
  %v2196 = vld [vmem:[#allocation2 + $0x88] sm:$0xff]
  %v2197 = vld [vmem:[#allocation2 + $0x90] sm:$0xff]
  %v2198 = vld [vmem:[#allocation2 + $0x98] sm:$0xff]
  %v2199 = vld [vmem:[#allocation2 + $0xa0] sm:$0xff]
  %v2200 = vld [vmem:[#allocation2 + $0xa8] sm:$0xff]
  %v2201 = vld [vmem:[#allocation2 + $0xb0] sm:$0xff]
  %v2202 = vld [vmem:[#allocation2 + $0xb8] sm:$0xff]
  %v2203 = vld [vmem:[#allocation2 + $0xc0] sm:$0xff]
  %v2204 = vld [vmem:[#allocation2 + $0xc8] sm:$0xff]
  %v2205 = vld [vmem:[#allocation2 + $0xd0] sm:$0xff]
  %v2206 = vld [vmem:[#allocation2 + $0xd8] sm:$0xff]
  %v2207 = vld [vmem:[#allocation2 + $0xe0] sm:$0xff]
  %v2208 = vld [vmem:[#allocation2 + $0xe8] sm:$0xff]
  %v2209 = vld [vmem:[#allocation2 + $0xf0] sm:$0xff]
  %v2210 = vld [vmem:[#allocation2 + $0xf8] sm:$0xff]
  %v2211 = vld [vmem:[#allocation2 + $0x100] sm:$0xff]
  %v2212 = vld [vmem:[#allocation2 + $0x108] sm:$0xff]
  %v2213 = vld [vmem:[#allocation2 + $0x89] sm:$0xff]
  %v2214 = vld [vmem:[#allocation2 + $0x91] sm:$0xff]
  %v2215 = vld [vmem:[#allocation2 + $0x99] sm:$0xff]
  %v2216 = vld [vmem:[#allocation2 + $0xa1] sm:$0xff]
  %v2217 = vld [vmem:[#allocation2 + $0xa9] sm:$0xff]
  %v2218 = vld [vmem:[#allocation2 + $0xb1] sm:$0xff]
  %v2219 = vld [vmem:[#allocation2 + $0xb9] sm:$0xff]
  %v2220 = vld [vmem:[#allocation2 + $0xc1] sm:$0xff]
  %v2221 = vld [vmem:[#allocation2 + $0xc9] sm:$0xff]
  %v2222 = vld [vmem:[#allocation2 + $0xd1] sm:$0xff]
  %v2223 = vld [vmem:[#allocation2 + $0xd9] sm:$0xff]
  %v2224 = vld [vmem:[#allocation2 + $0xe1] sm:$0xff]
  %v2225 = vld [vmem:[#allocation2 + $0xe9] sm:$0xff]
  %v2226 = vld [vmem:[#allocation2 + $0xf1] sm:$0xff]
  %v2227 = vld [vmem:[#allocation2 + $0xf9] sm:$0xff]
  %v2228 = vld [vmem:[#allocation2 + $0x101] sm:$0xff]
  %v2229 = vld [vmem:[#allocation2 + $0x109] sm:$0xff]
  %v2230 = vmax.f32 %v2196, %v2213
  %v2231 = vmax.f32 %v2197, %v2214
  %v2232 = vmax.f32 %v2198, %v2215
  %v2233 = vmax.f32 %v2199, %v2216
  %v2234 = vmax.f32 %v2200, %v2217
  %v2235 = vmax.f32 %v2201, %v2218
  %v2236 = vmax.f32 %v2202, %v2219
  %v2237 = vmax.f32 %v2203, %v2220
  %v2238 = vmax.f32 %v2204, %v2221
  %v2239 = vmax.f32 %v2205, %v2222
  %v2240 = vmax.f32 %v2206, %v2223
  %v2241 = vmax.f32 %v2207, %v2224
  %v2242 = vmax.f32 %v2208, %v2225
  %v2243 = vmax.f32 %v2209, %v2226
  %v2244 = vmax.f32 %v2210, %v2227
  %v2245 = vmax.f32 %v2211, %v2228
  %v2246 = vmax.f32 %v2212, %v2229
  %v2247 = vld [vmem:[#allocation2 + $0x110] sm:$0xff]
  %v2248 = vld [vmem:[#allocation2 + $0x118] sm:$0xff]
  %v2249 = vld [vmem:[#allocation2 + $0x120] sm:$0xff]
  %v2250 = vld [vmem:[#allocation2 + $0x128] sm:$0xff]
  %v2251 = vmax.f32 %v2230, %v2200
  %v2252 = vmax.f32 %v2231, %v2201
  %v2253 = vmax.f32 %v2232, %v2202
  %v2254 = vmax.f32 %v2233, %v2203
  %v2255 = vmax.f32 %v2234, %v2204
  %v2256 = vmax.f32 %v2235, %v2205
  %v2257 = vmax.f32 %v2236, %v2206
  %v2258 = vmax.f32 %v2237, %v2207
  %v2259 = vmax.f32 %v2238, %v2208
  %v2260 = vmax.f32 %v2239, %v2209
  %v2261 = vmax.f32 %v2240, %v2210
  %v2262 = vmax.f32 %v2241, %v2211
  %v2263 = vmax.f32 %v2242, %v2212
  %v2264 = vmax.f32 %v2243, %v2247
  %v2265 = vmax.f32 %v2244, %v2248
  %v2266 = vmax.f32 %v2245, %v2249
  %v2267 = vmax.f32 %v2246, %v2250
  %v2268 = vld [vmem:[#allocation2 + $0x111] sm:$0xff]
  %v2269 = vld [vmem:[#allocation2 + $0x119] sm:$0xff]
  %v2270 = vld [vmem:[#allocation2 + $0x121] sm:$0xff]
  %v2271 = vld [vmem:[#allocation2 + $0x129] sm:$0xff]
  %v2272 = vmax.f32 %v2251, %v2217
  %v2273 = vmax.f32 %v2252, %v2218
  %v2274 = vmax.f32 %v2253, %v2219
  %v2275 = vmax.f32 %v2254, %v2220
  %v2276 = vmax.f32 %v2255, %v2221
  %v2277 = vmax.f32 %v2256, %v2222
  %v2278 = vmax.f32 %v2257, %v2223
  %v2279 = vmax.f32 %v2258, %v2224
  %v2280 = vmax.f32 %v2259, %v2225
  %v2281 = vmax.f32 %v2260, %v2226
  %v2282 = vmax.f32 %v2261, %v2227
  %v2283 = vmax.f32 %v2262, %v2228
  %v2284 = vmax.f32 %v2263, %v2229
  %v2285 = vmax.f32 %v2264, %v2268
  %v2286 = vmax.f32 %v2265, %v2269
  %v2287 = vmax.f32 %v2266, %v2270
  %v2288 = vmax.f32 %v2267, %v2271
  %v2289 = vpack.c.bf16 %v2273, %v2272
  %v2290 = vpack.c.bf16 %v2275, %v2274
  %v2291 = vpack.c.bf16 %v2277, %v2276
  %v2292 = vpack.c.bf16 %v2279, %v2278
  %v2293 = vpack.c.bf16 %v2281, %v2280
  %v2294 = vpack.c.bf16 %v2283, %v2282
  %v2295 = vpack.c.bf16 %v2285, %v2284
  %v2296 = vpack.c.bf16 %v2287, %v2286
  %v2297 = vpack.c.bf16 %v2288, %v2288
  %vm2307 = vcmask 1043456
  %v2308 = vrot.slane %v2289, 4
  %v2309 = vrot.slane %v2290, 4
  %v2310 = vsel %vm2307, %v2308, %v2309
  %v2311 = vrot.slane %v2291, 4
  %v2312 = vsel %vm2307, %v2309, %v2311
  %v2313 = vrot.slane %v2292, 4
  %v2314 = vsel %vm2307, %v2311, %v2313
  %v2315 = vrot.slane %v2293, 4
  %v2316 = vsel %vm2307, %v2313, %v2315
  %v2317 = vrot.slane %v2294, 4
  %v2318 = vsel %vm2307, %v2315, %v2317
  %v2319 = vrot.slane %v2295, 4
  %v2320 = vsel %vm2307, %v2317, %v2319
  %v2321 = vrot.slane %v2296, 4
  %v2322 = vsel %vm2307, %v2319, %v2321
  %v2323 = vrot.slane %v2297, 4
  %v2324 = vsel %vm2307, %v2321, %v2323
  %vm2334 = vcmask 203780
  %2335 = vst.msk [vmem:[#allocation3 + $0x40] sm:$0xf0] %vm2334, %v2308
  %2336 = vst.msk [vmem:[#allocation3 + $0x48] sm:$0xff] %vm512, %v2310
  %2337 = vst.msk [vmem:[#allocation3 + $0x50] sm:$0xff] %vm512, %v2312
  %2338 = vst.msk [vmem:[#allocation3 + $0x58] sm:$0xff] %vm512, %v2314
  %2339 = vst.msk [vmem:[#allocation3 + $0x60] sm:$0xff] %vm512, %v2316
  %2340 = vst.msk [vmem:[#allocation3 + $0x68] sm:$0xff] %vm512, %v2318
  %2341 = vst.msk [vmem:[#allocation3 + $0x70] sm:$0xff] %vm512, %v2320
  %2342 = vst.msk [vmem:[#allocation3 + $0x78] sm:$0xff] %vm512, %v2322
  %2343 = vst.msk [vmem:[#allocation3 + $0x80] sm:$0xff] %vm512, %v2324
  %v2344 = vld [vmem:[#allocation2 + $0x110] sm:$0xff]
  %v2345 = vld [vmem:[#allocation2 + $0x118] sm:$0xff]
  %v2346 = vld [vmem:[#allocation2 + $0x120] sm:$0xff]
  %v2347 = vld [vmem:[#allocation2 + $0x128] sm:$0xff]
  %v2348 = vld [vmem:[#allocation2 + $0x130] sm:$0xff]
  %v2349 = vld [vmem:[#allocation2 + $0x138] sm:$0xff]
  %v2350 = vld [vmem:[#allocation2 + $0x140] sm:$0xff]
  %v2351 = vld [vmem:[#allocation2 + $0x148] sm:$0xff]
  %v2352 = vld [vmem:[#allocation2 + $0x150] sm:$0xff]
  %v2353 = vld [vmem:[#allocation2 + $0x158] sm:$0xff]
  %v2354 = vld [vmem:[#allocation2 + $0x160] sm:$0xff]
  %v2355 = vld [vmem:[#allocation2 + $0x168] sm:$0xff]
  %v2356 = vld [vmem:[#allocation2 + $0x170] sm:$0xff]
  %v2357 = vld [vmem:[#allocation2 + $0x178] sm:$0xff]
  %v2358 = vld [vmem:[#allocation2 + $0x180] sm:$0xff]
  %v2359 = vld [vmem:[#allocation2 + $0x188] sm:$0xff]
  %v2360 = vld [vmem:[#allocation2 + $0x190] sm:$0xff]
  %v2361 = vld [vmem:[#allocation2 + $0x111] sm:$0xff]
  %v2362 = vld [vmem:[#allocation2 + $0x119] sm:$0xff]
  %v2363 = vld [vmem:[#allocation2 + $0x121] sm:$0xff]
  %v2364 = vld [vmem:[#allocation2 + $0x129] sm:$0xff]
  %v2365 = vld [vmem:[#allocation2 + $0x131] sm:$0xff]
  %v2366 = vld [vmem:[#allocation2 + $0x139] sm:$0xff]
  %v2367 = vld [vmem:[#allocation2 + $0x141] sm:$0xff]
  %v2368 = vld [vmem:[#allocation2 + $0x149] sm:$0xff]
  %v2369 = vld [vmem:[#allocation2 + $0x151] sm:$0xff]
  %v2370 = vld [vmem:[#allocation2 + $0x159] sm:$0xff]
  %v2371 = vld [vmem:[#allocation2 + $0x161] sm:$0xff]
  %v2372 = vld [vmem:[#allocation2 + $0x169] sm:$0xff]
  %v2373 = vld [vmem:[#allocation2 + $0x171] sm:$0xff]
  %v2374 = vld [vmem:[#allocation2 + $0x179] sm:$0xff]
  %v2375 = vld [vmem:[#allocation2 + $0x181] sm:$0xff]
  %v2376 = vld [vmem:[#allocation2 + $0x189] sm:$0xff]
  %v2377 = vld [vmem:[#allocation2 + $0x191] sm:$0xff]
  %v2378 = vmax.f32 %v2344, %v2361
  %v2379 = vmax.f32 %v2345, %v2362
  %v2380 = vmax.f32 %v2346, %v2363
  %v2381 = vmax.f32 %v2347, %v2364
  %v2382 = vmax.f32 %v2348, %v2365
  %v2383 = vmax.f32 %v2349, %v2366
  %v2384 = vmax.f32 %v2350, %v2367
  %v2385 = vmax.f32 %v2351, %v2368
  %v2386 = vmax.f32 %v2352, %v2369
  %v2387 = vmax.f32 %v2353, %v2370
  %v2388 = vmax.f32 %v2354, %v2371
  %v2389 = vmax.f32 %v2355, %v2372
  %v2390 = vmax.f32 %v2356, %v2373
  %v2391 = vmax.f32 %v2357, %v2374
  %v2392 = vmax.f32 %v2358, %v2375
  %v2393 = vmax.f32 %v2359, %v2376
  %v2394 = vmax.f32 %v2360, %v2377
  %v2395 = vld [vmem:[#allocation2 + $0x198] sm:$0xff]
  %v2396 = vld [vmem:[#allocation2 + $0x1a0] sm:$0xff]
  %v2397 = vld [vmem:[#allocation2 + $0x1a8] sm:$0xff]
  %v2398 = vld [vmem:[#allocation2 + $0x1b0] sm:$0xff]
  %v2399 = vmax.f32 %v2378, %v2348
  %v2400 = vmax.f32 %v2379, %v2349
  %v2401 = vmax.f32 %v2380, %v2350
  %v2402 = vmax.f32 %v2381, %v2351
  %v2403 = vmax.f32 %v2382, %v2352
  %v2404 = vmax.f32 %v2383, %v2353
  %v2405 = vmax.f32 %v2384, %v2354
  %v2406 = vmax.f32 %v2385, %v2355
  %v2407 = vmax.f32 %v2386, %v2356
  %v2408 = vmax.f32 %v2387, %v2357
  %v2409 = vmax.f32 %v2388, %v2358
  %v2410 = vmax.f32 %v2389, %v2359
  %v2411 = vmax.f32 %v2390, %v2360
  %v2412 = vmax.f32 %v2391, %v2395
  %v2413 = vmax.f32 %v2392, %v2396
  %v2414 = vmax.f32 %v2393, %v2397
  %v2415 = vmax.f32 %v2394, %v2398
  %v2416 = vld [vmem:[#allocation2 + $0x199] sm:$0xff]
  %v2417 = vld [vmem:[#allocation2 + $0x1a1] sm:$0xff]
  %v2418 = vld [vmem:[#allocation2 + $0x1a9] sm:$0xff]
  %v2419 = vld [vmem:[#allocation2 + $0x1b1] sm:$0xff]
  %v2420 = vmax.f32 %v2399, %v2365
  %v2421 = vmax.f32 %v2400, %v2366
  %v2422 = vmax.f32 %v2401, %v2367
  %v2423 = vmax.f32 %v2402, %v2368
  %v2424 = vmax.f32 %v2403, %v2369
  %v2425 = vmax.f32 %v2404, %v2370
  %v2426 = vmax.f32 %v2405, %v2371
  %v2427 = vmax.f32 %v2406, %v2372
  %v2428 = vmax.f32 %v2407, %v2373
  %v2429 = vmax.f32 %v2408, %v2374
  %v2430 = vmax.f32 %v2409, %v2375
  %v2431 = vmax.f32 %v2410, %v2376
  %v2432 = vmax.f32 %v2411, %v2377
  %v2433 = vmax.f32 %v2412, %v2416
  %v2434 = vmax.f32 %v2413, %v2417
  %v2435 = vmax.f32 %v2414, %v2418
  %v2436 = vmax.f32 %v2415, %v2419
  %v2437 = vpack.c.bf16 %v2421, %v2420
  %v2438 = vpack.c.bf16 %v2423, %v2422
  %v2439 = vpack.c.bf16 %v2425, %v2424
  %v2440 = vpack.c.bf16 %v2427, %v2426
  %v2441 = vpack.c.bf16 %v2429, %v2428
  %v2442 = vpack.c.bf16 %v2431, %v2430
  %v2443 = vpack.c.bf16 %v2433, %v2432
  %v2444 = vpack.c.bf16 %v2435, %v2434
  %v2445 = vpack.c.bf16 %v2436, %v2436
  %2446 = vst.msk [vmem:[#allocation3 + $0x88] sm:$0xff] %vm512, %v2437
  %2447 = vst.msk [vmem:[#allocation3 + $0x90] sm:$0xff] %vm512, %v2438
  %2448 = vst.msk [vmem:[#allocation3 + $0x98] sm:$0xff] %vm512, %v2439
  %2449 = vst.msk [vmem:[#allocation3 + $0xa0] sm:$0xff] %vm512, %v2440
  %2450 = vst.msk [vmem:[#allocation3 + $0xa8] sm:$0xff] %vm512, %v2441
  %2451 = vst.msk [vmem:[#allocation3 + $0xb0] sm:$0xff] %vm512, %v2442
  %2452 = vst.msk [vmem:[#allocation3 + $0xb8] sm:$0xff] %vm512, %v2443
  %2453 = vst.msk [vmem:[#allocation3 + $0xc0] sm:$0xff] %vm512, %v2444
  %2454 = vst.msk [vmem:[#allocation3 + $0xc8] sm:$0xf] %vm66, %v2445
  %v2455 = vld [vmem:[#allocation2 + $0x198] sm:$0xff]
  %v2456 = vld [vmem:[#allocation2 + $0x1a0] sm:$0xff]
  %v2457 = vld [vmem:[#allocation2 + $0x1a8] sm:$0xff]
  %v2458 = vld [vmem:[#allocation2 + $0x1b0] sm:$0xff]
  %v2459 = vld [vmem:[#allocation2 + $0x1b8] sm:$0xff]
  %v2460 = vld [vmem:[#allocation2 + $0x1c0] sm:$0xff]
  %v2461 = vld [vmem:[#allocation2 + $0x1c8] sm:$0xff]
  %v2462 = vld [vmem:[#allocation2 + $0x1d0] sm:$0xff]
  %v2463 = vld [vmem:[#allocation2 + $0x1d8] sm:$0xff]
  %v2464 = vld [vmem:[#allocation2 + $0x1e0] sm:$0xff]
  %v2465 = vld [vmem:[#allocation2 + $0x1e8] sm:$0xff]
  %v2466 = vld [vmem:[#allocation2 + $0x1f0] sm:$0xff]
  %v2467 = vld [vmem:[#allocation2 + $0x1f8] sm:$0xff]
  %v2468 = vld [vmem:[#allocation2 + $0x200] sm:$0xff]
  %v2469 = vld [vmem:[#allocation2 + $0x208] sm:$0xff]
  %v2470 = vld [vmem:[#allocation2 + $0x210] sm:$0xff]
  %v2471 = vld [vmem:[#allocation2 + $0x218] sm:$0xff]
  %v2472 = vld [vmem:[#allocation2 + $0x199] sm:$0xff]
  %v2473 = vld [vmem:[#allocation2 + $0x1a1] sm:$0xff]
  %v2474 = vld [vmem:[#allocation2 + $0x1a9] sm:$0xff]
  %v2475 = vld [vmem:[#allocation2 + $0x1b1] sm:$0xff]
  %v2476 = vld [vmem:[#allocation2 + $0x1b9] sm:$0xff]
  %v2477 = vld [vmem:[#allocation2 + $0x1c1] sm:$0xff]
  %v2478 = vld [vmem:[#allocation2 + $0x1c9] sm:$0xff]
  %v2479 = vld [vmem:[#allocation2 + $0x1d1] sm:$0xff]
  %v2480 = vld [vmem:[#allocation2 + $0x1d9] sm:$0xff]
  %v2481 = vld [vmem:[#allocation2 + $0x1e1] sm:$0xff]
  %v2482 = vld [vmem:[#allocation2 + $0x1e9] sm:$0xff]
  %v2483 = vld [vmem:[#allocation2 + $0x1f1] sm:$0xff]
  %v2484 = vld [vmem:[#allocation2 + $0x1f9] sm:$0xff]
  %v2485 = vld [vmem:[#allocation2 + $0x201] sm:$0xff]
  %v2486 = vld [vmem:[#allocation2 + $0x209] sm:$0xff]
  %v2487 = vld [vmem:[#allocation2 + $0x211] sm:$0xff]
  %v2488 = vld [vmem:[#allocation2 + $0x219] sm:$0xff]
  %v2489 = vmax.f32 %v2455, %v2472
  %v2490 = vmax.f32 %v2456, %v2473
  %v2491 = vmax.f32 %v2457, %v2474
  %v2492 = vmax.f32 %v2458, %v2475
  %v2493 = vmax.f32 %v2459, %v2476
  %v2494 = vmax.f32 %v2460, %v2477
  %v2495 = vmax.f32 %v2461, %v2478
  %v2496 = vmax.f32 %v2462, %v2479
  %v2497 = vmax.f32 %v2463, %v2480
  %v2498 = vmax.f32 %v2464, %v2481
  %v2499 = vmax.f32 %v2465, %v2482
  %v2500 = vmax.f32 %v2466, %v2483
  %v2501 = vmax.f32 %v2467, %v2484
  %v2502 = vmax.f32 %v2468, %v2485
  %v2503 = vmax.f32 %v2469, %v2486
  %v2504 = vmax.f32 %v2470, %v2487
  %v2505 = vmax.f32 %v2471, %v2488
  %v2506 = vld [vmem:[#allocation2 + $0x220] sm:$0xff]
  %v2507 = vld [vmem:[#allocation2 + $0x228] sm:$0xff]
  %v2508 = vld [vmem:[#allocation2 + $0x230] sm:$0xff]
  %v2509 = vld [vmem:[#allocation2 + $0x238] sm:$0xff]
  %v2510 = vmax.f32 %v2489, %v2459
  %v2511 = vmax.f32 %v2490, %v2460
  %v2512 = vmax.f32 %v2491, %v2461
  %v2513 = vmax.f32 %v2492, %v2462
  %v2514 = vmax.f32 %v2493, %v2463
  %v2515 = vmax.f32 %v2494, %v2464
  %v2516 = vmax.f32 %v2495, %v2465
  %v2517 = vmax.f32 %v2496, %v2466
  %v2518 = vmax.f32 %v2497, %v2467
  %v2519 = vmax.f32 %v2498, %v2468
  %v2520 = vmax.f32 %v2499, %v2469
  %v2521 = vmax.f32 %v2500, %v2470
  %v2522 = vmax.f32 %v2501, %v2471
  %v2523 = vmax.f32 %v2502, %v2506
  %v2524 = vmax.f32 %v2503, %v2507
  %v2525 = vmax.f32 %v2504, %v2508
  %v2526 = vmax.f32 %v2505, %v2509
  %v2527 = vld [vmem:[#allocation2 + $0x221] sm:$0xff]
  %v2528 = vld [vmem:[#allocation2 + $0x229] sm:$0xff]
  %v2529 = vld [vmem:[#allocation2 + $0x231] sm:$0xff]
  %v2530 = vld [vmem:[#allocation2 + $0x239] sm:$0xff]
  %v2531 = vmax.f32 %v2510, %v2476
  %v2532 = vmax.f32 %v2511, %v2477
  %v2533 = vmax.f32 %v2512, %v2478
  %v2534 = vmax.f32 %v2513, %v2479
  %v2535 = vmax.f32 %v2514, %v2480
  %v2536 = vmax.f32 %v2515, %v2481
  %v2537 = vmax.f32 %v2516, %v2482
  %v2538 = vmax.f32 %v2517, %v2483
  %v2539 = vmax.f32 %v2518, %v2484
  %v2540 = vmax.f32 %v2519, %v2485
  %v2541 = vmax.f32 %v2520, %v2486
  %v2542 = vmax.f32 %v2521, %v2487
  %v2543 = vmax.f32 %v2522, %v2488
  %v2544 = vmax.f32 %v2523, %v2527
  %v2545 = vmax.f32 %v2524, %v2528
  %v2546 = vmax.f32 %v2525, %v2529
  %v2547 = vmax.f32 %v2526, %v2530
  %v2548 = vpack.c.bf16 %v2532, %v2531
  %v2549 = vpack.c.bf16 %v2534, %v2533
  %v2550 = vpack.c.bf16 %v2536, %v2535
  %v2551 = vpack.c.bf16 %v2538, %v2537
  %v2552 = vpack.c.bf16 %v2540, %v2539
  %v2553 = vpack.c.bf16 %v2542, %v2541
  %v2554 = vpack.c.bf16 %v2544, %v2543
  %v2555 = vpack.c.bf16 %v2546, %v2545
  %v2556 = vpack.c.bf16 %v2547, %v2547
  %v2566 = vrot.slane %v2548, 4
  %v2567 = vrot.slane %v2549, 4
  %v2568 = vsel %vm2307, %v2566, %v2567
  %v2569 = vrot.slane %v2550, 4
  %v2570 = vsel %vm2307, %v2567, %v2569
  %v2571 = vrot.slane %v2551, 4
  %v2572 = vsel %vm2307, %v2569, %v2571
  %v2573 = vrot.slane %v2552, 4
  %v2574 = vsel %vm2307, %v2571, %v2573
  %v2575 = vrot.slane %v2553, 4
  %v2576 = vsel %vm2307, %v2573, %v2575
  %v2577 = vrot.slane %v2554, 4
  %v2578 = vsel %vm2307, %v2575, %v2577
  %v2579 = vrot.slane %v2555, 4
  %v2580 = vsel %vm2307, %v2577, %v2579
  %v2581 = vrot.slane %v2556, 4
  %v2582 = vsel %vm2307, %v2579, %v2581
  %2592 = vst.msk [vmem:[#allocation3 + $0xc8] sm:$0xf0] %vm2334, %v2566
  %2593 = vst.msk [vmem:[#allocation3 + $0xd0] sm:$0xff] %vm512, %v2568
  %2594 = vst.msk [vmem:[#allocation3 + $0xd8] sm:$0xff] %vm512, %v2570
  %2595 = vst.msk [vmem:[#allocation3 + $0xe0] sm:$0xff] %vm512, %v2572
  %2596 = vst.msk [vmem:[#allocation3 + $0xe8] sm:$0xff] %vm512, %v2574
  %2597 = vst.msk [vmem:[#allocation3 + $0xf0] sm:$0xff] %vm512, %v2576
  %2598 = vst.msk [vmem:[#allocation3 + $0xf8] sm:$0xff] %vm512, %v2578
  %2599 = vst.msk [vmem:[#allocation3 + $0x100] sm:$0xff] %vm512, %v2580
  %2600 = vst.msk [vmem:[#allocation3 + $0x108] sm:$0xff] %vm512, %v2582
  %v2601 = vld [vmem:[#allocation2 + $0x280] sm:$0xff]
  %v2602 = vld [vmem:[#allocation2 + $0x288] sm:$0xff]
  %v2603 = vld [vmem:[#allocation2 + $0x290] sm:$0xff]
  %v2604 = vld [vmem:[#allocation2 + $0x298] sm:$0xff]
  %v2605 = vld [vmem:[#allocation2 + $0x2a0] sm:$0xff]
  %v2606 = vld [vmem:[#allocation2 + $0x2a8] sm:$0xff]
  %v2607 = vld [vmem:[#allocation2 + $0x2b0] sm:$0xff]
  %v2608 = vld [vmem:[#allocation2 + $0x2b8] sm:$0xff]
  %v2609 = vld [vmem:[#allocation2 + $0x2c0] sm:$0xff]
  %v2610 = vld [vmem:[#allocation2 + $0x2c8] sm:$0xff]
  %v2611 = vld [vmem:[#allocation2 + $0x2d0] sm:$0xff]
  %v2612 = vld [vmem:[#allocation2 + $0x2d8] sm:$0xff]
  %v2613 = vld [vmem:[#allocation2 + $0x2e0] sm:$0xff]
  %v2614 = vld [vmem:[#allocation2 + $0x2e8] sm:$0xff]
  %v2615 = vld [vmem:[#allocation2 + $0x2f0] sm:$0xff]
  %v2616 = vld [vmem:[#allocation2 + $0x2f8] sm:$0xff]
  %v2617 = vld [vmem:[#allocation2 + $0x300] sm:$0xff]
  %v2618 = vld [vmem:[#allocation2 + $0x281] sm:$0xff]
  %v2619 = vld [vmem:[#allocation2 + $0x289] sm:$0xff]
  %v2620 = vld [vmem:[#allocation2 + $0x291] sm:$0xff]
  %v2621 = vld [vmem:[#allocation2 + $0x299] sm:$0xff]
  %v2622 = vld [vmem:[#allocation2 + $0x2a1] sm:$0xff]
  %v2623 = vld [vmem:[#allocation2 + $0x2a9] sm:$0xff]
  %v2624 = vld [vmem:[#allocation2 + $0x2b1] sm:$0xff]
  %v2625 = vld [vmem:[#allocation2 + $0x2b9] sm:$0xff]
  %v2626 = vld [vmem:[#allocation2 + $0x2c1] sm:$0xff]
  %v2627 = vld [vmem:[#allocation2 + $0x2c9] sm:$0xff]
  %v2628 = vld [vmem:[#allocation2 + $0x2d1] sm:$0xff]
  %v2629 = vld [vmem:[#allocation2 + $0x2d9] sm:$0xff]
  %v2630 = vld [vmem:[#allocation2 + $0x2e1] sm:$0xff]
  %v2631 = vld [vmem:[#allocation2 + $0x2e9] sm:$0xff]
  %v2632 = vld [vmem:[#allocation2 + $0x2f1] sm:$0xff]
  %v2633 = vld [vmem:[#allocation2 + $0x2f9] sm:$0xff]
  %v2634 = vld [vmem:[#allocation2 + $0x301] sm:$0xff]
  %v2635 = vmax.f32 %v2601, %v2618
  %v2636 = vmax.f32 %v2602, %v2619
  %v2637 = vmax.f32 %v2603, %v2620
  %v2638 = vmax.f32 %v2604, %v2621
  %v2639 = vmax.f32 %v2605, %v2622
  %v2640 = vmax.f32 %v2606, %v2623
  %v2641 = vmax.f32 %v2607, %v2624
  %v2642 = vmax.f32 %v2608, %v2625
  %v2643 = vmax.f32 %v2609, %v2626
  %v2644 = vmax.f32 %v2610, %v2627
  %v2645 = vmax.f32 %v2611, %v2628
  %v2646 = vmax.f32 %v2612, %v2629
  %v2647 = vmax.f32 %v2613, %v2630
  %v2648 = vmax.f32 %v2614, %v2631
  %v2649 = vmax.f32 %v2615, %v2632
  %v2650 = vmax.f32 %v2616, %v2633
  %v2651 = vmax.f32 %v2617, %v2634
  %v2652 = vld [vmem:[#allocation2 + $0x308] sm:$0xff]
  %v2653 = vld [vmem:[#allocation2 + $0x310] sm:$0xff]
  %v2654 = vld [vmem:[#allocation2 + $0x318] sm:$0xff]
  %v2655 = vld [vmem:[#allocation2 + $0x320] sm:$0xff]
  %v2656 = vmax.f32 %v2635, %v2605
  %v2657 = vmax.f32 %v2636, %v2606
  %v2658 = vmax.f32 %v2637, %v2607
  %v2659 = vmax.f32 %v2638, %v2608
  %v2660 = vmax.f32 %v2639, %v2609
  %v2661 = vmax.f32 %v2640, %v2610
  %v2662 = vmax.f32 %v2641, %v2611
  %v2663 = vmax.f32 %v2642, %v2612
  %v2664 = vmax.f32 %v2643, %v2613
  %v2665 = vmax.f32 %v2644, %v2614
  %v2666 = vmax.f32 %v2645, %v2615
  %v2667 = vmax.f32 %v2646, %v2616
  %v2668 = vmax.f32 %v2647, %v2617
  %v2669 = vmax.f32 %v2648, %v2652
  %v2670 = vmax.f32 %v2649, %v2653
  %v2671 = vmax.f32 %v2650, %v2654
  %v2672 = vmax.f32 %v2651, %v2655
  %v2673 = vld [vmem:[#allocation2 + $0x309] sm:$0xff]
  %v2674 = vld [vmem:[#allocation2 + $0x311] sm:$0xff]
  %v2675 = vld [vmem:[#allocation2 + $0x319] sm:$0xff]
  %v2676 = vld [vmem:[#allocation2 + $0x321] sm:$0xff]
  %v2677 = vmax.f32 %v2656, %v2622
  %v2678 = vmax.f32 %v2657, %v2623
  %v2679 = vmax.f32 %v2658, %v2624
  %v2680 = vmax.f32 %v2659, %v2625
  %v2681 = vmax.f32 %v2660, %v2626
  %v2682 = vmax.f32 %v2661, %v2627
  %v2683 = vmax.f32 %v2662, %v2628
  %v2684 = vmax.f32 %v2663, %v2629
  %v2685 = vmax.f32 %v2664, %v2630
  %v2686 = vmax.f32 %v2665, %v2631
  %v2687 = vmax.f32 %v2666, %v2632
  %v2688 = vmax.f32 %v2667, %v2633
  %v2689 = vmax.f32 %v2668, %v2634
  %v2690 = vmax.f32 %v2669, %v2673
  %v2691 = vmax.f32 %v2670, %v2674
  %v2692 = vmax.f32 %v2671, %v2675
  %v2693 = vmax.f32 %v2672, %v2676
  %v2694 = vpack.c.bf16 %v2678, %v2677
  %v2695 = vpack.c.bf16 %v2680, %v2679
  %v2696 = vpack.c.bf16 %v2682, %v2681
  %v2697 = vpack.c.bf16 %v2684, %v2683
  %v2698 = vpack.c.bf16 %v2686, %v2685
  %v2699 = vpack.c.bf16 %v2688, %v2687
  %v2700 = vpack.c.bf16 %v2690, %v2689
  %v2701 = vpack.c.bf16 %v2692, %v2691
  %v2702 = vpack.c.bf16 %v2693, %v2693
  %2703 = vst.msk [vmem:[#allocation3 + $0x110] sm:$0xff] %vm512, %v2694
  %2704 = vst.msk [vmem:[#allocation3 + $0x118] sm:$0xff] %vm512, %v2695
  %2705 = vst.msk [vmem:[#allocation3 + $0x120] sm:$0xff] %vm512, %v2696
  %2706 = vst.msk [vmem:[#allocation3 + $0x128] sm:$0xff] %vm512, %v2697
  %2707 = vst.msk [vmem:[#allocation3 + $0x130] sm:$0xff] %vm512, %v2698
  %2708 = vst.msk [vmem:[#allocation3 + $0x138] sm:$0xff] %vm512, %v2699
  %2709 = vst.msk [vmem:[#allocation3 + $0x140] sm:$0xff] %vm512, %v2700
  %2710 = vst.msk [vmem:[#allocation3 + $0x148] sm:$0xff] %vm512, %v2701
  %2711 = vst.msk [vmem:[#allocation3 + $0x150] sm:$0xf] %vm66, %v2702
  %v2712 = vld [vmem:[#allocation2 + $0x308] sm:$0xff]
  %v2713 = vld [vmem:[#allocation2 + $0x310] sm:$0xff]
  %v2714 = vld [vmem:[#allocation2 + $0x318] sm:$0xff]
  %v2715 = vld [vmem:[#allocation2 + $0x320] sm:$0xff]
  %v2716 = vld [vmem:[#allocation2 + $0x328] sm:$0xff]
  %v2717 = vld [vmem:[#allocation2 + $0x330] sm:$0xff]
  %v2718 = vld [vmem:[#allocation2 + $0x338] sm:$0xff]
  %v2719 = vld [vmem:[#allocation2 + $0x340] sm:$0xff]
  %v2720 = vld [vmem:[#allocation2 + $0x348] sm:$0xff]
  %v2721 = vld [vmem:[#allocation2 + $0x350] sm:$0xff]
  %v2722 = vld [vmem:[#allocation2 + $0x358] sm:$0xff]
  %v2723 = vld [vmem:[#allocation2 + $0x360] sm:$0xff]
  %v2724 = vld [vmem:[#allocation2 + $0x368] sm:$0xff]
  %v2725 = vld [vmem:[#allocation2 + $0x370] sm:$0xff]
  %v2726 = vld [vmem:[#allocation2 + $0x378] sm:$0xff]
  %v2727 = vld [vmem:[#allocation2 + $0x380] sm:$0xff]
  %v2728 = vld [vmem:[#allocation2 + $0x388] sm:$0xff]
  %v2729 = vld [vmem:[#allocation2 + $0x309] sm:$0xff]
  %v2730 = vld [vmem:[#allocation2 + $0x311] sm:$0xff]
  %v2731 = vld [vmem:[#allocation2 + $0x319] sm:$0xff]
  %v2732 = vld [vmem:[#allocation2 + $0x321] sm:$0xff]
  %v2733 = vld [vmem:[#allocation2 + $0x329] sm:$0xff]
  %v2734 = vld [vmem:[#allocation2 + $0x331] sm:$0xff]
  %v2735 = vld [vmem:[#allocation2 + $0x339] sm:$0xff]
  %v2736 = vld [vmem:[#allocation2 + $0x341] sm:$0xff]
  %v2737 = vld [vmem:[#allocation2 + $0x349] sm:$0xff]
  %v2738 = vld [vmem:[#allocation2 + $0x351] sm:$0xff]
  %v2739 = vld [vmem:[#allocation2 + $0x359] sm:$0xff]
  %v2740 = vld [vmem:[#allocation2 + $0x361] sm:$0xff]
  %v2741 = vld [vmem:[#allocation2 + $0x369] sm:$0xff]
  %v2742 = vld [vmem:[#allocation2 + $0x371] sm:$0xff]
  %v2743 = vld [vmem:[#allocation2 + $0x379] sm:$0xff]
  %v2744 = vld [vmem:[#allocation2 + $0x381] sm:$0xff]
  %v2745 = vld [vmem:[#allocation2 + $0x389] sm:$0xff]
  %v2746 = vmax.f32 %v2712, %v2729
  %v2747 = vmax.f32 %v2713, %v2730
  %v2748 = vmax.f32 %v2714, %v2731
  %v2749 = vmax.f32 %v2715, %v2732
  %v2750 = vmax.f32 %v2716, %v2733
  %v2751 = vmax.f32 %v2717, %v2734
  %v2752 = vmax.f32 %v2718, %v2735
  %v2753 = vmax.f32 %v2719, %v2736
  %v2754 = vmax.f32 %v2720, %v2737
  %v2755 = vmax.f32 %v2721, %v2738
  %v2756 = vmax.f32 %v2722, %v2739
  %v2757 = vmax.f32 %v2723, %v2740
  %v2758 = vmax.f32 %v2724, %v2741
  %v2759 = vmax.f32 %v2725, %v2742
  %v2760 = vmax.f32 %v2726, %v2743
  %v2761 = vmax.f32 %v2727, %v2744
  %v2762 = vmax.f32 %v2728, %v2745
  %v2763 = vld [vmem:[#allocation2 + $0x390] sm:$0xff]
  %v2764 = vld [vmem:[#allocation2 + $0x398] sm:$0xff]
  %v2765 = vld [vmem:[#allocation2 + $0x3a0] sm:$0xff]
  %v2766 = vld [vmem:[#allocation2 + $0x3a8] sm:$0xff]
  %v2767 = vmax.f32 %v2746, %v2716
  %v2768 = vmax.f32 %v2747, %v2717
  %v2769 = vmax.f32 %v2748, %v2718
  %v2770 = vmax.f32 %v2749, %v2719
  %v2771 = vmax.f32 %v2750, %v2720
  %v2772 = vmax.f32 %v2751, %v2721
  %v2773 = vmax.f32 %v2752, %v2722
  %v2774 = vmax.f32 %v2753, %v2723
  %v2775 = vmax.f32 %v2754, %v2724
  %v2776 = vmax.f32 %v2755, %v2725
  %v2777 = vmax.f32 %v2756, %v2726
  %v2778 = vmax.f32 %v2757, %v2727
  %v2779 = vmax.f32 %v2758, %v2728
  %v2780 = vmax.f32 %v2759, %v2763
  %v2781 = vmax.f32 %v2760, %v2764
  %v2782 = vmax.f32 %v2761, %v2765
  %v2783 = vmax.f32 %v2762, %v2766
  %v2784 = vld [vmem:[#allocation2 + $0x391] sm:$0xff]
  %v2785 = vld [vmem:[#allocation2 + $0x399] sm:$0xff]
  %v2786 = vld [vmem:[#allocation2 + $0x3a1] sm:$0xff]
  %v2787 = vld [vmem:[#allocation2 + $0x3a9] sm:$0xff]
  %v2788 = vmax.f32 %v2767, %v2733
  %v2789 = vmax.f32 %v2768, %v2734
  %v2790 = vmax.f32 %v2769, %v2735
  %v2791 = vmax.f32 %v2770, %v2736
  %v2792 = vmax.f32 %v2771, %v2737
  %v2793 = vmax.f32 %v2772, %v2738
  %v2794 = vmax.f32 %v2773, %v2739
  %v2795 = vmax.f32 %v2774, %v2740
  %v2796 = vmax.f32 %v2775, %v2741
  %v2797 = vmax.f32 %v2776, %v2742
  %v2798 = vmax.f32 %v2777, %v2743
  %v2799 = vmax.f32 %v2778, %v2744
  %v2800 = vmax.f32 %v2779, %v2745
  %v2801 = vmax.f32 %v2780, %v2784
  %v2802 = vmax.f32 %v2781, %v2785
  %v2803 = vmax.f32 %v2782, %v2786
  %v2804 = vmax.f32 %v2783, %v2787
  %v2805 = vpack.c.bf16 %v2789, %v2788
  %v2806 = vpack.c.bf16 %v2791, %v2790
  %v2807 = vpack.c.bf16 %v2793, %v2792
  %v2808 = vpack.c.bf16 %v2795, %v2794
  %v2809 = vpack.c.bf16 %v2797, %v2796
  %v2810 = vpack.c.bf16 %v2799, %v2798
  %v2811 = vpack.c.bf16 %v2801, %v2800
  %v2812 = vpack.c.bf16 %v2803, %v2802
  %v2813 = vpack.c.bf16 %v2804, %v2804
  %v2823 = vrot.slane %v2805, 4
  %v2824 = vrot.slane %v2806, 4
  %v2825 = vsel %vm2307, %v2823, %v2824
  %v2826 = vrot.slane %v2807, 4
  %v2827 = vsel %vm2307, %v2824, %v2826
  %v2828 = vrot.slane %v2808, 4
  %v2829 = vsel %vm2307, %v2826, %v2828
  %v2830 = vrot.slane %v2809, 4
  %v2831 = vsel %vm2307, %v2828, %v2830
  %v2832 = vrot.slane %v2810, 4
  %v2833 = vsel %vm2307, %v2830, %v2832
  %v2834 = vrot.slane %v2811, 4
  %v2835 = vsel %vm2307, %v2832, %v2834
  %v2836 = vrot.slane %v2812, 4
  %v2837 = vsel %vm2307, %v2834, %v2836
  %v2838 = vrot.slane %v2813, 4
  %v2839 = vsel %vm2307, %v2836, %v2838
  %2849 = vst.msk [vmem:[#allocation3 + $0x150] sm:$0xf0] %vm2334, %v2823
  %2850 = vst.msk [vmem:[#allocation3 + $0x158] sm:$0xff] %vm512, %v2825
  %2851 = vst.msk [vmem:[#allocation3 + $0x160] sm:$0xff] %vm512, %v2827
  %2852 = vst.msk [vmem:[#allocation3 + $0x168] sm:$0xff] %vm512, %v2829
  %2853 = vst.msk [vmem:[#allocation3 + $0x170] sm:$0xff] %vm512, %v2831
  %2854 = vst.msk [vmem:[#allocation3 + $0x178] sm:$0xff] %vm512, %v2833
  %2855 = vst.msk [vmem:[#allocation3 + $0x180] sm:$0xff] %vm512, %v2835
  %2856 = vst.msk [vmem:[#allocation3 + $0x188] sm:$0xff] %vm512, %v2837
  %2857 = vst.msk [vmem:[#allocation3 + $0x190] sm:$0xff] %vm512, %v2839
  %v2858 = vld [vmem:[#allocation2 + $0x390] sm:$0xff]
  %v2859 = vld [vmem:[#allocation2 + $0x398] sm:$0xff]
  %v2860 = vld [vmem:[#allocation2 + $0x3a0] sm:$0xff]
  %v2861 = vld [vmem:[#allocation2 + $0x3a8] sm:$0xff]
  %v2862 = vld [vmem:[#allocation2 + $0x3b0] sm:$0xff]
  %v2863 = vld [vmem:[#allocation2 + $0x3b8] sm:$0xff]
  %v2864 = vld [vmem:[#allocation2 + $0x3c0] sm:$0xff]
  %v2865 = vld [vmem:[#allocation2 + $0x3c8] sm:$0xff]
  %v2866 = vld [vmem:[#allocation2 + $0x3d0] sm:$0xff]
  %v2867 = vld [vmem:[#allocation2 + $0x3d8] sm:$0xff]
  %v2868 = vld [vmem:[#allocation2 + $0x3e0] sm:$0xff]
  %v2869 = vld [vmem:[#allocation2 + $0x3e8] sm:$0xff]
  %v2870 = vld [vmem:[#allocation2 + $0x3f0] sm:$0xff]
  %v2871 = vld [vmem:[#allocation2 + $0x3f8] sm:$0xff]
  %v2872 = vld [vmem:[#allocation2 + $0x400] sm:$0xff]
  %v2873 = vld [vmem:[#allocation2 + $0x408] sm:$0xff]
  %v2874 = vld [vmem:[#allocation2 + $0x410] sm:$0xff]
  %v2875 = vld [vmem:[#allocation2 + $0x391] sm:$0xff]
  %v2876 = vld [vmem:[#allocation2 + $0x399] sm:$0xff]
  %v2877 = vld [vmem:[#allocation2 + $0x3a1] sm:$0xff]
  %v2878 = vld [vmem:[#allocation2 + $0x3a9] sm:$0xff]
  %v2879 = vld [vmem:[#allocation2 + $0x3b1] sm:$0xff]
  %v2880 = vld [vmem:[#allocation2 + $0x3b9] sm:$0xff]
  %v2881 = vld [vmem:[#allocation2 + $0x3c1] sm:$0xff]
  %v2882 = vld [vmem:[#allocation2 + $0x3c9] sm:$0xff]
  %v2883 = vld [vmem:[#allocation2 + $0x3d1] sm:$0xff]
  %v2884 = vld [vmem:[#allocation2 + $0x3d9] sm:$0xff]
  %v2885 = vld [vmem:[#allocation2 + $0x3e1] sm:$0xff]
  %v2886 = vld [vmem:[#allocation2 + $0x3e9] sm:$0xff]
  %v2887 = vld [vmem:[#allocation2 + $0x3f1] sm:$0xff]
  %v2888 = vld [vmem:[#allocation2 + $0x3f9] sm:$0xff]
  %v2889 = vld [vmem:[#allocation2 + $0x401] sm:$0xff]
  %v2890 = vld [vmem:[#allocation2 + $0x409] sm:$0xff]
  %v2891 = vld [vmem:[#allocation2 + $0x411] sm:$0xff]
  %v2892 = vmax.f32 %v2858, %v2875
  %v2893 = vmax.f32 %v2859, %v2876
  %v2894 = vmax.f32 %v2860, %v2877
  %v2895 = vmax.f32 %v2861, %v2878
  %v2896 = vmax.f32 %v2862, %v2879
  %v2897 = vmax.f32 %v2863, %v2880
  %v2898 = vmax.f32 %v2864, %v2881
  %v2899 = vmax.f32 %v2865, %v2882
  %v2900 = vmax.f32 %v2866, %v2883
  %v2901 = vmax.f32 %v2867, %v2884
  %v2902 = vmax.f32 %v2868, %v2885
  %v2903 = vmax.f32 %v2869, %v2886
  %v2904 = vmax.f32 %v2870, %v2887
  %v2905 = vmax.f32 %v2871, %v2888
  %v2906 = vmax.f32 %v2872, %v2889
  %v2907 = vmax.f32 %v2873, %v2890
  %v2908 = vmax.f32 %v2874, %v2891
  %v2909 = vld [vmem:[#allocation2 + $0x418] sm:$0xff]
  %v2910 = vld [vmem:[#allocation2 + $0x420] sm:$0xff]
  %v2911 = vld [vmem:[#allocation2 + $0x428] sm:$0xff]
  %v2912 = vld [vmem:[#allocation2 + $0x430] sm:$0xff]
  %v2913 = vmax.f32 %v2892, %v2862
  %v2914 = vmax.f32 %v2893, %v2863
  %v2915 = vmax.f32 %v2894, %v2864
  %v2916 = vmax.f32 %v2895, %v2865
  %v2917 = vmax.f32 %v2896, %v2866
  %v2918 = vmax.f32 %v2897, %v2867
  %v2919 = vmax.f32 %v2898, %v2868
  %v2920 = vmax.f32 %v2899, %v2869
  %v2921 = vmax.f32 %v2900, %v2870
  %v2922 = vmax.f32 %v2901, %v2871
  %v2923 = vmax.f32 %v2902, %v2872
  %v2924 = vmax.f32 %v2903, %v2873
  %v2925 = vmax.f32 %v2904, %v2874
  %v2926 = vmax.f32 %v2905, %v2909
  %v2927 = vmax.f32 %v2906, %v2910
  %v2928 = vmax.f32 %v2907, %v2911
  %v2929 = vmax.f32 %v2908, %v2912
  %v2930 = vld [vmem:[#allocation2 + $0x419] sm:$0xff]
  %v2931 = vld [vmem:[#allocation2 + $0x421] sm:$0xff]
  %v2932 = vld [vmem:[#allocation2 + $0x429] sm:$0xff]
  %v2933 = vld [vmem:[#allocation2 + $0x431] sm:$0xff]
  %v2934 = vmax.f32 %v2913, %v2879
  %v2935 = vmax.f32 %v2914, %v2880
  %v2936 = vmax.f32 %v2915, %v2881
  %v2937 = vmax.f32 %v2916, %v2882
  %v2938 = vmax.f32 %v2917, %v2883
  %v2939 = vmax.f32 %v2918, %v2884
  %v2940 = vmax.f32 %v2919, %v2885
  %v2941 = vmax.f32 %v2920, %v2886
  %v2942 = vmax.f32 %v2921, %v2887
  %v2943 = vmax.f32 %v2922, %v2888
  %v2944 = vmax.f32 %v2923, %v2889
  %v2945 = vmax.f32 %v2924, %v2890
  %v2946 = vmax.f32 %v2925, %v2891
  %v2947 = vmax.f32 %v2926, %v2930
  %v2948 = vmax.f32 %v2927, %v2931
  %v2949 = vmax.f32 %v2928, %v2932
  %v2950 = vmax.f32 %v2929, %v2933
  %v2951 = vpack.c.bf16 %v2935, %v2934
  %v2952 = vpack.c.bf16 %v2937, %v2936
  %v2953 = vpack.c.bf16 %v2939, %v2938
  %v2954 = vpack.c.bf16 %v2941, %v2940
  %v2955 = vpack.c.bf16 %v2943, %v2942
  %v2956 = vpack.c.bf16 %v2945, %v2944
  %v2957 = vpack.c.bf16 %v2947, %v2946
  %v2958 = vpack.c.bf16 %v2949, %v2948
  %v2959 = vpack.c.bf16 %v2950, %v2950
  %2960 = vst.msk [vmem:[#allocation3 + $0x198] sm:$0xff] %vm512, %v2951
  %2961 = vst.msk [vmem:[#allocation3 + $0x1a0] sm:$0xff] %vm512, %v2952
  %2962 = vst.msk [vmem:[#allocation3 + $0x1a8] sm:$0xff] %vm512, %v2953
  %2963 = vst.msk [vmem:[#allocation3 + $0x1b0] sm:$0xff] %vm512, %v2954
  %2964 = vst.msk [vmem:[#allocation3 + $0x1b8] sm:$0xff] %vm512, %v2955
  %2965 = vst.msk [vmem:[#allocation3 + $0x1c0] sm:$0xff] %vm512, %v2956
  %2966 = vst.msk [vmem:[#allocation3 + $0x1c8] sm:$0xff] %vm512, %v2957
  %2967 = vst.msk [vmem:[#allocation3 + $0x1d0] sm:$0xff] %vm512, %v2958
  %2968 = vst.msk [vmem:[#allocation3 + $0x1d8] sm:$0xf] %vm66, %v2959
  %v2969 = vld [vmem:[#allocation2 + $0x418] sm:$0xff]
  %v2970 = vld [vmem:[#allocation2 + $0x420] sm:$0xff]
  %v2971 = vld [vmem:[#allocation2 + $0x428] sm:$0xff]
  %v2972 = vld [vmem:[#allocation2 + $0x430] sm:$0xff]
  %v2973 = vld [vmem:[#allocation2 + $0x438] sm:$0xff]
  %v2974 = vld [vmem:[#allocation2 + $0x440] sm:$0xff]
  %v2975 = vld [vmem:[#allocation2 + $0x448] sm:$0xff]
  %v2976 = vld [vmem:[#allocation2 + $0x450] sm:$0xff]
  %v2977 = vld [vmem:[#allocation2 + $0x458] sm:$0xff]
  %v2978 = vld [vmem:[#allocation2 + $0x460] sm:$0xff]
  %v2979 = vld [vmem:[#allocation2 + $0x468] sm:$0xff]
  %v2980 = vld [vmem:[#allocation2 + $0x470] sm:$0xff]
  %v2981 = vld [vmem:[#allocation2 + $0x478] sm:$0xff]
  %v2982 = vld [vmem:[#allocation2 + $0x480] sm:$0xff]
  %v2983 = vld [vmem:[#allocation2 + $0x488] sm:$0xff]
  %v2984 = vld [vmem:[#allocation2 + $0x490] sm:$0xff]
  %v2985 = vld [vmem:[#allocation2 + $0x498] sm:$0xff]
  %v2986 = vld [vmem:[#allocation2 + $0x419] sm:$0xff]
  %v2987 = vld [vmem:[#allocation2 + $0x421] sm:$0xff]
  %v2988 = vld [vmem:[#allocation2 + $0x429] sm:$0xff]
  %v2989 = vld [vmem:[#allocation2 + $0x431] sm:$0xff]
  %v2990 = vld [vmem:[#allocation2 + $0x439] sm:$0xff]
  %v2991 = vld [vmem:[#allocation2 + $0x441] sm:$0xff]
  %v2992 = vld [vmem:[#allocation2 + $0x449] sm:$0xff]
  %v2993 = vld [vmem:[#allocation2 + $0x451] sm:$0xff]
  %v2994 = vld [vmem:[#allocation2 + $0x459] sm:$0xff]
  %v2995 = vld [vmem:[#allocation2 + $0x461] sm:$0xff]
  %v2996 = vld [vmem:[#allocation2 + $0x469] sm:$0xff]
  %v2997 = vld [vmem:[#allocation2 + $0x471] sm:$0xff]
  %v2998 = vld [vmem:[#allocation2 + $0x479] sm:$0xff]
  %v2999 = vld [vmem:[#allocation2 + $0x481] sm:$0xff]
  %v3000 = vld [vmem:[#allocation2 + $0x489] sm:$0xff]
  %v3001 = vld [vmem:[#allocation2 + $0x491] sm:$0xff]
  %v3002 = vld [vmem:[#allocation2 + $0x499] sm:$0xff]
  %v3003 = vmax.f32 %v2969, %v2986
  %v3004 = vmax.f32 %v2970, %v2987
  %v3005 = vmax.f32 %v2971, %v2988
  %v3006 = vmax.f32 %v2972, %v2989
  %v3007 = vmax.f32 %v2973, %v2990
  %v3008 = vmax.f32 %v2974, %v2991
  %v3009 = vmax.f32 %v2975, %v2992
  %v3010 = vmax.f32 %v2976, %v2993
  %v3011 = vmax.f32 %v2977, %v2994
  %v3012 = vmax.f32 %v2978, %v2995
  %v3013 = vmax.f32 %v2979, %v2996
  %v3014 = vmax.f32 %v2980, %v2997
  %v3015 = vmax.f32 %v2981, %v2998
  %v3016 = vmax.f32 %v2982, %v2999
  %v3017 = vmax.f32 %v2983, %v3000
  %v3018 = vmax.f32 %v2984, %v3001
  %v3019 = vmax.f32 %v2985, %v3002
  %v3020 = vld [vmem:[#allocation2 + $0x4a0] sm:$0xff]
  %v3021 = vld [vmem:[#allocation2 + $0x4a8] sm:$0xff]
  %v3022 = vld [vmem:[#allocation2 + $0x4b0] sm:$0xff]
  %v3023 = vld [vmem:[#allocation2 + $0x4b8] sm:$0xff]
  %v3024 = vmax.f32 %v3003, %v2973
  %v3025 = vmax.f32 %v3004, %v2974
  %v3026 = vmax.f32 %v3005, %v2975
  %v3027 = vmax.f32 %v3006, %v2976
  %v3028 = vmax.f32 %v3007, %v2977
  %v3029 = vmax.f32 %v3008, %v2978
  %v3030 = vmax.f32 %v3009, %v2979
  %v3031 = vmax.f32 %v3010, %v2980
  %v3032 = vmax.f32 %v3011, %v2981
  %v3033 = vmax.f32 %v3012, %v2982
  %v3034 = vmax.f32 %v3013, %v2983
  %v3035 = vmax.f32 %v3014, %v2984
  %v3036 = vmax.f32 %v3015, %v2985
  %v3037 = vmax.f32 %v3016, %v3020
  %v3038 = vmax.f32 %v3017, %v3021
  %v3039 = vmax.f32 %v3018, %v3022
  %v3040 = vmax.f32 %v3019, %v3023
  %v3041 = vld [vmem:[#allocation2 + $0x4a1] sm:$0xff]
  %v3042 = vld [vmem:[#allocation2 + $0x4a9] sm:$0xff]
  %v3043 = vld [vmem:[#allocation2 + $0x4b1] sm:$0xff]
  %v3044 = vld [vmem:[#allocation2 + $0x4b9] sm:$0xff]
  %v3045 = vmax.f32 %v3024, %v2990
  %v3046 = vmax.f32 %v3025, %v2991
  %v3047 = vmax.f32 %v3026, %v2992
  %v3048 = vmax.f32 %v3027, %v2993
  %v3049 = vmax.f32 %v3028, %v2994
  %v3050 = vmax.f32 %v3029, %v2995
  %v3051 = vmax.f32 %v3030, %v2996
  %v3052 = vmax.f32 %v3031, %v2997
  %v3053 = vmax.f32 %v3032, %v2998
  %v3054 = vmax.f32 %v3033, %v2999
  %v3055 = vmax.f32 %v3034, %v3000
  %v3056 = vmax.f32 %v3035, %v3001
  %v3057 = vmax.f32 %v3036, %v3002
  %v3058 = vmax.f32 %v3037, %v3041
  %v3059 = vmax.f32 %v3038, %v3042
  %v3060 = vmax.f32 %v3039, %v3043
  %v3061 = vmax.f32 %v3040, %v3044
  %v3062 = vpack.c.bf16 %v3046, %v3045
  %v3063 = vpack.c.bf16 %v3048, %v3047
  %v3064 = vpack.c.bf16 %v3050, %v3049
  %v3065 = vpack.c.bf16 %v3052, %v3051
  %v3066 = vpack.c.bf16 %v3054, %v3053
  %v3067 = vpack.c.bf16 %v3056, %v3055
  %v3068 = vpack.c.bf16 %v3058, %v3057
  %v3069 = vpack.c.bf16 %v3060, %v3059
  %v3070 = vpack.c.bf16 %v3061, %v3061
  %v3080 = vrot.slane %v3062, 4
  %v3081 = vrot.slane %v3063, 4
  %v3082 = vsel %vm2307, %v3080, %v3081
  %v3083 = vrot.slane %v3064, 4
  %v3084 = vsel %vm2307, %v3081, %v3083
  %v3085 = vrot.slane %v3065, 4
  %v3086 = vsel %vm2307, %v3083, %v3085
  %v3087 = vrot.slane %v3066, 4
  %v3088 = vsel %vm2307, %v3085, %v3087
  %v3089 = vrot.slane %v3067, 4
  %v3090 = vsel %vm2307, %v3087, %v3089
  %v3091 = vrot.slane %v3068, 4
  %v3092 = vsel %vm2307, %v3089, %v3091
  %v3093 = vrot.slane %v3069, 4
  %v3094 = vsel %vm2307, %v3091, %v3093
  %v3095 = vrot.slane %v3070, 4
  %v3096 = vsel %vm2307, %v3093, %v3095
  %3106 = vst.msk [vmem:[#allocation3 + $0x1d8] sm:$0xf0] %vm2334, %v3080
  %3107 = vst.msk [vmem:[#allocation3 + $0x1e0] sm:$0xff] %vm512, %v3082
  %3108 = vst.msk [vmem:[#allocation3 + $0x1e8] sm:$0xff] %vm512, %v3084
  %3109 = vst.msk [vmem:[#allocation3 + $0x1f0] sm:$0xff] %vm512, %v3086
  %3110 = vst.msk [vmem:[#allocation3 + $0x1f8] sm:$0xff] %vm512, %v3088
  %3111 = vst.msk [vmem:[#allocation3 + $0x200] sm:$0xff] %vm512, %v3090
  %3112 = vst.msk [vmem:[#allocation3 + $0x208] sm:$0xff] %vm512, %v3092
  %3113 = vst.msk [vmem:[#allocation3 + $0x210] sm:$0xff] %vm512, %v3094
  %3114 = vst.msk [vmem:[#allocation3 + $0x218] sm:$0xff] %vm512, %v3096
  %v3115 = vld [vmem:[%s3] sm:$0xff]
  %v3116 = vld [vmem:[%s3 + $0x8] sm:$0xff]
  %v3117 = vld [vmem:[%s3 + $0x10] sm:$0xf]
  %v3118 = vld [vmem:[%s3 + $0x14] sm:$0xff]
  %v3119 = vld [vmem:[%s3 + $0x1c] sm:$0xff]
  %v3120 = vld [vmem:[%s3 + $0x24] sm:$0xf]
  %v3121 = vld [vmem:[%s3 + $0x28] sm:$0xff]
  %v3122 = vld [vmem:[%s3 + $0x30] sm:$0xff]
  %v3123 = vld [vmem:[%s3 + $0x38] sm:$0xf]
  %v3124 = vld [vmem:[%s3 + $0x3c] sm:$0xff]
  %v3125 = vld [vmem:[%s3 + $0x44] sm:$0xff]
  %v3126 = vld [vmem:[%s3 + $0x4c] sm:$0xf]
  %v3127 = vld [vmem:[%s3 + $0x50] sm:$0xff]
  %v3128 = vld [vmem:[%s3 + $0x58] sm:$0xff]
  %v3129 = vld [vmem:[%s3 + $0x60] sm:$0xf]
  %v3130 = vld [vmem:[%s3 + $0x64] sm:$0xff]
  %v3131 = vld [vmem:[%s3 + $0x6c] sm:$0xff]
  %v3132 = vld [vmem:[%s3 + $0x74] sm:$0xf]
  %v3133 = vld [vmem:[%s3 + $0x78] sm:$0xff]
  %v3134 = vld [vmem:[%s3 + $0x80] sm:$0xff]
  %v3135 = vld [vmem:[%s3 + $0x88] sm:$0xf]
  %v3136 = vld [vmem:[%s3 + $0x8c] sm:$0xff]
  %v3137 = vld [vmem:[%s3 + $0x94] sm:$0xff]
  %v3138 = vld [vmem:[%s3 + $0x9c] sm:$0xf]
  %v3139 = vld [vmem:[%s3 + $0xa0] sm:$0xff]
  %v3140 = vld [vmem:[%s3 + $0xa8] sm:$0xff]
  %v3141 = vld [vmem:[%s3 + $0xb0] sm:$0xf]
  %v3142 = vld [vmem:[%s3 + $0xb4] sm:$0xff]
  %v3143 = vld [vmem:[%s3 + $0xbc] sm:$0xff]
  %v3144 = vld [vmem:[%s3 + $0xc4] sm:$0xf]
  %v3145 = vld [vmem:[%s3 + $0xc8] sm:$0xff]
  %v3146 = vld [vmem:[%s3 + $0xd0] sm:$0xff]
  %v3147 = vld [vmem:[%s3 + $0xd8] sm:$0xf]
  %v3148 = vld [vmem:[%s3 + $0xdc] sm:$0xff]
  %v3149 = vld [vmem:[%s3 + $0xe4] sm:$0xff]
  %v3150 = vld [vmem:[%s3 + $0xec] sm:$0xf]
  %v3151 = vld [vmem:[%s3 + $0xf0] sm:$0xff]
  %v3152 = vld [vmem:[%s3 + $0xf8] sm:$0xff]
  %v3153 = vld [vmem:[%s3 + $0x100] sm:$0xf]
  %v3154 = vld [vmem:[%s3 + $0x104] sm:$0xff]
  %v3155 = vld [vmem:[%s3 + $0x10c] sm:$0xff]
  %v3156 = vld [vmem:[%s3 + $0x114] sm:$0xf]
  %v3157 = vld [vmem:[%s3 + $0x118] sm:$0xff]
  %v3158 = vld [vmem:[%s3 + $0x120] sm:$0xff]
  %v3159 = vld [vmem:[%s3 + $0x128] sm:$0xf]
  %v3160 = vld [vmem:[%s3 + $0x12c] sm:$0xff]
  %v3161 = vld [vmem:[%s3 + $0x134] sm:$0xff]
  %v3162 = vld [vmem:[%s3 + $0x13c] sm:$0xf]
  %v3163 = vld [vmem:[%s3 + $0x140] sm:$0xff]
  %v3164 = vld [vmem:[%s3 + $0x148] sm:$0xff]
  %v3165 = vld [vmem:[%s3 + $0x150] sm:$0xf]
  %v3166 = vld [vmem:[%s3 + $0x154] sm:$0xff]
  %v3167 = vld [vmem:[%s3 + $0x15c] sm:$0xff]
  %v3168 = vld [vmem:[%s3 + $0x164] sm:$0xf]
  %v3169 = vld [vmem:[#allocation3] sm:$0xff]
  %v3170 = vld [vmem:[#allocation3 + $0x8] sm:$0xff]
  %v3171 = vld [vmem:[#allocation3 + $0x10] sm:$0xff]
  %v3172 = vld [vmem:[#allocation3 + $0x18] sm:$0xff]
  %v3173 = vld [vmem:[#allocation3 + $0x20] sm:$0xff]
  %v3174 = vld [vmem:[#allocation3 + $0x28] sm:$0xff]
  %v3175 = vld [vmem:[#allocation3 + $0x30] sm:$0xff]
  %v3176 = vld [vmem:[#allocation3 + $0x38] sm:$0xff]
  %v3177 = vld [vmem:[#allocation3 + $0x40] sm:$0xff]
  %v3178 = vld [vmem:[#allocation3 + $0x48] sm:$0xff]
  %v3179 = vld [vmem:[#allocation3 + $0x50] sm:$0xff]
  %v3180 = vld [vmem:[#allocation3 + $0x58] sm:$0xff]
  %v3181 = vld [vmem:[#allocation3 + $0x60] sm:$0xff]
  %v3182 = vld [vmem:[#allocation3 + $0x68] sm:$0xff]
  %v3183 = vld [vmem:[#allocation3 + $0x70] sm:$0xff]
  %v3184 = vld [vmem:[#allocation3 + $0x78] sm:$0xff]
  %v3185 = vld [vmem:[#allocation3 + $0x80] sm:$0xff]
  %v3186 = vld [vmem:[#allocation3 + $0x88] sm:$0xff]
  %v3187 = vld [vmem:[#allocation3 + $0x90] sm:$0xff]
  %v3188 = vld [vmem:[#allocation3 + $0x98] sm:$0xff]
  %v3189 = vld [vmem:[#allocation3 + $0xa0] sm:$0xff]
  %v3190 = vld [vmem:[#allocation3 + $0xa8] sm:$0xff]
  %v3191 = vld [vmem:[#allocation3 + $0xb0] sm:$0xff]
  %v3192 = vld [vmem:[#allocation3 + $0xb8] sm:$0xff]
  %v3193 = vld [vmem:[#allocation3 + $0xc0] sm:$0xff]
  %v3194 = vld [vmem:[#allocation3 + $0xc8] sm:$0xff]
  %v3195 = vld [vmem:[#allocation3 + $0xd0] sm:$0xff]
  %v3196 = vld [vmem:[#allocation3 + $0xd8] sm:$0xff]
  %v3197 = vld [vmem:[#allocation3 + $0xe0] sm:$0xff]
  %v3198 = vld [vmem:[#allocation3 + $0xe8] sm:$0xff]
  %v3199 = vld [vmem:[#allocation3 + $0xf0] sm:$0xff]
  %v3200 = vld [vmem:[#allocation3 + $0xf8] sm:$0xff]
  %v3201 = vld [vmem:[#allocation3 + $0x100] sm:$0xff]
  %v3202 = vld [vmem:[#allocation3 + $0x108] sm:$0xff]
  %v3257 = vunpack.c.l.b16 %v3115
  %v3258 = vunpack.c.h.b16 %v3115
  %v3259 = vunpack.c.l.b16 %v3116
  %v3260 = vunpack.c.h.b16 %v3116
  %v3261 = vunpack.c.l.b16 %v3117
  %v3262 = vunpack.c.l.b16 %v3118
  %v3263 = vunpack.c.h.b16 %v3118
  %v3264 = vunpack.c.l.b16 %v3119
  %v3265 = vunpack.c.h.b16 %v3119
  %v3266 = vunpack.c.l.b16 %v3120
  %v3267 = vunpack.c.l.b16 %v3121
  %v3268 = vunpack.c.h.b16 %v3121
  %v3269 = vunpack.c.l.b16 %v3122
  %v3270 = vunpack.c.h.b16 %v3122
  %v3271 = vunpack.c.l.b16 %v3123
  %v3272 = vunpack.c.l.b16 %v3124
  %v3273 = vunpack.c.h.b16 %v3124
  %v3274 = vunpack.c.l.b16 %v3125
  %v3275 = vunpack.c.h.b16 %v3125
  %v3276 = vunpack.c.l.b16 %v3126
  %v3277 = vunpack.c.l.b16 %v3127
  %v3278 = vunpack.c.h.b16 %v3127
  %v3279 = vunpack.c.l.b16 %v3128
  %v3280 = vunpack.c.h.b16 %v3128
  %v3281 = vunpack.c.l.b16 %v3129
  %v3282 = vunpack.c.l.b16 %v3130
  %v3283 = vunpack.c.h.b16 %v3130
  %v3284 = vunpack.c.l.b16 %v3131
  %v3285 = vunpack.c.h.b16 %v3131
  %v3286 = vunpack.c.l.b16 %v3132
  %v3287 = vunpack.c.l.b16 %v3133
  %v3288 = vunpack.c.h.b16 %v3133
  %v3289 = vunpack.c.l.b16 %v3134
  %v3290 = vunpack.c.h.b16 %v3134
  %v3291 = vunpack.c.l.b16 %v3135
  %v3292 = vunpack.c.l.b16 %v3136
  %v3293 = vunpack.c.h.b16 %v3136
  %v3294 = vunpack.c.l.b16 %v3137
  %v3295 = vunpack.c.h.b16 %v3137
  %v3296 = vunpack.c.l.b16 %v3138
  %v3297 = vunpack.c.l.b16 %v3139
  %v3298 = vunpack.c.h.b16 %v3139
  %v3299 = vunpack.c.l.b16 %v3140
  %v3300 = vunpack.c.h.b16 %v3140
  %v3301 = vunpack.c.l.b16 %v3141
  %v3302 = vunpack.c.l.b16 %v3142
  %v3303 = vunpack.c.h.b16 %v3142
  %v3304 = vunpack.c.l.b16 %v3143
  %v3305 = vunpack.c.h.b16 %v3143
  %v3306 = vunpack.c.l.b16 %v3144
  %v3307 = vunpack.c.l.b16 %v3145
  %v3308 = vunpack.c.h.b16 %v3145
  %v3309 = vunpack.c.l.b16 %v3146
  %v3310 = vunpack.c.h.b16 %v3146
  %v3311 = vunpack.c.l.b16 %v3147
  %v3312 = vunpack.c.l.b16 %v3148
  %v3313 = vunpack.c.h.b16 %v3148
  %v3314 = vunpack.c.l.b16 %v3149
  %v3315 = vunpack.c.h.b16 %v3149
  %v3316 = vunpack.c.l.b16 %v3150
  %v3317 = vunpack.c.l.b16 %v3151
  %v3318 = vunpack.c.h.b16 %v3151
  %v3319 = vunpack.c.l.b16 %v3152
  %v3320 = vunpack.c.h.b16 %v3152
  %v3321 = vunpack.c.l.b16 %v3153
  %v3322 = vunpack.c.l.b16 %v3154
  %v3323 = vunpack.c.h.b16 %v3154
  %v3324 = vunpack.c.l.b16 %v3155
  %v3325 = vunpack.c.h.b16 %v3155
  %v3326 = vunpack.c.l.b16 %v3156
  %v3327 = vunpack.c.l.b16 %v3157
  %v3328 = vunpack.c.h.b16 %v3157
  %v3329 = vunpack.c.l.b16 %v3158
  %v3330 = vunpack.c.h.b16 %v3158
  %v3331 = vunpack.c.l.b16 %v3159
  %v3332 = vunpack.c.l.b16 %v3160
  %v3333 = vunpack.c.h.b16 %v3160
  %v3334 = vunpack.c.l.b16 %v3161
  %v3335 = vunpack.c.h.b16 %v3161
  %v3336 = vunpack.c.l.b16 %v3162
  %v3337 = vunpack.c.l.b16 %v3163
  %v3338 = vunpack.c.h.b16 %v3163
  %v3339 = vunpack.c.l.b16 %v3164
  %v3340 = vunpack.c.h.b16 %v3164
  %v3341 = vunpack.c.l.b16 %v3165
  %v3342 = vunpack.c.l.b16 %v3166
  %v3343 = vunpack.c.h.b16 %v3166
  %v3344 = vunpack.c.l.b16 %v3167
  %v3345 = vunpack.c.h.b16 %v3167
  %v3346 = vunpack.c.l.b16 %v3168
  %v3347 = vpack.c.b16 %v3262, %v3257
  %v3348 = vpack.c.b16 %v3263, %v3258
  %v3349 = vpack.c.b16 %v3264, %v3259
  %v3350 = vpack.c.b16 %v3265, %v3260
  %v3351 = vpack.c.b16 %v3266, %v3261
  %v3352 = vpack.c.b16 %v3272, %v3267
  %v3353 = vpack.c.b16 %v3273, %v3268
  %v3354 = vpack.c.b16 %v3274, %v3269
  %v3355 = vpack.c.b16 %v3275, %v3270
  %v3356 = vpack.c.b16 %v3276, %v3271
  %v3357 = vpack.c.b16 %v3282, %v3277
  %v3358 = vpack.c.b16 %v3283, %v3278
  %v3359 = vpack.c.b16 %v3284, %v3279
  %v3360 = vpack.c.b16 %v3285, %v3280
  %v3361 = vpack.c.b16 %v3286, %v3281
  %v3362 = vpack.c.b16 %v3292, %v3287
  %v3363 = vpack.c.b16 %v3293, %v3288
  %v3364 = vpack.c.b16 %v3294, %v3289
  %v3365 = vpack.c.b16 %v3295, %v3290
  %v3366 = vpack.c.b16 %v3296, %v3291
  %v3367 = vpack.c.b16 %v3302, %v3297
  %v3368 = vpack.c.b16 %v3303, %v3298
  %v3369 = vpack.c.b16 %v3304, %v3299
  %v3370 = vpack.c.b16 %v3305, %v3300
  %v3371 = vpack.c.b16 %v3306, %v3301
  %v3372 = vpack.c.b16 %v3312, %v3307
  %v3373 = vpack.c.b16 %v3313, %v3308
  %v3374 = vpack.c.b16 %v3314, %v3309
  %v3375 = vpack.c.b16 %v3315, %v3310
  %v3376 = vpack.c.b16 %v3316, %v3311
  %v3377 = vpack.c.b16 %v3322, %v3317
  %v3378 = vpack.c.b16 %v3323, %v3318
  %v3379 = vpack.c.b16 %v3324, %v3319
  %v3380 = vpack.c.b16 %v3325, %v3320
  %v3381 = vpack.c.b16 %v3326, %v3321
  %v3382 = vpack.c.b16 %v3332, %v3327
  %v3383 = vpack.c.b16 %v3333, %v3328
  %v3384 = vpack.c.b16 %v3334, %v3329
  %v3385 = vpack.c.b16 %v3335, %v3330
  %v3386 = vpack.c.b16 %v3336, %v3331
  %v3387 = vpack.c.b16 %v3342, %v3337
  %v3388 = vpack.c.b16 %v3343, %v3338
  %v3389 = vpack.c.b16 %v3344, %v3339
  %v3390 = vpack.c.b16 %v3345, %v3340
  %v3391 = vpack.c.b16 %v3346, %v3341
  %vm3428 = vcmask 261120
  %v3430 = vsel %vm3428, %v3351, 0
  %v3433 = vsel %vm3428, %v3356, 0
  %v3436 = vsel %vm3428, %v3361, 0
  %v3439 = vsel %vm3428, %v3366, 0
  %v3442 = vsel %vm3428, %v3371, 0
  %v3445 = vsel %vm3428, %v3376, 0
  %v3448 = vsel %vm3428, %v3381, 0
  %v3451 = vsel %vm3428, %v3386, 0
  %v3454 = vsel %vm3428, %v3391, 0
  %3456 = vmatprep.subr.bf16.mxu0 0
  %3457 = vmatpush1.bf16.msra.mxu0 %v3169
  %3458 = vmatprep.subr.bf16.mxu0 0
  %3459 = vmatpush1.bf16.msra.mxu0 %v3170
  %3460 = vmatprep.subr.bf16.mxu0 0
  %3461 = vmatpush1.bf16.msra.mxu0 %v3171
  %3462 = vmatprep.subr.bf16.mxu0 0
  %3463 = vmatpush1.bf16.msra.mxu0 %v3172
  %3464 = vmatprep.subr.bf16.mxu0 0
  %3465 = vmatpush1.bf16.msra.mxu0 %v3173
  %3466 = vmatprep.subr.bf16.mxu0 0
  %3467 = vmatpush1.bf16.msra.mxu0 %v3174
  %3468 = vmatprep.subr.bf16.mxu0 0
  %3469 = vmatpush1.bf16.msra.mxu0 %v3175
  %3470 = vmatprep.subr.bf16.mxu0 0
  %3471 = vmatpush1.bf16.msra.mxu0 %v3176
  %3472 = vmatprep.subr.bf16.mxu0 0
  %3473 = vmatpush1.bf16.msra.mxu0 %v3177
  %3474 = vmatprep.subr.bf16.mxu0 0
  %3475 = vmatpush1.bf16.msra.mxu0 %v3178
  %3476 = vmatprep.subr.bf16.mxu0 0
  %3477 = vmatpush1.bf16.msra.mxu0 %v3179
  %3478 = vmatprep.subr.bf16.mxu0 0
  %3479 = vmatpush1.bf16.msra.mxu0 %v3180
  %3480 = vmatprep.subr.bf16.mxu0 0
  %3481 = vmatpush1.bf16.msra.mxu0 %v3181
  %3482 = vmatprep.subr.bf16.mxu0 0
  %3483 = vmatpush1.bf16.msra.mxu0 %v3182
  %3484 = vmatprep.subr.bf16.mxu0 0
  %3485 = vmatpush1.bf16.msra.mxu0 %v3183
  %3486 = vmatprep.subr.bf16.mxu0 0
  %3487 = vmatpush1.bf16.msra.mxu0 %v3184
  %3488 = vmatprep.mubr.bf16.mxu0 %v3348
  %3489 = vmatmul.mubr.bf16.gmra.mrb[0].mxu0 %v3347
  %v3490 = vpop.f32.mrb[0].mxu0
  %v3491 = vadd.f32 0.0, %v3490
  %v3492 = vpop.f32.mrb[0].mxu0
  %v3493 = vpop.f32.mrb[0].mxu0
  %v3494 = vadd.f32 0.0, %v3493
  %v3495 = vpop.f32.mrb[0].mxu0
  %3496 = vmatprep.mubr.bf16.mxu0 %v3353
  %3497 = vmatmul.mubr.bf16.gmra.mrb[0].mxu0 %v3352
  %v3498 = vpop.f32.mrb[0].mxu0
  %v3499 = vadd.f32 0.0, %v3498
  %v3500 = vpop.f32.mrb[0].mxu0
  %v3501 = vpop.f32.mrb[0].mxu0
  %v3502 = vadd.f32 0.0, %v3501
  %v3503 = vpop.f32.mrb[0].mxu0
  %3504 = vmatprep.mubr.bf16.mxu0 %v3358
  %3505 = vmatmul.mubr.bf16.gmra.mrb[0].mxu0 %v3357
  %v3506 = vpop.f32.mrb[0].mxu0
  %v3507 = vadd.f32 0.0, %v3506
  %v3508 = vpop.f32.mrb[0].mxu0
  %v3509 = vpop.f32.mrb[0].mxu0
  %v3510 = vadd.f32 0.0, %v3509
  %v3511 = vpop.f32.mrb[0].mxu0
  %3512 = vmatprep.mubr.bf16.mxu0 %v3363
  %3513 = vmatmul.mubr.bf16.gmra.mrb[0].mxu0 %v3362
  %v3514 = vpop.f32.mrb[0].mxu0
  %v3515 = vadd.f32 0.0, %v3514
  %v3516 = vpop.f32.mrb[0].mxu0
  %v3517 = vpop.f32.mrb[0].mxu0
  %v3518 = vadd.f32 0.0, %v3517
  %v3519 = vpop.f32.mrb[0].mxu0
  %3520 = vmatprep.mubr.bf16.mxu0 %v3368
  %3521 = vmatmul.mubr.bf16.gmra.mrb[0].mxu0 %v3367
  %v3522 = vpop.f32.mrb[0].mxu0
  %v3523 = vadd.f32 0.0, %v3522
  %v3524 = vpop.f32.mrb[0].mxu0
  %v3525 = vpop.f32.mrb[0].mxu0
  %v3526 = vadd.f32 0.0, %v3525
  %v3527 = vpop.f32.mrb[0].mxu0
  %3528 = vmatprep.mubr.bf16.mxu0 %v3373
  %3529 = vmatmul.mubr.bf16.gmra.mrb[0].mxu0 %v3372
  %v3530 = vpop.f32.mrb[0].mxu0
  %v3531 = vadd.f32 0.0, %v3530
  %v3532 = vpop.f32.mrb[0].mxu0
  %v3533 = vpop.f32.mrb[0].mxu0
  %v3534 = vadd.f32 0.0, %v3533
  %v3535 = vpop.f32.mrb[0].mxu0
  %3536 = vmatprep.mubr.bf16.mxu0 %v3378
  %3537 = vmatmul.mubr.bf16.gmra.mrb[0].mxu0 %v3377
  %v3538 = vpop.f32.mrb[0].mxu0
  %v3539 = vadd.f32 0.0, %v3538
  %v3540 = vpop.f32.mrb[0].mxu0
  %v3541 = vpop.f32.mrb[0].mxu0
  %v3542 = vadd.f32 0.0, %v3541
  %v3543 = vpop.f32.mrb[0].mxu0
  %3544 = vmatprep.mubr.bf16.mxu0 %v3383
  %3545 = vmatmul.mubr.bf16.gmra.mrb[0].mxu0 %v3382
  %v3546 = vpop.f32.mrb[0].mxu0
  %v3547 = vadd.f32 0.0, %v3546
  %v3548 = vpop.f32.mrb[0].mxu0
  %v3549 = vpop.f32.mrb[0].mxu0
  %v3550 = vadd.f32 0.0, %v3549
  %v3551 = vpop.f32.mrb[0].mxu0
  %3552 = vmatprep.mubr.bf16.mxu0 %v3388
  %3553 = vmatmul.mubr.bf16.gmra.mrb[0].mxu0 %v3387
  %v3554 = vpop.f32.mrb[0].mxu0
  %v3555 = vadd.f32 0.0, %v3554
  %v3556 = vpop.f32.mrb[0].mxu0
  %v3557 = vpop.f32.mrb[0].mxu0
  %v3558 = vadd.f32 0.0, %v3557
  %v3559 = vpop.f32.mrb[0].mxu0
  %3560 = vdwg.mxu0
  %3561 = vmatprep.subr.bf16.mxu0 0
  %3562 = vmatpush1.bf16.msra.mxu0 %v3185
  %3563 = vmatprep.subr.bf16.mxu0 0
  %3564 = vmatpush1.bf16.msra.mxu0 %v3186
  %3565 = vmatprep.subr.bf16.mxu0 0
  %3566 = vmatpush1.bf16.msra.mxu0 %v3187
  %3567 = vmatprep.subr.bf16.mxu0 0
  %3568 = vmatpush1.bf16.msra.mxu0 %v3188
  %3569 = vmatprep.subr.bf16.mxu0 0
  %3570 = vmatpush1.bf16.msra.mxu0 %v3189
  %3571 = vmatprep.subr.bf16.mxu0 0
  %3572 = vmatpush1.bf16.msra.mxu0 %v3190
  %3573 = vmatprep.subr.bf16.mxu0 0
  %3574 = vmatpush1.bf16.msra.mxu0 %v3191
  %3575 = vmatprep.subr.bf16.mxu0 0
  %3576 = vmatpush1.bf16.msra.mxu0 %v3192
  %3577 = vmatprep.subr.bf16.mxu0 0
  %3578 = vmatpush1.bf16.msra.mxu0 %v3193
  %3579 = vmatprep.subr.bf16.mxu0 0
  %3580 = vmatpush1.bf16.msra.mxu0 %v3194
  %3581 = vmatprep.subr.bf16.mxu0 0
  %3582 = vmatpush1.bf16.msra.mxu0 %v3195
  %3583 = vmatprep.subr.bf16.mxu0 0
  %3584 = vmatpush1.bf16.msra.mxu0 %v3196
  %3585 = vmatprep.subr.bf16.mxu0 0
  %3586 = vmatpush1.bf16.msra.mxu0 %v3197
  %3587 = vmatprep.subr.bf16.mxu0 0
  %3588 = vmatpush1.bf16.msra.mxu0 %v3198
  %3589 = vmatprep.subr.bf16.mxu0 0
  %3590 = vmatpush1.bf16.msra.mxu0 %v3199
  %3591 = vmatprep.subr.bf16.mxu0 0
  %3592 = vmatpush1.bf16.msra.mxu0 %v3200
  %3593 = vmatprep.mubr.bf16.mxu0 %v3350
  %3594 = vmatmul.mubr.bf16.gmra.mrb[0].mxu0 %v3349
  %v3595 = vpop.f32.mrb[0].mxu0
  %v3596 = vadd.f32 %v3491, %v3595
  %v3597 = vpop.f32.mrb[0].mxu0
  %v3598 = vpop.f32.mrb[0].mxu0
  %v3599 = vadd.f32 %v3494, %v3598
  %v3600 = vpop.f32.mrb[0].mxu0
  %3601 = vmatprep.mubr.bf16.mxu0 %v3355
  %3602 = vmatmul.mubr.bf16.gmra.mrb[0].mxu0 %v3354
  %v3603 = vpop.f32.mrb[0].mxu0
  %v3604 = vadd.f32 %v3499, %v3603
  %v3605 = vpop.f32.mrb[0].mxu0
  %v3606 = vpop.f32.mrb[0].mxu0
  %v3607 = vadd.f32 %v3502, %v3606
  %v3608 = vpop.f32.mrb[0].mxu0
  %3609 = vmatprep.mubr.bf16.mxu0 %v3360
  %3610 = vmatmul.mubr.bf16.gmra.mrb[0].mxu0 %v3359
  %v3611 = vpop.f32.mrb[0].mxu0
  %v3612 = vadd.f32 %v3507, %v3611
  %v3613 = vpop.f32.mrb[0].mxu0
  %v3614 = vpop.f32.mrb[0].mxu0
  %v3615 = vadd.f32 %v3510, %v3614
  %v3616 = vpop.f32.mrb[0].mxu0
  %3617 = vmatprep.mubr.bf16.mxu0 %v3365
  %3618 = vmatmul.mubr.bf16.gmra.mrb[0].mxu0 %v3364
  %v3619 = vpop.f32.mrb[0].mxu0
  %v3620 = vadd.f32 %v3515, %v3619
  %v3621 = vpop.f32.mrb[0].mxu0
  %v3622 = vpop.f32.mrb[0].mxu0
  %v3623 = vadd.f32 %v3518, %v3622
  %v3624 = vpop.f32.mrb[0].mxu0
  %3625 = vmatprep.mubr.bf16.mxu0 %v3370
  %3626 = vmatmul.mubr.bf16.gmra.mrb[0].mxu0 %v3369
  %v3627 = vpop.f32.mrb[0].mxu0
  %v3628 = vadd.f32 %v3523, %v3627
  %v3629 = vpop.f32.mrb[0].mxu0
  %v3630 = vpop.f32.mrb[0].mxu0
  %v3631 = vadd.f32 %v3526, %v3630
  %v3632 = vpop.f32.mrb[0].mxu0
  %3633 = vmatprep.mubr.bf16.mxu0 %v3375
  %3634 = vmatmul.mubr.bf16.gmra.mrb[0].mxu0 %v3374
  %v3635 = vpop.f32.mrb[0].mxu0
  %v3636 = vadd.f32 %v3531, %v3635
  %v3637 = vpop.f32.mrb[0].mxu0
  %v3638 = vpop.f32.mrb[0].mxu0
  %v3639 = vadd.f32 %v3534, %v3638
  %v3640 = vpop.f32.mrb[0].mxu0
  %3641 = vmatprep.mubr.bf16.mxu0 %v3380
  %3642 = vmatmul.mubr.bf16.gmra.mrb[0].mxu0 %v3379
  %v3643 = vpop.f32.mrb[0].mxu0
  %v3644 = vadd.f32 %v3539, %v3643
  %v3645 = vpop.f32.mrb[0].mxu0
  %v3646 = vpop.f32.mrb[0].mxu0
  %v3647 = vadd.f32 %v3542, %v3646
  %v3648 = vpop.f32.mrb[0].mxu0
  %3649 = vmatprep.mubr.bf16.mxu0 %v3385
  %3650 = vmatmul.mubr.bf16.gmra.mrb[0].mxu0 %v3384
  %v3651 = vpop.f32.mrb[0].mxu0
  %v3652 = vadd.f32 %v3547, %v3651
  %v3653 = vpop.f32.mrb[0].mxu0
  %v3654 = vpop.f32.mrb[0].mxu0
  %v3655 = vadd.f32 %v3550, %v3654
  %v3656 = vpop.f32.mrb[0].mxu0
  %3657 = vmatprep.mubr.bf16.mxu0 %v3390
  %3658 = vmatmul.mubr.bf16.gmra.mrb[0].mxu0 %v3389
  %v3659 = vpop.f32.mrb[0].mxu0
  %v3660 = vadd.f32 %v3555, %v3659
  %v3661 = vpop.f32.mrb[0].mxu0
  %v3662 = vpop.f32.mrb[0].mxu0
  %v3663 = vadd.f32 %v3558, %v3662
  %v3664 = vpop.f32.mrb[0].mxu0
  %3665 = vdwg.mxu0
  %3666 = vmatprep.subr.bf16.mxu0 0
  %3667 = vmatpush1.bf16.msra.mxu0 %v3201
  %3668 = vmatprep.subr.bf16.mxu0 0
  %3669 = vmatpush1.bf16.msra.mxu0 %v3202
  %3670 = vmatprep.subr.bf16.mxu0 0
  %3671 = vmatpush1.bf16.msra.mxu0 0
  %3672 = vmatprep.subr.bf16.mxu0 0
  %3673 = vmatpush1.bf16.msra.mxu0 0
  %3674 = vmatprep.subr.bf16.mxu0 0
  %3675 = vmatpush1.bf16.msra.mxu0 0
  %3676 = vmatprep.subr.bf16.mxu0 0
  %3677 = vmatpush1.bf16.msra.mxu0 0
  %3678 = vmatprep.subr.bf16.mxu0 0
  %3679 = vmatpush1.bf16.msra.mxu0 0
  %3680 = vmatprep.subr.bf16.mxu0 0
  %3681 = vmatpush1.bf16.msra.mxu0 0
  %3682 = vmatprep.subr.bf16.mxu0 0
  %3683 = vmatpush1.bf16.msra.mxu0 0
  %3684 = vmatprep.subr.bf16.mxu0 0
  %3685 = vmatpush1.bf16.msra.mxu0 0
  %3686 = vmatprep.subr.bf16.mxu0 0
  %3687 = vmatpush1.bf16.msra.mxu0 0
  %3688 = vmatprep.subr.bf16.mxu0 0
  %3689 = vmatpush1.bf16.msra.mxu0 0
  %3690 = vmatprep.subr.bf16.mxu0 0
  %3691 = vmatpush1.bf16.msra.mxu0 0
  %3692 = vmatprep.subr.bf16.mxu0 0
  %3693 = vmatpush1.bf16.msra.mxu0 0
  %3694 = vmatprep.subr.bf16.mxu0 0
  %3695 = vmatpush1.bf16.msra.mxu0 0
  %3696 = vmatprep.subr.bf16.mxu0 0
  %3697 = vmatpush1.bf16.msra.mxu0 0
  %3698 = vmatprep.mubr.bf16.mxu0 0
  %3699 = vmatmul.mubr.bf16.gmra.mrb[0].mxu0 %v3430
  %v3700 = vpop.f32.mrb[0].mxu0
  %v3701 = vadd.f32 %v3596, %v3700
  %v3702 = vpop.f32.mrb[0].mxu0
  %v3703 = vpop.f32.mrb[0].mxu0
  %v3704 = vadd.f32 %v3599, %v3703
  %v3705 = vpop.f32.mrb[0].mxu0
  %3706 = vmatprep.mubr.bf16.mxu0 0
  %3707 = vmatmul.mubr.bf16.gmra.mrb[0].mxu0 %v3433
  %v3708 = vpop.f32.mrb[0].mxu0
  %v3709 = vadd.f32 %v3604, %v3708
  %v3710 = vpop.f32.mrb[0].mxu0
  %v3711 = vpop.f32.mrb[0].mxu0
  %v3712 = vadd.f32 %v3607, %v3711
  %v3713 = vpop.f32.mrb[0].mxu0
  %3714 = vmatprep.mubr.bf16.mxu0 0
  %3715 = vmatmul.mubr.bf16.gmra.mrb[0].mxu0 %v3436
  %v3716 = vpop.f32.mrb[0].mxu0
  %v3717 = vadd.f32 %v3612, %v3716
  %v3718 = vpop.f32.mrb[0].mxu0
  %v3719 = vpop.f32.mrb[0].mxu0
  %v3720 = vadd.f32 %v3615, %v3719
  %v3721 = vpop.f32.mrb[0].mxu0
  %3722 = vmatprep.mubr.bf16.mxu0 0
  %3723 = vmatmul.mubr.bf16.gmra.mrb[0].mxu0 %v3439
  %v3724 = vpop.f32.mrb[0].mxu0
  %v3725 = vadd.f32 %v3620, %v3724
  %v3726 = vpop.f32.mrb[0].mxu0
  %v3727 = vpop.f32.mrb[0].mxu0
  %v3728 = vadd.f32 %v3623, %v3727
  %v3729 = vpop.f32.mrb[0].mxu0
  %3730 = vmatprep.mubr.bf16.mxu0 0
  %3731 = vmatmul.mubr.bf16.gmra.mrb[0].mxu0 %v3442
  %v3732 = vpop.f32.mrb[0].mxu0
  %v3733 = vadd.f32 %v3628, %v3732
  %v3734 = vpop.f32.mrb[0].mxu0
  %v3735 = vpop.f32.mrb[0].mxu0
  %v3736 = vadd.f32 %v3631, %v3735
  %v3737 = vpop.f32.mrb[0].mxu0
  %3738 = vmatprep.mubr.bf16.mxu0 0
  %3739 = vmatmul.mubr.bf16.gmra.mrb[0].mxu0 %v3445
  %v3740 = vpop.f32.mrb[0].mxu0
  %v3741 = vadd.f32 %v3636, %v3740
  %v3742 = vpop.f32.mrb[0].mxu0
  %v3743 = vpop.f32.mrb[0].mxu0
  %v3744 = vadd.f32 %v3639, %v3743
  %v3745 = vpop.f32.mrb[0].mxu0
  %3746 = vmatprep.mubr.bf16.mxu0 0
  %3747 = vmatmul.mubr.bf16.gmra.mrb[0].mxu0 %v3448
  %v3748 = vpop.f32.mrb[0].mxu0
  %v3749 = vadd.f32 %v3644, %v3748
  %v3750 = vpop.f32.mrb[0].mxu0
  %v3751 = vpop.f32.mrb[0].mxu0
  %v3752 = vadd.f32 %v3647, %v3751
  %v3753 = vpop.f32.mrb[0].mxu0
  %3754 = vmatprep.mubr.bf16.mxu0 0
  %3755 = vmatmul.mubr.bf16.gmra.mrb[0].mxu0 %v3451
  %v3756 = vpop.f32.mrb[0].mxu0
  %v3757 = vadd.f32 %v3652, %v3756
  %v3758 = vpop.f32.mrb[0].mxu0
  %v3759 = vpop.f32.mrb[0].mxu0
  %v3760 = vadd.f32 %v3655, %v3759
  %v3761 = vpop.f32.mrb[0].mxu0
  %3762 = vmatprep.mubr.bf16.mxu0 0
  %3763 = vmatmul.mubr.bf16.gmra.mrb[0].mxu0 %v3454
  %v3764 = vpop.f32.mrb[0].mxu0
  %v3765 = vadd.f32 %v3660, %v3764
  %v3766 = vpop.f32.mrb[0].mxu0
  %v3767 = vpop.f32.mrb[0].mxu0
  %v3768 = vadd.f32 %v3663, %v3767
  %v3769 = vpop.f32.mrb[0].mxu0
  %3770 = vdwg.mxu0
  %v3771 = vpack.c.bf16 %v3704, %v3701
  %v3772 = vpack.c.bf16 %v3712, %v3709
  %v3773 = vpack.c.bf16 %v3720, %v3717
  %v3774 = vpack.c.bf16 %v3728, %v3725
  %v3775 = vpack.c.bf16 %v3736, %v3733
  %v3776 = vpack.c.bf16 %v3744, %v3741
  %v3777 = vpack.c.bf16 %v3752, %v3749
  %v3778 = vpack.c.bf16 %v3760, %v3757
  %v3779 = vpack.c.bf16 %v3768, %v3765
  %v3789 = vunpack.c.l.b16 %v3771
  %v3790 = vunpack.c.h.b16 %v3771
  %v3791 = vunpack.c.l.b16 %v3772
  %v3792 = vunpack.c.h.b16 %v3772
  %v3793 = vunpack.c.l.b16 %v3773
  %v3794 = vunpack.c.h.b16 %v3773
  %v3795 = vunpack.c.l.b16 %v3774
  %v3796 = vunpack.c.h.b16 %v3774
  %v3797 = vunpack.c.l.b16 %v3775
  %v3798 = vunpack.c.h.b16 %v3775
  %v3799 = vunpack.c.l.b16 %v3776
  %v3800 = vunpack.c.h.b16 %v3776
  %v3801 = vunpack.c.l.b16 %v3777
  %v3802 = vunpack.c.h.b16 %v3777
  %v3803 = vunpack.c.l.b16 %v3778
  %v3804 = vunpack.c.h.b16 %v3778
  %v3805 = vunpack.c.l.b16 %v3779
  %v3806 = vunpack.c.h.b16 %v3779
  %v3807 = vpack.c.b16 %v3789, %v3789
  %v3808 = vpack.c.b16 %v3790, %v3790
  %v3809 = vpack.c.b16 %v3791, %v3791
  %v3810 = vpack.c.b16 %v3792, %v3792
  %v3811 = vpack.c.b16 %v3793, %v3793
  %v3812 = vpack.c.b16 %v3794, %v3794
  %v3813 = vpack.c.b16 %v3795, %v3795
  %v3814 = vpack.c.b16 %v3796, %v3796
  %v3815 = vpack.c.b16 %v3797, %v3797
  %v3816 = vpack.c.b16 %v3798, %v3798
  %v3817 = vpack.c.b16 %v3799, %v3799
  %v3818 = vpack.c.b16 %v3800, %v3800
  %v3819 = vpack.c.b16 %v3801, %v3801
  %v3820 = vpack.c.b16 %v3802, %v3802
  %v3821 = vpack.c.b16 %v3803, %v3803
  %v3822 = vpack.c.b16 %v3804, %v3804
  %v3823 = vpack.c.b16 %v3805, %v3805
  %v3824 = vpack.c.b16 %v3806, %v3806
  %3843 = vst.msk [vmem:[#allocation4] sm:$0xf] %vm66, %v3807
  %3844 = vst.msk [vmem:[#allocation4 + $0x4] sm:$0xf] %vm66, %v3808
  %3845 = vst.msk [vmem:[#allocation4 + $0x8] sm:$0xf] %vm66, %v3809
  %3846 = vst.msk [vmem:[#allocation4 + $0xc] sm:$0xf] %vm66, %v3810
  %3847 = vst.msk [vmem:[#allocation4 + $0x10] sm:$0xf] %vm66, %v3811
  %3848 = vst.msk [vmem:[#allocation4 + $0x14] sm:$0xf] %vm66, %v3812
  %3849 = vst.msk [vmem:[#allocation4 + $0x18] sm:$0xf] %vm66, %v3813
  %3850 = vst.msk [vmem:[#allocation4 + $0x1c] sm:$0xf] %vm66, %v3814
  %3851 = vst.msk [vmem:[#allocation4 + $0x20] sm:$0xf] %vm66, %v3815
  %3852 = vst.msk [vmem:[#allocation4 + $0x24] sm:$0xf] %vm66, %v3816
  %3853 = vst.msk [vmem:[#allocation4 + $0x28] sm:$0xf] %vm66, %v3817
  %3854 = vst.msk [vmem:[#allocation4 + $0x2c] sm:$0xf] %vm66, %v3818
  %3855 = vst.msk [vmem:[#allocation4 + $0x30] sm:$0xf] %vm66, %v3819
  %3856 = vst.msk [vmem:[#allocation4 + $0x34] sm:$0xf] %vm66, %v3820
  %3857 = vst.msk [vmem:[#allocation4 + $0x38] sm:$0xf] %vm66, %v3821
  %3858 = vst.msk [vmem:[#allocation4 + $0x3c] sm:$0xf] %vm66, %v3822
  %3859 = vst.msk [vmem:[#allocation4 + $0x40] sm:$0xf] %vm66, %v3823
  %3860 = vst.msk [vmem:[#allocation4 + $0x44] sm:$0xf] %vm66, %v3824
  %v3861 = vld [vmem:[#allocation3 + $0x110] sm:$0xff]
  %v3862 = vld [vmem:[#allocation3 + $0x118] sm:$0xff]
  %v3863 = vld [vmem:[#allocation3 + $0x120] sm:$0xff]
  %v3864 = vld [vmem:[#allocation3 + $0x128] sm:$0xff]
  %v3865 = vld [vmem:[#allocation3 + $0x130] sm:$0xff]
  %v3866 = vld [vmem:[#allocation3 + $0x138] sm:$0xff]
  %v3867 = vld [vmem:[#allocation3 + $0x140] sm:$0xff]
  %v3868 = vld [vmem:[#allocation3 + $0x148] sm:$0xff]
  %v3869 = vld [vmem:[#allocation3 + $0x150] sm:$0xff]
  %v3870 = vld [vmem:[#allocation3 + $0x158] sm:$0xff]
  %v3871 = vld [vmem:[#allocation3 + $0x160] sm:$0xff]
  %v3872 = vld [vmem:[#allocation3 + $0x168] sm:$0xff]
  %v3873 = vld [vmem:[#allocation3 + $0x170] sm:$0xff]
  %v3874 = vld [vmem:[#allocation3 + $0x178] sm:$0xff]
  %v3875 = vld [vmem:[#allocation3 + $0x180] sm:$0xff]
  %v3876 = vld [vmem:[#allocation3 + $0x188] sm:$0xff]
  %v3877 = vld [vmem:[#allocation3 + $0x190] sm:$0xff]
  %v3878 = vld [vmem:[#allocation3 + $0x198] sm:$0xff]
  %v3879 = vld [vmem:[#allocation3 + $0x1a0] sm:$0xff]
  %v3880 = vld [vmem:[#allocation3 + $0x1a8] sm:$0xff]
  %v3881 = vld [vmem:[#allocation3 + $0x1b0] sm:$0xff]
  %v3882 = vld [vmem:[#allocation3 + $0x1b8] sm:$0xff]
  %v3883 = vld [vmem:[#allocation3 + $0x1c0] sm:$0xff]
  %v3884 = vld [vmem:[#allocation3 + $0x1c8] sm:$0xff]
  %v3885 = vld [vmem:[#allocation3 + $0x1d0] sm:$0xff]
  %v3886 = vld [vmem:[#allocation3 + $0x1d8] sm:$0xff]
  %v3887 = vld [vmem:[#allocation3 + $0x1e0] sm:$0xff]
  %v3888 = vld [vmem:[#allocation3 + $0x1e8] sm:$0xff]
  %v3889 = vld [vmem:[#allocation3 + $0x1f0] sm:$0xff]
  %v3890 = vld [vmem:[#allocation3 + $0x1f8] sm:$0xff]
  %v3891 = vld [vmem:[#allocation3 + $0x200] sm:$0xff]
  %v3892 = vld [vmem:[#allocation3 + $0x208] sm:$0xff]
  %v3893 = vld [vmem:[#allocation3 + $0x210] sm:$0xff]
  %v3894 = vld [vmem:[#allocation3 + $0x218] sm:$0xff]
  %3895 = vmatprep.subr.bf16.mxu0 0
  %3896 = vmatpush1.bf16.msra.mxu0 %v3861
  %3897 = vmatprep.subr.bf16.mxu0 0
  %3898 = vmatpush1.bf16.msra.mxu0 %v3862
  %3899 = vmatprep.subr.bf16.mxu0 0
  %3900 = vmatpush1.bf16.msra.mxu0 %v3863
  %3901 = vmatprep.subr.bf16.mxu0 0
  %3902 = vmatpush1.bf16.msra.mxu0 %v3864
  %3903 = vmatprep.subr.bf16.mxu0 0
  %3904 = vmatpush1.bf16.msra.mxu0 %v3865
  %3905 = vmatprep.subr.bf16.mxu0 0
  %3906 = vmatpush1.bf16.msra.mxu0 %v3866
  %3907 = vmatprep.subr.bf16.mxu0 0
  %3908 = vmatpush1.bf16.msra.mxu0 %v3867
  %3909 = vmatprep.subr.bf16.mxu0 0
  %3910 = vmatpush1.bf16.msra.mxu0 %v3868
  %3911 = vmatprep.subr.bf16.mxu0 0
  %3912 = vmatpush1.bf16.msra.mxu0 %v3869
  %3913 = vmatprep.subr.bf16.mxu0 0
  %3914 = vmatpush1.bf16.msra.mxu0 %v3870
  %3915 = vmatprep.subr.bf16.mxu0 0
  %3916 = vmatpush1.bf16.msra.mxu0 %v3871
  %3917 = vmatprep.subr.bf16.mxu0 0
  %3918 = vmatpush1.bf16.msra.mxu0 %v3872
  %3919 = vmatprep.subr.bf16.mxu0 0
  %3920 = vmatpush1.bf16.msra.mxu0 %v3873
  %3921 = vmatprep.subr.bf16.mxu0 0
  %3922 = vmatpush1.bf16.msra.mxu0 %v3874
  %3923 = vmatprep.subr.bf16.mxu0 0
  %3924 = vmatpush1.bf16.msra.mxu0 %v3875
  %3925 = vmatprep.subr.bf16.mxu0 0
  %3926 = vmatpush1.bf16.msra.mxu0 %v3876
  %3927 = vmatprep.mubr.bf16.mxu0 %v3348
  %3928 = vmatmul.mubr.bf16.gmra.mrb[0].mxu0 %v3347
  %v3929 = vpop.f32.mrb[0].mxu0
  %v3930 = vadd.f32 0.0, %v3929
  %v3931 = vpop.f32.mrb[0].mxu0
  %v3932 = vpop.f32.mrb[0].mxu0
  %v3933 = vadd.f32 0.0, %v3932
  %v3934 = vpop.f32.mrb[0].mxu0
  %3935 = vmatprep.mubr.bf16.mxu0 %v3353
  %3936 = vmatmul.mubr.bf16.gmra.mrb[0].mxu0 %v3352
  %v3937 = vpop.f32.mrb[0].mxu0
  %v3938 = vadd.f32 0.0, %v3937
  %v3939 = vpop.f32.mrb[0].mxu0
  %v3940 = vpop.f32.mrb[0].mxu0
  %v3941 = vadd.f32 0.0, %v3940
  %v3942 = vpop.f32.mrb[0].mxu0
  %3943 = vmatprep.mubr.bf16.mxu0 %v3358
  %3944 = vmatmul.mubr.bf16.gmra.mrb[0].mxu0 %v3357
  %v3945 = vpop.f32.mrb[0].mxu0
  %v3946 = vadd.f32 0.0, %v3945
  %v3947 = vpop.f32.mrb[0].mxu0
  %v3948 = vpop.f32.mrb[0].mxu0
  %v3949 = vadd.f32 0.0, %v3948
  %v3950 = vpop.f32.mrb[0].mxu0
  %3951 = vmatprep.mubr.bf16.mxu0 %v3363
  %3952 = vmatmul.mubr.bf16.gmra.mrb[0].mxu0 %v3362
  %v3953 = vpop.f32.mrb[0].mxu0
  %v3954 = vadd.f32 0.0, %v3953
  %v3955 = vpop.f32.mrb[0].mxu0
  %v3956 = vpop.f32.mrb[0].mxu0
  %v3957 = vadd.f32 0.0, %v3956
  %v3958 = vpop.f32.mrb[0].mxu0
  %3959 = vmatprep.mubr.bf16.mxu0 %v3368
  %3960 = vmatmul.mubr.bf16.gmra.mrb[0].mxu0 %v3367
  %v3961 = vpop.f32.mrb[0].mxu0
  %v3962 = vadd.f32 0.0, %v3961
  %v3963 = vpop.f32.mrb[0].mxu0
  %v3964 = vpop.f32.mrb[0].mxu0
  %v3965 = vadd.f32 0.0, %v3964
  %v3966 = vpop.f32.mrb[0].mxu0
  %3967 = vmatprep.mubr.bf16.mxu0 %v3373
  %3968 = vmatmul.mubr.bf16.gmra.mrb[0].mxu0 %v3372
  %v3969 = vpop.f32.mrb[0].mxu0
  %v3970 = vadd.f32 0.0, %v3969
  %v3971 = vpop.f32.mrb[0].mxu0
  %v3972 = vpop.f32.mrb[0].mxu0
  %v3973 = vadd.f32 0.0, %v3972
  %v3974 = vpop.f32.mrb[0].mxu0
  %3975 = vmatprep.mubr.bf16.mxu0 %v3378
  %3976 = vmatmul.mubr.bf16.gmra.mrb[0].mxu0 %v3377
  %v3977 = vpop.f32.mrb[0].mxu0
  %v3978 = vadd.f32 0.0, %v3977
  %v3979 = vpop.f32.mrb[0].mxu0
  %v3980 = vpop.f32.mrb[0].mxu0
  %v3981 = vadd.f32 0.0, %v3980
  %v3982 = vpop.f32.mrb[0].mxu0
  %3983 = vmatprep.mubr.bf16.mxu0 %v3383
  %3984 = vmatmul.mubr.bf16.gmra.mrb[0].mxu0 %v3382
  %v3985 = vpop.f32.mrb[0].mxu0
  %v3986 = vadd.f32 0.0, %v3985
  %v3987 = vpop.f32.mrb[0].mxu0
  %v3988 = vpop.f32.mrb[0].mxu0
  %v3989 = vadd.f32 0.0, %v3988
  %v3990 = vpop.f32.mrb[0].mxu0
  %3991 = vmatprep.mubr.bf16.mxu0 %v3388
  %3992 = vmatmul.mubr.bf16.gmra.mrb[0].mxu0 %v3387
  %v3993 = vpop.f32.mrb[0].mxu0
  %v3994 = vadd.f32 0.0, %v3993
  %v3995 = vpop.f32.mrb[0].mxu0
  %v3996 = vpop.f32.mrb[0].mxu0
  %v3997 = vadd.f32 0.0, %v3996
  %v3998 = vpop.f32.mrb[0].mxu0
  %3999 = vdwg.mxu0
  %4000 = vmatprep.subr.bf16.mxu0 0
  %4001 = vmatpush1.bf16.msra.mxu0 %v3877
  %4002 = vmatprep.subr.bf16.mxu0 0
  %4003 = vmatpush1.bf16.msra.mxu0 %v3878
  %4004 = vmatprep.subr.bf16.mxu0 0
  %4005 = vmatpush1.bf16.msra.mxu0 %v3879
  %4006 = vmatprep.subr.bf16.mxu0 0
  %4007 = vmatpush1.bf16.msra.mxu0 %v3880
  %4008 = vmatprep.subr.bf16.mxu0 0
  %4009 = vmatpush1.bf16.msra.mxu0 %v3881
  %4010 = vmatprep.subr.bf16.mxu0 0
  %4011 = vmatpush1.bf16.msra.mxu0 %v3882
  %4012 = vmatprep.subr.bf16.mxu0 0
  %4013 = vmatpush1.bf16.msra.mxu0 %v3883
  %4014 = vmatprep.subr.bf16.mxu0 0
  %4015 = vmatpush1.bf16.msra.mxu0 %v3884
  %4016 = vmatprep.subr.bf16.mxu0 0
  %4017 = vmatpush1.bf16.msra.mxu0 %v3885
  %4018 = vmatprep.subr.bf16.mxu0 0
  %4019 = vmatpush1.bf16.msra.mxu0 %v3886
  %4020 = vmatprep.subr.bf16.mxu0 0
  %4021 = vmatpush1.bf16.msra.mxu0 %v3887
  %4022 = vmatprep.subr.bf16.mxu0 0
  %4023 = vmatpush1.bf16.msra.mxu0 %v3888
  %4024 = vmatprep.subr.bf16.mxu0 0
  %4025 = vmatpush1.bf16.msra.mxu0 %v3889
  %4026 = vmatprep.subr.bf16.mxu0 0
  %4027 = vmatpush1.bf16.msra.mxu0 %v3890
  %4028 = vmatprep.subr.bf16.mxu0 0
  %4029 = vmatpush1.bf16.msra.mxu0 %v3891
  %4030 = vmatprep.subr.bf16.mxu0 0
  %4031 = vmatpush1.bf16.msra.mxu0 %v3892
  %4032 = vmatprep.mubr.bf16.mxu0 %v3350
  %4033 = vmatmul.mubr.bf16.gmra.mrb[0].mxu0 %v3349
  %v4034 = vpop.f32.mrb[0].mxu0
  %v4035 = vadd.f32 %v3930, %v4034
  %v4036 = vpop.f32.mrb[0].mxu0
  %v4037 = vpop.f32.mrb[0].mxu0
  %v4038 = vadd.f32 %v3933, %v4037
  %v4039 = vpop.f32.mrb[0].mxu0
  %4040 = vmatprep.mubr.bf16.mxu0 %v3355
  %4041 = vmatmul.mubr.bf16.gmra.mrb[0].mxu0 %v3354
  %v4042 = vpop.f32.mrb[0].mxu0
  %v4043 = vadd.f32 %v3938, %v4042
  %v4044 = vpop.f32.mrb[0].mxu0
  %v4045 = vpop.f32.mrb[0].mxu0
  %v4046 = vadd.f32 %v3941, %v4045
  %v4047 = vpop.f32.mrb[0].mxu0
  %4048 = vmatprep.mubr.bf16.mxu0 %v3360
  %4049 = vmatmul.mubr.bf16.gmra.mrb[0].mxu0 %v3359
  %v4050 = vpop.f32.mrb[0].mxu0
  %v4051 = vadd.f32 %v3946, %v4050
  %v4052 = vpop.f32.mrb[0].mxu0
  %v4053 = vpop.f32.mrb[0].mxu0
  %v4054 = vadd.f32 %v3949, %v4053
  %v4055 = vpop.f32.mrb[0].mxu0
  %4056 = vmatprep.mubr.bf16.mxu0 %v3365
  %4057 = vmatmul.mubr.bf16.gmra.mrb[0].mxu0 %v3364
  %v4058 = vpop.f32.mrb[0].mxu0
  %v4059 = vadd.f32 %v3954, %v4058
  %v4060 = vpop.f32.mrb[0].mxu0
  %v4061 = vpop.f32.mrb[0].mxu0
  %v4062 = vadd.f32 %v3957, %v4061
  %v4063 = vpop.f32.mrb[0].mxu0
  %4064 = vmatprep.mubr.bf16.mxu0 %v3370
  %4065 = vmatmul.mubr.bf16.gmra.mrb[0].mxu0 %v3369
  %v4066 = vpop.f32.mrb[0].mxu0
  %v4067 = vadd.f32 %v3962, %v4066
  %v4068 = vpop.f32.mrb[0].mxu0
  %v4069 = vpop.f32.mrb[0].mxu0
  %v4070 = vadd.f32 %v3965, %v4069
  %v4071 = vpop.f32.mrb[0].mxu0
  %4072 = vmatprep.mubr.bf16.mxu0 %v3375
  %4073 = vmatmul.mubr.bf16.gmra.mrb[0].mxu0 %v3374
  %v4074 = vpop.f32.mrb[0].mxu0
  %v4075 = vadd.f32 %v3970, %v4074
  %v4076 = vpop.f32.mrb[0].mxu0
  %v4077 = vpop.f32.mrb[0].mxu0
  %v4078 = vadd.f32 %v3973, %v4077
  %v4079 = vpop.f32.mrb[0].mxu0
  %4080 = vmatprep.mubr.bf16.mxu0 %v3380
  %4081 = vmatmul.mubr.bf16.gmra.mrb[0].mxu0 %v3379
  %v4082 = vpop.f32.mrb[0].mxu0
  %v4083 = vadd.f32 %v3978, %v4082
  %v4084 = vpop.f32.mrb[0].mxu0
  %v4085 = vpop.f32.mrb[0].mxu0
  %v4086 = vadd.f32 %v3981, %v4085
  %v4087 = vpop.f32.mrb[0].mxu0
  %4088 = vmatprep.mubr.bf16.mxu0 %v3385
  %4089 = vmatmul.mubr.bf16.gmra.mrb[0].mxu0 %v3384
  %v4090 = vpop.f32.mrb[0].mxu0
  %v4091 = vadd.f32 %v3986, %v4090
  %v4092 = vpop.f32.mrb[0].mxu0
  %v4093 = vpop.f32.mrb[0].mxu0
  %v4094 = vadd.f32 %v3989, %v4093
  %v4095 = vpop.f32.mrb[0].mxu0
  %4096 = vmatprep.mubr.bf16.mxu0 %v3390
  %4097 = vmatmul.mubr.bf16.gmra.mrb[0].mxu0 %v3389
  %v4098 = vpop.f32.mrb[0].mxu0
  %v4099 = vadd.f32 %v3994, %v4098
  %v4100 = vpop.f32.mrb[0].mxu0
  %v4101 = vpop.f32.mrb[0].mxu0
  %v4102 = vadd.f32 %v3997, %v4101
  %v4103 = vpop.f32.mrb[0].mxu0
  %4104 = vdwg.mxu0
  %4105 = vmatprep.subr.bf16.mxu0 0
  %4106 = vmatpush1.bf16.msra.mxu0 %v3893
  %4107 = vmatprep.subr.bf16.mxu0 0
  %4108 = vmatpush1.bf16.msra.mxu0 %v3894
  %4109 = vmatprep.subr.bf16.mxu0 0
  %4110 = vmatpush1.bf16.msra.mxu0 0
  %4111 = vmatprep.subr.bf16.mxu0 0
  %4112 = vmatpush1.bf16.msra.mxu0 0
  %4113 = vmatprep.subr.bf16.mxu0 0
  %4114 = vmatpush1.bf16.msra.mxu0 0
  %4115 = vmatprep.subr.bf16.mxu0 0
  %4116 = vmatpush1.bf16.msra.mxu0 0
  %4117 = vmatprep.subr.bf16.mxu0 0
  %4118 = vmatpush1.bf16.msra.mxu0 0
  %4119 = vmatprep.subr.bf16.mxu0 0
  %4120 = vmatpush1.bf16.msra.mxu0 0
  %4121 = vmatprep.subr.bf16.mxu0 0
  %4122 = vmatpush1.bf16.msra.mxu0 0
  %4123 = vmatprep.subr.bf16.mxu0 0
  %4124 = vmatpush1.bf16.msra.mxu0 0
  %4125 = vmatprep.subr.bf16.mxu0 0
  %4126 = vmatpush1.bf16.msra.mxu0 0
  %4127 = vmatprep.subr.bf16.mxu0 0
  %4128 = vmatpush1.bf16.msra.mxu0 0
  %4129 = vmatprep.subr.bf16.mxu0 0
  %4130 = vmatpush1.bf16.msra.mxu0 0
  %4131 = vmatprep.subr.bf16.mxu0 0
  %4132 = vmatpush1.bf16.msra.mxu0 0
  %4133 = vmatprep.subr.bf16.mxu0 0
  %4134 = vmatpush1.bf16.msra.mxu0 0
  %4135 = vmatprep.subr.bf16.mxu0 0
  %4136 = vmatpush1.bf16.msra.mxu0 0
  %4137 = vmatprep.mubr.bf16.mxu0 0
  %4138 = vmatmul.mubr.bf16.gmra.mrb[0].mxu0 %v3430
  %v4139 = vpop.f32.mrb[0].mxu0
  %v4140 = vadd.f32 %v4035, %v4139
  %v4141 = vpop.f32.mrb[0].mxu0
  %v4142 = vpop.f32.mrb[0].mxu0
  %v4143 = vadd.f32 %v4038, %v4142
  %v4144 = vpop.f32.mrb[0].mxu0
  %4145 = vmatprep.mubr.bf16.mxu0 0
  %4146 = vmatmul.mubr.bf16.gmra.mrb[0].mxu0 %v3433
  %v4147 = vpop.f32.mrb[0].mxu0
  %v4148 = vadd.f32 %v4043, %v4147
  %v4149 = vpop.f32.mrb[0].mxu0
  %v4150 = vpop.f32.mrb[0].mxu0
  %v4151 = vadd.f32 %v4046, %v4150
  %v4152 = vpop.f32.mrb[0].mxu0
  %4153 = vmatprep.mubr.bf16.mxu0 0
  %4154 = vmatmul.mubr.bf16.gmra.mrb[0].mxu0 %v3436
  %v4155 = vpop.f32.mrb[0].mxu0
  %v4156 = vadd.f32 %v4051, %v4155
  %v4157 = vpop.f32.mrb[0].mxu0
  %v4158 = vpop.f32.mrb[0].mxu0
  %v4159 = vadd.f32 %v4054, %v4158
  %v4160 = vpop.f32.mrb[0].mxu0
  %4161 = vmatprep.mubr.bf16.mxu0 0
  %4162 = vmatmul.mubr.bf16.gmra.mrb[0].mxu0 %v3439
  %v4163 = vpop.f32.mrb[0].mxu0
  %v4164 = vadd.f32 %v4059, %v4163
  %v4165 = vpop.f32.mrb[0].mxu0
  %v4166 = vpop.f32.mrb[0].mxu0
  %v4167 = vadd.f32 %v4062, %v4166
  %v4168 = vpop.f32.mrb[0].mxu0
  %4169 = vmatprep.mubr.bf16.mxu0 0
  %4170 = vmatmul.mubr.bf16.gmra.mrb[0].mxu0 %v3442
  %v4171 = vpop.f32.mrb[0].mxu0
  %v4172 = vadd.f32 %v4067, %v4171
  %v4173 = vpop.f32.mrb[0].mxu0
  %v4174 = vpop.f32.mrb[0].mxu0
  %v4175 = vadd.f32 %v4070, %v4174
  %v4176 = vpop.f32.mrb[0].mxu0
  %4177 = vmatprep.mubr.bf16.mxu0 0
  %4178 = vmatmul.mubr.bf16.gmra.mrb[0].mxu0 %v3445
  %v4179 = vpop.f32.mrb[0].mxu0
  %v4180 = vadd.f32 %v4075, %v4179
  %v4181 = vpop.f32.mrb[0].mxu0
  %v4182 = vpop.f32.mrb[0].mxu0
  %v4183 = vadd.f32 %v4078, %v4182
  %v4184 = vpop.f32.mrb[0].mxu0
  %4185 = vmatprep.mubr.bf16.mxu0 0
  %4186 = vmatmul.mubr.bf16.gmra.mrb[0].mxu0 %v3448
  %v4187 = vpop.f32.mrb[0].mxu0
  %v4188 = vadd.f32 %v4083, %v4187
  %v4189 = vpop.f32.mrb[0].mxu0
  %v4190 = vpop.f32.mrb[0].mxu0
  %v4191 = vadd.f32 %v4086, %v4190
  %v4192 = vpop.f32.mrb[0].mxu0
  %4193 = vmatprep.mubr.bf16.mxu0 0
  %4194 = vmatmul.mubr.bf16.gmra.mrb[0].mxu0 %v3451
  %v4195 = vpop.f32.mrb[0].mxu0
  %v4196 = vadd.f32 %v4091, %v4195
  %v4197 = vpop.f32.mrb[0].mxu0
  %v4198 = vpop.f32.mrb[0].mxu0
  %v4199 = vadd.f32 %v4094, %v4198
  %v4200 = vpop.f32.mrb[0].mxu0
  %4201 = vmatprep.mubr.bf16.mxu0 0
  %4202 = vmatmul.mubr.bf16.gmra.mrb[0].mxu0 %v3454
  %v4203 = vpop.f32.mrb[0].mxu0
  %v4204 = vadd.f32 %v4099, %v4203
  %v4205 = vpop.f32.mrb[0].mxu0
  %v4206 = vpop.f32.mrb[0].mxu0
  %v4207 = vadd.f32 %v4102, %v4206
  %v4208 = vpop.f32.mrb[0].mxu0
  %4209 = vdwg.mxu0
  %v4210 = vpack.c.bf16 %v4143, %v4140
  %v4211 = vpack.c.bf16 %v4151, %v4148
  %v4212 = vpack.c.bf16 %v4159, %v4156
  %v4213 = vpack.c.bf16 %v4167, %v4164
  %v4214 = vpack.c.bf16 %v4175, %v4172
  %v4215 = vpack.c.bf16 %v4183, %v4180
  %v4216 = vpack.c.bf16 %v4191, %v4188
  %v4217 = vpack.c.bf16 %v4199, %v4196
  %v4218 = vpack.c.bf16 %v4207, %v4204
  %v4228 = vunpack.c.l.b16 %v4210
  %v4229 = vunpack.c.h.b16 %v4210
  %v4230 = vunpack.c.l.b16 %v4211
  %v4231 = vunpack.c.h.b16 %v4211
  %v4232 = vunpack.c.l.b16 %v4212
  %v4233 = vunpack.c.h.b16 %v4212
  %v4234 = vunpack.c.l.b16 %v4213
  %v4235 = vunpack.c.h.b16 %v4213
  %v4236 = vunpack.c.l.b16 %v4214
  %v4237 = vunpack.c.h.b16 %v4214
  %v4238 = vunpack.c.l.b16 %v4215
  %v4239 = vunpack.c.h.b16 %v4215
  %v4240 = vunpack.c.l.b16 %v4216
  %v4241 = vunpack.c.h.b16 %v4216
  %v4242 = vunpack.c.l.b16 %v4217
  %v4243 = vunpack.c.h.b16 %v4217
  %v4244 = vunpack.c.l.b16 %v4218
  %v4245 = vunpack.c.h.b16 %v4218
  %v4246 = vpack.c.b16 %v4228, %v4228
  %v4247 = vpack.c.b16 %v4229, %v4229
  %v4248 = vpack.c.b16 %v4230, %v4230
  %v4249 = vpack.c.b16 %v4231, %v4231
  %v4250 = vpack.c.b16 %v4232, %v4232
  %v4251 = vpack.c.b16 %v4233, %v4233
  %v4252 = vpack.c.b16 %v4234, %v4234
  %v4253 = vpack.c.b16 %v4235, %v4235
  %v4254 = vpack.c.b16 %v4236, %v4236
  %v4255 = vpack.c.b16 %v4237, %v4237
  %v4256 = vpack.c.b16 %v4238, %v4238
  %v4257 = vpack.c.b16 %v4239, %v4239
  %v4258 = vpack.c.b16 %v4240, %v4240
  %v4259 = vpack.c.b16 %v4241, %v4241
  %v4260 = vpack.c.b16 %v4242, %v4242
  %v4261 = vpack.c.b16 %v4243, %v4243
  %v4262 = vpack.c.b16 %v4244, %v4244
  %v4263 = vpack.c.b16 %v4245, %v4245
  %4282 = vst.msk [vmem:[#allocation4 + $0x48] sm:$0xf] %vm66, %v4246
  %4283 = vst.msk [vmem:[#allocation4 + $0x4c] sm:$0xf] %vm66, %v4247
  %4284 = vst.msk [vmem:[#allocation4 + $0x50] sm:$0xf] %vm66, %v4248
  %4285 = vst.msk [vmem:[#allocation4 + $0x54] sm:$0xf] %vm66, %v4249
  %4286 = vst.msk [vmem:[#allocation4 + $0x58] sm:$0xf] %vm66, %v4250
  %4287 = vst.msk [vmem:[#allocation4 + $0x5c] sm:$0xf] %vm66, %v4251
  %4288 = vst.msk [vmem:[#allocation4 + $0x60] sm:$0xf] %vm66, %v4252
  %4289 = vst.msk [vmem:[#allocation4 + $0x64] sm:$0xf] %vm66, %v4253
  %4290 = vst.msk [vmem:[#allocation4 + $0x68] sm:$0xf] %vm66, %v4254
  %4291 = vst.msk [vmem:[#allocation4 + $0x6c] sm:$0xf] %vm66, %v4255
  %4292 = vst.msk [vmem:[#allocation4 + $0x70] sm:$0xf] %vm66, %v4256
  %4293 = vst.msk [vmem:[#allocation4 + $0x74] sm:$0xf] %vm66, %v4257
  %4294 = vst.msk [vmem:[#allocation4 + $0x78] sm:$0xf] %vm66, %v4258
  %4295 = vst.msk [vmem:[#allocation4 + $0x7c] sm:$0xf] %vm66, %v4259
  %4296 = vst.msk [vmem:[#allocation4 + $0x80] sm:$0xf] %vm66, %v4260
  %4297 = vst.msk [vmem:[#allocation4 + $0x84] sm:$0xf] %vm66, %v4261
  %4298 = vst.msk [vmem:[#allocation4 + $0x88] sm:$0xf] %vm66, %v4262
  %4299 = vst.msk [vmem:[#allocation4 + $0x8c] sm:$0xf] %vm66, %v4263
  %v4300 = vld [vmem:[%s5] sm:$0x1]
  %v4301 = vld [vmem:[#allocation4] sm:$0xf]
  %v4302 = vld [vmem:[#allocation4 + $0x4] sm:$0xf]
  %v4303 = vld [vmem:[#allocation4 + $0x8] sm:$0xf]
  %v4304 = vld [vmem:[#allocation4 + $0xc] sm:$0xf]
  %v4305 = vld [vmem:[#allocation4 + $0x10] sm:$0xf]
  %v4306 = vld [vmem:[#allocation4 + $0x14] sm:$0xf]
  %v4307 = vld [vmem:[#allocation4 + $0x18] sm:$0xf]
  %v4308 = vld [vmem:[#allocation4 + $0x1c] sm:$0xf]
  %v4309 = vld [vmem:[#allocation4 + $0x20] sm:$0xf]
  %v4310 = vld [vmem:[#allocation4 + $0x24] sm:$0xf]
  %v4311 = vld [vmem:[#allocation4 + $0x28] sm:$0xf]
  %v4312 = vld [vmem:[#allocation4 + $0x2c] sm:$0xf]
  %v4313 = vld [vmem:[%s4] sm:$0xf]
  %v4314 = vld [vmem:[%s4 + $0x4] sm:$0xf]
  %v4315 = vld [vmem:[%s4 + $0x8] sm:$0xf]
  %v4316 = vld [vmem:[%s4 + $0xc] sm:$0x1]
  %v4317 = vld [vmem:[#allocation4 + $0x30] sm:$0x1]
  %s4318 = scalar_lea.vmem %s4, 16
  %v4319 = vld [vmem:[%s4318] sm:$0xf]
  %v4320 = vld [vmem:[%s4318 + $0x4] sm:$0xf]
  %v4321 = vld [vmem:[%s4318 + $0x8] sm:$0xf]
  %v4322 = vld [vmem:[%s4318 + $0xc] sm:$0x1]
  %v4336 = vunpack.c.l.b16 %v4301
  %v4337 = vunpack.c.l.b16 %v4302
  %v4338 = vunpack.c.l.b16 %v4303
  %v4339 = vunpack.c.l.b16 %v4304
  %v4340 = vunpack.c.l.b16 %v4305
  %v4341 = vunpack.c.l.b16 %v4306
  %v4342 = vunpack.c.l.b16 %v4307
  %v4343 = vunpack.c.l.b16 %v4308
  %v4344 = vunpack.c.l.b16 %v4309
  %v4345 = vunpack.c.l.b16 %v4310
  %v4346 = vunpack.c.l.b16 %v4311
  %v4347 = vunpack.c.l.b16 %v4312
  %v4348 = vunpack.c.l.b16 %v4317
  %v4349 = vpack.c.b16 %v4337, %v4336
  %v4350 = vpack.c.b16 %v4339, %v4338
  %v4351 = vpack.c.b16 %v4341, %v4340
  %v4352 = vpack.c.b16 %v4343, %v4342
  %v4353 = vpack.c.b16 %v4345, %v4344
  %v4354 = vpack.c.b16 %v4347, %v4346
  %v4355 = vpack.c.b16 %v4348, %v4348
  %vm4356 = vsmask.f32 7424
  %v4358 = vshrl.u32 %v4349, 16
  %v4360 = vshll.u32 %v4349, 16
  %v4362 = vrot.slane %v4360, 1
  %v4363 = vor.u32 %v4358, %v4362
  %v4365 = vshll.u32 %v4350, 16
  %v4367 = vrot.slane %v4365, 1
  %v4368 = vsel %vm4356, %v4363, %v4367
  %v4369 = vshrl.u32 %v4350, 16
  %v4371 = vor.u32 %v4369, %v4367
  %v4373 = vshll.u32 %v4351, 16
  %v4375 = vrot.slane %v4373, 1
  %v4376 = vsel %vm4356, %v4371, %v4375
  %v4377 = vshrl.u32 %v4351, 16
  %v4379 = vor.u32 %v4377, %v4375
  %v4381 = vshll.u32 %v4352, 16
  %v4383 = vrot.slane %v4381, 1
  %v4384 = vsel %vm4356, %v4379, %v4383
  %v4385 = vshrl.u32 %v4352, 16
  %v4387 = vor.u32 %v4385, %v4383
  %v4389 = vshll.u32 %v4353, 16
  %v4391 = vrot.slane %v4389, 1
  %v4392 = vsel %vm4356, %v4387, %v4391
  %v4393 = vshrl.u32 %v4353, 16
  %v4395 = vor.u32 %v4393, %v4391
  %v4397 = vshll.u32 %v4354, 16
  %v4399 = vrot.slane %v4397, 1
  %v4400 = vsel %vm4356, %v4395, %v4399
  %v4401 = vshrl.u32 %v4354, 16
  %v4403 = vor.u32 %v4401, %v4399
  %v4405 = vshll.u32 %v4355, 16
  %v4407 = vrot.slane %v4405, 1
  %v4408 = vsel %vm4356, %v4403, %v4407
  %v4413 = vunpack.c.l.b16 %v4319
  %v4414 = vunpack.c.l.b16 %v4320
  %v4415 = vunpack.c.l.b16 %v4321
  %v4416 = vunpack.c.l.b16 %v4322
  %v4417 = vpack.c.b16 %v4414, %v4413
  %v4418 = vpack.c.b16 %v4416, %v4415
  %v4421 = vsel %vm512, %v4368, 0
  %v4424 = vsel %vm512, %v4376, 0
  %v4427 = vsel %vm512, %v4384, 0
  %v4430 = vsel %vm512, %v4392, 0
  %v4433 = vsel %vm512, %v4400, 0
  %v4436 = vsel %vm512, %v4408, 0
  %vm4438 = vcmask 1044480
  %v4439 = vsel %vm315, 4294967295, 65535
  %v4440 = vsel %vm4438, %v4439, 0
  %v4442 = vand.u32 %v4418, %v4440
  %4444 = vmatprep.subr.bf16.mxu0 0
  %4445 = vmatpush1.bf16.msra.mxu0 %v4417
  %4446 = vmatprep.subr.bf16.mxu0 0
  %4447 = vmatpush1.bf16.msra.mxu0 %v4442
  %4448 = vmatprep.subr.bf16.mxu0 0
  %4449 = vmatpush1.bf16.msra.mxu0 0
  %4450 = vmatprep.subr.bf16.mxu0 0
  %4451 = vmatpush1.bf16.msra.mxu0 0
  %4452 = vmatprep.subr.bf16.mxu0 0
  %4453 = vmatpush1.bf16.msra.mxu0 0
  %4454 = vmatprep.subr.bf16.mxu0 0
  %4455 = vmatpush1.bf16.msra.mxu0 0
  %4456 = vmatprep.subr.bf16.mxu0 0
  %4457 = vmatpush1.bf16.msra.mxu0 0
  %4458 = vmatprep.subr.bf16.mxu0 0
  %4459 = vmatpush1.bf16.msra.mxu0 0
  %4460 = vmatprep.subr.bf16.mxu0 0
  %4461 = vmatpush1.bf16.msra.mxu0 0
  %4462 = vmatprep.subr.bf16.mxu0 0
  %4463 = vmatpush1.bf16.msra.mxu0 0
  %4464 = vmatprep.subr.bf16.mxu0 0
  %4465 = vmatpush1.bf16.msra.mxu0 0
  %4466 = vmatprep.subr.bf16.mxu0 0
  %4467 = vmatpush1.bf16.msra.mxu0 0
  %4468 = vmatprep.subr.bf16.mxu0 0
  %4469 = vmatpush1.bf16.msra.mxu0 0
  %4470 = vmatprep.subr.bf16.mxu0 0
  %4471 = vmatpush1.bf16.msra.mxu0 0
  %4472 = vmatprep.subr.bf16.mxu0 0
  %4473 = vmatpush1.bf16.msra.mxu0 0
  %4474 = vmatprep.subr.bf16.mxu0 0
  %4475 = vmatpush1.bf16.msra.mxu0 0
  %4476 = vmatprep.mubr.bf16.mxu0 0
  %4477 = vmatmul.mubr.bf16.gmra.mrb[0].mxu0 %v4421
  %v4478 = vpop.f32.mrb[0].mxu0
  %v4479 = vadd.f32 0.0, %v4478
  %v4480 = vpop.f32.mrb[0].mxu0
  %v4481 = vpop.f32.mrb[0].mxu0
  %v4482 = vadd.f32 0.0, %v4481
  %v4483 = vpop.f32.mrb[0].mxu0
  %4484 = vmatprep.mubr.bf16.mxu0 0
  %4485 = vmatmul.mubr.bf16.gmra.mrb[0].mxu0 %v4424
  %v4486 = vpop.f32.mrb[0].mxu0
  %v4487 = vadd.f32 0.0, %v4486
  %v4488 = vpop.f32.mrb[0].mxu0
  %v4489 = vpop.f32.mrb[0].mxu0
  %v4490 = vadd.f32 0.0, %v4489
  %v4491 = vpop.f32.mrb[0].mxu0
  %4492 = vmatprep.mubr.bf16.mxu0 0
  %4493 = vmatmul.mubr.bf16.gmra.mrb[0].mxu0 %v4427
  %v4494 = vpop.f32.mrb[0].mxu0
  %v4495 = vadd.f32 0.0, %v4494
  %v4496 = vpop.f32.mrb[0].mxu0
  %v4497 = vpop.f32.mrb[0].mxu0
  %v4498 = vadd.f32 0.0, %v4497
  %v4499 = vpop.f32.mrb[0].mxu0
  %4500 = vmatprep.mubr.bf16.mxu0 0
  %4501 = vmatmul.mubr.bf16.gmra.mrb[0].mxu0 %v4430
  %v4502 = vpop.f32.mrb[0].mxu0
  %v4503 = vadd.f32 0.0, %v4502
  %v4504 = vpop.f32.mrb[0].mxu0
  %v4505 = vpop.f32.mrb[0].mxu0
  %v4506 = vadd.f32 0.0, %v4505
  %v4507 = vpop.f32.mrb[0].mxu0
  %4508 = vmatprep.mubr.bf16.mxu0 0
  %4509 = vmatmul.mubr.bf16.gmra.mrb[0].mxu0 %v4433
  %v4510 = vpop.f32.mrb[0].mxu0
  %v4511 = vadd.f32 0.0, %v4510
  %v4512 = vpop.f32.mrb[0].mxu0
  %v4513 = vpop.f32.mrb[0].mxu0
  %v4514 = vadd.f32 0.0, %v4513
  %v4515 = vpop.f32.mrb[0].mxu0
  %4516 = vmatprep.mubr.bf16.mxu0 0
  %4517 = vmatmul.mubr.bf16.gmra.mrb[0].mxu0 %v4436
  %v4518 = vpop.f32.mrb[0].mxu0
  %v4519 = vadd.f32 0.0, %v4518
  %v4520 = vpop.f32.mrb[0].mxu0
  %v4521 = vpop.f32.mrb[0].mxu0
  %v4522 = vadd.f32 0.0, %v4521
  %v4523 = vpop.f32.mrb[0].mxu0
  %4524 = vdwg.mxu0
  %v4529 = vunpack.c.l.b16 %v4313
  %v4530 = vunpack.c.l.b16 %v4314
  %v4531 = vunpack.c.l.b16 %v4315
  %v4532 = vunpack.c.l.b16 %v4316
  %v4533 = vpack.c.b16 %v4530, %v4529
  %v4534 = vpack.c.b16 %v4532, %v4531
  %v4536 = vsel %vm512, %v4349, 0
  %v4538 = vsel %vm512, %v4350, 0
  %v4540 = vsel %vm512, %v4351, 0
  %v4542 = vsel %vm512, %v4352, 0
  %v4544 = vsel %vm512, %v4353, 0
  %v4546 = vsel %vm512, %v4354, 0
  %v4549 = vand.u32 %v4534, %v4440
  %4551 = vmatprep.subr.bf16.mxu0 0
  %4552 = vmatpush1.bf16.msra.mxu0 %v4533
  %4553 = vmatprep.subr.bf16.mxu0 0
  %4554 = vmatpush1.bf16.msra.mxu0 %v4549
  %4555 = vmatprep.subr.bf16.mxu0 0
  %4556 = vmatpush1.bf16.msra.mxu0 0
  %4557 = vmatprep.subr.bf16.mxu0 0
  %4558 = vmatpush1.bf16.msra.mxu0 0
  %4559 = vmatprep.subr.bf16.mxu0 0
  %4560 = vmatpush1.bf16.msra.mxu0 0
  %4561 = vmatprep.subr.bf16.mxu0 0
  %4562 = vmatpush1.bf16.msra.mxu0 0
  %4563 = vmatprep.subr.bf16.mxu0 0
  %4564 = vmatpush1.bf16.msra.mxu0 0
  %4565 = vmatprep.subr.bf16.mxu0 0
  %4566 = vmatpush1.bf16.msra.mxu0 0
  %4567 = vmatprep.subr.bf16.mxu0 0
  %4568 = vmatpush1.bf16.msra.mxu0 0
  %4569 = vmatprep.subr.bf16.mxu0 0
  %4570 = vmatpush1.bf16.msra.mxu0 0
  %4571 = vmatprep.subr.bf16.mxu0 0
  %4572 = vmatpush1.bf16.msra.mxu0 0
  %4573 = vmatprep.subr.bf16.mxu0 0
  %4574 = vmatpush1.bf16.msra.mxu0 0
  %4575 = vmatprep.subr.bf16.mxu0 0
  %4576 = vmatpush1.bf16.msra.mxu0 0
  %4577 = vmatprep.subr.bf16.mxu0 0
  %4578 = vmatpush1.bf16.msra.mxu0 0
  %4579 = vmatprep.subr.bf16.mxu0 0
  %4580 = vmatpush1.bf16.msra.mxu0 0
  %4581 = vmatprep.subr.bf16.mxu0 0
  %4582 = vmatpush1.bf16.msra.mxu0 0
  %4583 = vmatprep.mubr.bf16.mxu0 0
  %4584 = vmatmul.mubr.bf16.gmra.mrb[0].mxu0 %v4536
  %v4585 = vpop.f32.mrb[0].mxu0
  %v4586 = vadd.f32 %v4479, %v4585
  %v4587 = vpop.f32.mrb[0].mxu0
  %v4588 = vpop.f32.mrb[0].mxu0
  %v4589 = vadd.f32 %v4482, %v4588
  %v4590 = vpop.f32.mrb[0].mxu0
  %4591 = vmatprep.mubr.bf16.mxu0 0
  %4592 = vmatmul.mubr.bf16.gmra.mrb[0].mxu0 %v4538
  %v4593 = vpop.f32.mrb[0].mxu0
  %v4594 = vadd.f32 %v4487, %v4593
  %v4595 = vpop.f32.mrb[0].mxu0
  %v4596 = vpop.f32.mrb[0].mxu0
  %v4597 = vadd.f32 %v4490, %v4596
  %v4598 = vpop.f32.mrb[0].mxu0
  %4599 = vmatprep.mubr.bf16.mxu0 0
  %4600 = vmatmul.mubr.bf16.gmra.mrb[0].mxu0 %v4540
  %v4601 = vpop.f32.mrb[0].mxu0
  %v4602 = vadd.f32 %v4495, %v4601
  %v4603 = vpop.f32.mrb[0].mxu0
  %v4604 = vpop.f32.mrb[0].mxu0
  %v4605 = vadd.f32 %v4498, %v4604
  %v4606 = vpop.f32.mrb[0].mxu0
  %4607 = vmatprep.mubr.bf16.mxu0 0
  %4608 = vmatmul.mubr.bf16.gmra.mrb[0].mxu0 %v4542
  %v4609 = vpop.f32.mrb[0].mxu0
  %v4610 = vadd.f32 %v4503, %v4609
  %v4611 = vpop.f32.mrb[0].mxu0
  %v4612 = vpop.f32.mrb[0].mxu0
  %v4613 = vadd.f32 %v4506, %v4612
  %v4614 = vpop.f32.mrb[0].mxu0
  %4615 = vmatprep.mubr.bf16.mxu0 0
  %4616 = vmatmul.mubr.bf16.gmra.mrb[0].mxu0 %v4544
  %v4617 = vpop.f32.mrb[0].mxu0
  %v4618 = vadd.f32 %v4511, %v4617
  %v4619 = vpop.f32.mrb[0].mxu0
  %v4620 = vpop.f32.mrb[0].mxu0
  %v4621 = vadd.f32 %v4514, %v4620
  %v4622 = vpop.f32.mrb[0].mxu0
  %4623 = vmatprep.mubr.bf16.mxu0 0
  %4624 = vmatmul.mubr.bf16.gmra.mrb[0].mxu0 %v4546
  %v4625 = vpop.f32.mrb[0].mxu0
  %v4626 = vadd.f32 %v4519, %v4625
  %v4627 = vpop.f32.mrb[0].mxu0
  %v4628 = vpop.f32.mrb[0].mxu0
  %v4629 = vadd.f32 %v4522, %v4628
  %v4630 = vpop.f32.mrb[0].mxu0
  %4631 = vdwg.mxu0
  %v4632 = vld [vmem:[#allocation4] sm:$0xe]
  %s4633 = scalar_lea.vmem %s4, 32
  %v4634 = vld [vmem:[%s4633] sm:$0xf]
  %v4635 = vld [vmem:[%s4633 + $0x4] sm:$0xf]
  %v4636 = vld [vmem:[%s4633 + $0x8] sm:$0xf]
  %v4637 = vld [vmem:[%s4633 + $0xc] sm:$0x1]
  %v4639 = vunpack.c.l.b16 %v4632
  %v4640 = vpack.c.b16 %v4337, %v4639
  %vm4641 = vcmask 1046528
  %v4642 = vrot.slane %v4640, 1
  %v4643 = vrot.slane %v4350, 1
  %v4644 = vsel %vm4641, %v4642, %v4643
  %v4645 = vrot.slane %v4351, 1
  %v4646 = vsel %vm4641, %v4643, %v4645
  %v4647 = vrot.slane %v4352, 1
  %v4648 = vsel %vm4641, %v4645, %v4647
  %v4649 = vrot.slane %v4353, 1
  %v4650 = vsel %vm4641, %v4647, %v4649
  %v4651 = vrot.slane %v4354, 1
  %v4652 = vsel %vm4641, %v4649, %v4651
  %v4653 = vrot.slane %v4355, 1
  %v4654 = vsel %vm4641, %v4651, %v4653
  %v4659 = vunpack.c.l.b16 %v4634
  %v4660 = vunpack.c.l.b16 %v4635
  %v4661 = vunpack.c.l.b16 %v4636
  %v4662 = vunpack.c.l.b16 %v4637
  %v4663 = vpack.c.b16 %v4660, %v4659
  %v4664 = vpack.c.b16 %v4662, %v4661
  %v4667 = vsel %vm512, %v4644, 0
  %v4670 = vsel %vm512, %v4646, 0
  %v4673 = vsel %vm512, %v4648, 0
  %v4676 = vsel %vm512, %v4650, 0
  %v4679 = vsel %vm512, %v4652, 0
  %v4682 = vsel %vm512, %v4654, 0
  %v4685 = vand.u32 %v4664, %v4440
  %4687 = vmatprep.subr.bf16.mxu0 0
  %4688 = vmatpush1.bf16.msra.mxu0 %v4663
  %4689 = vmatprep.subr.bf16.mxu0 0
  %4690 = vmatpush1.bf16.msra.mxu0 %v4685
  %4691 = vmatprep.subr.bf16.mxu0 0
  %4692 = vmatpush1.bf16.msra.mxu0 0
  %4693 = vmatprep.subr.bf16.mxu0 0
  %4694 = vmatpush1.bf16.msra.mxu0 0
  %4695 = vmatprep.subr.bf16.mxu0 0
  %4696 = vmatpush1.bf16.msra.mxu0 0
  %4697 = vmatprep.subr.bf16.mxu0 0
  %4698 = vmatpush1.bf16.msra.mxu0 0
  %4699 = vmatprep.subr.bf16.mxu0 0
  %4700 = vmatpush1.bf16.msra.mxu0 0
  %4701 = vmatprep.subr.bf16.mxu0 0
  %4702 = vmatpush1.bf16.msra.mxu0 0
  %4703 = vmatprep.subr.bf16.mxu0 0
  %4704 = vmatpush1.bf16.msra.mxu0 0
  %4705 = vmatprep.subr.bf16.mxu0 0
  %4706 = vmatpush1.bf16.msra.mxu0 0
  %4707 = vmatprep.subr.bf16.mxu0 0
  %4708 = vmatpush1.bf16.msra.mxu0 0
  %4709 = vmatprep.subr.bf16.mxu0 0
  %4710 = vmatpush1.bf16.msra.mxu0 0
  %4711 = vmatprep.subr.bf16.mxu0 0
  %4712 = vmatpush1.bf16.msra.mxu0 0
  %4713 = vmatprep.subr.bf16.mxu0 0
  %4714 = vmatpush1.bf16.msra.mxu0 0
  %4715 = vmatprep.subr.bf16.mxu0 0
  %4716 = vmatpush1.bf16.msra.mxu0 0
  %4717 = vmatprep.subr.bf16.mxu0 0
  %4718 = vmatpush1.bf16.msra.mxu0 0
  %4719 = vmatprep.mubr.bf16.mxu0 0
  %4720 = vmatmul.mubr.bf16.gmra.mrb[0].mxu0 %v4667
  %v4721 = vpop.f32.mrb[0].mxu0
  %v4722 = vadd.f32 0.0, %v4721
  %v4723 = vpop.f32.mrb[0].mxu0
  %v4724 = vpop.f32.mrb[0].mxu0
  %v4725 = vadd.f32 0.0, %v4724
  %v4726 = vpop.f32.mrb[0].mxu0
  %4727 = vmatprep.mubr.bf16.mxu0 0
  %4728 = vmatmul.mubr.bf16.gmra.mrb[0].mxu0 %v4670
  %v4729 = vpop.f32.mrb[0].mxu0
  %v4730 = vadd.f32 0.0, %v4729
  %v4731 = vpop.f32.mrb[0].mxu0
  %v4732 = vpop.f32.mrb[0].mxu0
  %v4733 = vadd.f32 0.0, %v4732
  %v4734 = vpop.f32.mrb[0].mxu0
  %4735 = vmatprep.mubr.bf16.mxu0 0
  %4736 = vmatmul.mubr.bf16.gmra.mrb[0].mxu0 %v4673
  %v4737 = vpop.f32.mrb[0].mxu0
  %v4738 = vadd.f32 0.0, %v4737
  %v4739 = vpop.f32.mrb[0].mxu0
  %v4740 = vpop.f32.mrb[0].mxu0
  %v4741 = vadd.f32 0.0, %v4740
  %v4742 = vpop.f32.mrb[0].mxu0
  %4743 = vmatprep.mubr.bf16.mxu0 0
  %4744 = vmatmul.mubr.bf16.gmra.mrb[0].mxu0 %v4676
  %v4745 = vpop.f32.mrb[0].mxu0
  %v4746 = vadd.f32 0.0, %v4745
  %v4747 = vpop.f32.mrb[0].mxu0
  %v4748 = vpop.f32.mrb[0].mxu0
  %v4749 = vadd.f32 0.0, %v4748
  %v4750 = vpop.f32.mrb[0].mxu0
  %4751 = vmatprep.mubr.bf16.mxu0 0
  %4752 = vmatmul.mubr.bf16.gmra.mrb[0].mxu0 %v4679
  %v4753 = vpop.f32.mrb[0].mxu0
  %v4754 = vadd.f32 0.0, %v4753
  %v4755 = vpop.f32.mrb[0].mxu0
  %v4756 = vpop.f32.mrb[0].mxu0
  %v4757 = vadd.f32 0.0, %v4756
  %v4758 = vpop.f32.mrb[0].mxu0
  %4759 = vmatprep.mubr.bf16.mxu0 0
  %4760 = vmatmul.mubr.bf16.gmra.mrb[0].mxu0 %v4682
  %v4761 = vpop.f32.mrb[0].mxu0
  %v4762 = vadd.f32 0.0, %v4761
  %v4763 = vpop.f32.mrb[0].mxu0
  %v4764 = vpop.f32.mrb[0].mxu0
  %v4765 = vadd.f32 0.0, %v4764
  %v4766 = vpop.f32.mrb[0].mxu0
  %4767 = vdwg.mxu0
  %v4768 = vadd.f32 %v4586, %v4722
  %v4769 = vadd.f32 %v4589, %v4725
  %v4770 = vadd.f32 %v4594, %v4730
  %v4771 = vadd.f32 %v4597, %v4733
  %v4772 = vadd.f32 %v4602, %v4738
  %v4773 = vadd.f32 %v4605, %v4741
  %v4774 = vadd.f32 %v4610, %v4746
  %v4775 = vadd.f32 %v4613, %v4749
  %v4776 = vadd.f32 %v4618, %v4754
  %v4777 = vadd.f32 %v4621, %v4757
  %v4778 = vadd.f32 %v4626, %v4762
  %v4779 = vadd.f32 %v4629, %v4765
  %v4780 = vld [vmem:[#allocation4 + $0x8] sm:$0xf]
  %v4781 = vld [vmem:[#allocation4 + $0xc] sm:$0xf]
  %v4782 = vld [vmem:[#allocation4 + $0x10] sm:$0xf]
  %v4783 = vld [vmem:[#allocation4 + $0x14] sm:$0xf]
  %v4784 = vld [vmem:[#allocation4 + $0x18] sm:$0xf]
  %v4785 = vld [vmem:[#allocation4 + $0x1c] sm:$0xf]
  %v4786 = vld [vmem:[#allocation4 + $0x20] sm:$0xf]
  %v4787 = vld [vmem:[#allocation4 + $0x24] sm:$0xf]
  %v4788 = vld [vmem:[#allocation4 + $0x28] sm:$0xf]
  %v4789 = vld [vmem:[#allocation4 + $0x2c] sm:$0xf]
  %v4790 = vld [vmem:[#allocation4 + $0x30] sm:$0xf]
  %v4791 = vld [vmem:[#allocation4 + $0x34] sm:$0xf]
  %s4792 = scalar_lea.vmem %s4, 48
  %v4793 = vld [vmem:[%s4792] sm:$0xf]
  %v4794 = vld [vmem:[%s4792 + $0x4] sm:$0xf]
  %v4795 = vld [vmem:[%s4792 + $0x8] sm:$0xf]
  %v4796 = vld [vmem:[%s4792 + $0xc] sm:$0x1]
  %v4809 = vunpack.c.l.b16 %v4780
  %v4810 = vunpack.c.l.b16 %v4781
  %v4811 = vunpack.c.l.b16 %v4782
  %v4812 = vunpack.c.l.b16 %v4783
  %v4813 = vunpack.c.l.b16 %v4784
  %v4814 = vunpack.c.l.b16 %v4785
  %v4815 = vunpack.c.l.b16 %v4786
  %v4816 = vunpack.c.l.b16 %v4787
  %v4817 = vunpack.c.l.b16 %v4788
  %v4818 = vunpack.c.l.b16 %v4789
  %v4819 = vunpack.c.l.b16 %v4790
  %v4820 = vunpack.c.l.b16 %v4791
  %v4821 = vpack.c.b16 %v4810, %v4809
  %v4822 = vpack.c.b16 %v4812, %v4811
  %v4823 = vpack.c.b16 %v4814, %v4813
  %v4824 = vpack.c.b16 %v4816, %v4815
  %v4825 = vpack.c.b16 %v4818, %v4817
  %v4826 = vpack.c.b16 %v4820, %v4819
  %v4831 = vunpack.c.l.b16 %v4793
  %v4832 = vunpack.c.l.b16 %v4794
  %v4833 = vunpack.c.l.b16 %v4795
  %v4834 = vunpack.c.l.b16 %v4796
  %v4835 = vpack.c.b16 %v4832, %v4831
  %v4836 = vpack.c.b16 %v4834, %v4833
  %v4839 = vsel %vm512, %v4821, 0
  %v4842 = vsel %vm512, %v4822, 0
  %v4845 = vsel %vm512, %v4823, 0
  %v4848 = vsel %vm512, %v4824, 0
  %v4851 = vsel %vm512, %v4825, 0
  %v4854 = vsel %vm512, %v4826, 0
  %v4857 = vand.u32 %v4836, %v4440
  %4859 = vmatprep.subr.bf16.mxu0 0
  %4860 = vmatpush1.bf16.msra.mxu0 %v4835
  %4861 = vmatprep.subr.bf16.mxu0 0
  %4862 = vmatpush1.bf16.msra.mxu0 %v4857
  %4863 = vmatprep.subr.bf16.mxu0 0
  %4864 = vmatpush1.bf16.msra.mxu0 0
  %4865 = vmatprep.subr.bf16.mxu0 0
  %4866 = vmatpush1.bf16.msra.mxu0 0
  %4867 = vmatprep.subr.bf16.mxu0 0
  %4868 = vmatpush1.bf16.msra.mxu0 0
  %4869 = vmatprep.subr.bf16.mxu0 0
  %4870 = vmatpush1.bf16.msra.mxu0 0
  %4871 = vmatprep.subr.bf16.mxu0 0
  %4872 = vmatpush1.bf16.msra.mxu0 0
  %4873 = vmatprep.subr.bf16.mxu0 0
  %4874 = vmatpush1.bf16.msra.mxu0 0
  %4875 = vmatprep.subr.bf16.mxu0 0
  %4876 = vmatpush1.bf16.msra.mxu0 0
  %4877 = vmatprep.subr.bf16.mxu0 0
  %4878 = vmatpush1.bf16.msra.mxu0 0
  %4879 = vmatprep.subr.bf16.mxu0 0
  %4880 = vmatpush1.bf16.msra.mxu0 0
  %4881 = vmatprep.subr.bf16.mxu0 0
  %4882 = vmatpush1.bf16.msra.mxu0 0
  %4883 = vmatprep.subr.bf16.mxu0 0
  %4884 = vmatpush1.bf16.msra.mxu0 0
  %4885 = vmatprep.subr.bf16.mxu0 0
  %4886 = vmatpush1.bf16.msra.mxu0 0
  %4887 = vmatprep.subr.bf16.mxu0 0
  %4888 = vmatpush1.bf16.msra.mxu0 0
  %4889 = vmatprep.subr.bf16.mxu0 0
  %4890 = vmatpush1.bf16.msra.mxu0 0
  %4891 = vmatprep.mubr.bf16.mxu0 0
  %4892 = vmatmul.mubr.bf16.gmra.mrb[0].mxu0 %v4839
  %v4893 = vpop.f32.mrb[0].mxu0
  %v4894 = vadd.f32 0.0, %v4893
  %v4895 = vpop.f32.mrb[0].mxu0
  %v4896 = vpop.f32.mrb[0].mxu0
  %v4897 = vadd.f32 0.0, %v4896
  %v4898 = vpop.f32.mrb[0].mxu0
  %4899 = vmatprep.mubr.bf16.mxu0 0
  %4900 = vmatmul.mubr.bf16.gmra.mrb[0].mxu0 %v4842
  %v4901 = vpop.f32.mrb[0].mxu0
  %v4902 = vadd.f32 0.0, %v4901
  %v4903 = vpop.f32.mrb[0].mxu0
  %v4904 = vpop.f32.mrb[0].mxu0
  %v4905 = vadd.f32 0.0, %v4904
  %v4906 = vpop.f32.mrb[0].mxu0
  %4907 = vmatprep.mubr.bf16.mxu0 0
  %4908 = vmatmul.mubr.bf16.gmra.mrb[0].mxu0 %v4845
  %v4909 = vpop.f32.mrb[0].mxu0
  %v4910 = vadd.f32 0.0, %v4909
  %v4911 = vpop.f32.mrb[0].mxu0
  %v4912 = vpop.f32.mrb[0].mxu0
  %v4913 = vadd.f32 0.0, %v4912
  %v4914 = vpop.f32.mrb[0].mxu0
  %4915 = vmatprep.mubr.bf16.mxu0 0
  %4916 = vmatmul.mubr.bf16.gmra.mrb[0].mxu0 %v4848
  %v4917 = vpop.f32.mrb[0].mxu0
  %v4918 = vadd.f32 0.0, %v4917
  %v4919 = vpop.f32.mrb[0].mxu0
  %v4920 = vpop.f32.mrb[0].mxu0
  %v4921 = vadd.f32 0.0, %v4920
  %v4922 = vpop.f32.mrb[0].mxu0
  %4923 = vmatprep.mubr.bf16.mxu0 0
  %4924 = vmatmul.mubr.bf16.gmra.mrb[0].mxu0 %v4851
  %v4925 = vpop.f32.mrb[0].mxu0
  %v4926 = vadd.f32 0.0, %v4925
  %v4927 = vpop.f32.mrb[0].mxu0
  %v4928 = vpop.f32.mrb[0].mxu0
  %v4929 = vadd.f32 0.0, %v4928
  %v4930 = vpop.f32.mrb[0].mxu0
  %4931 = vmatprep.mubr.bf16.mxu0 0
  %4932 = vmatmul.mubr.bf16.gmra.mrb[0].mxu0 %v4854
  %v4933 = vpop.f32.mrb[0].mxu0
  %v4934 = vadd.f32 0.0, %v4933
  %v4935 = vpop.f32.mrb[0].mxu0
  %v4936 = vpop.f32.mrb[0].mxu0
  %v4937 = vadd.f32 0.0, %v4936
  %v4938 = vpop.f32.mrb[0].mxu0
  %4939 = vdwg.mxu0
  %v4940 = vadd.f32 %v4768, %v4894
  %v4941 = vadd.f32 %v4769, %v4897
  %v4942 = vadd.f32 %v4770, %v4902
  %v4943 = vadd.f32 %v4771, %v4905
  %v4944 = vadd.f32 %v4772, %v4910
  %v4945 = vadd.f32 %v4773, %v4913
  %v4946 = vadd.f32 %v4774, %v4918
  %v4947 = vadd.f32 %v4775, %v4921
  %v4948 = vadd.f32 %v4776, %v4926
  %v4949 = vadd.f32 %v4777, %v4929
  %v4950 = vadd.f32 %v4778, %v4934
  %v4951 = vadd.f32 %v4779, %v4937
  %v4952 = vld [vmem:[#allocation4 + $0x8] sm:$0xf]
  %v4953 = vld [vmem:[#allocation4 + $0xc] sm:$0xf]
  %v4954 = vld [vmem:[#allocation4 + $0x10] sm:$0xf]
  %v4955 = vld [vmem:[#allocation4 + $0x14] sm:$0xf]
  %v4956 = vld [vmem:[#allocation4 + $0x18] sm:$0xf]
  %v4957 = vld [vmem:[#allocation4 + $0x1c] sm:$0xf]
  %v4958 = vld [vmem:[#allocation4 + $0x20] sm:$0xf]
  %v4959 = vld [vmem:[#allocation4 + $0x24] sm:$0xf]
  %v4960 = vld [vmem:[#allocation4 + $0x28] sm:$0xf]
  %v4961 = vld [vmem:[#allocation4 + $0x2c] sm:$0xf]
  %v4962 = vld [vmem:[#allocation4 + $0x30] sm:$0xf]
  %v4963 = vld [vmem:[#allocation4 + $0x34] sm:$0xf]
  %v4964 = vld [vmem:[#allocation4 + $0x38] sm:$0x1]
  %s4965 = scalar_lea.vmem %s4, 64
  %v4966 = vld [vmem:[%s4965] sm:$0xf]
  %v4967 = vld [vmem:[%s4965 + $0x4] sm:$0xf]
  %v4968 = vld [vmem:[%s4965 + $0x8] sm:$0xf]
  %v4969 = vld [vmem:[%s4965 + $0xc] sm:$0x1]
  %v4983 = vunpack.c.l.b16 %v4952
  %v4984 = vunpack.c.l.b16 %v4953
  %v4985 = vunpack.c.l.b16 %v4954
  %v4986 = vunpack.c.l.b16 %v4955
  %v4987 = vunpack.c.l.b16 %v4956
  %v4988 = vunpack.c.l.b16 %v4957
  %v4989 = vunpack.c.l.b16 %v4958
  %v4990 = vunpack.c.l.b16 %v4959
  %v4991 = vunpack.c.l.b16 %v4960
  %v4992 = vunpack.c.l.b16 %v4961
  %v4993 = vunpack.c.l.b16 %v4962
  %v4994 = vunpack.c.l.b16 %v4963
  %v4995 = vunpack.c.l.b16 %v4964
  %v4996 = vpack.c.b16 %v4984, %v4983
  %v4997 = vpack.c.b16 %v4986, %v4985
  %v4998 = vpack.c.b16 %v4988, %v4987
  %v4999 = vpack.c.b16 %v4990, %v4989
  %v5000 = vpack.c.b16 %v4992, %v4991
  %v5001 = vpack.c.b16 %v4994, %v4993
  %v5002 = vpack.c.b16 %v4995, %v4995
  %v5004 = vshrl.u32 %v4996, 16
  %v5006 = vshll.u32 %v4996, 16
  %v5008 = vrot.slane %v5006, 1
  %v5009 = vor.u32 %v5004, %v5008
  %v5011 = vshll.u32 %v4997, 16
  %v5013 = vrot.slane %v5011, 1
  %v5014 = vsel %vm4356, %v5009, %v5013
  %v5015 = vshrl.u32 %v4997, 16
  %v5017 = vor.u32 %v5015, %v5013
  %v5019 = vshll.u32 %v4998, 16
  %v5021 = vrot.slane %v5019, 1
  %v5022 = vsel %vm4356, %v5017, %v5021
  %v5023 = vshrl.u32 %v4998, 16
  %v5025 = vor.u32 %v5023, %v5021
  %v5027 = vshll.u32 %v4999, 16
  %v5029 = vrot.slane %v5027, 1
  %v5030 = vsel %vm4356, %v5025, %v5029
  %v5031 = vshrl.u32 %v4999, 16
  %v5033 = vor.u32 %v5031, %v5029
  %v5035 = vshll.u32 %v5000, 16
  %v5037 = vrot.slane %v5035, 1
  %v5038 = vsel %vm4356, %v5033, %v5037
  %v5039 = vshrl.u32 %v5000, 16
  %v5041 = vor.u32 %v5039, %v5037
  %v5043 = vshll.u32 %v5001, 16
  %v5045 = vrot.slane %v5043, 1
  %v5046 = vsel %vm4356, %v5041, %v5045
  %v5047 = vshrl.u32 %v5001, 16
  %v5049 = vor.u32 %v5047, %v5045
  %v5051 = vshll.u32 %v5002, 16
  %v5053 = vrot.slane %v5051, 1
  %v5054 = vsel %vm4356, %v5049, %v5053
  %v5059 = vunpack.c.l.b16 %v4966
  %v5060 = vunpack.c.l.b16 %v4967
  %v5061 = vunpack.c.l.b16 %v4968
  %v5062 = vunpack.c.l.b16 %v4969
  %v5063 = vpack.c.b16 %v5060, %v5059
  %v5064 = vpack.c.b16 %v5062, %v5061
  %v5067 = vsel %vm512, %v5014, 0
  %v5070 = vsel %vm512, %v5022, 0
  %v5073 = vsel %vm512, %v5030, 0
  %v5076 = vsel %vm512, %v5038, 0
  %v5079 = vsel %vm512, %v5046, 0
  %v5082 = vsel %vm512, %v5054, 0
  %v5085 = vand.u32 %v5064, %v4440
  %5087 = vmatprep.subr.bf16.mxu0 0
  %5088 = vmatpush1.bf16.msra.mxu0 %v5063
  %5089 = vmatprep.subr.bf16.mxu0 0
  %5090 = vmatpush1.bf16.msra.mxu0 %v5085
  %5091 = vmatprep.subr.bf16.mxu0 0
  %5092 = vmatpush1.bf16.msra.mxu0 0
  %5093 = vmatprep.subr.bf16.mxu0 0
  %5094 = vmatpush1.bf16.msra.mxu0 0
  %5095 = vmatprep.subr.bf16.mxu0 0
  %5096 = vmatpush1.bf16.msra.mxu0 0
  %5097 = vmatprep.subr.bf16.mxu0 0
  %5098 = vmatpush1.bf16.msra.mxu0 0
  %5099 = vmatprep.subr.bf16.mxu0 0
  %5100 = vmatpush1.bf16.msra.mxu0 0
  %5101 = vmatprep.subr.bf16.mxu0 0
  %5102 = vmatpush1.bf16.msra.mxu0 0
  %5103 = vmatprep.subr.bf16.mxu0 0
  %5104 = vmatpush1.bf16.msra.mxu0 0
  %5105 = vmatprep.subr.bf16.mxu0 0
  %5106 = vmatpush1.bf16.msra.mxu0 0
  %5107 = vmatprep.subr.bf16.mxu0 0
  %5108 = vmatpush1.bf16.msra.mxu0 0
  %5109 = vmatprep.subr.bf16.mxu0 0
  %5110 = vmatpush1.bf16.msra.mxu0 0
  %5111 = vmatprep.subr.bf16.mxu0 0
  %5112 = vmatpush1.bf16.msra.mxu0 0
  %5113 = vmatprep.subr.bf16.mxu0 0
  %5114 = vmatpush1.bf16.msra.mxu0 0
  %5115 = vmatprep.subr.bf16.mxu0 0
  %5116 = vmatpush1.bf16.msra.mxu0 0
  %5117 = vmatprep.subr.bf16.mxu0 0
  %5118 = vmatpush1.bf16.msra.mxu0 0
  %5119 = vmatprep.mubr.bf16.mxu0 0
  %5120 = vmatmul.mubr.bf16.gmra.mrb[0].mxu0 %v5067
  %v5121 = vpop.f32.mrb[0].mxu0
  %v5122 = vadd.f32 0.0, %v5121
  %v5123 = vpop.f32.mrb[0].mxu0
  %v5124 = vpop.f32.mrb[0].mxu0
  %v5125 = vadd.f32 0.0, %v5124
  %v5126 = vpop.f32.mrb[0].mxu0
  %5127 = vmatprep.mubr.bf16.mxu0 0
  %5128 = vmatmul.mubr.bf16.gmra.mrb[0].mxu0 %v5070
  %v5129 = vpop.f32.mrb[0].mxu0
  %v5130 = vadd.f32 0.0, %v5129
  %v5131 = vpop.f32.mrb[0].mxu0
  %v5132 = vpop.f32.mrb[0].mxu0
  %v5133 = vadd.f32 0.0, %v5132
  %v5134 = vpop.f32.mrb[0].mxu0
  %5135 = vmatprep.mubr.bf16.mxu0 0
  %5136 = vmatmul.mubr.bf16.gmra.mrb[0].mxu0 %v5073
  %v5137 = vpop.f32.mrb[0].mxu0
  %v5138 = vadd.f32 0.0, %v5137
  %v5139 = vpop.f32.mrb[0].mxu0
  %v5140 = vpop.f32.mrb[0].mxu0
  %v5141 = vadd.f32 0.0, %v5140
  %v5142 = vpop.f32.mrb[0].mxu0
  %5143 = vmatprep.mubr.bf16.mxu0 0
  %5144 = vmatmul.mubr.bf16.gmra.mrb[0].mxu0 %v5076
  %v5145 = vpop.f32.mrb[0].mxu0
  %v5146 = vadd.f32 0.0, %v5145
  %v5147 = vpop.f32.mrb[0].mxu0
  %v5148 = vpop.f32.mrb[0].mxu0
  %v5149 = vadd.f32 0.0, %v5148
  %v5150 = vpop.f32.mrb[0].mxu0
  %5151 = vmatprep.mubr.bf16.mxu0 0
  %5152 = vmatmul.mubr.bf16.gmra.mrb[0].mxu0 %v5079
  %v5153 = vpop.f32.mrb[0].mxu0
  %v5154 = vadd.f32 0.0, %v5153
  %v5155 = vpop.f32.mrb[0].mxu0
  %v5156 = vpop.f32.mrb[0].mxu0
  %v5157 = vadd.f32 0.0, %v5156
  %v5158 = vpop.f32.mrb[0].mxu0
  %5159 = vmatprep.mubr.bf16.mxu0 0
  %5160 = vmatmul.mubr.bf16.gmra.mrb[0].mxu0 %v5082
  %v5161 = vpop.f32.mrb[0].mxu0
  %v5162 = vadd.f32 0.0, %v5161
  %v5163 = vpop.f32.mrb[0].mxu0
  %v5164 = vpop.f32.mrb[0].mxu0
  %v5165 = vadd.f32 0.0, %v5164
  %v5166 = vpop.f32.mrb[0].mxu0
  %5167 = vdwg.mxu0
  %v5168 = vadd.f32 %v4940, %v5122
  %v5169 = vadd.f32 %v4941, %v5125
  %v5170 = vadd.f32 %v4942, %v5130
  %v5171 = vadd.f32 %v4943, %v5133
  %v5172 = vadd.f32 %v4944, %v5138
  %v5173 = vadd.f32 %v4945, %v5141
  %v5174 = vadd.f32 %v4946, %v5146
  %v5175 = vadd.f32 %v4947, %v5149
  %v5176 = vadd.f32 %v4948, %v5154
  %v5177 = vadd.f32 %v4949, %v5157
  %v5178 = vadd.f32 %v4950, %v5162
  %v5179 = vadd.f32 %v4951, %v5165
  %v5180 = vld [vmem:[#allocation4 + $0x8] sm:$0xe]
  %s5181 = scalar_lea.vmem %s4, 80
  %v5182 = vld [vmem:[%s5181] sm:$0xf]
  %v5183 = vld [vmem:[%s5181 + $0x4] sm:$0xf]
  %v5184 = vld [vmem:[%s5181 + $0x8] sm:$0xf]
  %v5185 = vld [vmem:[%s5181 + $0xc] sm:$0x1]
  %v5187 = vunpack.c.l.b16 %v5180
  %v5188 = vpack.c.b16 %v4984, %v5187
  %v5189 = vrot.slane %v5188, 1
  %v5190 = vrot.slane %v4997, 1
  %v5191 = vsel %vm4641, %v5189, %v5190
  %v5192 = vrot.slane %v4998, 1
  %v5193 = vsel %vm4641, %v5190, %v5192
  %v5194 = vrot.slane %v4999, 1
  %v5195 = vsel %vm4641, %v5192, %v5194
  %v5196 = vrot.slane %v5000, 1
  %v5197 = vsel %vm4641, %v5194, %v5196
  %v5198 = vrot.slane %v5001, 1
  %v5199 = vsel %vm4641, %v5196, %v5198
  %v5200 = vrot.slane %v5002, 1
  %v5201 = vsel %vm4641, %v5198, %v5200
  %v5206 = vunpack.c.l.b16 %v5182
  %v5207 = vunpack.c.l.b16 %v5183
  %v5208 = vunpack.c.l.b16 %v5184
  %v5209 = vunpack.c.l.b16 %v5185
  %v5210 = vpack.c.b16 %v5207, %v5206
  %v5211 = vpack.c.b16 %v5209, %v5208
  %v5214 = vsel %vm512, %v5191, 0
  %v5217 = vsel %vm512, %v5193, 0
  %v5220 = vsel %vm512, %v5195, 0
  %v5223 = vsel %vm512, %v5197, 0
  %v5226 = vsel %vm512, %v5199, 0
  %v5229 = vsel %vm512, %v5201, 0
  %v5232 = vand.u32 %v5211, %v4440
  %5234 = vmatprep.subr.bf16.mxu0 0
  %5235 = vmatpush1.bf16.msra.mxu0 %v5210
  %5236 = vmatprep.subr.bf16.mxu0 0
  %5237 = vmatpush1.bf16.msra.mxu0 %v5232
  %5238 = vmatprep.subr.bf16.mxu0 0
  %5239 = vmatpush1.bf16.msra.mxu0 0
  %5240 = vmatprep.subr.bf16.mxu0 0
  %5241 = vmatpush1.bf16.msra.mxu0 0
  %5242 = vmatprep.subr.bf16.mxu0 0
  %5243 = vmatpush1.bf16.msra.mxu0 0
  %5244 = vmatprep.subr.bf16.mxu0 0
  %5245 = vmatpush1.bf16.msra.mxu0 0
  %5246 = vmatprep.subr.bf16.mxu0 0
  %5247 = vmatpush1.bf16.msra.mxu0 0
  %5248 = vmatprep.subr.bf16.mxu0 0
  %5249 = vmatpush1.bf16.msra.mxu0 0
  %5250 = vmatprep.subr.bf16.mxu0 0
  %5251 = vmatpush1.bf16.msra.mxu0 0
  %5252 = vmatprep.subr.bf16.mxu0 0
  %5253 = vmatpush1.bf16.msra.mxu0 0
  %5254 = vmatprep.subr.bf16.mxu0 0
  %5255 = vmatpush1.bf16.msra.mxu0 0
  %5256 = vmatprep.subr.bf16.mxu0 0
  %5257 = vmatpush1.bf16.msra.mxu0 0
  %5258 = vmatprep.subr.bf16.mxu0 0
  %5259 = vmatpush1.bf16.msra.mxu0 0
  %5260 = vmatprep.subr.bf16.mxu0 0
  %5261 = vmatpush1.bf16.msra.mxu0 0
  %5262 = vmatprep.subr.bf16.mxu0 0
  %5263 = vmatpush1.bf16.msra.mxu0 0
  %5264 = vmatprep.subr.bf16.mxu0 0
  %5265 = vmatpush1.bf16.msra.mxu0 0
  %5266 = vmatprep.mubr.bf16.mxu0 0
  %5267 = vmatmul.mubr.bf16.gmra.mrb[0].mxu0 %v5214
  %v5268 = vpop.f32.mrb[0].mxu0
  %v5269 = vadd.f32 0.0, %v5268
  %v5270 = vpop.f32.mrb[0].mxu0
  %v5271 = vpop.f32.mrb[0].mxu0
  %v5272 = vadd.f32 0.0, %v5271
  %v5273 = vpop.f32.mrb[0].mxu0
  %5274 = vmatprep.mubr.bf16.mxu0 0
  %5275 = vmatmul.mubr.bf16.gmra.mrb[0].mxu0 %v5217
  %v5276 = vpop.f32.mrb[0].mxu0
  %v5277 = vadd.f32 0.0, %v5276
  %v5278 = vpop.f32.mrb[0].mxu0
  %v5279 = vpop.f32.mrb[0].mxu0
  %v5280 = vadd.f32 0.0, %v5279
  %v5281 = vpop.f32.mrb[0].mxu0
  %5282 = vmatprep.mubr.bf16.mxu0 0
  %5283 = vmatmul.mubr.bf16.gmra.mrb[0].mxu0 %v5220
  %v5284 = vpop.f32.mrb[0].mxu0
  %v5285 = vadd.f32 0.0, %v5284
  %v5286 = vpop.f32.mrb[0].mxu0
  %v5287 = vpop.f32.mrb[0].mxu0
  %v5288 = vadd.f32 0.0, %v5287
  %v5289 = vpop.f32.mrb[0].mxu0
  %5290 = vmatprep.mubr.bf16.mxu0 0
  %5291 = vmatmul.mubr.bf16.gmra.mrb[0].mxu0 %v5223
  %v5292 = vpop.f32.mrb[0].mxu0
  %v5293 = vadd.f32 0.0, %v5292
  %v5294 = vpop.f32.mrb[0].mxu0
  %v5295 = vpop.f32.mrb[0].mxu0
  %v5296 = vadd.f32 0.0, %v5295
  %v5297 = vpop.f32.mrb[0].mxu0
  %5298 = vmatprep.mubr.bf16.mxu0 0
  %5299 = vmatmul.mubr.bf16.gmra.mrb[0].mxu0 %v5226
  %v5300 = vpop.f32.mrb[0].mxu0
  %v5301 = vadd.f32 0.0, %v5300
  %v5302 = vpop.f32.mrb[0].mxu0
  %v5303 = vpop.f32.mrb[0].mxu0
  %v5304 = vadd.f32 0.0, %v5303
  %v5305 = vpop.f32.mrb[0].mxu0
  %5306 = vmatprep.mubr.bf16.mxu0 0
  %5307 = vmatmul.mubr.bf16.gmra.mrb[0].mxu0 %v5229
  %v5308 = vpop.f32.mrb[0].mxu0
  %v5309 = vadd.f32 0.0, %v5308
  %v5310 = vpop.f32.mrb[0].mxu0
  %v5311 = vpop.f32.mrb[0].mxu0
  %v5312 = vadd.f32 0.0, %v5311
  %v5313 = vpop.f32.mrb[0].mxu0
  %5314 = vdwg.mxu0
  %v5315 = vadd.f32 %v5168, %v5269
  %v5316 = vadd.f32 %v5169, %v5272
  %v5317 = vadd.f32 %v5170, %v5277
  %v5318 = vadd.f32 %v5171, %v5280
  %v5319 = vadd.f32 %v5172, %v5285
  %v5320 = vadd.f32 %v5173, %v5288
  %v5321 = vadd.f32 %v5174, %v5293
  %v5322 = vadd.f32 %v5175, %v5296
  %v5323 = vadd.f32 %v5176, %v5301
  %v5324 = vadd.f32 %v5177, %v5304
  %v5325 = vadd.f32 %v5178, %v5309
  %v5326 = vadd.f32 %v5179, %v5312
  %v5327 = vld [vmem:[#allocation4 + $0x10] sm:$0xf]
  %v5328 = vld [vmem:[#allocation4 + $0x14] sm:$0xf]
  %v5329 = vld [vmem:[#allocation4 + $0x18] sm:$0xf]
  %v5330 = vld [vmem:[#allocation4 + $0x1c] sm:$0xf]
  %v5331 = vld [vmem:[#allocation4 + $0x20] sm:$0xf]
  %v5332 = vld [vmem:[#allocation4 + $0x24] sm:$0xf]
  %v5333 = vld [vmem:[#allocation4 + $0x28] sm:$0xf]
  %v5334 = vld [vmem:[#allocation4 + $0x2c] sm:$0xf]
  %v5335 = vld [vmem:[#allocation4 + $0x30] sm:$0xf]
  %v5336 = vld [vmem:[#allocation4 + $0x34] sm:$0xf]
  %v5337 = vld [vmem:[#allocation4 + $0x38] sm:$0xf]
  %v5338 = vld [vmem:[#allocation4 + $0x3c] sm:$0xf]
  %s5339 = scalar_lea.vmem %s4, 96
  %v5340 = vld [vmem:[%s5339] sm:$0xf]
  %v5341 = vld [vmem:[%s5339 + $0x4] sm:$0xf]
  %v5342 = vld [vmem:[%s5339 + $0x8] sm:$0xf]
  %v5343 = vld [vmem:[%s5339 + $0xc] sm:$0x1]
  %v5356 = vunpack.c.l.b16 %v5327
  %v5357 = vunpack.c.l.b16 %v5328
  %v5358 = vunpack.c.l.b16 %v5329
  %v5359 = vunpack.c.l.b16 %v5330
  %v5360 = vunpack.c.l.b16 %v5331
  %v5361 = vunpack.c.l.b16 %v5332
  %v5362 = vunpack.c.l.b16 %v5333
  %v5363 = vunpack.c.l.b16 %v5334
  %v5364 = vunpack.c.l.b16 %v5335
  %v5365 = vunpack.c.l.b16 %v5336
  %v5366 = vunpack.c.l.b16 %v5337
  %v5367 = vunpack.c.l.b16 %v5338
  %v5368 = vpack.c.b16 %v5357, %v5356
  %v5369 = vpack.c.b16 %v5359, %v5358
  %v5370 = vpack.c.b16 %v5361, %v5360
  %v5371 = vpack.c.b16 %v5363, %v5362
  %v5372 = vpack.c.b16 %v5365, %v5364
  %v5373 = vpack.c.b16 %v5367, %v5366
  %v5378 = vunpack.c.l.b16 %v5340
  %v5379 = vunpack.c.l.b16 %v5341
  %v5380 = vunpack.c.l.b16 %v5342
  %v5381 = vunpack.c.l.b16 %v5343
  %v5382 = vpack.c.b16 %v5379, %v5378
  %v5383 = vpack.c.b16 %v5381, %v5380
  %v5386 = vsel %vm512, %v5368, 0
  %v5389 = vsel %vm512, %v5369, 0
  %v5392 = vsel %vm512, %v5370, 0
  %v5395 = vsel %vm512, %v5371, 0
  %v5398 = vsel %vm512, %v5372, 0
  %v5401 = vsel %vm512, %v5373, 0
  %v5404 = vand.u32 %v5383, %v4440
  %5406 = vmatprep.subr.bf16.mxu0 0
  %5407 = vmatpush1.bf16.msra.mxu0 %v5382
  %5408 = vmatprep.subr.bf16.mxu0 0
  %5409 = vmatpush1.bf16.msra.mxu0 %v5404
  %5410 = vmatprep.subr.bf16.mxu0 0
  %5411 = vmatpush1.bf16.msra.mxu0 0
  %5412 = vmatprep.subr.bf16.mxu0 0
  %5413 = vmatpush1.bf16.msra.mxu0 0
  %5414 = vmatprep.subr.bf16.mxu0 0
  %5415 = vmatpush1.bf16.msra.mxu0 0
  %5416 = vmatprep.subr.bf16.mxu0 0
  %5417 = vmatpush1.bf16.msra.mxu0 0
  %5418 = vmatprep.subr.bf16.mxu0 0
  %5419 = vmatpush1.bf16.msra.mxu0 0
  %5420 = vmatprep.subr.bf16.mxu0 0
  %5421 = vmatpush1.bf16.msra.mxu0 0
  %5422 = vmatprep.subr.bf16.mxu0 0
  %5423 = vmatpush1.bf16.msra.mxu0 0
  %5424 = vmatprep.subr.bf16.mxu0 0
  %5425 = vmatpush1.bf16.msra.mxu0 0
  %5426 = vmatprep.subr.bf16.mxu0 0
  %5427 = vmatpush1.bf16.msra.mxu0 0
  %5428 = vmatprep.subr.bf16.mxu0 0
  %5429 = vmatpush1.bf16.msra.mxu0 0
  %5430 = vmatprep.subr.bf16.mxu0 0
  %5431 = vmatpush1.bf16.msra.mxu0 0
  %5432 = vmatprep.subr.bf16.mxu0 0
  %5433 = vmatpush1.bf16.msra.mxu0 0
  %5434 = vmatprep.subr.bf16.mxu0 0
  %5435 = vmatpush1.bf16.msra.mxu0 0
  %5436 = vmatprep.subr.bf16.mxu0 0
  %5437 = vmatpush1.bf16.msra.mxu0 0
  %5438 = vmatprep.mubr.bf16.mxu0 0
  %5439 = vmatmul.mubr.bf16.gmra.mrb[0].mxu0 %v5386
  %v5440 = vpop.f32.mrb[0].mxu0
  %v5441 = vadd.f32 0.0, %v5440
  %v5442 = vpop.f32.mrb[0].mxu0
  %v5443 = vpop.f32.mrb[0].mxu0
  %v5444 = vadd.f32 0.0, %v5443
  %v5445 = vpop.f32.mrb[0].mxu0
  %5446 = vmatprep.mubr.bf16.mxu0 0
  %5447 = vmatmul.mubr.bf16.gmra.mrb[0].mxu0 %v5389
  %v5448 = vpop.f32.mrb[0].mxu0
  %v5449 = vadd.f32 0.0, %v5448
  %v5450 = vpop.f32.mrb[0].mxu0
  %v5451 = vpop.f32.mrb[0].mxu0
  %v5452 = vadd.f32 0.0, %v5451
  %v5453 = vpop.f32.mrb[0].mxu0
  %5454 = vmatprep.mubr.bf16.mxu0 0
  %5455 = vmatmul.mubr.bf16.gmra.mrb[0].mxu0 %v5392
  %v5456 = vpop.f32.mrb[0].mxu0
  %v5457 = vadd.f32 0.0, %v5456
  %v5458 = vpop.f32.mrb[0].mxu0
  %v5459 = vpop.f32.mrb[0].mxu0
  %v5460 = vadd.f32 0.0, %v5459
  %v5461 = vpop.f32.mrb[0].mxu0
  %5462 = vmatprep.mubr.bf16.mxu0 0
  %5463 = vmatmul.mubr.bf16.gmra.mrb[0].mxu0 %v5395
  %v5464 = vpop.f32.mrb[0].mxu0
  %v5465 = vadd.f32 0.0, %v5464
  %v5466 = vpop.f32.mrb[0].mxu0
  %v5467 = vpop.f32.mrb[0].mxu0
  %v5468 = vadd.f32 0.0, %v5467
  %v5469 = vpop.f32.mrb[0].mxu0
  %5470 = vmatprep.mubr.bf16.mxu0 0
  %5471 = vmatmul.mubr.bf16.gmra.mrb[0].mxu0 %v5398
  %v5472 = vpop.f32.mrb[0].mxu0
  %v5473 = vadd.f32 0.0, %v5472
  %v5474 = vpop.f32.mrb[0].mxu0
  %v5475 = vpop.f32.mrb[0].mxu0
  %v5476 = vadd.f32 0.0, %v5475
  %v5477 = vpop.f32.mrb[0].mxu0
  %5478 = vmatprep.mubr.bf16.mxu0 0
  %5479 = vmatmul.mubr.bf16.gmra.mrb[0].mxu0 %v5401
  %v5480 = vpop.f32.mrb[0].mxu0
  %v5481 = vadd.f32 0.0, %v5480
  %v5482 = vpop.f32.mrb[0].mxu0
  %v5483 = vpop.f32.mrb[0].mxu0
  %v5484 = vadd.f32 0.0, %v5483
  %v5485 = vpop.f32.mrb[0].mxu0
  %5486 = vdwg.mxu0
  %v5487 = vadd.f32 %v5315, %v5441
  %v5488 = vadd.f32 %v5316, %v5444
  %v5489 = vadd.f32 %v5317, %v5449
  %v5490 = vadd.f32 %v5318, %v5452
  %v5491 = vadd.f32 %v5319, %v5457
  %v5492 = vadd.f32 %v5320, %v5460
  %v5493 = vadd.f32 %v5321, %v5465
  %v5494 = vadd.f32 %v5322, %v5468
  %v5495 = vadd.f32 %v5323, %v5473
  %v5496 = vadd.f32 %v5324, %v5476
  %v5497 = vadd.f32 %v5325, %v5481
  %v5498 = vadd.f32 %v5326, %v5484
  %v5499 = vld [vmem:[#allocation4 + $0x10] sm:$0xf]
  %v5500 = vld [vmem:[#allocation4 + $0x14] sm:$0xf]
  %v5501 = vld [vmem:[#allocation4 + $0x18] sm:$0xf]
  %v5502 = vld [vmem:[#allocation4 + $0x1c] sm:$0xf]
  %v5503 = vld [vmem:[#allocation4 + $0x20] sm:$0xf]
  %v5504 = vld [vmem:[#allocation4 + $0x24] sm:$0xf]
  %v5505 = vld [vmem:[#allocation4 + $0x28] sm:$0xf]
  %v5506 = vld [vmem:[#allocation4 + $0x2c] sm:$0xf]
  %v5507 = vld [vmem:[#allocation4 + $0x30] sm:$0xf]
  %v5508 = vld [vmem:[#allocation4 + $0x34] sm:$0xf]
  %v5509 = vld [vmem:[#allocation4 + $0x38] sm:$0xf]
  %v5510 = vld [vmem:[#allocation4 + $0x3c] sm:$0xf]
  %v5511 = vld [vmem:[#allocation4 + $0x40] sm:$0x1]
  %s5512 = scalar_lea.vmem %s4, 112
  %v5513 = vld [vmem:[%s5512] sm:$0xf]
  %v5514 = vld [vmem:[%s5512 + $0x4] sm:$0xf]
  %v5515 = vld [vmem:[%s5512 + $0x8] sm:$0xf]
  %v5516 = vld [vmem:[%s5512 + $0xc] sm:$0x1]
  %v5530 = vunpack.c.l.b16 %v5499
  %v5531 = vunpack.c.l.b16 %v5500
  %v5532 = vunpack.c.l.b16 %v5501
  %v5533 = vunpack.c.l.b16 %v5502
  %v5534 = vunpack.c.l.b16 %v5503
  %v5535 = vunpack.c.l.b16 %v5504
  %v5536 = vunpack.c.l.b16 %v5505
  %v5537 = vunpack.c.l.b16 %v5506
  %v5538 = vunpack.c.l.b16 %v5507
  %v5539 = vunpack.c.l.b16 %v5508
  %v5540 = vunpack.c.l.b16 %v5509
  %v5541 = vunpack.c.l.b16 %v5510
  %v5542 = vunpack.c.l.b16 %v5511
  %v5543 = vpack.c.b16 %v5531, %v5530
  %v5544 = vpack.c.b16 %v5533, %v5532
  %v5545 = vpack.c.b16 %v5535, %v5534
  %v5546 = vpack.c.b16 %v5537, %v5536
  %v5547 = vpack.c.b16 %v5539, %v5538
  %v5548 = vpack.c.b16 %v5541, %v5540
  %v5549 = vpack.c.b16 %v5542, %v5542
  %v5551 = vshrl.u32 %v5543, 16
  %v5553 = vshll.u32 %v5543, 16
  %v5555 = vrot.slane %v5553, 1
  %v5556 = vor.u32 %v5551, %v5555
  %v5558 = vshll.u32 %v5544, 16
  %v5560 = vrot.slane %v5558, 1
  %v5561 = vsel %vm4356, %v5556, %v5560
  %v5562 = vshrl.u32 %v5544, 16
  %v5564 = vor.u32 %v5562, %v5560
  %v5566 = vshll.u32 %v5545, 16
  %v5568 = vrot.slane %v5566, 1
  %v5569 = vsel %vm4356, %v5564, %v5568
  %v5570 = vshrl.u32 %v5545, 16
  %v5572 = vor.u32 %v5570, %v5568
  %v5574 = vshll.u32 %v5546, 16
  %v5576 = vrot.slane %v5574, 1
  %v5577 = vsel %vm4356, %v5572, %v5576
  %v5578 = vshrl.u32 %v5546, 16
  %v5580 = vor.u32 %v5578, %v5576
  %v5582 = vshll.u32 %v5547, 16
  %v5584 = vrot.slane %v5582, 1
  %v5585 = vsel %vm4356, %v5580, %v5584
  %v5586 = vshrl.u32 %v5547, 16
  %v5588 = vor.u32 %v5586, %v5584
  %v5590 = vshll.u32 %v5548, 16
  %v5592 = vrot.slane %v5590, 1
  %v5593 = vsel %vm4356, %v5588, %v5592
  %v5594 = vshrl.u32 %v5548, 16
  %v5596 = vor.u32 %v5594, %v5592
  %v5598 = vshll.u32 %v5549, 16
  %v5600 = vrot.slane %v5598, 1
  %v5601 = vsel %vm4356, %v5596, %v5600
  %v5606 = vunpack.c.l.b16 %v5513
  %v5607 = vunpack.c.l.b16 %v5514
  %v5608 = vunpack.c.l.b16 %v5515
  %v5609 = vunpack.c.l.b16 %v5516
  %v5610 = vpack.c.b16 %v5607, %v5606
  %v5611 = vpack.c.b16 %v5609, %v5608
  %v5614 = vsel %vm512, %v5561, 0
  %v5617 = vsel %vm512, %v5569, 0
  %v5620 = vsel %vm512, %v5577, 0
  %v5623 = vsel %vm512, %v5585, 0
  %v5626 = vsel %vm512, %v5593, 0
  %v5629 = vsel %vm512, %v5601, 0
  %v5632 = vand.u32 %v5611, %v4440
  %5634 = vmatprep.subr.bf16.mxu0 0
  %5635 = vmatpush1.bf16.msra.mxu0 %v5610
  %5636 = vmatprep.subr.bf16.mxu0 0
  %5637 = vmatpush1.bf16.msra.mxu0 %v5632
  %5638 = vmatprep.subr.bf16.mxu0 0
  %5639 = vmatpush1.bf16.msra.mxu0 0
  %5640 = vmatprep.subr.bf16.mxu0 0
  %5641 = vmatpush1.bf16.msra.mxu0 0
  %5642 = vmatprep.subr.bf16.mxu0 0
  %5643 = vmatpush1.bf16.msra.mxu0 0
  %5644 = vmatprep.subr.bf16.mxu0 0
  %5645 = vmatpush1.bf16.msra.mxu0 0
  %5646 = vmatprep.subr.bf16.mxu0 0
  %5647 = vmatpush1.bf16.msra.mxu0 0
  %5648 = vmatprep.subr.bf16.mxu0 0
  %5649 = vmatpush1.bf16.msra.mxu0 0
  %5650 = vmatprep.subr.bf16.mxu0 0
  %5651 = vmatpush1.bf16.msra.mxu0 0
  %5652 = vmatprep.subr.bf16.mxu0 0
  %5653 = vmatpush1.bf16.msra.mxu0 0
  %5654 = vmatprep.subr.bf16.mxu0 0
  %5655 = vmatpush1.bf16.msra.mxu0 0
  %5656 = vmatprep.subr.bf16.mxu0 0
  %5657 = vmatpush1.bf16.msra.mxu0 0
  %5658 = vmatprep.subr.bf16.mxu0 0
  %5659 = vmatpush1.bf16.msra.mxu0 0
  %5660 = vmatprep.subr.bf16.mxu0 0
  %5661 = vmatpush1.bf16.msra.mxu0 0
  %5662 = vmatprep.subr.bf16.mxu0 0
  %5663 = vmatpush1.bf16.msra.mxu0 0
  %5664 = vmatprep.subr.bf16.mxu0 0
  %5665 = vmatpush1.bf16.msra.mxu0 0
  %5666 = vmatprep.mubr.bf16.mxu0 0
  %5667 = vmatmul.mubr.bf16.gmra.mrb[0].mxu0 %v5614
  %v5668 = vpop.f32.mrb[0].mxu0
  %v5669 = vadd.f32 0.0, %v5668
  %v5670 = vpop.f32.mrb[0].mxu0
  %v5671 = vpop.f32.mrb[0].mxu0
  %v5672 = vadd.f32 0.0, %v5671
  %v5673 = vpop.f32.mrb[0].mxu0
  %5674 = vmatprep.mubr.bf16.mxu0 0
  %5675 = vmatmul.mubr.bf16.gmra.mrb[0].mxu0 %v5617
  %v5676 = vpop.f32.mrb[0].mxu0
  %v5677 = vadd.f32 0.0, %v5676
  %v5678 = vpop.f32.mrb[0].mxu0
  %v5679 = vpop.f32.mrb[0].mxu0
  %v5680 = vadd.f32 0.0, %v5679
  %v5681 = vpop.f32.mrb[0].mxu0
  %5682 = vmatprep.mubr.bf16.mxu0 0
  %5683 = vmatmul.mubr.bf16.gmra.mrb[0].mxu0 %v5620
  %v5684 = vpop.f32.mrb[0].mxu0
  %v5685 = vadd.f32 0.0, %v5684
  %v5686 = vpop.f32.mrb[0].mxu0
  %v5687 = vpop.f32.mrb[0].mxu0
  %v5688 = vadd.f32 0.0, %v5687
  %v5689 = vpop.f32.mrb[0].mxu0
  %5690 = vmatprep.mubr.bf16.mxu0 0
  %5691 = vmatmul.mubr.bf16.gmra.mrb[0].mxu0 %v5623
  %v5692 = vpop.f32.mrb[0].mxu0
  %v5693 = vadd.f32 0.0, %v5692
  %v5694 = vpop.f32.mrb[0].mxu0
  %v5695 = vpop.f32.mrb[0].mxu0
  %v5696 = vadd.f32 0.0, %v5695
  %v5697 = vpop.f32.mrb[0].mxu0
  %5698 = vmatprep.mubr.bf16.mxu0 0
  %5699 = vmatmul.mubr.bf16.gmra.mrb[0].mxu0 %v5626
  %v5700 = vpop.f32.mrb[0].mxu0
  %v5701 = vadd.f32 0.0, %v5700
  %v5702 = vpop.f32.mrb[0].mxu0
  %v5703 = vpop.f32.mrb[0].mxu0
  %v5704 = vadd.f32 0.0, %v5703
  %v5705 = vpop.f32.mrb[0].mxu0
  %5706 = vmatprep.mubr.bf16.mxu0 0
  %5707 = vmatmul.mubr.bf16.gmra.mrb[0].mxu0 %v5629
  %v5708 = vpop.f32.mrb[0].mxu0
  %v5709 = vadd.f32 0.0, %v5708
  %v5710 = vpop.f32.mrb[0].mxu0
  %v5711 = vpop.f32.mrb[0].mxu0
  %v5712 = vadd.f32 0.0, %v5711
  %v5713 = vpop.f32.mrb[0].mxu0
  %5714 = vdwg.mxu0
  %v5715 = vadd.f32 %v5487, %v5669
  %v5716 = vadd.f32 %v5488, %v5672
  %v5717 = vadd.f32 %v5489, %v5677
  %v5718 = vadd.f32 %v5490, %v5680
  %v5719 = vadd.f32 %v5491, %v5685
  %v5720 = vadd.f32 %v5492, %v5688
  %v5721 = vadd.f32 %v5493, %v5693
  %v5722 = vadd.f32 %v5494, %v5696
  %v5723 = vadd.f32 %v5495, %v5701
  %v5724 = vadd.f32 %v5496, %v5704
  %v5725 = vadd.f32 %v5497, %v5709
  %v5726 = vadd.f32 %v5498, %v5712
  %v5727 = vld [vmem:[#allocation4 + $0x10] sm:$0xe]
  %s5728 = scalar_lea.vmem %s4, 128
  %v5729 = vld [vmem:[%s5728] sm:$0xf]
  %v5730 = vld [vmem:[%s5728 + $0x4] sm:$0xf]
  %v5731 = vld [vmem:[%s5728 + $0x8] sm:$0xf]
  %v5732 = vld [vmem:[%s5728 + $0xc] sm:$0x1]
  %v5734 = vunpack.c.l.b16 %v5727
  %v5735 = vpack.c.b16 %v5531, %v5734
  %v5736 = vrot.slane %v5735, 1
  %v5737 = vrot.slane %v5544, 1
  %v5738 = vsel %vm4641, %v5736, %v5737
  %v5739 = vrot.slane %v5545, 1
  %v5740 = vsel %vm4641, %v5737, %v5739
  %v5741 = vrot.slane %v5546, 1
  %v5742 = vsel %vm4641, %v5739, %v5741
  %v5743 = vrot.slane %v5547, 1
  %v5744 = vsel %vm4641, %v5741, %v5743
  %v5745 = vrot.slane %v5548, 1
  %v5746 = vsel %vm4641, %v5743, %v5745
  %v5747 = vrot.slane %v5549, 1
  %v5748 = vsel %vm4641, %v5745, %v5747
  %v5753 = vunpack.c.l.b16 %v5729
  %v5754 = vunpack.c.l.b16 %v5730
  %v5755 = vunpack.c.l.b16 %v5731
  %v5756 = vunpack.c.l.b16 %v5732
  %v5757 = vpack.c.b16 %v5754, %v5753
  %v5758 = vpack.c.b16 %v5756, %v5755
  %v5761 = vsel %vm512, %v5738, 0
  %v5764 = vsel %vm512, %v5740, 0
  %v5767 = vsel %vm512, %v5742, 0
  %v5770 = vsel %vm512, %v5744, 0
  %v5773 = vsel %vm512, %v5746, 0
  %v5776 = vsel %vm512, %v5748, 0
  %v5779 = vand.u32 %v5758, %v4440
  %5781 = vmatprep.subr.bf16.mxu0 0
  %5782 = vmatpush1.bf16.msra.mxu0 %v5757
  %5783 = vmatprep.subr.bf16.mxu0 0
  %5784 = vmatpush1.bf16.msra.mxu0 %v5779
  %5785 = vmatprep.subr.bf16.mxu0 0
  %5786 = vmatpush1.bf16.msra.mxu0 0
  %5787 = vmatprep.subr.bf16.mxu0 0
  %5788 = vmatpush1.bf16.msra.mxu0 0
  %5789 = vmatprep.subr.bf16.mxu0 0
  %5790 = vmatpush1.bf16.msra.mxu0 0
  %5791 = vmatprep.subr.bf16.mxu0 0
  %5792 = vmatpush1.bf16.msra.mxu0 0
  %5793 = vmatprep.subr.bf16.mxu0 0
  %5794 = vmatpush1.bf16.msra.mxu0 0
  %5795 = vmatprep.subr.bf16.mxu0 0
  %5796 = vmatpush1.bf16.msra.mxu0 0
  %5797 = vmatprep.subr.bf16.mxu0 0
  %5798 = vmatpush1.bf16.msra.mxu0 0
  %5799 = vmatprep.subr.bf16.mxu0 0
  %5800 = vmatpush1.bf16.msra.mxu0 0
  %5801 = vmatprep.subr.bf16.mxu0 0
  %5802 = vmatpush1.bf16.msra.mxu0 0
  %5803 = vmatprep.subr.bf16.mxu0 0
  %5804 = vmatpush1.bf16.msra.mxu0 0
  %5805 = vmatprep.subr.bf16.mxu0 0
  %5806 = vmatpush1.bf16.msra.mxu0 0
  %5807 = vmatprep.subr.bf16.mxu0 0
  %5808 = vmatpush1.bf16.msra.mxu0 0
  %5809 = vmatprep.subr.bf16.mxu0 0
  %5810 = vmatpush1.bf16.msra.mxu0 0
  %5811 = vmatprep.subr.bf16.mxu0 0
  %5812 = vmatpush1.bf16.msra.mxu0 0
  %5813 = vmatprep.mubr.bf16.mxu0 0
  %5814 = vmatmul.mubr.bf16.gmra.mrb[0].mxu0 %v5761
  %v5815 = vpop.f32.mrb[0].mxu0
  %v5816 = vadd.f32 0.0, %v5815
  %v5817 = vpop.f32.mrb[0].mxu0
  %v5818 = vpop.f32.mrb[0].mxu0
  %v5819 = vadd.f32 0.0, %v5818
  %v5820 = vpop.f32.mrb[0].mxu0
  %5821 = vmatprep.mubr.bf16.mxu0 0
  %5822 = vmatmul.mubr.bf16.gmra.mrb[0].mxu0 %v5764
  %v5823 = vpop.f32.mrb[0].mxu0
  %v5824 = vadd.f32 0.0, %v5823
  %v5825 = vpop.f32.mrb[0].mxu0
  %v5826 = vpop.f32.mrb[0].mxu0
  %v5827 = vadd.f32 0.0, %v5826
  %v5828 = vpop.f32.mrb[0].mxu0
  %5829 = vmatprep.mubr.bf16.mxu0 0
  %5830 = vmatmul.mubr.bf16.gmra.mrb[0].mxu0 %v5767
  %v5831 = vpop.f32.mrb[0].mxu0
  %v5832 = vadd.f32 0.0, %v5831
  %v5833 = vpop.f32.mrb[0].mxu0
  %v5834 = vpop.f32.mrb[0].mxu0
  %v5835 = vadd.f32 0.0, %v5834
  %v5836 = vpop.f32.mrb[0].mxu0
  %5837 = vmatprep.mubr.bf16.mxu0 0
  %5838 = vmatmul.mubr.bf16.gmra.mrb[0].mxu0 %v5770
  %v5839 = vpop.f32.mrb[0].mxu0
  %v5840 = vadd.f32 0.0, %v5839
  %v5841 = vpop.f32.mrb[0].mxu0
  %v5842 = vpop.f32.mrb[0].mxu0
  %v5843 = vadd.f32 0.0, %v5842
  %v5844 = vpop.f32.mrb[0].mxu0
  %5845 = vmatprep.mubr.bf16.mxu0 0
  %5846 = vmatmul.mubr.bf16.gmra.mrb[0].mxu0 %v5773
  %v5847 = vpop.f32.mrb[0].mxu0
  %v5848 = vadd.f32 0.0, %v5847
  %v5849 = vpop.f32.mrb[0].mxu0
  %v5850 = vpop.f32.mrb[0].mxu0
  %v5851 = vadd.f32 0.0, %v5850
  %v5852 = vpop.f32.mrb[0].mxu0
  %5853 = vmatprep.mubr.bf16.mxu0 0
  %5854 = vmatmul.mubr.bf16.gmra.mrb[0].mxu0 %v5776
  %v5855 = vpop.f32.mrb[0].mxu0
  %v5856 = vadd.f32 0.0, %v5855
  %v5857 = vpop.f32.mrb[0].mxu0
  %v5858 = vpop.f32.mrb[0].mxu0
  %v5859 = vadd.f32 0.0, %v5858
  %v5860 = vpop.f32.mrb[0].mxu0
  %5861 = vdwg.mxu0
  %v5862 = vadd.f32 %v5715, %v5816
  %v5863 = vadd.f32 %v5716, %v5819
  %v5864 = vadd.f32 %v5717, %v5824
  %v5865 = vadd.f32 %v5718, %v5827
  %v5866 = vadd.f32 %v5719, %v5832
  %v5867 = vadd.f32 %v5720, %v5835
  %v5868 = vadd.f32 %v5721, %v5840
  %v5869 = vadd.f32 %v5722, %v5843
  %v5870 = vadd.f32 %v5723, %v5848
  %v5871 = vadd.f32 %v5724, %v5851
  %v5872 = vadd.f32 %v5725, %v5856
  %v5873 = vadd.f32 %v5726, %v5859
  %v5874 = vld [vmem:[#allocation4 + $0x18] sm:$0xf]
  %v5875 = vld [vmem:[#allocation4 + $0x1c] sm:$0xf]
  %v5876 = vld [vmem:[#allocation4 + $0x20] sm:$0xf]
  %v5877 = vld [vmem:[#allocation4 + $0x24] sm:$0xf]
  %v5878 = vld [vmem:[#allocation4 + $0x28] sm:$0xf]
  %v5879 = vld [vmem:[#allocation4 + $0x2c] sm:$0xf]
  %v5880 = vld [vmem:[#allocation4 + $0x30] sm:$0xf]
  %v5881 = vld [vmem:[#allocation4 + $0x34] sm:$0xf]
  %v5882 = vld [vmem:[#allocation4 + $0x38] sm:$0xf]
  %v5883 = vld [vmem:[#allocation4 + $0x3c] sm:$0xf]
  %v5884 = vld [vmem:[#allocation4 + $0x40] sm:$0xf]
  %v5885 = vld [vmem:[#allocation4 + $0x44] sm:$0xf]
  %s5886 = scalar_lea.vmem %s4, 144
  %v5887 = vld [vmem:[%s5886] sm:$0xf]
  %v5888 = vld [vmem:[%s5886 + $0x4] sm:$0xf]
  %v5889 = vld [vmem:[%s5886 + $0x8] sm:$0xf]
  %v5890 = vld [vmem:[%s5886 + $0xc] sm:$0x1]
  %v5903 = vunpack.c.l.b16 %v5874
  %v5904 = vunpack.c.l.b16 %v5875
  %v5905 = vunpack.c.l.b16 %v5876
  %v5906 = vunpack.c.l.b16 %v5877
  %v5907 = vunpack.c.l.b16 %v5878
  %v5908 = vunpack.c.l.b16 %v5879
  %v5909 = vunpack.c.l.b16 %v5880
  %v5910 = vunpack.c.l.b16 %v5881
  %v5911 = vunpack.c.l.b16 %v5882
  %v5912 = vunpack.c.l.b16 %v5883
  %v5913 = vunpack.c.l.b16 %v5884
  %v5914 = vunpack.c.l.b16 %v5885
  %v5915 = vpack.c.b16 %v5904, %v5903
  %v5916 = vpack.c.b16 %v5906, %v5905
  %v5917 = vpack.c.b16 %v5908, %v5907
  %v5918 = vpack.c.b16 %v5910, %v5909
  %v5919 = vpack.c.b16 %v5912, %v5911
  %v5920 = vpack.c.b16 %v5914, %v5913
  %v5925 = vunpack.c.l.b16 %v5887
  %v5926 = vunpack.c.l.b16 %v5888
  %v5927 = vunpack.c.l.b16 %v5889
  %v5928 = vunpack.c.l.b16 %v5890
  %v5929 = vpack.c.b16 %v5926, %v5925
  %v5930 = vpack.c.b16 %v5928, %v5927
  %v5933 = vsel %vm512, %v5915, 0
  %v5936 = vsel %vm512, %v5916, 0
  %v5939 = vsel %vm512, %v5917, 0
  %v5942 = vsel %vm512, %v5918, 0
  %v5945 = vsel %vm512, %v5919, 0
  %v5948 = vsel %vm512, %v5920, 0
  %v5951 = vand.u32 %v5930, %v4440
  %5953 = vmatprep.subr.bf16.mxu0 0
  %5954 = vmatpush1.bf16.msra.mxu0 %v5929
  %5955 = vmatprep.subr.bf16.mxu0 0
  %5956 = vmatpush1.bf16.msra.mxu0 %v5951
  %5957 = vmatprep.subr.bf16.mxu0 0
  %5958 = vmatpush1.bf16.msra.mxu0 0
  %5959 = vmatprep.subr.bf16.mxu0 0
  %5960 = vmatpush1.bf16.msra.mxu0 0
  %5961 = vmatprep.subr.bf16.mxu0 0
  %5962 = vmatpush1.bf16.msra.mxu0 0
  %5963 = vmatprep.subr.bf16.mxu0 0
  %5964 = vmatpush1.bf16.msra.mxu0 0
  %5965 = vmatprep.subr.bf16.mxu0 0
  %5966 = vmatpush1.bf16.msra.mxu0 0
  %5967 = vmatprep.subr.bf16.mxu0 0
  %5968 = vmatpush1.bf16.msra.mxu0 0
  %5969 = vmatprep.subr.bf16.mxu0 0
  %5970 = vmatpush1.bf16.msra.mxu0 0
  %5971 = vmatprep.subr.bf16.mxu0 0
  %5972 = vmatpush1.bf16.msra.mxu0 0
  %5973 = vmatprep.subr.bf16.mxu0 0
  %5974 = vmatpush1.bf16.msra.mxu0 0
  %5975 = vmatprep.subr.bf16.mxu0 0
  %5976 = vmatpush1.bf16.msra.mxu0 0
  %5977 = vmatprep.subr.bf16.mxu0 0
  %5978 = vmatpush1.bf16.msra.mxu0 0
  %5979 = vmatprep.subr.bf16.mxu0 0
  %5980 = vmatpush1.bf16.msra.mxu0 0
  %5981 = vmatprep.subr.bf16.mxu0 0
  %5982 = vmatpush1.bf16.msra.mxu0 0
  %5983 = vmatprep.subr.bf16.mxu0 0
  %5984 = vmatpush1.bf16.msra.mxu0 0
  %5985 = vmatprep.mubr.bf16.mxu0 0
  %5986 = vmatmul.mubr.bf16.gmra.mrb[0].mxu0 %v5933
  %v5987 = vpop.f32.mrb[0].mxu0
  %v5988 = vadd.f32 0.0, %v5987
  %v5989 = vpop.f32.mrb[0].mxu0
  %v5990 = vpop.f32.mrb[0].mxu0
  %v5991 = vadd.f32 0.0, %v5990
  %v5992 = vpop.f32.mrb[0].mxu0
  %5993 = vmatprep.mubr.bf16.mxu0 0
  %5994 = vmatmul.mubr.bf16.gmra.mrb[0].mxu0 %v5936
  %v5995 = vpop.f32.mrb[0].mxu0
  %v5996 = vadd.f32 0.0, %v5995
  %v5997 = vpop.f32.mrb[0].mxu0
  %v5998 = vpop.f32.mrb[0].mxu0
  %v5999 = vadd.f32 0.0, %v5998
  %v6000 = vpop.f32.mrb[0].mxu0
  %6001 = vmatprep.mubr.bf16.mxu0 0
  %6002 = vmatmul.mubr.bf16.gmra.mrb[0].mxu0 %v5939
  %v6003 = vpop.f32.mrb[0].mxu0
  %v6004 = vadd.f32 0.0, %v6003
  %v6005 = vpop.f32.mrb[0].mxu0
  %v6006 = vpop.f32.mrb[0].mxu0
  %v6007 = vadd.f32 0.0, %v6006
  %v6008 = vpop.f32.mrb[0].mxu0
  %6009 = vmatprep.mubr.bf16.mxu0 0
  %6010 = vmatmul.mubr.bf16.gmra.mrb[0].mxu0 %v5942
  %v6011 = vpop.f32.mrb[0].mxu0
  %v6012 = vadd.f32 0.0, %v6011
  %v6013 = vpop.f32.mrb[0].mxu0
  %v6014 = vpop.f32.mrb[0].mxu0
  %v6015 = vadd.f32 0.0, %v6014
  %v6016 = vpop.f32.mrb[0].mxu0
  %6017 = vmatprep.mubr.bf16.mxu0 0
  %6018 = vmatmul.mubr.bf16.gmra.mrb[0].mxu0 %v5945
  %v6019 = vpop.f32.mrb[0].mxu0
  %v6020 = vadd.f32 0.0, %v6019
  %v6021 = vpop.f32.mrb[0].mxu0
  %v6022 = vpop.f32.mrb[0].mxu0
  %v6023 = vadd.f32 0.0, %v6022
  %v6024 = vpop.f32.mrb[0].mxu0
  %6025 = vmatprep.mubr.bf16.mxu0 0
  %6026 = vmatmul.mubr.bf16.gmra.mrb[0].mxu0 %v5948
  %v6027 = vpop.f32.mrb[0].mxu0
  %v6028 = vadd.f32 0.0, %v6027
  %v6029 = vpop.f32.mrb[0].mxu0
  %v6030 = vpop.f32.mrb[0].mxu0
  %v6031 = vadd.f32 0.0, %v6030
  %v6032 = vpop.f32.mrb[0].mxu0
  %6033 = vdwg.mxu0
  %v6034 = vadd.f32 %v5862, %v5988
  %v6035 = vadd.f32 %v5863, %v5991
  %v6036 = vadd.f32 %v5864, %v5996
  %v6037 = vadd.f32 %v5865, %v5999
  %v6038 = vadd.f32 %v5866, %v6004
  %v6039 = vadd.f32 %v5867, %v6007
  %v6040 = vadd.f32 %v5868, %v6012
  %v6041 = vadd.f32 %v5869, %v6015
  %v6042 = vadd.f32 %v5870, %v6020
  %v6043 = vadd.f32 %v5871, %v6023
  %v6044 = vadd.f32 %v5872, %v6028
  %v6045 = vadd.f32 %v5873, %v6031
  %v6046 = vld [vmem:[#allocation4 + $0x18] sm:$0xf]
  %v6047 = vld [vmem:[#allocation4 + $0x1c] sm:$0xf]
  %v6048 = vld [vmem:[#allocation4 + $0x20] sm:$0xf]
  %v6049 = vld [vmem:[#allocation4 + $0x24] sm:$0xf]
  %v6050 = vld [vmem:[#allocation4 + $0x28] sm:$0xf]
  %v6051 = vld [vmem:[#allocation4 + $0x2c] sm:$0xf]
  %v6052 = vld [vmem:[#allocation4 + $0x30] sm:$0xf]
  %v6053 = vld [vmem:[#allocation4 + $0x34] sm:$0xf]
  %v6054 = vld [vmem:[#allocation4 + $0x38] sm:$0xf]
  %v6055 = vld [vmem:[#allocation4 + $0x3c] sm:$0xf]
  %v6056 = vld [vmem:[#allocation4 + $0x40] sm:$0xf]
  %v6057 = vld [vmem:[#allocation4 + $0x44] sm:$0xf]
  %v6058 = vld [vmem:[#allocation4 + $0x48] sm:$0x1]
  %s6059 = scalar_lea.vmem %s4, 160
  %v6060 = vld [vmem:[%s6059] sm:$0xf]
  %v6061 = vld [vmem:[%s6059 + $0x4] sm:$0xf]
  %v6062 = vld [vmem:[%s6059 + $0x8] sm:$0xf]
  %v6063 = vld [vmem:[%s6059 + $0xc] sm:$0x1]
  %v6077 = vunpack.c.l.b16 %v6046
  %v6078 = vunpack.c.l.b16 %v6047
  %v6079 = vunpack.c.l.b16 %v6048
  %v6080 = vunpack.c.l.b16 %v6049
  %v6081 = vunpack.c.l.b16 %v6050
  %v6082 = vunpack.c.l.b16 %v6051
  %v6083 = vunpack.c.l.b16 %v6052
  %v6084 = vunpack.c.l.b16 %v6053
  %v6085 = vunpack.c.l.b16 %v6054
  %v6086 = vunpack.c.l.b16 %v6055
  %v6087 = vunpack.c.l.b16 %v6056
  %v6088 = vunpack.c.l.b16 %v6057
  %v6089 = vunpack.c.l.b16 %v6058
  %v6090 = vpack.c.b16 %v6078, %v6077
  %v6091 = vpack.c.b16 %v6080, %v6079
  %v6092 = vpack.c.b16 %v6082, %v6081
  %v6093 = vpack.c.b16 %v6084, %v6083
  %v6094 = vpack.c.b16 %v6086, %v6085
  %v6095 = vpack.c.b16 %v6088, %v6087
  %v6096 = vpack.c.b16 %v6089, %v6089
  %v6098 = vshrl.u32 %v6090, 16
  %v6100 = vshll.u32 %v6090, 16
  %v6102 = vrot.slane %v6100, 1
  %v6103 = vor.u32 %v6098, %v6102
  %v6105 = vshll.u32 %v6091, 16
  %v6107 = vrot.slane %v6105, 1
  %v6108 = vsel %vm4356, %v6103, %v6107
  %v6109 = vshrl.u32 %v6091, 16
  %v6111 = vor.u32 %v6109, %v6107
  %v6113 = vshll.u32 %v6092, 16
  %v6115 = vrot.slane %v6113, 1
  %v6116 = vsel %vm4356, %v6111, %v6115
  %v6117 = vshrl.u32 %v6092, 16
  %v6119 = vor.u32 %v6117, %v6115
  %v6121 = vshll.u32 %v6093, 16
  %v6123 = vrot.slane %v6121, 1
  %v6124 = vsel %vm4356, %v6119, %v6123
  %v6125 = vshrl.u32 %v6093, 16
  %v6127 = vor.u32 %v6125, %v6123
  %v6129 = vshll.u32 %v6094, 16
  %v6131 = vrot.slane %v6129, 1
  %v6132 = vsel %vm4356, %v6127, %v6131
  %v6133 = vshrl.u32 %v6094, 16
  %v6135 = vor.u32 %v6133, %v6131
  %v6137 = vshll.u32 %v6095, 16
  %v6139 = vrot.slane %v6137, 1
  %v6140 = vsel %vm4356, %v6135, %v6139
  %v6141 = vshrl.u32 %v6095, 16
  %v6143 = vor.u32 %v6141, %v6139
  %v6145 = vshll.u32 %v6096, 16
  %v6147 = vrot.slane %v6145, 1
  %v6148 = vsel %vm4356, %v6143, %v6147
  %v6153 = vunpack.c.l.b16 %v6060
  %v6154 = vunpack.c.l.b16 %v6061
  %v6155 = vunpack.c.l.b16 %v6062
  %v6156 = vunpack.c.l.b16 %v6063
  %v6157 = vpack.c.b16 %v6154, %v6153
  %v6158 = vpack.c.b16 %v6156, %v6155
  %v6161 = vsel %vm512, %v6108, 0
  %v6164 = vsel %vm512, %v6116, 0
  %v6167 = vsel %vm512, %v6124, 0
  %v6170 = vsel %vm512, %v6132, 0
  %v6173 = vsel %vm512, %v6140, 0
  %v6176 = vsel %vm512, %v6148, 0
  %v6179 = vand.u32 %v6158, %v4440
  %6181 = vmatprep.subr.bf16.mxu0 0
  %6182 = vmatpush1.bf16.msra.mxu0 %v6157
  %6183 = vmatprep.subr.bf16.mxu0 0
  %6184 = vmatpush1.bf16.msra.mxu0 %v6179
  %6185 = vmatprep.subr.bf16.mxu0 0
  %6186 = vmatpush1.bf16.msra.mxu0 0
  %6187 = vmatprep.subr.bf16.mxu0 0
  %6188 = vmatpush1.bf16.msra.mxu0 0
  %6189 = vmatprep.subr.bf16.mxu0 0
  %6190 = vmatpush1.bf16.msra.mxu0 0
  %6191 = vmatprep.subr.bf16.mxu0 0
  %6192 = vmatpush1.bf16.msra.mxu0 0
  %6193 = vmatprep.subr.bf16.mxu0 0
  %6194 = vmatpush1.bf16.msra.mxu0 0
  %6195 = vmatprep.subr.bf16.mxu0 0
  %6196 = vmatpush1.bf16.msra.mxu0 0
  %6197 = vmatprep.subr.bf16.mxu0 0
  %6198 = vmatpush1.bf16.msra.mxu0 0
  %6199 = vmatprep.subr.bf16.mxu0 0
  %6200 = vmatpush1.bf16.msra.mxu0 0
  %6201 = vmatprep.subr.bf16.mxu0 0
  %6202 = vmatpush1.bf16.msra.mxu0 0
  %6203 = vmatprep.subr.bf16.mxu0 0
  %6204 = vmatpush1.bf16.msra.mxu0 0
  %6205 = vmatprep.subr.bf16.mxu0 0
  %6206 = vmatpush1.bf16.msra.mxu0 0
  %6207 = vmatprep.subr.bf16.mxu0 0
  %6208 = vmatpush1.bf16.msra.mxu0 0
  %6209 = vmatprep.subr.bf16.mxu0 0
  %6210 = vmatpush1.bf16.msra.mxu0 0
  %6211 = vmatprep.subr.bf16.mxu0 0
  %6212 = vmatpush1.bf16.msra.mxu0 0
  %6213 = vmatprep.mubr.bf16.mxu0 0
  %6214 = vmatmul.mubr.bf16.gmra.mrb[0].mxu0 %v6161
  %v6215 = vpop.f32.mrb[0].mxu0
  %v6216 = vadd.f32 0.0, %v6215
  %v6217 = vpop.f32.mrb[0].mxu0
  %v6218 = vpop.f32.mrb[0].mxu0
  %v6219 = vadd.f32 0.0, %v6218
  %v6220 = vpop.f32.mrb[0].mxu0
  %6221 = vmatprep.mubr.bf16.mxu0 0
  %6222 = vmatmul.mubr.bf16.gmra.mrb[0].mxu0 %v6164
  %v6223 = vpop.f32.mrb[0].mxu0
  %v6224 = vadd.f32 0.0, %v6223
  %v6225 = vpop.f32.mrb[0].mxu0
  %v6226 = vpop.f32.mrb[0].mxu0
  %v6227 = vadd.f32 0.0, %v6226
  %v6228 = vpop.f32.mrb[0].mxu0
  %6229 = vmatprep.mubr.bf16.mxu0 0
  %6230 = vmatmul.mubr.bf16.gmra.mrb[0].mxu0 %v6167
  %v6231 = vpop.f32.mrb[0].mxu0
  %v6232 = vadd.f32 0.0, %v6231
  %v6233 = vpop.f32.mrb[0].mxu0
  %v6234 = vpop.f32.mrb[0].mxu0
  %v6235 = vadd.f32 0.0, %v6234
  %v6236 = vpop.f32.mrb[0].mxu0
  %6237 = vmatprep.mubr.bf16.mxu0 0
  %6238 = vmatmul.mubr.bf16.gmra.mrb[0].mxu0 %v6170
  %v6239 = vpop.f32.mrb[0].mxu0
  %v6240 = vadd.f32 0.0, %v6239
  %v6241 = vpop.f32.mrb[0].mxu0
  %v6242 = vpop.f32.mrb[0].mxu0
  %v6243 = vadd.f32 0.0, %v6242
  %v6244 = vpop.f32.mrb[0].mxu0
  %6245 = vmatprep.mubr.bf16.mxu0 0
  %6246 = vmatmul.mubr.bf16.gmra.mrb[0].mxu0 %v6173
  %v6247 = vpop.f32.mrb[0].mxu0
  %v6248 = vadd.f32 0.0, %v6247
  %v6249 = vpop.f32.mrb[0].mxu0
  %v6250 = vpop.f32.mrb[0].mxu0
  %v6251 = vadd.f32 0.0, %v6250
  %v6252 = vpop.f32.mrb[0].mxu0
  %6253 = vmatprep.mubr.bf16.mxu0 0
  %6254 = vmatmul.mubr.bf16.gmra.mrb[0].mxu0 %v6176
  %v6255 = vpop.f32.mrb[0].mxu0
  %v6256 = vadd.f32 0.0, %v6255
  %v6257 = vpop.f32.mrb[0].mxu0
  %v6258 = vpop.f32.mrb[0].mxu0
  %v6259 = vadd.f32 0.0, %v6258
  %v6260 = vpop.f32.mrb[0].mxu0
  %6261 = vdwg.mxu0
  %v6262 = vadd.f32 %v6034, %v6216
  %v6263 = vadd.f32 %v6035, %v6219
  %v6264 = vadd.f32 %v6036, %v6224
  %v6265 = vadd.f32 %v6037, %v6227
  %v6266 = vadd.f32 %v6038, %v6232
  %v6267 = vadd.f32 %v6039, %v6235
  %v6268 = vadd.f32 %v6040, %v6240
  %v6269 = vadd.f32 %v6041, %v6243
  %v6270 = vadd.f32 %v6042, %v6248
  %v6271 = vadd.f32 %v6043, %v6251
  %v6272 = vadd.f32 %v6044, %v6256
  %v6273 = vadd.f32 %v6045, %v6259
  %v6274 = vld [vmem:[#allocation4 + $0x18] sm:$0xe]
  %s6275 = scalar_lea.vmem %s4, 176
  %v6276 = vld [vmem:[%s6275] sm:$0xf]
  %v6277 = vld [vmem:[%s6275 + $0x4] sm:$0xf]
  %v6278 = vld [vmem:[%s6275 + $0x8] sm:$0xf]
  %v6279 = vld [vmem:[%s6275 + $0xc] sm:$0x1]
  %v6281 = vunpack.c.l.b16 %v6274
  %v6282 = vpack.c.b16 %v6078, %v6281
  %v6283 = vrot.slane %v6282, 1
  %v6284 = vrot.slane %v6091, 1
  %v6285 = vsel %vm4641, %v6283, %v6284
  %v6286 = vrot.slane %v6092, 1
  %v6287 = vsel %vm4641, %v6284, %v6286
  %v6288 = vrot.slane %v6093, 1
  %v6289 = vsel %vm4641, %v6286, %v6288
  %v6290 = vrot.slane %v6094, 1
  %v6291 = vsel %vm4641, %v6288, %v6290
  %v6292 = vrot.slane %v6095, 1
  %v6293 = vsel %vm4641, %v6290, %v6292
  %v6294 = vrot.slane %v6096, 1
  %v6295 = vsel %vm4641, %v6292, %v6294
  %v6300 = vunpack.c.l.b16 %v6276
  %v6301 = vunpack.c.l.b16 %v6277
  %v6302 = vunpack.c.l.b16 %v6278
  %v6303 = vunpack.c.l.b16 %v6279
  %v6304 = vpack.c.b16 %v6301, %v6300
  %v6305 = vpack.c.b16 %v6303, %v6302
  %v6308 = vsel %vm512, %v6285, 0
  %v6311 = vsel %vm512, %v6287, 0
  %v6314 = vsel %vm512, %v6289, 0
  %v6317 = vsel %vm512, %v6291, 0
  %v6320 = vsel %vm512, %v6293, 0
  %v6323 = vsel %vm512, %v6295, 0
  %v6326 = vand.u32 %v6305, %v4440
  %6328 = vmatprep.subr.bf16.mxu0 0
  %6329 = vmatpush1.bf16.msra.mxu0 %v6304
  %6330 = vmatprep.subr.bf16.mxu0 0
  %6331 = vmatpush1.bf16.msra.mxu0 %v6326
  %6332 = vmatprep.subr.bf16.mxu0 0
  %6333 = vmatpush1.bf16.msra.mxu0 0
  %6334 = vmatprep.subr.bf16.mxu0 0
  %6335 = vmatpush1.bf16.msra.mxu0 0
  %6336 = vmatprep.subr.bf16.mxu0 0
  %6337 = vmatpush1.bf16.msra.mxu0 0
  %6338 = vmatprep.subr.bf16.mxu0 0
  %6339 = vmatpush1.bf16.msra.mxu0 0
  %6340 = vmatprep.subr.bf16.mxu0 0
  %6341 = vmatpush1.bf16.msra.mxu0 0
  %6342 = vmatprep.subr.bf16.mxu0 0
  %6343 = vmatpush1.bf16.msra.mxu0 0
  %6344 = vmatprep.subr.bf16.mxu0 0
  %6345 = vmatpush1.bf16.msra.mxu0 0
  %6346 = vmatprep.subr.bf16.mxu0 0
  %6347 = vmatpush1.bf16.msra.mxu0 0
  %6348 = vmatprep.subr.bf16.mxu0 0
  %6349 = vmatpush1.bf16.msra.mxu0 0
  %6350 = vmatprep.subr.bf16.mxu0 0
  %6351 = vmatpush1.bf16.msra.mxu0 0
  %6352 = vmatprep.subr.bf16.mxu0 0
  %6353 = vmatpush1.bf16.msra.mxu0 0
  %6354 = vmatprep.subr.bf16.mxu0 0
  %6355 = vmatpush1.bf16.msra.mxu0 0
  %6356 = vmatprep.subr.bf16.mxu0 0
  %6357 = vmatpush1.bf16.msra.mxu0 0
  %6358 = vmatprep.subr.bf16.mxu0 0
  %6359 = vmatpush1.bf16.msra.mxu0 0
  %6360 = vmatprep.mubr.bf16.mxu0 0
  %6361 = vmatmul.mubr.bf16.gmra.mrb[0].mxu0 %v6308
  %v6362 = vpop.f32.mrb[0].mxu0
  %v6363 = vadd.f32 0.0, %v6362
  %v6364 = vpop.f32.mrb[0].mxu0
  %v6365 = vpop.f32.mrb[0].mxu0
  %v6366 = vadd.f32 0.0, %v6365
  %v6367 = vpop.f32.mrb[0].mxu0
  %6368 = vmatprep.mubr.bf16.mxu0 0
  %6369 = vmatmul.mubr.bf16.gmra.mrb[0].mxu0 %v6311
  %v6370 = vpop.f32.mrb[0].mxu0
  %v6371 = vadd.f32 0.0, %v6370
  %v6372 = vpop.f32.mrb[0].mxu0
  %v6373 = vpop.f32.mrb[0].mxu0
  %v6374 = vadd.f32 0.0, %v6373
  %v6375 = vpop.f32.mrb[0].mxu0
  %6376 = vmatprep.mubr.bf16.mxu0 0
  %6377 = vmatmul.mubr.bf16.gmra.mrb[0].mxu0 %v6314
  %v6378 = vpop.f32.mrb[0].mxu0
  %v6379 = vadd.f32 0.0, %v6378
  %v6380 = vpop.f32.mrb[0].mxu0
  %v6381 = vpop.f32.mrb[0].mxu0
  %v6382 = vadd.f32 0.0, %v6381
  %v6383 = vpop.f32.mrb[0].mxu0
  %6384 = vmatprep.mubr.bf16.mxu0 0
  %6385 = vmatmul.mubr.bf16.gmra.mrb[0].mxu0 %v6317
  %v6386 = vpop.f32.mrb[0].mxu0
  %v6387 = vadd.f32 0.0, %v6386
  %v6388 = vpop.f32.mrb[0].mxu0
  %v6389 = vpop.f32.mrb[0].mxu0
  %v6390 = vadd.f32 0.0, %v6389
  %v6391 = vpop.f32.mrb[0].mxu0
  %6392 = vmatprep.mubr.bf16.mxu0 0
  %6393 = vmatmul.mubr.bf16.gmra.mrb[0].mxu0 %v6320
  %v6394 = vpop.f32.mrb[0].mxu0
  %v6395 = vadd.f32 0.0, %v6394
  %v6396 = vpop.f32.mrb[0].mxu0
  %v6397 = vpop.f32.mrb[0].mxu0
  %v6398 = vadd.f32 0.0, %v6397
  %v6399 = vpop.f32.mrb[0].mxu0
  %6400 = vmatprep.mubr.bf16.mxu0 0
  %6401 = vmatmul.mubr.bf16.gmra.mrb[0].mxu0 %v6323
  %v6402 = vpop.f32.mrb[0].mxu0
  %v6403 = vadd.f32 0.0, %v6402
  %v6404 = vpop.f32.mrb[0].mxu0
  %v6405 = vpop.f32.mrb[0].mxu0
  %v6406 = vadd.f32 0.0, %v6405
  %v6407 = vpop.f32.mrb[0].mxu0
  %6408 = vdwg.mxu0
  %v6409 = vadd.f32 %v6262, %v6363
  %v6410 = vadd.f32 %v6263, %v6366
  %v6411 = vadd.f32 %v6264, %v6371
  %v6412 = vadd.f32 %v6265, %v6374
  %v6413 = vadd.f32 %v6266, %v6379
  %v6414 = vadd.f32 %v6267, %v6382
  %v6415 = vadd.f32 %v6268, %v6387
  %v6416 = vadd.f32 %v6269, %v6390
  %v6417 = vadd.f32 %v6270, %v6395
  %v6418 = vadd.f32 %v6271, %v6398
  %v6419 = vadd.f32 %v6272, %v6403
  %v6420 = vadd.f32 %v6273, %v6406
  %v6422 = vlaneseq
  %v6423 = vshrl.u32 %v6422, 7
  %v6424 = vsub.s32 0, %v6423
  %v6425 = vrot.slane %v4300, %v6424
  %v6427 = vadd.f32 %v6409, %v6425
  %v6428 = vadd.f32 %v6410, %v6425
  %v6429 = vadd.f32 %v6411, %v6425
  %v6430 = vadd.f32 %v6412, %v6425
  %v6431 = vadd.f32 %v6413, %v6425
  %v6432 = vadd.f32 %v6414, %v6425
  %v6433 = vadd.f32 %v6415, %v6425
  %v6434 = vadd.f32 %v6416, %v6425
  %v6435 = vadd.f32 %v6417, %v6425
  %v6436 = vadd.f32 %v6418, %v6425
  %v6437 = vadd.f32 %v6419, %v6425
  %v6438 = vadd.f32 %v6420, %v6425
  %v6439 = vmax.f32 %v6427, 0.0
  %v6440 = vmax.f32 %v6428, 0.0
  %v6441 = vmax.f32 %v6429, 0.0
  %v6442 = vmax.f32 %v6430, 0.0
  %v6443 = vmax.f32 %v6431, 0.0
  %v6444 = vmax.f32 %v6432, 0.0
  %v6445 = vmax.f32 %v6433, 0.0
  %v6446 = vmax.f32 %v6434, 0.0
  %v6447 = vmax.f32 %v6435, 0.0
  %v6448 = vmax.f32 %v6436, 0.0
  %v6449 = vmax.f32 %v6437, 0.0
  %v6450 = vmax.f32 %v6438, 0.0
  %6451 = vst.msk [vmem:[#allocation5] sm:$0xff] %vm104, %v6439
  %6452 = vst.msk [vmem:[#allocation5 + $0x8] sm:$0xff] %vm104, %v6440
  %6453 = vst.msk [vmem:[#allocation5 + $0x10] sm:$0xff] %vm104, %v6441
  %6454 = vst.msk [vmem:[#allocation5 + $0x18] sm:$0xff] %vm104, %v6442
  %6455 = vst.msk [vmem:[#allocation5 + $0x20] sm:$0xff] %vm104, %v6443
  %6456 = vst.msk [vmem:[#allocation5 + $0x28] sm:$0xff] %vm104, %v6444
  %6457 = vst.msk [vmem:[#allocation5 + $0x30] sm:$0xff] %vm104, %v6445
  %6458 = vst.msk [vmem:[#allocation5 + $0x38] sm:$0xff] %vm104, %v6446
  %6459 = vst.msk [vmem:[#allocation5 + $0x40] sm:$0xff] %vm104, %v6447
  %6460 = vst.msk [vmem:[#allocation5 + $0x48] sm:$0xff] %vm104, %v6448
  %6461 = vst.msk [vmem:[#allocation5 + $0x50] sm:$0xff] %vm104, %v6449
  %6462 = vst.msk [vmem:[#allocation5 + $0x58] sm:$0xff] %vm104, %v6450
  %v6463 = vld [vmem:[#allocation4 + $0x48] sm:$0xf]
  %v6464 = vld [vmem:[#allocation4 + $0x4c] sm:$0xf]
  %v6465 = vld [vmem:[#allocation4 + $0x50] sm:$0xf]
  %v6466 = vld [vmem:[#allocation4 + $0x54] sm:$0xf]
  %v6467 = vld [vmem:[#allocation4 + $0x58] sm:$0xf]
  %v6468 = vld [vmem:[#allocation4 + $0x5c] sm:$0xf]
  %v6469 = vld [vmem:[#allocation4 + $0x60] sm:$0xf]
  %v6470 = vld [vmem:[#allocation4 + $0x64] sm:$0xf]
  %v6471 = vld [vmem:[#allocation4 + $0x68] sm:$0xf]
  %v6472 = vld [vmem:[#allocation4 + $0x6c] sm:$0xf]
  %v6473 = vld [vmem:[#allocation4 + $0x70] sm:$0xf]
  %v6474 = vld [vmem:[#allocation4 + $0x74] sm:$0xf]
  %v6475 = vld [vmem:[%s4] sm:$0xf]
  %v6476 = vld [vmem:[%s4 + $0x4] sm:$0xf]
  %v6477 = vld [vmem:[%s4 + $0x8] sm:$0xf]
  %v6478 = vld [vmem:[%s4 + $0xc] sm:$0x1]
  %v6479 = vld [vmem:[#allocation4 + $0x78] sm:$0x1]
  %v6480 = vld [vmem:[%s4318] sm:$0xf]
  %v6481 = vld [vmem:[%s4318 + $0x4] sm:$0xf]
  %v6482 = vld [vmem:[%s4318 + $0x8] sm:$0xf]
  %v6483 = vld [vmem:[%s4318 + $0xc] sm:$0x1]
  %v6497 = vunpack.c.l.b16 %v6463
  %v6498 = vunpack.c.l.b16 %v6464
  %v6499 = vunpack.c.l.b16 %v6465
  %v6500 = vunpack.c.l.b16 %v6466
  %v6501 = vunpack.c.l.b16 %v6467
  %v6502 = vunpack.c.l.b16 %v6468
  %v6503 = vunpack.c.l.b16 %v6469
  %v6504 = vunpack.c.l.b16 %v6470
  %v6505 = vunpack.c.l.b16 %v6471
  %v6506 = vunpack.c.l.b16 %v6472
  %v6507 = vunpack.c.l.b16 %v6473
  %v6508 = vunpack.c.l.b16 %v6474
  %v6509 = vunpack.c.l.b16 %v6479
  %v6510 = vpack.c.b16 %v6498, %v6497
  %v6511 = vpack.c.b16 %v6500, %v6499
  %v6512 = vpack.c.b16 %v6502, %v6501
  %v6513 = vpack.c.b16 %v6504, %v6503
  %v6514 = vpack.c.b16 %v6506, %v6505
  %v6515 = vpack.c.b16 %v6508, %v6507
  %v6516 = vpack.c.b16 %v6509, %v6509
  %v6518 = vshrl.u32 %v6510, 16
  %v6520 = vshll.u32 %v6510, 16
  %v6522 = vrot.slane %v6520, 1
  %v6523 = vor.u32 %v6518, %v6522
  %v6525 = vshll.u32 %v6511, 16
  %v6527 = vrot.slane %v6525, 1
  %v6528 = vsel %vm4356, %v6523, %v6527
  %v6529 = vshrl.u32 %v6511, 16
  %v6531 = vor.u32 %v6529, %v6527
  %v6533 = vshll.u32 %v6512, 16
  %v6535 = vrot.slane %v6533, 1
  %v6536 = vsel %vm4356, %v6531, %v6535
  %v6537 = vshrl.u32 %v6512, 16
  %v6539 = vor.u32 %v6537, %v6535
  %v6541 = vshll.u32 %v6513, 16
  %v6543 = vrot.slane %v6541, 1
  %v6544 = vsel %vm4356, %v6539, %v6543
  %v6545 = vshrl.u32 %v6513, 16
  %v6547 = vor.u32 %v6545, %v6543
  %v6549 = vshll.u32 %v6514, 16
  %v6551 = vrot.slane %v6549, 1
  %v6552 = vsel %vm4356, %v6547, %v6551
  %v6553 = vshrl.u32 %v6514, 16
  %v6555 = vor.u32 %v6553, %v6551
  %v6557 = vshll.u32 %v6515, 16
  %v6559 = vrot.slane %v6557, 1
  %v6560 = vsel %vm4356, %v6555, %v6559
  %v6561 = vshrl.u32 %v6515, 16
  %v6563 = vor.u32 %v6561, %v6559
  %v6565 = vshll.u32 %v6516, 16
  %v6567 = vrot.slane %v6565, 1
  %v6568 = vsel %vm4356, %v6563, %v6567
  %v6573 = vunpack.c.l.b16 %v6480
  %v6574 = vunpack.c.l.b16 %v6481
  %v6575 = vunpack.c.l.b16 %v6482
  %v6576 = vunpack.c.l.b16 %v6483
  %v6577 = vpack.c.b16 %v6574, %v6573
  %v6578 = vpack.c.b16 %v6576, %v6575
  %v6581 = vsel %vm512, %v6528, 0
  %v6584 = vsel %vm512, %v6536, 0
  %v6587 = vsel %vm512, %v6544, 0
  %v6590 = vsel %vm512, %v6552, 0
  %v6593 = vsel %vm512, %v6560, 0
  %v6596 = vsel %vm512, %v6568, 0
  %v6599 = vand.u32 %v6578, %v4440
  %6601 = vmatprep.subr.bf16.mxu0 0
  %6602 = vmatpush1.bf16.msra.mxu0 %v6577
  %6603 = vmatprep.subr.bf16.mxu0 0
  %6604 = vmatpush1.bf16.msra.mxu0 %v6599
  %6605 = vmatprep.subr.bf16.mxu0 0
  %6606 = vmatpush1.bf16.msra.mxu0 0
  %6607 = vmatprep.subr.bf16.mxu0 0
  %6608 = vmatpush1.bf16.msra.mxu0 0
  %6609 = vmatprep.subr.bf16.mxu0 0
  %6610 = vmatpush1.bf16.msra.mxu0 0
  %6611 = vmatprep.subr.bf16.mxu0 0
  %6612 = vmatpush1.bf16.msra.mxu0 0
  %6613 = vmatprep.subr.bf16.mxu0 0
  %6614 = vmatpush1.bf16.msra.mxu0 0
  %6615 = vmatprep.subr.bf16.mxu0 0
  %6616 = vmatpush1.bf16.msra.mxu0 0
  %6617 = vmatprep.subr.bf16.mxu0 0
  %6618 = vmatpush1.bf16.msra.mxu0 0
  %6619 = vmatprep.subr.bf16.mxu0 0
  %6620 = vmatpush1.bf16.msra.mxu0 0
  %6621 = vmatprep.subr.bf16.mxu0 0
  %6622 = vmatpush1.bf16.msra.mxu0 0
  %6623 = vmatprep.subr.bf16.mxu0 0
  %6624 = vmatpush1.bf16.msra.mxu0 0
  %6625 = vmatprep.subr.bf16.mxu0 0
  %6626 = vmatpush1.bf16.msra.mxu0 0
  %6627 = vmatprep.subr.bf16.mxu0 0
  %6628 = vmatpush1.bf16.msra.mxu0 0
  %6629 = vmatprep.subr.bf16.mxu0 0
  %6630 = vmatpush1.bf16.msra.mxu0 0
  %6631 = vmatprep.subr.bf16.mxu0 0
  %6632 = vmatpush1.bf16.msra.mxu0 0
  %6633 = vmatprep.mubr.bf16.mxu0 0
  %6634 = vmatmul.mubr.bf16.gmra.mrb[0].mxu0 %v6581
  %v6635 = vpop.f32.mrb[0].mxu0
  %v6636 = vadd.f32 0.0, %v6635
  %v6637 = vpop.f32.mrb[0].mxu0
  %v6638 = vpop.f32.mrb[0].mxu0
  %v6639 = vadd.f32 0.0, %v6638
  %v6640 = vpop.f32.mrb[0].mxu0
  %6641 = vmatprep.mubr.bf16.mxu0 0
  %6642 = vmatmul.mubr.bf16.gmra.mrb[0].mxu0 %v6584
  %v6643 = vpop.f32.mrb[0].mxu0
  %v6644 = vadd.f32 0.0, %v6643
  %v6645 = vpop.f32.mrb[0].mxu0
  %v6646 = vpop.f32.mrb[0].mxu0
  %v6647 = vadd.f32 0.0, %v6646
  %v6648 = vpop.f32.mrb[0].mxu0
  %6649 = vmatprep.mubr.bf16.mxu0 0
  %6650 = vmatmul.mubr.bf16.gmra.mrb[0].mxu0 %v6587
  %v6651 = vpop.f32.mrb[0].mxu0
  %v6652 = vadd.f32 0.0, %v6651
  %v6653 = vpop.f32.mrb[0].mxu0
  %v6654 = vpop.f32.mrb[0].mxu0
  %v6655 = vadd.f32 0.0, %v6654
  %v6656 = vpop.f32.mrb[0].mxu0
  %6657 = vmatprep.mubr.bf16.mxu0 0
  %6658 = vmatmul.mubr.bf16.gmra.mrb[0].mxu0 %v6590
  %v6659 = vpop.f32.mrb[0].mxu0
  %v6660 = vadd.f32 0.0, %v6659
  %v6661 = vpop.f32.mrb[0].mxu0
  %v6662 = vpop.f32.mrb[0].mxu0
  %v6663 = vadd.f32 0.0, %v6662
  %v6664 = vpop.f32.mrb[0].mxu0
  %6665 = vmatprep.mubr.bf16.mxu0 0
  %6666 = vmatmul.mubr.bf16.gmra.mrb[0].mxu0 %v6593
  %v6667 = vpop.f32.mrb[0].mxu0
  %v6668 = vadd.f32 0.0, %v6667
  %v6669 = vpop.f32.mrb[0].mxu0
  %v6670 = vpop.f32.mrb[0].mxu0
  %v6671 = vadd.f32 0.0, %v6670
  %v6672 = vpop.f32.mrb[0].mxu0
  %6673 = vmatprep.mubr.bf16.mxu0 0
  %6674 = vmatmul.mubr.bf16.gmra.mrb[0].mxu0 %v6596
  %v6675 = vpop.f32.mrb[0].mxu0
  %v6676 = vadd.f32 0.0, %v6675
  %v6677 = vpop.f32.mrb[0].mxu0
  %v6678 = vpop.f32.mrb[0].mxu0
  %v6679 = vadd.f32 0.0, %v6678
  %v6680 = vpop.f32.mrb[0].mxu0
  %6681 = vdwg.mxu0
  %v6686 = vunpack.c.l.b16 %v6475
  %v6687 = vunpack.c.l.b16 %v6476
  %v6688 = vunpack.c.l.b16 %v6477
  %v6689 = vunpack.c.l.b16 %v6478
  %v6690 = vpack.c.b16 %v6687, %v6686
  %v6691 = vpack.c.b16 %v6689, %v6688
  %v6693 = vsel %vm512, %v6510, 0
  %v6695 = vsel %vm512, %v6511, 0
  %v6697 = vsel %vm512, %v6512, 0
  %v6699 = vsel %vm512, %v6513, 0
  %v6701 = vsel %vm512, %v6514, 0
  %v6703 = vsel %vm512, %v6515, 0
  %v6706 = vand.u32 %v6691, %v4440
  %6708 = vmatprep.subr.bf16.mxu0 0
  %6709 = vmatpush1.bf16.msra.mxu0 %v6690
  %6710 = vmatprep.subr.bf16.mxu0 0
  %6711 = vmatpush1.bf16.msra.mxu0 %v6706
  %6712 = vmatprep.subr.bf16.mxu0 0
  %6713 = vmatpush1.bf16.msra.mxu0 0
  %6714 = vmatprep.subr.bf16.mxu0 0
  %6715 = vmatpush1.bf16.msra.mxu0 0
  %6716 = vmatprep.subr.bf16.mxu0 0
  %6717 = vmatpush1.bf16.msra.mxu0 0
  %6718 = vmatprep.subr.bf16.mxu0 0
  %6719 = vmatpush1.bf16.msra.mxu0 0
  %6720 = vmatprep.subr.bf16.mxu0 0
  %6721 = vmatpush1.bf16.msra.mxu0 0
  %6722 = vmatprep.subr.bf16.mxu0 0
  %6723 = vmatpush1.bf16.msra.mxu0 0
  %6724 = vmatprep.subr.bf16.mxu0 0
  %6725 = vmatpush1.bf16.msra.mxu0 0
  %6726 = vmatprep.subr.bf16.mxu0 0
  %6727 = vmatpush1.bf16.msra.mxu0 0
  %6728 = vmatprep.subr.bf16.mxu0 0
  %6729 = vmatpush1.bf16.msra.mxu0 0
  %6730 = vmatprep.subr.bf16.mxu0 0
  %6731 = vmatpush1.bf16.msra.mxu0 0
  %6732 = vmatprep.subr.bf16.mxu0 0
  %6733 = vmatpush1.bf16.msra.mxu0 0
  %6734 = vmatprep.subr.bf16.mxu0 0
  %6735 = vmatpush1.bf16.msra.mxu0 0
  %6736 = vmatprep.subr.bf16.mxu0 0
  %6737 = vmatpush1.bf16.msra.mxu0 0
  %6738 = vmatprep.subr.bf16.mxu0 0
  %6739 = vmatpush1.bf16.msra.mxu0 0
  %6740 = vmatprep.mubr.bf16.mxu0 0
  %6741 = vmatmul.mubr.bf16.gmra.mrb[0].mxu0 %v6693
  %v6742 = vpop.f32.mrb[0].mxu0
  %v6743 = vadd.f32 %v6636, %v6742
  %v6744 = vpop.f32.mrb[0].mxu0
  %v6745 = vpop.f32.mrb[0].mxu0
  %v6746 = vadd.f32 %v6639, %v6745
  %v6747 = vpop.f32.mrb[0].mxu0
  %6748 = vmatprep.mubr.bf16.mxu0 0
  %6749 = vmatmul.mubr.bf16.gmra.mrb[0].mxu0 %v6695
  %v6750 = vpop.f32.mrb[0].mxu0
  %v6751 = vadd.f32 %v6644, %v6750
  %v6752 = vpop.f32.mrb[0].mxu0
  %v6753 = vpop.f32.mrb[0].mxu0
  %v6754 = vadd.f32 %v6647, %v6753
  %v6755 = vpop.f32.mrb[0].mxu0
  %6756 = vmatprep.mubr.bf16.mxu0 0
  %6757 = vmatmul.mubr.bf16.gmra.mrb[0].mxu0 %v6697
  %v6758 = vpop.f32.mrb[0].mxu0
  %v6759 = vadd.f32 %v6652, %v6758
  %v6760 = vpop.f32.mrb[0].mxu0
  %v6761 = vpop.f32.mrb[0].mxu0
  %v6762 = vadd.f32 %v6655, %v6761
  %v6763 = vpop.f32.mrb[0].mxu0
  %6764 = vmatprep.mubr.bf16.mxu0 0
  %6765 = vmatmul.mubr.bf16.gmra.mrb[0].mxu0 %v6699
  %v6766 = vpop.f32.mrb[0].mxu0
  %v6767 = vadd.f32 %v6660, %v6766
  %v6768 = vpop.f32.mrb[0].mxu0
  %v6769 = vpop.f32.mrb[0].mxu0
  %v6770 = vadd.f32 %v6663, %v6769
  %v6771 = vpop.f32.mrb[0].mxu0
  %6772 = vmatprep.mubr.bf16.mxu0 0
  %6773 = vmatmul.mubr.bf16.gmra.mrb[0].mxu0 %v6701
  %v6774 = vpop.f32.mrb[0].mxu0
  %v6775 = vadd.f32 %v6668, %v6774
  %v6776 = vpop.f32.mrb[0].mxu0
  %v6777 = vpop.f32.mrb[0].mxu0
  %v6778 = vadd.f32 %v6671, %v6777
  %v6779 = vpop.f32.mrb[0].mxu0
  %6780 = vmatprep.mubr.bf16.mxu0 0
  %6781 = vmatmul.mubr.bf16.gmra.mrb[0].mxu0 %v6703
  %v6782 = vpop.f32.mrb[0].mxu0
  %v6783 = vadd.f32 %v6676, %v6782
  %v6784 = vpop.f32.mrb[0].mxu0
  %v6785 = vpop.f32.mrb[0].mxu0
  %v6786 = vadd.f32 %v6679, %v6785
  %v6787 = vpop.f32.mrb[0].mxu0
  %6788 = vdwg.mxu0
  %v6789 = vld [vmem:[#allocation4 + $0x48] sm:$0xe]
  %v6790 = vld [vmem:[%s4633] sm:$0xf]
  %v6791 = vld [vmem:[%s4633 + $0x4] sm:$0xf]
  %v6792 = vld [vmem:[%s4633 + $0x8] sm:$0xf]
  %v6793 = vld [vmem:[%s4633 + $0xc] sm:$0x1]
  %v6795 = vunpack.c.l.b16 %v6789
  %v6796 = vpack.c.b16 %v6498, %v6795
  %v6797 = vrot.slane %v6796, 1
  %v6798 = vrot.slane %v6511, 1
  %v6799 = vsel %vm4641, %v6797, %v6798
  %v6800 = vrot.slane %v6512, 1
  %v6801 = vsel %vm4641, %v6798, %v6800
  %v6802 = vrot.slane %v6513, 1
  %v6803 = vsel %vm4641, %v6800, %v6802
  %v6804 = vrot.slane %v6514, 1
  %v6805 = vsel %vm4641, %v6802, %v6804
  %v6806 = vrot.slane %v6515, 1
  %v6807 = vsel %vm4641, %v6804, %v6806
  %v6808 = vrot.slane %v6516, 1
  %v6809 = vsel %vm4641, %v6806, %v6808
  %v6814 = vunpack.c.l.b16 %v6790
  %v6815 = vunpack.c.l.b16 %v6791
  %v6816 = vunpack.c.l.b16 %v6792
  %v6817 = vunpack.c.l.b16 %v6793
  %v6818 = vpack.c.b16 %v6815, %v6814
  %v6819 = vpack.c.b16 %v6817, %v6816
  %v6822 = vsel %vm512, %v6799, 0
  %v6825 = vsel %vm512, %v6801, 0
  %v6828 = vsel %vm512, %v6803, 0
  %v6831 = vsel %vm512, %v6805, 0
  %v6834 = vsel %vm512, %v6807, 0
  %v6837 = vsel %vm512, %v6809, 0
  %v6840 = vand.u32 %v6819, %v4440
  %6842 = vmatprep.subr.bf16.mxu0 0
  %6843 = vmatpush1.bf16.msra.mxu0 %v6818
  %6844 = vmatprep.subr.bf16.mxu0 0
  %6845 = vmatpush1.bf16.msra.mxu0 %v6840
  %6846 = vmatprep.subr.bf16.mxu0 0
  %6847 = vmatpush1.bf16.msra.mxu0 0
  %6848 = vmatprep.subr.bf16.mxu0 0
  %6849 = vmatpush1.bf16.msra.mxu0 0
  %6850 = vmatprep.subr.bf16.mxu0 0
  %6851 = vmatpush1.bf16.msra.mxu0 0
  %6852 = vmatprep.subr.bf16.mxu0 0
  %6853 = vmatpush1.bf16.msra.mxu0 0
  %6854 = vmatprep.subr.bf16.mxu0 0
  %6855 = vmatpush1.bf16.msra.mxu0 0
  %6856 = vmatprep.subr.bf16.mxu0 0
  %6857 = vmatpush1.bf16.msra.mxu0 0
  %6858 = vmatprep.subr.bf16.mxu0 0
  %6859 = vmatpush1.bf16.msra.mxu0 0
  %6860 = vmatprep.subr.bf16.mxu0 0
  %6861 = vmatpush1.bf16.msra.mxu0 0
  %6862 = vmatprep.subr.bf16.mxu0 0
  %6863 = vmatpush1.bf16.msra.mxu0 0
  %6864 = vmatprep.subr.bf16.mxu0 0
  %6865 = vmatpush1.bf16.msra.mxu0 0
  %6866 = vmatprep.subr.bf16.mxu0 0
  %6867 = vmatpush1.bf16.msra.mxu0 0
  %6868 = vmatprep.subr.bf16.mxu0 0
  %6869 = vmatpush1.bf16.msra.mxu0 0
  %6870 = vmatprep.subr.bf16.mxu0 0
  %6871 = vmatpush1.bf16.msra.mxu0 0
  %6872 = vmatprep.subr.bf16.mxu0 0
  %6873 = vmatpush1.bf16.msra.mxu0 0
  %6874 = vmatprep.mubr.bf16.mxu0 0
  %6875 = vmatmul.mubr.bf16.gmra.mrb[0].mxu0 %v6822
  %v6876 = vpop.f32.mrb[0].mxu0
  %v6877 = vadd.f32 0.0, %v6876
  %v6878 = vpop.f32.mrb[0].mxu0
  %v6879 = vpop.f32.mrb[0].mxu0
  %v6880 = vadd.f32 0.0, %v6879
  %v6881 = vpop.f32.mrb[0].mxu0
  %6882 = vmatprep.mubr.bf16.mxu0 0
  %6883 = vmatmul.mubr.bf16.gmra.mrb[0].mxu0 %v6825
  %v6884 = vpop.f32.mrb[0].mxu0
  %v6885 = vadd.f32 0.0, %v6884
  %v6886 = vpop.f32.mrb[0].mxu0
  %v6887 = vpop.f32.mrb[0].mxu0
  %v6888 = vadd.f32 0.0, %v6887
  %v6889 = vpop.f32.mrb[0].mxu0
  %6890 = vmatprep.mubr.bf16.mxu0 0
  %6891 = vmatmul.mubr.bf16.gmra.mrb[0].mxu0 %v6828
  %v6892 = vpop.f32.mrb[0].mxu0
  %v6893 = vadd.f32 0.0, %v6892
  %v6894 = vpop.f32.mrb[0].mxu0
  %v6895 = vpop.f32.mrb[0].mxu0
  %v6896 = vadd.f32 0.0, %v6895
  %v6897 = vpop.f32.mrb[0].mxu0
  %6898 = vmatprep.mubr.bf16.mxu0 0
  %6899 = vmatmul.mubr.bf16.gmra.mrb[0].mxu0 %v6831
  %v6900 = vpop.f32.mrb[0].mxu0
  %v6901 = vadd.f32 0.0, %v6900
  %v6902 = vpop.f32.mrb[0].mxu0
  %v6903 = vpop.f32.mrb[0].mxu0
  %v6904 = vadd.f32 0.0, %v6903
  %v6905 = vpop.f32.mrb[0].mxu0
  %6906 = vmatprep.mubr.bf16.mxu0 0
  %6907 = vmatmul.mubr.bf16.gmra.mrb[0].mxu0 %v6834
  %v6908 = vpop.f32.mrb[0].mxu0
  %v6909 = vadd.f32 0.0, %v6908
  %v6910 = vpop.f32.mrb[0].mxu0
  %v6911 = vpop.f32.mrb[0].mxu0
  %v6912 = vadd.f32 0.0, %v6911
  %v6913 = vpop.f32.mrb[0].mxu0
  %6914 = vmatprep.mubr.bf16.mxu0 0
  %6915 = vmatmul.mubr.bf16.gmra.mrb[0].mxu0 %v6837
  %v6916 = vpop.f32.mrb[0].mxu0
  %v6917 = vadd.f32 0.0, %v6916
  %v6918 = vpop.f32.mrb[0].mxu0
  %v6919 = vpop.f32.mrb[0].mxu0
  %v6920 = vadd.f32 0.0, %v6919
  %v6921 = vpop.f32.mrb[0].mxu0
  %6922 = vdwg.mxu0
  %v6923 = vadd.f32 %v6743, %v6877
  %v6924 = vadd.f32 %v6746, %v6880
  %v6925 = vadd.f32 %v6751, %v6885
  %v6926 = vadd.f32 %v6754, %v6888
  %v6927 = vadd.f32 %v6759, %v6893
  %v6928 = vadd.f32 %v6762, %v6896
  %v6929 = vadd.f32 %v6767, %v6901
  %v6930 = vadd.f32 %v6770, %v6904
  %v6931 = vadd.f32 %v6775, %v6909
  %v6932 = vadd.f32 %v6778, %v6912
  %v6933 = vadd.f32 %v6783, %v6917
  %v6934 = vadd.f32 %v6786, %v6920
  %v6935 = vld [vmem:[#allocation4 + $0x50] sm:$0xf]
  %v6936 = vld [vmem:[#allocation4 + $0x54] sm:$0xf]
  %v6937 = vld [vmem:[#allocation4 + $0x58] sm:$0xf]
  %v6938 = vld [vmem:[#allocation4 + $0x5c] sm:$0xf]
  %v6939 = vld [vmem:[#allocation4 + $0x60] sm:$0xf]
  %v6940 = vld [vmem:[#allocation4 + $0x64] sm:$0xf]
  %v6941 = vld [vmem:[#allocation4 + $0x68] sm:$0xf]
  %v6942 = vld [vmem:[#allocation4 + $0x6c] sm:$0xf]
  %v6943 = vld [vmem:[#allocation4 + $0x70] sm:$0xf]
  %v6944 = vld [vmem:[#allocation4 + $0x74] sm:$0xf]
  %v6945 = vld [vmem:[#allocation4 + $0x78] sm:$0xf]
  %v6946 = vld [vmem:[#allocation4 + $0x7c] sm:$0xf]
  %v6947 = vld [vmem:[%s4792] sm:$0xf]
  %v6948 = vld [vmem:[%s4792 + $0x4] sm:$0xf]
  %v6949 = vld [vmem:[%s4792 + $0x8] sm:$0xf]
  %v6950 = vld [vmem:[%s4792 + $0xc] sm:$0x1]
  %v6963 = vunpack.c.l.b16 %v6935
  %v6964 = vunpack.c.l.b16 %v6936
  %v6965 = vunpack.c.l.b16 %v6937
  %v6966 = vunpack.c.l.b16 %v6938
  %v6967 = vunpack.c.l.b16 %v6939
  %v6968 = vunpack.c.l.b16 %v6940
  %v6969 = vunpack.c.l.b16 %v6941
  %v6970 = vunpack.c.l.b16 %v6942
  %v6971 = vunpack.c.l.b16 %v6943
  %v6972 = vunpack.c.l.b16 %v6944
  %v6973 = vunpack.c.l.b16 %v6945
  %v6974 = vunpack.c.l.b16 %v6946
  %v6975 = vpack.c.b16 %v6964, %v6963
  %v6976 = vpack.c.b16 %v6966, %v6965
  %v6977 = vpack.c.b16 %v6968, %v6967
  %v6978 = vpack.c.b16 %v6970, %v6969
  %v6979 = vpack.c.b16 %v6972, %v6971
  %v6980 = vpack.c.b16 %v6974, %v6973
  %v6985 = vunpack.c.l.b16 %v6947
  %v6986 = vunpack.c.l.b16 %v6948
  %v6987 = vunpack.c.l.b16 %v6949
  %v6988 = vunpack.c.l.b16 %v6950
  %v6989 = vpack.c.b16 %v6986, %v6985
  %v6990 = vpack.c.b16 %v6988, %v6987
  %v6993 = vsel %vm512, %v6975, 0
  %v6996 = vsel %vm512, %v6976, 0
  %v6999 = vsel %vm512, %v6977, 0
  %v7002 = vsel %vm512, %v6978, 0
  %v7005 = vsel %vm512, %v6979, 0
  %v7008 = vsel %vm512, %v6980, 0
  %v7011 = vand.u32 %v6990, %v4440
  %7013 = vmatprep.subr.bf16.mxu0 0
  %7014 = vmatpush1.bf16.msra.mxu0 %v6989
  %7015 = vmatprep.subr.bf16.mxu0 0
  %7016 = vmatpush1.bf16.msra.mxu0 %v7011
  %7017 = vmatprep.subr.bf16.mxu0 0
  %7018 = vmatpush1.bf16.msra.mxu0 0
  %7019 = vmatprep.subr.bf16.mxu0 0
  %7020 = vmatpush1.bf16.msra.mxu0 0
  %7021 = vmatprep.subr.bf16.mxu0 0
  %7022 = vmatpush1.bf16.msra.mxu0 0
  %7023 = vmatprep.subr.bf16.mxu0 0
  %7024 = vmatpush1.bf16.msra.mxu0 0
  %7025 = vmatprep.subr.bf16.mxu0 0
  %7026 = vmatpush1.bf16.msra.mxu0 0
  %7027 = vmatprep.subr.bf16.mxu0 0
  %7028 = vmatpush1.bf16.msra.mxu0 0
  %7029 = vmatprep.subr.bf16.mxu0 0
  %7030 = vmatpush1.bf16.msra.mxu0 0
  %7031 = vmatprep.subr.bf16.mxu0 0
  %7032 = vmatpush1.bf16.msra.mxu0 0
  %7033 = vmatprep.subr.bf16.mxu0 0
  %7034 = vmatpush1.bf16.msra.mxu0 0
  %7035 = vmatprep.subr.bf16.mxu0 0
  %7036 = vmatpush1.bf16.msra.mxu0 0
  %7037 = vmatprep.subr.bf16.mxu0 0
  %7038 = vmatpush1.bf16.msra.mxu0 0
  %7039 = vmatprep.subr.bf16.mxu0 0
  %7040 = vmatpush1.bf16.msra.mxu0 0
  %7041 = vmatprep.subr.bf16.mxu0 0
  %7042 = vmatpush1.bf16.msra.mxu0 0
  %7043 = vmatprep.subr.bf16.mxu0 0
  %7044 = vmatpush1.bf16.msra.mxu0 0
  %7045 = vmatprep.mubr.bf16.mxu0 0
  %7046 = vmatmul.mubr.bf16.gmra.mrb[0].mxu0 %v6993
  %v7047 = vpop.f32.mrb[0].mxu0
  %v7048 = vadd.f32 0.0, %v7047
  %v7049 = vpop.f32.mrb[0].mxu0
  %v7050 = vpop.f32.mrb[0].mxu0
  %v7051 = vadd.f32 0.0, %v7050
  %v7052 = vpop.f32.mrb[0].mxu0
  %7053 = vmatprep.mubr.bf16.mxu0 0
  %7054 = vmatmul.mubr.bf16.gmra.mrb[0].mxu0 %v6996
  %v7055 = vpop.f32.mrb[0].mxu0
  %v7056 = vadd.f32 0.0, %v7055
  %v7057 = vpop.f32.mrb[0].mxu0
  %v7058 = vpop.f32.mrb[0].mxu0
  %v7059 = vadd.f32 0.0, %v7058
  %v7060 = vpop.f32.mrb[0].mxu0
  %7061 = vmatprep.mubr.bf16.mxu0 0
  %7062 = vmatmul.mubr.bf16.gmra.mrb[0].mxu0 %v6999
  %v7063 = vpop.f32.mrb[0].mxu0
  %v7064 = vadd.f32 0.0, %v7063
  %v7065 = vpop.f32.mrb[0].mxu0
  %v7066 = vpop.f32.mrb[0].mxu0
  %v7067 = vadd.f32 0.0, %v7066
  %v7068 = vpop.f32.mrb[0].mxu0
  %7069 = vmatprep.mubr.bf16.mxu0 0
  %7070 = vmatmul.mubr.bf16.gmra.mrb[0].mxu0 %v7002
  %v7071 = vpop.f32.mrb[0].mxu0
  %v7072 = vadd.f32 0.0, %v7071
  %v7073 = vpop.f32.mrb[0].mxu0
  %v7074 = vpop.f32.mrb[0].mxu0
  %v7075 = vadd.f32 0.0, %v7074
  %v7076 = vpop.f32.mrb[0].mxu0
  %7077 = vmatprep.mubr.bf16.mxu0 0
  %7078 = vmatmul.mubr.bf16.gmra.mrb[0].mxu0 %v7005
  %v7079 = vpop.f32.mrb[0].mxu0
  %v7080 = vadd.f32 0.0, %v7079
  %v7081 = vpop.f32.mrb[0].mxu0
  %v7082 = vpop.f32.mrb[0].mxu0
  %v7083 = vadd.f32 0.0, %v7082
  %v7084 = vpop.f32.mrb[0].mxu0
  %7085 = vmatprep.mubr.bf16.mxu0 0
  %7086 = vmatmul.mubr.bf16.gmra.mrb[0].mxu0 %v7008
  %v7087 = vpop.f32.mrb[0].mxu0
  %v7088 = vadd.f32 0.0, %v7087
  %v7089 = vpop.f32.mrb[0].mxu0
  %v7090 = vpop.f32.mrb[0].mxu0
  %v7091 = vadd.f32 0.0, %v7090
  %v7092 = vpop.f32.mrb[0].mxu0
  %7093 = vdwg.mxu0
  %v7094 = vadd.f32 %v6923, %v7048
  %v7095 = vadd.f32 %v6924, %v7051
  %v7096 = vadd.f32 %v6925, %v7056
  %v7097 = vadd.f32 %v6926, %v7059
  %v7098 = vadd.f32 %v6927, %v7064
  %v7099 = vadd.f32 %v6928, %v7067
  %v7100 = vadd.f32 %v6929, %v7072
  %v7101 = vadd.f32 %v6930, %v7075
  %v7102 = vadd.f32 %v6931, %v7080
  %v7103 = vadd.f32 %v6932, %v7083
  %v7104 = vadd.f32 %v6933, %v7088
  %v7105 = vadd.f32 %v6934, %v7091
  %v7106 = vld [vmem:[#allocation4 + $0x50] sm:$0xf]
  %v7107 = vld [vmem:[#allocation4 + $0x54] sm:$0xf]
  %v7108 = vld [vmem:[#allocation4 + $0x58] sm:$0xf]
  %v7109 = vld [vmem:[#allocation4 + $0x5c] sm:$0xf]
  %v7110 = vld [vmem:[#allocation4 + $0x60] sm:$0xf]
  %v7111 = vld [vmem:[#allocation4 + $0x64] sm:$0xf]
  %v7112 = vld [vmem:[#allocation4 + $0x68] sm:$0xf]
  %v7113 = vld [vmem:[#allocation4 + $0x6c] sm:$0xf]
  %v7114 = vld [vmem:[#allocation4 + $0x70] sm:$0xf]
  %v7115 = vld [vmem:[#allocation4 + $0x74] sm:$0xf]
  %v7116 = vld [vmem:[#allocation4 + $0x78] sm:$0xf]
  %v7117 = vld [vmem:[#allocation4 + $0x7c] sm:$0xf]
  %v7118 = vld [vmem:[#allocation4 + $0x80] sm:$0x1]
  %v7119 = vld [vmem:[%s4965] sm:$0xf]
  %v7120 = vld [vmem:[%s4965 + $0x4] sm:$0xf]
  %v7121 = vld [vmem:[%s4965 + $0x8] sm:$0xf]
  %v7122 = vld [vmem:[%s4965 + $0xc] sm:$0x1]
  %v7136 = vunpack.c.l.b16 %v7106
  %v7137 = vunpack.c.l.b16 %v7107
  %v7138 = vunpack.c.l.b16 %v7108
  %v7139 = vunpack.c.l.b16 %v7109
  %v7140 = vunpack.c.l.b16 %v7110
  %v7141 = vunpack.c.l.b16 %v7111
  %v7142 = vunpack.c.l.b16 %v7112
  %v7143 = vunpack.c.l.b16 %v7113
  %v7144 = vunpack.c.l.b16 %v7114
  %v7145 = vunpack.c.l.b16 %v7115
  %v7146 = vunpack.c.l.b16 %v7116
  %v7147 = vunpack.c.l.b16 %v7117
  %v7148 = vunpack.c.l.b16 %v7118
  %v7149 = vpack.c.b16 %v7137, %v7136
  %v7150 = vpack.c.b16 %v7139, %v7138
  %v7151 = vpack.c.b16 %v7141, %v7140
  %v7152 = vpack.c.b16 %v7143, %v7142
  %v7153 = vpack.c.b16 %v7145, %v7144
  %v7154 = vpack.c.b16 %v7147, %v7146
  %v7155 = vpack.c.b16 %v7148, %v7148
  %v7157 = vshrl.u32 %v7149, 16
  %v7159 = vshll.u32 %v7149, 16
  %v7161 = vrot.slane %v7159, 1
  %v7162 = vor.u32 %v7157, %v7161
  %v7164 = vshll.u32 %v7150, 16
  %v7166 = vrot.slane %v7164, 1
  %v7167 = vsel %vm4356, %v7162, %v7166
  %v7168 = vshrl.u32 %v7150, 16
  %v7170 = vor.u32 %v7168, %v7166
  %v7172 = vshll.u32 %v7151, 16
  %v7174 = vrot.slane %v7172, 1
  %v7175 = vsel %vm4356, %v7170, %v7174
  %v7176 = vshrl.u32 %v7151, 16
  %v7178 = vor.u32 %v7176, %v7174
  %v7180 = vshll.u32 %v7152, 16
  %v7182 = vrot.slane %v7180, 1
  %v7183 = vsel %vm4356, %v7178, %v7182
  %v7184 = vshrl.u32 %v7152, 16
  %v7186 = vor.u32 %v7184, %v7182
  %v7188 = vshll.u32 %v7153, 16
  %v7190 = vrot.slane %v7188, 1
  %v7191 = vsel %vm4356, %v7186, %v7190
  %v7192 = vshrl.u32 %v7153, 16
  %v7194 = vor.u32 %v7192, %v7190
  %v7196 = vshll.u32 %v7154, 16
  %v7198 = vrot.slane %v7196, 1
  %v7199 = vsel %vm4356, %v7194, %v7198
  %v7200 = vshrl.u32 %v7154, 16
  %v7202 = vor.u32 %v7200, %v7198
  %v7204 = vshll.u32 %v7155, 16
  %v7206 = vrot.slane %v7204, 1
  %v7207 = vsel %vm4356, %v7202, %v7206
  %v7212 = vunpack.c.l.b16 %v7119
  %v7213 = vunpack.c.l.b16 %v7120
  %v7214 = vunpack.c.l.b16 %v7121
  %v7215 = vunpack.c.l.b16 %v7122
  %v7216 = vpack.c.b16 %v7213, %v7212
  %v7217 = vpack.c.b16 %v7215, %v7214
  %v7220 = vsel %vm512, %v7167, 0
  %v7223 = vsel %vm512, %v7175, 0
  %v7226 = vsel %vm512, %v7183, 0
  %v7229 = vsel %vm512, %v7191, 0
  %v7232 = vsel %vm512, %v7199, 0
  %v7235 = vsel %vm512, %v7207, 0
  %v7238 = vand.u32 %v7217, %v4440
  %7240 = vmatprep.subr.bf16.mxu0 0
  %7241 = vmatpush1.bf16.msra.mxu0 %v7216
  %7242 = vmatprep.subr.bf16.mxu0 0
  %7243 = vmatpush1.bf16.msra.mxu0 %v7238
  %7244 = vmatprep.subr.bf16.mxu0 0
  %7245 = vmatpush1.bf16.msra.mxu0 0
  %7246 = vmatprep.subr.bf16.mxu0 0
  %7247 = vmatpush1.bf16.msra.mxu0 0
  %7248 = vmatprep.subr.bf16.mxu0 0
  %7249 = vmatpush1.bf16.msra.mxu0 0
  %7250 = vmatprep.subr.bf16.mxu0 0
  %7251 = vmatpush1.bf16.msra.mxu0 0
  %7252 = vmatprep.subr.bf16.mxu0 0
  %7253 = vmatpush1.bf16.msra.mxu0 0
  %7254 = vmatprep.subr.bf16.mxu0 0
  %7255 = vmatpush1.bf16.msra.mxu0 0
  %7256 = vmatprep.subr.bf16.mxu0 0
  %7257 = vmatpush1.bf16.msra.mxu0 0
  %7258 = vmatprep.subr.bf16.mxu0 0
  %7259 = vmatpush1.bf16.msra.mxu0 0
  %7260 = vmatprep.subr.bf16.mxu0 0
  %7261 = vmatpush1.bf16.msra.mxu0 0
  %7262 = vmatprep.subr.bf16.mxu0 0
  %7263 = vmatpush1.bf16.msra.mxu0 0
  %7264 = vmatprep.subr.bf16.mxu0 0
  %7265 = vmatpush1.bf16.msra.mxu0 0
  %7266 = vmatprep.subr.bf16.mxu0 0
  %7267 = vmatpush1.bf16.msra.mxu0 0
  %7268 = vmatprep.subr.bf16.mxu0 0
  %7269 = vmatpush1.bf16.msra.mxu0 0
  %7270 = vmatprep.subr.bf16.mxu0 0
  %7271 = vmatpush1.bf16.msra.mxu0 0
  %7272 = vmatprep.mubr.bf16.mxu0 0
  %7273 = vmatmul.mubr.bf16.gmra.mrb[0].mxu0 %v7220
  %v7274 = vpop.f32.mrb[0].mxu0
  %v7275 = vadd.f32 0.0, %v7274
  %v7276 = vpop.f32.mrb[0].mxu0
  %v7277 = vpop.f32.mrb[0].mxu0
  %v7278 = vadd.f32 0.0, %v7277
  %v7279 = vpop.f32.mrb[0].mxu0
  %7280 = vmatprep.mubr.bf16.mxu0 0
  %7281 = vmatmul.mubr.bf16.gmra.mrb[0].mxu0 %v7223
  %v7282 = vpop.f32.mrb[0].mxu0
  %v7283 = vadd.f32 0.0, %v7282
  %v7284 = vpop.f32.mrb[0].mxu0
  %v7285 = vpop.f32.mrb[0].mxu0
  %v7286 = vadd.f32 0.0, %v7285
  %v7287 = vpop.f32.mrb[0].mxu0
  %7288 = vmatprep.mubr.bf16.mxu0 0
  %7289 = vmatmul.mubr.bf16.gmra.mrb[0].mxu0 %v7226
  %v7290 = vpop.f32.mrb[0].mxu0
  %v7291 = vadd.f32 0.0, %v7290
  %v7292 = vpop.f32.mrb[0].mxu0
  %v7293 = vpop.f32.mrb[0].mxu0
  %v7294 = vadd.f32 0.0, %v7293
  %v7295 = vpop.f32.mrb[0].mxu0
  %7296 = vmatprep.mubr.bf16.mxu0 0
  %7297 = vmatmul.mubr.bf16.gmra.mrb[0].mxu0 %v7229
  %v7298 = vpop.f32.mrb[0].mxu0
  %v7299 = vadd.f32 0.0, %v7298
  %v7300 = vpop.f32.mrb[0].mxu0
  %v7301 = vpop.f32.mrb[0].mxu0
  %v7302 = vadd.f32 0.0, %v7301
  %v7303 = vpop.f32.mrb[0].mxu0
  %7304 = vmatprep.mubr.bf16.mxu0 0
  %7305 = vmatmul.mubr.bf16.gmra.mrb[0].mxu0 %v7232
  %v7306 = vpop.f32.mrb[0].mxu0
  %v7307 = vadd.f32 0.0, %v7306
  %v7308 = vpop.f32.mrb[0].mxu0
  %v7309 = vpop.f32.mrb[0].mxu0
  %v7310 = vadd.f32 0.0, %v7309
  %v7311 = vpop.f32.mrb[0].mxu0
  %7312 = vmatprep.mubr.bf16.mxu0 0
  %7313 = vmatmul.mubr.bf16.gmra.mrb[0].mxu0 %v7235
  %v7314 = vpop.f32.mrb[0].mxu0
  %v7315 = vadd.f32 0.0, %v7314
  %v7316 = vpop.f32.mrb[0].mxu0
  %v7317 = vpop.f32.mrb[0].mxu0
  %v7318 = vadd.f32 0.0, %v7317
  %v7319 = vpop.f32.mrb[0].mxu0
  %7320 = vdwg.mxu0
  %v7321 = vadd.f32 %v7094, %v7275
  %v7322 = vadd.f32 %v7095, %v7278
  %v7323 = vadd.f32 %v7096, %v7283
  %v7324 = vadd.f32 %v7097, %v7286
  %v7325 = vadd.f32 %v7098, %v7291
  %v7326 = vadd.f32 %v7099, %v7294
  %v7327 = vadd.f32 %v7100, %v7299
  %v7328 = vadd.f32 %v7101, %v7302
  %v7329 = vadd.f32 %v7102, %v7307
  %v7330 = vadd.f32 %v7103, %v7310
  %v7331 = vadd.f32 %v7104, %v7315
  %v7332 = vadd.f32 %v7105, %v7318
  %v7333 = vld [vmem:[#allocation4 + $0x50] sm:$0xe]
  %v7334 = vld [vmem:[%s5181] sm:$0xf]
  %v7335 = vld [vmem:[%s5181 + $0x4] sm:$0xf]
  %v7336 = vld [vmem:[%s5181 + $0x8] sm:$0xf]
  %v7337 = vld [vmem:[%s5181 + $0xc] sm:$0x1]
  %v7339 = vunpack.c.l.b16 %v7333
  %v7340 = vpack.c.b16 %v7137, %v7339
  %v7341 = vrot.slane %v7340, 1
  %v7342 = vrot.slane %v7150, 1
  %v7343 = vsel %vm4641, %v7341, %v7342
  %v7344 = vrot.slane %v7151, 1
  %v7345 = vsel %vm4641, %v7342, %v7344
  %v7346 = vrot.slane %v7152, 1
  %v7347 = vsel %vm4641, %v7344, %v7346
  %v7348 = vrot.slane %v7153, 1
  %v7349 = vsel %vm4641, %v7346, %v7348
  %v7350 = vrot.slane %v7154, 1
  %v7351 = vsel %vm4641, %v7348, %v7350
  %v7352 = vrot.slane %v7155, 1
  %v7353 = vsel %vm4641, %v7350, %v7352
  %v7358 = vunpack.c.l.b16 %v7334
  %v7359 = vunpack.c.l.b16 %v7335
  %v7360 = vunpack.c.l.b16 %v7336
  %v7361 = vunpack.c.l.b16 %v7337
  %v7362 = vpack.c.b16 %v7359, %v7358
  %v7363 = vpack.c.b16 %v7361, %v7360
  %v7366 = vsel %vm512, %v7343, 0
  %v7369 = vsel %vm512, %v7345, 0
  %v7372 = vsel %vm512, %v7347, 0
  %v7375 = vsel %vm512, %v7349, 0
  %v7378 = vsel %vm512, %v7351, 0
  %v7381 = vsel %vm512, %v7353, 0
  %v7384 = vand.u32 %v7363, %v4440
  %7386 = vmatprep.subr.bf16.mxu0 0
  %7387 = vmatpush1.bf16.msra.mxu0 %v7362
  %7388 = vmatprep.subr.bf16.mxu0 0
  %7389 = vmatpush1.bf16.msra.mxu0 %v7384
  %7390 = vmatprep.subr.bf16.mxu0 0
  %7391 = vmatpush1.bf16.msra.mxu0 0
  %7392 = vmatprep.subr.bf16.mxu0 0
  %7393 = vmatpush1.bf16.msra.mxu0 0
  %7394 = vmatprep.subr.bf16.mxu0 0
  %7395 = vmatpush1.bf16.msra.mxu0 0
  %7396 = vmatprep.subr.bf16.mxu0 0
  %7397 = vmatpush1.bf16.msra.mxu0 0
  %7398 = vmatprep.subr.bf16.mxu0 0
  %7399 = vmatpush1.bf16.msra.mxu0 0
  %7400 = vmatprep.subr.bf16.mxu0 0
  %7401 = vmatpush1.bf16.msra.mxu0 0
  %7402 = vmatprep.subr.bf16.mxu0 0
  %7403 = vmatpush1.bf16.msra.mxu0 0
  %7404 = vmatprep.subr.bf16.mxu0 0
  %7405 = vmatpush1.bf16.msra.mxu0 0
  %7406 = vmatprep.subr.bf16.mxu0 0
  %7407 = vmatpush1.bf16.msra.mxu0 0
  %7408 = vmatprep.subr.bf16.mxu0 0
  %7409 = vmatpush1.bf16.msra.mxu0 0
  %7410 = vmatprep.subr.bf16.mxu0 0
  %7411 = vmatpush1.bf16.msra.mxu0 0
  %7412 = vmatprep.subr.bf16.mxu0 0
  %7413 = vmatpush1.bf16.msra.mxu0 0
  %7414 = vmatprep.subr.bf16.mxu0 0
  %7415 = vmatpush1.bf16.msra.mxu0 0
  %7416 = vmatprep.subr.bf16.mxu0 0
  %7417 = vmatpush1.bf16.msra.mxu0 0
  %7418 = vmatprep.mubr.bf16.mxu0 0
  %7419 = vmatmul.mubr.bf16.gmra.mrb[0].mxu0 %v7366
  %v7420 = vpop.f32.mrb[0].mxu0
  %v7421 = vadd.f32 0.0, %v7420
  %v7422 = vpop.f32.mrb[0].mxu0
  %v7423 = vpop.f32.mrb[0].mxu0
  %v7424 = vadd.f32 0.0, %v7423
  %v7425 = vpop.f32.mrb[0].mxu0
  %7426 = vmatprep.mubr.bf16.mxu0 0
  %7427 = vmatmul.mubr.bf16.gmra.mrb[0].mxu0 %v7369
  %v7428 = vpop.f32.mrb[0].mxu0
  %v7429 = vadd.f32 0.0, %v7428
  %v7430 = vpop.f32.mrb[0].mxu0
  %v7431 = vpop.f32.mrb[0].mxu0
  %v7432 = vadd.f32 0.0, %v7431
  %v7433 = vpop.f32.mrb[0].mxu0
  %7434 = vmatprep.mubr.bf16.mxu0 0
  %7435 = vmatmul.mubr.bf16.gmra.mrb[0].mxu0 %v7372
  %v7436 = vpop.f32.mrb[0].mxu0
  %v7437 = vadd.f32 0.0, %v7436
  %v7438 = vpop.f32.mrb[0].mxu0
  %v7439 = vpop.f32.mrb[0].mxu0
  %v7440 = vadd.f32 0.0, %v7439
  %v7441 = vpop.f32.mrb[0].mxu0
  %7442 = vmatprep.mubr.bf16.mxu0 0
  %7443 = vmatmul.mubr.bf16.gmra.mrb[0].mxu0 %v7375
  %v7444 = vpop.f32.mrb[0].mxu0
  %v7445 = vadd.f32 0.0, %v7444
  %v7446 = vpop.f32.mrb[0].mxu0
  %v7447 = vpop.f32.mrb[0].mxu0
  %v7448 = vadd.f32 0.0, %v7447
  %v7449 = vpop.f32.mrb[0].mxu0
  %7450 = vmatprep.mubr.bf16.mxu0 0
  %7451 = vmatmul.mubr.bf16.gmra.mrb[0].mxu0 %v7378
  %v7452 = vpop.f32.mrb[0].mxu0
  %v7453 = vadd.f32 0.0, %v7452
  %v7454 = vpop.f32.mrb[0].mxu0
  %v7455 = vpop.f32.mrb[0].mxu0
  %v7456 = vadd.f32 0.0, %v7455
  %v7457 = vpop.f32.mrb[0].mxu0
  %7458 = vmatprep.mubr.bf16.mxu0 0
  %7459 = vmatmul.mubr.bf16.gmra.mrb[0].mxu0 %v7381
  %v7460 = vpop.f32.mrb[0].mxu0
  %v7461 = vadd.f32 0.0, %v7460
  %v7462 = vpop.f32.mrb[0].mxu0
  %v7463 = vpop.f32.mrb[0].mxu0
  %v7464 = vadd.f32 0.0, %v7463
  %v7465 = vpop.f32.mrb[0].mxu0
  %7466 = vdwg.mxu0
  %v7467 = vadd.f32 %v7321, %v7421
  %v7468 = vadd.f32 %v7322, %v7424
  %v7469 = vadd.f32 %v7323, %v7429
  %v7470 = vadd.f32 %v7324, %v7432
  %v7471 = vadd.f32 %v7325, %v7437
  %v7472 = vadd.f32 %v7326, %v7440
  %v7473 = vadd.f32 %v7327, %v7445
  %v7474 = vadd.f32 %v7328, %v7448
  %v7475 = vadd.f32 %v7329, %v7453
  %v7476 = vadd.f32 %v7330, %v7456
  %v7477 = vadd.f32 %v7331, %v7461
  %v7478 = vadd.f32 %v7332, %v7464
  %v7479 = vld [vmem:[#allocation4 + $0x58] sm:$0xf]
  %v7480 = vld [vmem:[#allocation4 + $0x5c] sm:$0xf]
  %v7481 = vld [vmem:[#allocation4 + $0x60] sm:$0xf]
  %v7482 = vld [vmem:[#allocation4 + $0x64] sm:$0xf]
  %v7483 = vld [vmem:[#allocation4 + $0x68] sm:$0xf]
  %v7484 = vld [vmem:[#allocation4 + $0x6c] sm:$0xf]
  %v7485 = vld [vmem:[#allocation4 + $0x70] sm:$0xf]
  %v7486 = vld [vmem:[#allocation4 + $0x74] sm:$0xf]
  %v7487 = vld [vmem:[#allocation4 + $0x78] sm:$0xf]
  %v7488 = vld [vmem:[#allocation4 + $0x7c] sm:$0xf]
  %v7489 = vld [vmem:[#allocation4 + $0x80] sm:$0xf]
  %v7490 = vld [vmem:[#allocation4 + $0x84] sm:$0xf]
  %v7491 = vld [vmem:[%s5339] sm:$0xf]
  %v7492 = vld [vmem:[%s5339 + $0x4] sm:$0xf]
  %v7493 = vld [vmem:[%s5339 + $0x8] sm:$0xf]
  %v7494 = vld [vmem:[%s5339 + $0xc] sm:$0x1]
  %v7507 = vunpack.c.l.b16 %v7479
  %v7508 = vunpack.c.l.b16 %v7480
  %v7509 = vunpack.c.l.b16 %v7481
  %v7510 = vunpack.c.l.b16 %v7482
  %v7511 = vunpack.c.l.b16 %v7483
  %v7512 = vunpack.c.l.b16 %v7484
  %v7513 = vunpack.c.l.b16 %v7485
  %v7514 = vunpack.c.l.b16 %v7486
  %v7515 = vunpack.c.l.b16 %v7487
  %v7516 = vunpack.c.l.b16 %v7488
  %v7517 = vunpack.c.l.b16 %v7489
  %v7518 = vunpack.c.l.b16 %v7490
  %v7519 = vpack.c.b16 %v7508, %v7507
  %v7520 = vpack.c.b16 %v7510, %v7509
  %v7521 = vpack.c.b16 %v7512, %v7511
  %v7522 = vpack.c.b16 %v7514, %v7513
  %v7523 = vpack.c.b16 %v7516, %v7515
  %v7524 = vpack.c.b16 %v7518, %v7517
  %v7529 = vunpack.c.l.b16 %v7491
  %v7530 = vunpack.c.l.b16 %v7492
  %v7531 = vunpack.c.l.b16 %v7493
  %v7532 = vunpack.c.l.b16 %v7494
  %v7533 = vpack.c.b16 %v7530, %v7529
  %v7534 = vpack.c.b16 %v7532, %v7531
  %v7537 = vsel %vm512, %v7519, 0
  %v7540 = vsel %vm512, %v7520, 0
  %v7543 = vsel %vm512, %v7521, 0
  %v7546 = vsel %vm512, %v7522, 0
  %v7549 = vsel %vm512, %v7523, 0
  %v7552 = vsel %vm512, %v7524, 0
  %v7555 = vand.u32 %v7534, %v4440
  %7557 = vmatprep.subr.bf16.mxu0 0
  %7558 = vmatpush1.bf16.msra.mxu0 %v7533
  %7559 = vmatprep.subr.bf16.mxu0 0
  %7560 = vmatpush1.bf16.msra.mxu0 %v7555
  %7561 = vmatprep.subr.bf16.mxu0 0
  %7562 = vmatpush1.bf16.msra.mxu0 0
  %7563 = vmatprep.subr.bf16.mxu0 0
  %7564 = vmatpush1.bf16.msra.mxu0 0
  %7565 = vmatprep.subr.bf16.mxu0 0
  %7566 = vmatpush1.bf16.msra.mxu0 0
  %7567 = vmatprep.subr.bf16.mxu0 0
  %7568 = vmatpush1.bf16.msra.mxu0 0
  %7569 = vmatprep.subr.bf16.mxu0 0
  %7570 = vmatpush1.bf16.msra.mxu0 0
  %7571 = vmatprep.subr.bf16.mxu0 0
  %7572 = vmatpush1.bf16.msra.mxu0 0
  %7573 = vmatprep.subr.bf16.mxu0 0
  %7574 = vmatpush1.bf16.msra.mxu0 0
  %7575 = vmatprep.subr.bf16.mxu0 0
  %7576 = vmatpush1.bf16.msra.mxu0 0
  %7577 = vmatprep.subr.bf16.mxu0 0
  %7578 = vmatpush1.bf16.msra.mxu0 0
  %7579 = vmatprep.subr.bf16.mxu0 0
  %7580 = vmatpush1.bf16.msra.mxu0 0
  %7581 = vmatprep.subr.bf16.mxu0 0
  %7582 = vmatpush1.bf16.msra.mxu0 0
  %7583 = vmatprep.subr.bf16.mxu0 0
  %7584 = vmatpush1.bf16.msra.mxu0 0
  %7585 = vmatprep.subr.bf16.mxu0 0
  %7586 = vmatpush1.bf16.msra.mxu0 0
  %7587 = vmatprep.subr.bf16.mxu0 0
  %7588 = vmatpush1.bf16.msra.mxu0 0
  %7589 = vmatprep.mubr.bf16.mxu0 0
  %7590 = vmatmul.mubr.bf16.gmra.mrb[0].mxu0 %v7537
  %v7591 = vpop.f32.mrb[0].mxu0
  %v7592 = vadd.f32 0.0, %v7591
  %v7593 = vpop.f32.mrb[0].mxu0
  %v7594 = vpop.f32.mrb[0].mxu0
  %v7595 = vadd.f32 0.0, %v7594
  %v7596 = vpop.f32.mrb[0].mxu0
  %7597 = vmatprep.mubr.bf16.mxu0 0
  %7598 = vmatmul.mubr.bf16.gmra.mrb[0].mxu0 %v7540
  %v7599 = vpop.f32.mrb[0].mxu0
  %v7600 = vadd.f32 0.0, %v7599
  %v7601 = vpop.f32.mrb[0].mxu0
  %v7602 = vpop.f32.mrb[0].mxu0
  %v7603 = vadd.f32 0.0, %v7602
  %v7604 = vpop.f32.mrb[0].mxu0
  %7605 = vmatprep.mubr.bf16.mxu0 0
  %7606 = vmatmul.mubr.bf16.gmra.mrb[0].mxu0 %v7543
  %v7607 = vpop.f32.mrb[0].mxu0
  %v7608 = vadd.f32 0.0, %v7607
  %v7609 = vpop.f32.mrb[0].mxu0
  %v7610 = vpop.f32.mrb[0].mxu0
  %v7611 = vadd.f32 0.0, %v7610
  %v7612 = vpop.f32.mrb[0].mxu0
  %7613 = vmatprep.mubr.bf16.mxu0 0
  %7614 = vmatmul.mubr.bf16.gmra.mrb[0].mxu0 %v7546
  %v7615 = vpop.f32.mrb[0].mxu0
  %v7616 = vadd.f32 0.0, %v7615
  %v7617 = vpop.f32.mrb[0].mxu0
  %v7618 = vpop.f32.mrb[0].mxu0
  %v7619 = vadd.f32 0.0, %v7618
  %v7620 = vpop.f32.mrb[0].mxu0
  %7621 = vmatprep.mubr.bf16.mxu0 0
  %7622 = vmatmul.mubr.bf16.gmra.mrb[0].mxu0 %v7549
  %v7623 = vpop.f32.mrb[0].mxu0
  %v7624 = vadd.f32 0.0, %v7623
  %v7625 = vpop.f32.mrb[0].mxu0
  %v7626 = vpop.f32.mrb[0].mxu0
  %v7627 = vadd.f32 0.0, %v7626
  %v7628 = vpop.f32.mrb[0].mxu0
  %7629 = vmatprep.mubr.bf16.mxu0 0
  %7630 = vmatmul.mubr.bf16.gmra.mrb[0].mxu0 %v7552
  %v7631 = vpop.f32.mrb[0].mxu0
  %v7632 = vadd.f32 0.0, %v7631
  %v7633 = vpop.f32.mrb[0].mxu0
  %v7634 = vpop.f32.mrb[0].mxu0
  %v7635 = vadd.f32 0.0, %v7634
  %v7636 = vpop.f32.mrb[0].mxu0
  %7637 = vdwg.mxu0
  %v7638 = vadd.f32 %v7467, %v7592
  %v7639 = vadd.f32 %v7468, %v7595
  %v7640 = vadd.f32 %v7469, %v7600
  %v7641 = vadd.f32 %v7470, %v7603
  %v7642 = vadd.f32 %v7471, %v7608
  %v7643 = vadd.f32 %v7472, %v7611
  %v7644 = vadd.f32 %v7473, %v7616
  %v7645 = vadd.f32 %v7474, %v7619
  %v7646 = vadd.f32 %v7475, %v7624
  %v7647 = vadd.f32 %v7476, %v7627
  %v7648 = vadd.f32 %v7477, %v7632
  %v7649 = vadd.f32 %v7478, %v7635
  %v7650 = vld [vmem:[#allocation4 + $0x58] sm:$0xf]
  %v7651 = vld [vmem:[#allocation4 + $0x5c] sm:$0xf]
  %v7652 = vld [vmem:[#allocation4 + $0x60] sm:$0xf]
  %v7653 = vld [vmem:[#allocation4 + $0x64] sm:$0xf]
  %v7654 = vld [vmem:[#allocation4 + $0x68] sm:$0xf]
  %v7655 = vld [vmem:[#allocation4 + $0x6c] sm:$0xf]
  %v7656 = vld [vmem:[#allocation4 + $0x70] sm:$0xf]
  %v7657 = vld [vmem:[#allocation4 + $0x74] sm:$0xf]
  %v7658 = vld [vmem:[#allocation4 + $0x78] sm:$0xf]
  %v7659 = vld [vmem:[#allocation4 + $0x7c] sm:$0xf]
  %v7660 = vld [vmem:[#allocation4 + $0x80] sm:$0xf]
  %v7661 = vld [vmem:[#allocation4 + $0x84] sm:$0xf]
  %v7662 = vld [vmem:[#allocation4 + $0x88] sm:$0x1]
  %v7663 = vld [vmem:[%s5512] sm:$0xf]
  %v7664 = vld [vmem:[%s5512 + $0x4] sm:$0xf]
  %v7665 = vld [vmem:[%s5512 + $0x8] sm:$0xf]
  %v7666 = vld [vmem:[%s5512 + $0xc] sm:$0x1]
  %v7680 = vunpack.c.l.b16 %v7650
  %v7681 = vunpack.c.l.b16 %v7651
  %v7682 = vunpack.c.l.b16 %v7652
  %v7683 = vunpack.c.l.b16 %v7653
  %v7684 = vunpack.c.l.b16 %v7654
  %v7685 = vunpack.c.l.b16 %v7655
  %v7686 = vunpack.c.l.b16 %v7656
  %v7687 = vunpack.c.l.b16 %v7657
  %v7688 = vunpack.c.l.b16 %v7658
  %v7689 = vunpack.c.l.b16 %v7659
  %v7690 = vunpack.c.l.b16 %v7660
  %v7691 = vunpack.c.l.b16 %v7661
  %v7692 = vunpack.c.l.b16 %v7662
  %v7693 = vpack.c.b16 %v7681, %v7680
  %v7694 = vpack.c.b16 %v7683, %v7682
  %v7695 = vpack.c.b16 %v7685, %v7684
  %v7696 = vpack.c.b16 %v7687, %v7686
  %v7697 = vpack.c.b16 %v7689, %v7688
  %v7698 = vpack.c.b16 %v7691, %v7690
  %v7699 = vpack.c.b16 %v7692, %v7692
  %v7701 = vshrl.u32 %v7693, 16
  %v7703 = vshll.u32 %v7693, 16
  %v7705 = vrot.slane %v7703, 1
  %v7706 = vor.u32 %v7701, %v7705
  %v7708 = vshll.u32 %v7694, 16
  %v7710 = vrot.slane %v7708, 1
  %v7711 = vsel %vm4356, %v7706, %v7710
  %v7712 = vshrl.u32 %v7694, 16
  %v7714 = vor.u32 %v7712, %v7710
  %v7716 = vshll.u32 %v7695, 16
  %v7718 = vrot.slane %v7716, 1
  %v7719 = vsel %vm4356, %v7714, %v7718
  %v7720 = vshrl.u32 %v7695, 16
  %v7722 = vor.u32 %v7720, %v7718
  %v7724 = vshll.u32 %v7696, 16
  %v7726 = vrot.slane %v7724, 1
  %v7727 = vsel %vm4356, %v7722, %v7726
  %v7728 = vshrl.u32 %v7696, 16
  %v7730 = vor.u32 %v7728, %v7726
  %v7732 = vshll.u32 %v7697, 16
  %v7734 = vrot.slane %v7732, 1
  %v7735 = vsel %vm4356, %v7730, %v7734
  %v7736 = vshrl.u32 %v7697, 16
  %v7738 = vor.u32 %v7736, %v7734
  %v7740 = vshll.u32 %v7698, 16
  %v7742 = vrot.slane %v7740, 1
  %v7743 = vsel %vm4356, %v7738, %v7742
  %v7744 = vshrl.u32 %v7698, 16
  %v7746 = vor.u32 %v7744, %v7742
  %v7748 = vshll.u32 %v7699, 16
  %v7750 = vrot.slane %v7748, 1
  %v7751 = vsel %vm4356, %v7746, %v7750
  %v7756 = vunpack.c.l.b16 %v7663
  %v7757 = vunpack.c.l.b16 %v7664
  %v7758 = vunpack.c.l.b16 %v7665
  %v7759 = vunpack.c.l.b16 %v7666
  %v7760 = vpack.c.b16 %v7757, %v7756
  %v7761 = vpack.c.b16 %v7759, %v7758
  %v7764 = vsel %vm512, %v7711, 0
  %v7767 = vsel %vm512, %v7719, 0
  %v7770 = vsel %vm512, %v7727, 0
  %v7773 = vsel %vm512, %v7735, 0
  %v7776 = vsel %vm512, %v7743, 0
  %v7779 = vsel %vm512, %v7751, 0
  %v7782 = vand.u32 %v7761, %v4440
  %7784 = vmatprep.subr.bf16.mxu0 0
  %7785 = vmatpush1.bf16.msra.mxu0 %v7760
  %7786 = vmatprep.subr.bf16.mxu0 0
  %7787 = vmatpush1.bf16.msra.mxu0 %v7782
  %7788 = vmatprep.subr.bf16.mxu0 0
  %7789 = vmatpush1.bf16.msra.mxu0 0
  %7790 = vmatprep.subr.bf16.mxu0 0
  %7791 = vmatpush1.bf16.msra.mxu0 0
  %7792 = vmatprep.subr.bf16.mxu0 0
  %7793 = vmatpush1.bf16.msra.mxu0 0
  %7794 = vmatprep.subr.bf16.mxu0 0
  %7795 = vmatpush1.bf16.msra.mxu0 0
  %7796 = vmatprep.subr.bf16.mxu0 0
  %7797 = vmatpush1.bf16.msra.mxu0 0
  %7798 = vmatprep.subr.bf16.mxu0 0
  %7799 = vmatpush1.bf16.msra.mxu0 0
  %7800 = vmatprep.subr.bf16.mxu0 0
  %7801 = vmatpush1.bf16.msra.mxu0 0
  %7802 = vmatprep.subr.bf16.mxu0 0
  %7803 = vmatpush1.bf16.msra.mxu0 0
  %7804 = vmatprep.subr.bf16.mxu0 0
  %7805 = vmatpush1.bf16.msra.mxu0 0
  %7806 = vmatprep.subr.bf16.mxu0 0
  %7807 = vmatpush1.bf16.msra.mxu0 0
  %7808 = vmatprep.subr.bf16.mxu0 0
  %7809 = vmatpush1.bf16.msra.mxu0 0
  %7810 = vmatprep.subr.bf16.mxu0 0
  %7811 = vmatpush1.bf16.msra.mxu0 0
  %7812 = vmatprep.subr.bf16.mxu0 0
  %7813 = vmatpush1.bf16.msra.mxu0 0
  %7814 = vmatprep.subr.bf16.mxu0 0
  %7815 = vmatpush1.bf16.msra.mxu0 0
  %7816 = vmatprep.mubr.bf16.mxu0 0
  %7817 = vmatmul.mubr.bf16.gmra.mrb[0].mxu0 %v7764
  %v7818 = vpop.f32.mrb[0].mxu0
  %v7819 = vadd.f32 0.0, %v7818
  %v7820 = vpop.f32.mrb[0].mxu0
  %v7821 = vpop.f32.mrb[0].mxu0
  %v7822 = vadd.f32 0.0, %v7821
  %v7823 = vpop.f32.mrb[0].mxu0
  %7824 = vmatprep.mubr.bf16.mxu0 0
  %7825 = vmatmul.mubr.bf16.gmra.mrb[0].mxu0 %v7767
  %v7826 = vpop.f32.mrb[0].mxu0
  %v7827 = vadd.f32 0.0, %v7826
  %v7828 = vpop.f32.mrb[0].mxu0
  %v7829 = vpop.f32.mrb[0].mxu0
  %v7830 = vadd.f32 0.0, %v7829
  %v7831 = vpop.f32.mrb[0].mxu0
  %7832 = vmatprep.mubr.bf16.mxu0 0
  %7833 = vmatmul.mubr.bf16.gmra.mrb[0].mxu0 %v7770
  %v7834 = vpop.f32.mrb[0].mxu0
  %v7835 = vadd.f32 0.0, %v7834
  %v7836 = vpop.f32.mrb[0].mxu0
  %v7837 = vpop.f32.mrb[0].mxu0
  %v7838 = vadd.f32 0.0, %v7837
  %v7839 = vpop.f32.mrb[0].mxu0
  %7840 = vmatprep.mubr.bf16.mxu0 0
  %7841 = vmatmul.mubr.bf16.gmra.mrb[0].mxu0 %v7773
  %v7842 = vpop.f32.mrb[0].mxu0
  %v7843 = vadd.f32 0.0, %v7842
  %v7844 = vpop.f32.mrb[0].mxu0
  %v7845 = vpop.f32.mrb[0].mxu0
  %v7846 = vadd.f32 0.0, %v7845
  %v7847 = vpop.f32.mrb[0].mxu0
  %7848 = vmatprep.mubr.bf16.mxu0 0
  %7849 = vmatmul.mubr.bf16.gmra.mrb[0].mxu0 %v7776
  %v7850 = vpop.f32.mrb[0].mxu0
  %v7851 = vadd.f32 0.0, %v7850
  %v7852 = vpop.f32.mrb[0].mxu0
  %v7853 = vpop.f32.mrb[0].mxu0
  %v7854 = vadd.f32 0.0, %v7853
  %v7855 = vpop.f32.mrb[0].mxu0
  %7856 = vmatprep.mubr.bf16.mxu0 0
  %7857 = vmatmul.mubr.bf16.gmra.mrb[0].mxu0 %v7779
  %v7858 = vpop.f32.mrb[0].mxu0
  %v7859 = vadd.f32 0.0, %v7858
  %v7860 = vpop.f32.mrb[0].mxu0
  %v7861 = vpop.f32.mrb[0].mxu0
  %v7862 = vadd.f32 0.0, %v7861
  %v7863 = vpop.f32.mrb[0].mxu0
  %7864 = vdwg.mxu0
  %v7865 = vadd.f32 %v7638, %v7819
  %v7866 = vadd.f32 %v7639, %v7822
  %v7867 = vadd.f32 %v7640, %v7827
  %v7868 = vadd.f32 %v7641, %v7830
  %v7869 = vadd.f32 %v7642, %v7835
  %v7870 = vadd.f32 %v7643, %v7838
  %v7871 = vadd.f32 %v7644, %v7843
  %v7872 = vadd.f32 %v7645, %v7846
  %v7873 = vadd.f32 %v7646, %v7851
  %v7874 = vadd.f32 %v7647, %v7854
  %v7875 = vadd.f32 %v7648, %v7859
  %v7876 = vadd.f32 %v7649, %v7862
  %v7877 = vld [vmem:[#allocation4 + $0x58] sm:$0xe]
  %v7878 = vld [vmem:[%s5728] sm:$0xf]
  %v7879 = vld [vmem:[%s5728 + $0x4] sm:$0xf]
  %v7880 = vld [vmem:[%s5728 + $0x8] sm:$0xf]
  %v7881 = vld [vmem:[%s5728 + $0xc] sm:$0x1]
  %v7883 = vunpack.c.l.b16 %v7877
  %v7884 = vpack.c.b16 %v7681, %v7883
  %v7885 = vrot.slane %v7884, 1
  %v7886 = vrot.slane %v7694, 1
  %v7887 = vsel %vm4641, %v7885, %v7886
  %v7888 = vrot.slane %v7695, 1
  %v7889 = vsel %vm4641, %v7886, %v7888
  %v7890 = vrot.slane %v7696, 1
  %v7891 = vsel %vm4641, %v7888, %v7890
  %v7892 = vrot.slane %v7697, 1
  %v7893 = vsel %vm4641, %v7890, %v7892
  %v7894 = vrot.slane %v7698, 1
  %v7895 = vsel %vm4641, %v7892, %v7894
  %v7896 = vrot.slane %v7699, 1
  %v7897 = vsel %vm4641, %v7894, %v7896
  %v7902 = vunpack.c.l.b16 %v7878
  %v7903 = vunpack.c.l.b16 %v7879
  %v7904 = vunpack.c.l.b16 %v7880
  %v7905 = vunpack.c.l.b16 %v7881
  %v7906 = vpack.c.b16 %v7903, %v7902
  %v7907 = vpack.c.b16 %v7905, %v7904
  %v7910 = vsel %vm512, %v7887, 0
  %v7913 = vsel %vm512, %v7889, 0
  %v7916 = vsel %vm512, %v7891, 0
  %v7919 = vsel %vm512, %v7893, 0
  %v7922 = vsel %vm512, %v7895, 0
  %v7925 = vsel %vm512, %v7897, 0
  %v7928 = vand.u32 %v7907, %v4440
  %7930 = vmatprep.subr.bf16.mxu0 0
  %7931 = vmatpush1.bf16.msra.mxu0 %v7906
  %7932 = vmatprep.subr.bf16.mxu0 0
  %7933 = vmatpush1.bf16.msra.mxu0 %v7928
  %7934 = vmatprep.subr.bf16.mxu0 0
  %7935 = vmatpush1.bf16.msra.mxu0 0
  %7936 = vmatprep.subr.bf16.mxu0 0
  %7937 = vmatpush1.bf16.msra.mxu0 0
  %7938 = vmatprep.subr.bf16.mxu0 0
  %7939 = vmatpush1.bf16.msra.mxu0 0
  %7940 = vmatprep.subr.bf16.mxu0 0
  %7941 = vmatpush1.bf16.msra.mxu0 0
  %7942 = vmatprep.subr.bf16.mxu0 0
  %7943 = vmatpush1.bf16.msra.mxu0 0
  %7944 = vmatprep.subr.bf16.mxu0 0
  %7945 = vmatpush1.bf16.msra.mxu0 0
  %7946 = vmatprep.subr.bf16.mxu0 0
  %7947 = vmatpush1.bf16.msra.mxu0 0
  %7948 = vmatprep.subr.bf16.mxu0 0
  %7949 = vmatpush1.bf16.msra.mxu0 0
  %7950 = vmatprep.subr.bf16.mxu0 0
  %7951 = vmatpush1.bf16.msra.mxu0 0
  %7952 = vmatprep.subr.bf16.mxu0 0
  %7953 = vmatpush1.bf16.msra.mxu0 0
  %7954 = vmatprep.subr.bf16.mxu0 0
  %7955 = vmatpush1.bf16.msra.mxu0 0
  %7956 = vmatprep.subr.bf16.mxu0 0
  %7957 = vmatpush1.bf16.msra.mxu0 0
  %7958 = vmatprep.subr.bf16.mxu0 0
  %7959 = vmatpush1.bf16.msra.mxu0 0
  %7960 = vmatprep.subr.bf16.mxu0 0
  %7961 = vmatpush1.bf16.msra.mxu0 0
  %7962 = vmatprep.mubr.bf16.mxu0 0
  %7963 = vmatmul.mubr.bf16.gmra.mrb[0].mxu0 %v7910
  %v7964 = vpop.f32.mrb[0].mxu0
  %v7965 = vadd.f32 0.0, %v7964
  %v7966 = vpop.f32.mrb[0].mxu0
  %v7967 = vpop.f32.mrb[0].mxu0
  %v7968 = vadd.f32 0.0, %v7967
  %v7969 = vpop.f32.mrb[0].mxu0
  %7970 = vmatprep.mubr.bf16.mxu0 0
  %7971 = vmatmul.mubr.bf16.gmra.mrb[0].mxu0 %v7913
  %v7972 = vpop.f32.mrb[0].mxu0
  %v7973 = vadd.f32 0.0, %v7972
  %v7974 = vpop.f32.mrb[0].mxu0
  %v7975 = vpop.f32.mrb[0].mxu0
  %v7976 = vadd.f32 0.0, %v7975
  %v7977 = vpop.f32.mrb[0].mxu0
  %7978 = vmatprep.mubr.bf16.mxu0 0
  %7979 = vmatmul.mubr.bf16.gmra.mrb[0].mxu0 %v7916
  %v7980 = vpop.f32.mrb[0].mxu0
  %v7981 = vadd.f32 0.0, %v7980
  %v7982 = vpop.f32.mrb[0].mxu0
  %v7983 = vpop.f32.mrb[0].mxu0
  %v7984 = vadd.f32 0.0, %v7983
  %v7985 = vpop.f32.mrb[0].mxu0
  %7986 = vmatprep.mubr.bf16.mxu0 0
  %7987 = vmatmul.mubr.bf16.gmra.mrb[0].mxu0 %v7919
  %v7988 = vpop.f32.mrb[0].mxu0
  %v7989 = vadd.f32 0.0, %v7988
  %v7990 = vpop.f32.mrb[0].mxu0
  %v7991 = vpop.f32.mrb[0].mxu0
  %v7992 = vadd.f32 0.0, %v7991
  %v7993 = vpop.f32.mrb[0].mxu0
  %7994 = vmatprep.mubr.bf16.mxu0 0
  %7995 = vmatmul.mubr.bf16.gmra.mrb[0].mxu0 %v7922
  %v7996 = vpop.f32.mrb[0].mxu0
  %v7997 = vadd.f32 0.0, %v7996
  %v7998 = vpop.f32.mrb[0].mxu0
  %v7999 = vpop.f32.mrb[0].mxu0
  %v8000 = vadd.f32 0.0, %v7999
  %v8001 = vpop.f32.mrb[0].mxu0
  %8002 = vmatprep.mubr.bf16.mxu0 0
  %8003 = vmatmul.mubr.bf16.gmra.mrb[0].mxu0 %v7925
  %v8004 = vpop.f32.mrb[0].mxu0
  %v8005 = vadd.f32 0.0, %v8004
  %v8006 = vpop.f32.mrb[0].mxu0
  %v8007 = vpop.f32.mrb[0].mxu0
  %v8008 = vadd.f32 0.0, %v8007
  %v8009 = vpop.f32.mrb[0].mxu0
  %8010 = vdwg.mxu0
  %v8011 = vadd.f32 %v7865, %v7965
  %v8012 = vadd.f32 %v7866, %v7968
  %v8013 = vadd.f32 %v7867, %v7973
  %v8014 = vadd.f32 %v7868, %v7976
  %v8015 = vadd.f32 %v7869, %v7981
  %v8016 = vadd.f32 %v7870, %v7984
  %v8017 = vadd.f32 %v7871, %v7989
  %v8018 = vadd.f32 %v7872, %v7992
  %v8019 = vadd.f32 %v7873, %v7997
  %v8020 = vadd.f32 %v7874, %v8000
  %v8021 = vadd.f32 %v7875, %v8005
  %v8022 = vadd.f32 %v7876, %v8008
  %v8023 = vld [vmem:[#allocation4 + $0x60] sm:$0xf]
  %v8024 = vld [vmem:[#allocation4 + $0x64] sm:$0xf]
  %v8025 = vld [vmem:[#allocation4 + $0x68] sm:$0xf]
  %v8026 = vld [vmem:[#allocation4 + $0x6c] sm:$0xf]
  %v8027 = vld [vmem:[#allocation4 + $0x70] sm:$0xf]
  %v8028 = vld [vmem:[#allocation4 + $0x74] sm:$0xf]
  %v8029 = vld [vmem:[#allocation4 + $0x78] sm:$0xf]
  %v8030 = vld [vmem:[#allocation4 + $0x7c] sm:$0xf]
  %v8031 = vld [vmem:[#allocation4 + $0x80] sm:$0xf]
  %v8032 = vld [vmem:[#allocation4 + $0x84] sm:$0xf]
  %v8033 = vld [vmem:[#allocation4 + $0x88] sm:$0xf]
  %v8034 = vld [vmem:[#allocation4 + $0x8c] sm:$0xf]
  %v8035 = vld [vmem:[%s5886] sm:$0xf]
  %v8036 = vld [vmem:[%s5886 + $0x4] sm:$0xf]
  %v8037 = vld [vmem:[%s5886 + $0x8] sm:$0xf]
  %v8038 = vld [vmem:[%s5886 + $0xc] sm:$0x1]
  %v8051 = vunpack.c.l.b16 %v8023
  %v8052 = vunpack.c.l.b16 %v8024
  %v8053 = vunpack.c.l.b16 %v8025
  %v8054 = vunpack.c.l.b16 %v8026
  %v8055 = vunpack.c.l.b16 %v8027
  %v8056 = vunpack.c.l.b16 %v8028
  %v8057 = vunpack.c.l.b16 %v8029
  %v8058 = vunpack.c.l.b16 %v8030
  %v8059 = vunpack.c.l.b16 %v8031
  %v8060 = vunpack.c.l.b16 %v8032
  %v8061 = vunpack.c.l.b16 %v8033
  %v8062 = vunpack.c.l.b16 %v8034
  %v8063 = vpack.c.b16 %v8052, %v8051
  %v8064 = vpack.c.b16 %v8054, %v8053
  %v8065 = vpack.c.b16 %v8056, %v8055
  %v8066 = vpack.c.b16 %v8058, %v8057
  %v8067 = vpack.c.b16 %v8060, %v8059
  %v8068 = vpack.c.b16 %v8062, %v8061
  %v8073 = vunpack.c.l.b16 %v8035
  %v8074 = vunpack.c.l.b16 %v8036
  %v8075 = vunpack.c.l.b16 %v8037
  %v8076 = vunpack.c.l.b16 %v8038
  %v8077 = vpack.c.b16 %v8074, %v8073
  %v8078 = vpack.c.b16 %v8076, %v8075
  %v8081 = vsel %vm512, %v8063, 0
  %v8084 = vsel %vm512, %v8064, 0
  %v8087 = vsel %vm512, %v8065, 0
  %v8090 = vsel %vm512, %v8066, 0
  %v8093 = vsel %vm512, %v8067, 0
  %v8096 = vsel %vm512, %v8068, 0
  %v8099 = vand.u32 %v8078, %v4440
  %8101 = vmatprep.subr.bf16.mxu0 0
  %8102 = vmatpush1.bf16.msra.mxu0 %v8077
  %8103 = vmatprep.subr.bf16.mxu0 0
  %8104 = vmatpush1.bf16.msra.mxu0 %v8099
  %8105 = vmatprep.subr.bf16.mxu0 0
  %8106 = vmatpush1.bf16.msra.mxu0 0
  %8107 = vmatprep.subr.bf16.mxu0 0
  %8108 = vmatpush1.bf16.msra.mxu0 0
  %8109 = vmatprep.subr.bf16.mxu0 0
  %8110 = vmatpush1.bf16.msra.mxu0 0
  %8111 = vmatprep.subr.bf16.mxu0 0
  %8112 = vmatpush1.bf16.msra.mxu0 0
  %8113 = vmatprep.subr.bf16.mxu0 0
  %8114 = vmatpush1.bf16.msra.mxu0 0
  %8115 = vmatprep.subr.bf16.mxu0 0
  %8116 = vmatpush1.bf16.msra.mxu0 0
  %8117 = vmatprep.subr.bf16.mxu0 0
  %8118 = vmatpush1.bf16.msra.mxu0 0
  %8119 = vmatprep.subr.bf16.mxu0 0
  %8120 = vmatpush1.bf16.msra.mxu0 0
  %8121 = vmatprep.subr.bf16.mxu0 0
  %8122 = vmatpush1.bf16.msra.mxu0 0
  %8123 = vmatprep.subr.bf16.mxu0 0
  %8124 = vmatpush1.bf16.msra.mxu0 0
  %8125 = vmatprep.subr.bf16.mxu0 0
  %8126 = vmatpush1.bf16.msra.mxu0 0
  %8127 = vmatprep.subr.bf16.mxu0 0
  %8128 = vmatpush1.bf16.msra.mxu0 0
  %8129 = vmatprep.subr.bf16.mxu0 0
  %8130 = vmatpush1.bf16.msra.mxu0 0
  %8131 = vmatprep.subr.bf16.mxu0 0
  %8132 = vmatpush1.bf16.msra.mxu0 0
  %8133 = vmatprep.mubr.bf16.mxu0 0
  %8134 = vmatmul.mubr.bf16.gmra.mrb[0].mxu0 %v8081
  %v8135 = vpop.f32.mrb[0].mxu0
  %v8136 = vadd.f32 0.0, %v8135
  %v8137 = vpop.f32.mrb[0].mxu0
  %v8138 = vpop.f32.mrb[0].mxu0
  %v8139 = vadd.f32 0.0, %v8138
  %v8140 = vpop.f32.mrb[0].mxu0
  %8141 = vmatprep.mubr.bf16.mxu0 0
  %8142 = vmatmul.mubr.bf16.gmra.mrb[0].mxu0 %v8084
  %v8143 = vpop.f32.mrb[0].mxu0
  %v8144 = vadd.f32 0.0, %v8143
  %v8145 = vpop.f32.mrb[0].mxu0
  %v8146 = vpop.f32.mrb[0].mxu0
  %v8147 = vadd.f32 0.0, %v8146
  %v8148 = vpop.f32.mrb[0].mxu0
  %8149 = vmatprep.mubr.bf16.mxu0 0
  %8150 = vmatmul.mubr.bf16.gmra.mrb[0].mxu0 %v8087
  %v8151 = vpop.f32.mrb[0].mxu0
  %v8152 = vadd.f32 0.0, %v8151
  %v8153 = vpop.f32.mrb[0].mxu0
  %v8154 = vpop.f32.mrb[0].mxu0
  %v8155 = vadd.f32 0.0, %v8154
  %v8156 = vpop.f32.mrb[0].mxu0
  %8157 = vmatprep.mubr.bf16.mxu0 0
  %8158 = vmatmul.mubr.bf16.gmra.mrb[0].mxu0 %v8090
  %v8159 = vpop.f32.mrb[0].mxu0
  %v8160 = vadd.f32 0.0, %v8159
  %v8161 = vpop.f32.mrb[0].mxu0
  %v8162 = vpop.f32.mrb[0].mxu0
  %v8163 = vadd.f32 0.0, %v8162
  %v8164 = vpop.f32.mrb[0].mxu0
  %8165 = vmatprep.mubr.bf16.mxu0 0
  %8166 = vmatmul.mubr.bf16.gmra.mrb[0].mxu0 %v8093
  %v8167 = vpop.f32.mrb[0].mxu0
  %v8168 = vadd.f32 0.0, %v8167
  %v8169 = vpop.f32.mrb[0].mxu0
  %v8170 = vpop.f32.mrb[0].mxu0
  %v8171 = vadd.f32 0.0, %v8170
  %v8172 = vpop.f32.mrb[0].mxu0
  %8173 = vmatprep.mubr.bf16.mxu0 0
  %8174 = vmatmul.mubr.bf16.gmra.mrb[0].mxu0 %v8096
  %v8175 = vpop.f32.mrb[0].mxu0
  %v8176 = vadd.f32 0.0, %v8175
  %v8177 = vpop.f32.mrb[0].mxu0
  %v8178 = vpop.f32.mrb[0].mxu0
  %v8179 = vadd.f32 0.0, %v8178
  %v8180 = vpop.f32.mrb[0].mxu0
  %8181 = vdwg.mxu0
  %v8182 = vadd.f32 %v8011, %v8136
  %v8183 = vadd.f32 %v8012, %v8139
  %v8184 = vadd.f32 %v8013, %v8144
  %v8185 = vadd.f32 %v8014, %v8147
  %v8186 = vadd.f32 %v8015, %v8152
  %v8187 = vadd.f32 %v8016, %v8155
  %v8188 = vadd.f32 %v8017, %v8160
  %v8189 = vadd.f32 %v8018, %v8163
  %v8190 = vadd.f32 %v8019, %v8168
  %v8191 = vadd.f32 %v8020, %v8171
  %v8192 = vadd.f32 %v8021, %v8176
  %v8193 = vadd.f32 %v8022, %v8179
  %v8194 = vld [vmem:[#allocation4 + $0x60] sm:$0xf]
  %v8195 = vld [vmem:[#allocation4 + $0x64] sm:$0xf]
  %v8196 = vld [vmem:[#allocation4 + $0x68] sm:$0xf]
  %v8197 = vld [vmem:[#allocation4 + $0x6c] sm:$0xf]
  %v8198 = vld [vmem:[#allocation4 + $0x70] sm:$0xf]
  %v8199 = vld [vmem:[#allocation4 + $0x74] sm:$0xf]
  %v8200 = vld [vmem:[#allocation4 + $0x78] sm:$0xf]
  %v8201 = vld [vmem:[#allocation4 + $0x7c] sm:$0xf]
  %v8202 = vld [vmem:[#allocation4 + $0x80] sm:$0xf]
  %v8203 = vld [vmem:[#allocation4 + $0x84] sm:$0xf]
  %v8204 = vld [vmem:[#allocation4 + $0x88] sm:$0xf]
  %v8205 = vld [vmem:[#allocation4 + $0x8c] sm:$0xf]
  %v8206 = vld [vmem:[#allocation4 + $0x90] sm:$0x1]
  %v8207 = vld [vmem:[%s6059] sm:$0xf]
  %v8208 = vld [vmem:[%s6059 + $0x4] sm:$0xf]
  %v8209 = vld [vmem:[%s6059 + $0x8] sm:$0xf]
  %v8210 = vld [vmem:[%s6059 + $0xc] sm:$0x1]
  %v8224 = vunpack.c.l.b16 %v8194
  %v8225 = vunpack.c.l.b16 %v8195
  %v8226 = vunpack.c.l.b16 %v8196
  %v8227 = vunpack.c.l.b16 %v8197
  %v8228 = vunpack.c.l.b16 %v8198
  %v8229 = vunpack.c.l.b16 %v8199
  %v8230 = vunpack.c.l.b16 %v8200
  %v8231 = vunpack.c.l.b16 %v8201
  %v8232 = vunpack.c.l.b16 %v8202
  %v8233 = vunpack.c.l.b16 %v8203
  %v8234 = vunpack.c.l.b16 %v8204
  %v8235 = vunpack.c.l.b16 %v8205
  %v8236 = vunpack.c.l.b16 %v8206
  %v8237 = vpack.c.b16 %v8225, %v8224
  %v8238 = vpack.c.b16 %v8227, %v8226
  %v8239 = vpack.c.b16 %v8229, %v8228
  %v8240 = vpack.c.b16 %v8231, %v8230
  %v8241 = vpack.c.b16 %v8233, %v8232
  %v8242 = vpack.c.b16 %v8235, %v8234
  %v8243 = vpack.c.b16 %v8236, %v8236
  %v8245 = vshrl.u32 %v8237, 16
  %v8247 = vshll.u32 %v8237, 16
  %v8249 = vrot.slane %v8247, 1
  %v8250 = vor.u32 %v8245, %v8249
  %v8252 = vshll.u32 %v8238, 16
  %v8254 = vrot.slane %v8252, 1
  %v8255 = vsel %vm4356, %v8250, %v8254
  %v8256 = vshrl.u32 %v8238, 16
  %v8258 = vor.u32 %v8256, %v8254
  %v8260 = vshll.u32 %v8239, 16
  %v8262 = vrot.slane %v8260, 1
  %v8263 = vsel %vm4356, %v8258, %v8262
  %v8264 = vshrl.u32 %v8239, 16
  %v8266 = vor.u32 %v8264, %v8262
  %v8268 = vshll.u32 %v8240, 16
  %v8270 = vrot.slane %v8268, 1
  %v8271 = vsel %vm4356, %v8266, %v8270
  %v8272 = vshrl.u32 %v8240, 16
  %v8274 = vor.u32 %v8272, %v8270
  %v8276 = vshll.u32 %v8241, 16
  %v8278 = vrot.slane %v8276, 1
  %v8279 = vsel %vm4356, %v8274, %v8278
  %v8280 = vshrl.u32 %v8241, 16
  %v8282 = vor.u32 %v8280, %v8278
  %v8284 = vshll.u32 %v8242, 16
  %v8286 = vrot.slane %v8284, 1
  %v8287 = vsel %vm4356, %v8282, %v8286
  %v8288 = vshrl.u32 %v8242, 16
  %v8290 = vor.u32 %v8288, %v8286
  %v8292 = vshll.u32 %v8243, 16
  %v8294 = vrot.slane %v8292, 1
  %v8295 = vsel %vm4356, %v8290, %v8294
  %v8300 = vunpack.c.l.b16 %v8207
  %v8301 = vunpack.c.l.b16 %v8208
  %v8302 = vunpack.c.l.b16 %v8209
  %v8303 = vunpack.c.l.b16 %v8210
  %v8304 = vpack.c.b16 %v8301, %v8300
  %v8305 = vpack.c.b16 %v8303, %v8302
  %v8308 = vsel %vm512, %v8255, 0
  %v8311 = vsel %vm512, %v8263, 0
  %v8314 = vsel %vm512, %v8271, 0
  %v8317 = vsel %vm512, %v8279, 0
  %v8320 = vsel %vm512, %v8287, 0
  %v8323 = vsel %vm512, %v8295, 0
  %v8326 = vand.u32 %v8305, %v4440
  %8328 = vmatprep.subr.bf16.mxu0 0
  %8329 = vmatpush1.bf16.msra.mxu0 %v8304
  %8330 = vmatprep.subr.bf16.mxu0 0
  %8331 = vmatpush1.bf16.msra.mxu0 %v8326
  %8332 = vmatprep.subr.bf16.mxu0 0
  %8333 = vmatpush1.bf16.msra.mxu0 0
  %8334 = vmatprep.subr.bf16.mxu0 0
  %8335 = vmatpush1.bf16.msra.mxu0 0
  %8336 = vmatprep.subr.bf16.mxu0 0
  %8337 = vmatpush1.bf16.msra.mxu0 0
  %8338 = vmatprep.subr.bf16.mxu0 0
  %8339 = vmatpush1.bf16.msra.mxu0 0
  %8340 = vmatprep.subr.bf16.mxu0 0
  %8341 = vmatpush1.bf16.msra.mxu0 0
  %8342 = vmatprep.subr.bf16.mxu0 0
  %8343 = vmatpush1.bf16.msra.mxu0 0
  %8344 = vmatprep.subr.bf16.mxu0 0
  %8345 = vmatpush1.bf16.msra.mxu0 0
  %8346 = vmatprep.subr.bf16.mxu0 0
  %8347 = vmatpush1.bf16.msra.mxu0 0
  %8348 = vmatprep.subr.bf16.mxu0 0
  %8349 = vmatpush1.bf16.msra.mxu0 0
  %8350 = vmatprep.subr.bf16.mxu0 0
  %8351 = vmatpush1.bf16.msra.mxu0 0
  %8352 = vmatprep.subr.bf16.mxu0 0
  %8353 = vmatpush1.bf16.msra.mxu0 0
  %8354 = vmatprep.subr.bf16.mxu0 0
  %8355 = vmatpush1.bf16.msra.mxu0 0
  %8356 = vmatprep.subr.bf16.mxu0 0
  %8357 = vmatpush1.bf16.msra.mxu0 0
  %8358 = vmatprep.subr.bf16.mxu0 0
  %8359 = vmatpush1.bf16.msra.mxu0 0
  %8360 = vmatprep.mubr.bf16.mxu0 0
  %8361 = vmatmul.mubr.bf16.gmra.mrb[0].mxu0 %v8308
  %v8362 = vpop.f32.mrb[0].mxu0
  %v8363 = vadd.f32 0.0, %v8362
  %v8364 = vpop.f32.mrb[0].mxu0
  %v8365 = vpop.f32.mrb[0].mxu0
  %v8366 = vadd.f32 0.0, %v8365
  %v8367 = vpop.f32.mrb[0].mxu0
  %8368 = vmatprep.mubr.bf16.mxu0 0
  %8369 = vmatmul.mubr.bf16.gmra.mrb[0].mxu0 %v8311
  %v8370 = vpop.f32.mrb[0].mxu0
  %v8371 = vadd.f32 0.0, %v8370
  %v8372 = vpop.f32.mrb[0].mxu0
  %v8373 = vpop.f32.mrb[0].mxu0
  %v8374 = vadd.f32 0.0, %v8373
  %v8375 = vpop.f32.mrb[0].mxu0
  %8376 = vmatprep.mubr.bf16.mxu0 0
  %8377 = vmatmul.mubr.bf16.gmra.mrb[0].mxu0 %v8314
  %v8378 = vpop.f32.mrb[0].mxu0
  %v8379 = vadd.f32 0.0, %v8378
  %v8380 = vpop.f32.mrb[0].mxu0
  %v8381 = vpop.f32.mrb[0].mxu0
  %v8382 = vadd.f32 0.0, %v8381
  %v8383 = vpop.f32.mrb[0].mxu0
  %8384 = vmatprep.mubr.bf16.mxu0 0
  %8385 = vmatmul.mubr.bf16.gmra.mrb[0].mxu0 %v8317
  %v8386 = vpop.f32.mrb[0].mxu0
  %v8387 = vadd.f32 0.0, %v8386
  %v8388 = vpop.f32.mrb[0].mxu0
  %v8389 = vpop.f32.mrb[0].mxu0
  %v8390 = vadd.f32 0.0, %v8389
  %v8391 = vpop.f32.mrb[0].mxu0
  %8392 = vmatprep.mubr.bf16.mxu0 0
  %8393 = vmatmul.mubr.bf16.gmra.mrb[0].mxu0 %v8320
  %v8394 = vpop.f32.mrb[0].mxu0
  %v8395 = vadd.f32 0.0, %v8394
  %v8396 = vpop.f32.mrb[0].mxu0
  %v8397 = vpop.f32.mrb[0].mxu0
  %v8398 = vadd.f32 0.0, %v8397
  %v8399 = vpop.f32.mrb[0].mxu0
  %8400 = vmatprep.mubr.bf16.mxu0 0
  %8401 = vmatmul.mubr.bf16.gmra.mrb[0].mxu0 %v8323
  %v8402 = vpop.f32.mrb[0].mxu0
  %v8403 = vadd.f32 0.0, %v8402
  %v8404 = vpop.f32.mrb[0].mxu0
  %v8405 = vpop.f32.mrb[0].mxu0
  %v8406 = vadd.f32 0.0, %v8405
  %v8407 = vpop.f32.mrb[0].mxu0
  %8408 = vdwg.mxu0
  %v8409 = vadd.f32 %v8182, %v8363
  %v8410 = vadd.f32 %v8183, %v8366
  %v8411 = vadd.f32 %v8184, %v8371
  %v8412 = vadd.f32 %v8185, %v8374
  %v8413 = vadd.f32 %v8186, %v8379
  %v8414 = vadd.f32 %v8187, %v8382
  %v8415 = vadd.f32 %v8188, %v8387
  %v8416 = vadd.f32 %v8189, %v8390
  %v8417 = vadd.f32 %v8190, %v8395
  %v8418 = vadd.f32 %v8191, %v8398
  %v8419 = vadd.f32 %v8192, %v8403
  %v8420 = vadd.f32 %v8193, %v8406
  %v8421 = vld [vmem:[#allocation4 + $0x60] sm:$0xe]
  %v8422 = vld [vmem:[%s6275] sm:$0xf]
  %v8423 = vld [vmem:[%s6275 + $0x4] sm:$0xf]
  %v8424 = vld [vmem:[%s6275 + $0x8] sm:$0xf]
  %v8425 = vld [vmem:[%s6275 + $0xc] sm:$0x1]
  %v8427 = vunpack.c.l.b16 %v8421
  %v8428 = vpack.c.b16 %v8225, %v8427
  %v8429 = vrot.slane %v8428, 1
  %v8430 = vrot.slane %v8238, 1
  %v8431 = vsel %vm4641, %v8429, %v8430
  %v8432 = vrot.slane %v8239, 1
  %v8433 = vsel %vm4641, %v8430, %v8432
  %v8434 = vrot.slane %v8240, 1
  %v8435 = vsel %vm4641, %v8432, %v8434
  %v8436 = vrot.slane %v8241, 1
  %v8437 = vsel %vm4641, %v8434, %v8436
  %v8438 = vrot.slane %v8242, 1
  %v8439 = vsel %vm4641, %v8436, %v8438
  %v8440 = vrot.slane %v8243, 1
  %v8441 = vsel %vm4641, %v8438, %v8440
  %v8446 = vunpack.c.l.b16 %v8422
  %v8447 = vunpack.c.l.b16 %v8423
  %v8448 = vunpack.c.l.b16 %v8424
  %v8449 = vunpack.c.l.b16 %v8425
  %v8450 = vpack.c.b16 %v8447, %v8446
  %v8451 = vpack.c.b16 %v8449, %v8448
  %v8454 = vsel %vm512, %v8431, 0
  %v8457 = vsel %vm512, %v8433, 0
  %v8460 = vsel %vm512, %v8435, 0
  %v8463 = vsel %vm512, %v8437, 0
  %v8466 = vsel %vm512, %v8439, 0
  %v8469 = vsel %vm512, %v8441, 0
  %v8472 = vand.u32 %v8451, %v4440
  %8474 = vmatprep.subr.bf16.mxu0 0
  %8475 = vmatpush1.bf16.msra.mxu0 %v8450
  %8476 = vmatprep.subr.bf16.mxu0 0
  %8477 = vmatpush1.bf16.msra.mxu0 %v8472
  %8478 = vmatprep.subr.bf16.mxu0 0
  %8479 = vmatpush1.bf16.msra.mxu0 0
  %8480 = vmatprep.subr.bf16.mxu0 0
  %8481 = vmatpush1.bf16.msra.mxu0 0
  %8482 = vmatprep.subr.bf16.mxu0 0
  %8483 = vmatpush1.bf16.msra.mxu0 0
  %8484 = vmatprep.subr.bf16.mxu0 0
  %8485 = vmatpush1.bf16.msra.mxu0 0
  %8486 = vmatprep.subr.bf16.mxu0 0
  %8487 = vmatpush1.bf16.msra.mxu0 0
  %8488 = vmatprep.subr.bf16.mxu0 0
  %8489 = vmatpush1.bf16.msra.mxu0 0
  %8490 = vmatprep.subr.bf16.mxu0 0
  %8491 = vmatpush1.bf16.msra.mxu0 0
  %8492 = vmatprep.subr.bf16.mxu0 0
  %8493 = vmatpush1.bf16.msra.mxu0 0
  %8494 = vmatprep.subr.bf16.mxu0 0
  %8495 = vmatpush1.bf16.msra.mxu0 0
  %8496 = vmatprep.subr.bf16.mxu0 0
  %8497 = vmatpush1.bf16.msra.mxu0 0
  %8498 = vmatprep.subr.bf16.mxu0 0
  %8499 = vmatpush1.bf16.msra.mxu0 0
  %8500 = vmatprep.subr.bf16.mxu0 0
  %8501 = vmatpush1.bf16.msra.mxu0 0
  %8502 = vmatprep.subr.bf16.mxu0 0
  %8503 = vmatpush1.bf16.msra.mxu0 0
  %8504 = vmatprep.subr.bf16.mxu0 0
  %8505 = vmatpush1.bf16.msra.mxu0 0
  %8506 = vmatprep.mubr.bf16.mxu0 0
  %8507 = vmatmul.mubr.bf16.gmra.mrb[0].mxu0 %v8454
  %v8508 = vpop.f32.mrb[0].mxu0
  %v8509 = vadd.f32 0.0, %v8508
  %v8510 = vpop.f32.mrb[0].mxu0
  %v8511 = vpop.f32.mrb[0].mxu0
  %v8512 = vadd.f32 0.0, %v8511
  %v8513 = vpop.f32.mrb[0].mxu0
  %8514 = vmatprep.mubr.bf16.mxu0 0
  %8515 = vmatmul.mubr.bf16.gmra.mrb[0].mxu0 %v8457
  %v8516 = vpop.f32.mrb[0].mxu0
  %v8517 = vadd.f32 0.0, %v8516
  %v8518 = vpop.f32.mrb[0].mxu0
  %v8519 = vpop.f32.mrb[0].mxu0
  %v8520 = vadd.f32 0.0, %v8519
  %v8521 = vpop.f32.mrb[0].mxu0
  %8522 = vmatprep.mubr.bf16.mxu0 0
  %8523 = vmatmul.mubr.bf16.gmra.mrb[0].mxu0 %v8460
  %v8524 = vpop.f32.mrb[0].mxu0
  %v8525 = vadd.f32 0.0, %v8524
  %v8526 = vpop.f32.mrb[0].mxu0
  %v8527 = vpop.f32.mrb[0].mxu0
  %v8528 = vadd.f32 0.0, %v8527
  %v8529 = vpop.f32.mrb[0].mxu0
  %8530 = vmatprep.mubr.bf16.mxu0 0
  %8531 = vmatmul.mubr.bf16.gmra.mrb[0].mxu0 %v8463
  %v8532 = vpop.f32.mrb[0].mxu0
  %v8533 = vadd.f32 0.0, %v8532
  %v8534 = vpop.f32.mrb[0].mxu0
  %v8535 = vpop.f32.mrb[0].mxu0
  %v8536 = vadd.f32 0.0, %v8535
  %v8537 = vpop.f32.mrb[0].mxu0
  %8538 = vmatprep.mubr.bf16.mxu0 0
  %8539 = vmatmul.mubr.bf16.gmra.mrb[0].mxu0 %v8466
  %v8540 = vpop.f32.mrb[0].mxu0
  %v8541 = vadd.f32 0.0, %v8540
  %v8542 = vpop.f32.mrb[0].mxu0
  %v8543 = vpop.f32.mrb[0].mxu0
  %v8544 = vadd.f32 0.0, %v8543
  %v8545 = vpop.f32.mrb[0].mxu0
  %8546 = vmatprep.mubr.bf16.mxu0 0
  %8547 = vmatmul.mubr.bf16.gmra.mrb[0].mxu0 %v8469
  %v8548 = vpop.f32.mrb[0].mxu0
  %v8549 = vadd.f32 0.0, %v8548
  %v8550 = vpop.f32.mrb[0].mxu0
  %v8551 = vpop.f32.mrb[0].mxu0
  %v8552 = vadd.f32 0.0, %v8551
  %v8553 = vpop.f32.mrb[0].mxu0
  %8554 = vdwg.mxu0
  %v8555 = vadd.f32 %v8409, %v8509
  %v8556 = vadd.f32 %v8410, %v8512
  %v8557 = vadd.f32 %v8411, %v8517
  %v8558 = vadd.f32 %v8412, %v8520
  %v8559 = vadd.f32 %v8413, %v8525
  %v8560 = vadd.f32 %v8414, %v8528
  %v8561 = vadd.f32 %v8415, %v8533
  %v8562 = vadd.f32 %v8416, %v8536
  %v8563 = vadd.f32 %v8417, %v8541
  %v8564 = vadd.f32 %v8418, %v8544
  %v8565 = vadd.f32 %v8419, %v8549
  %v8566 = vadd.f32 %v8420, %v8552
  %v8567 = vadd.f32 %v8555, %v6425
  %v8568 = vadd.f32 %v8556, %v6425
  %v8569 = vadd.f32 %v8557, %v6425
  %v8570 = vadd.f32 %v8558, %v6425
  %v8571 = vadd.f32 %v8559, %v6425
  %v8572 = vadd.f32 %v8560, %v6425
  %v8573 = vadd.f32 %v8561, %v6425
  %v8574 = vadd.f32 %v8562, %v6425
  %v8575 = vadd.f32 %v8563, %v6425
  %v8576 = vadd.f32 %v8564, %v6425
  %v8577 = vadd.f32 %v8565, %v6425
  %v8578 = vadd.f32 %v8566, %v6425
  %v8579 = vmax.f32 %v8567, 0.0
  %v8580 = vmax.f32 %v8568, 0.0
  %v8581 = vmax.f32 %v8569, 0.0
  %v8582 = vmax.f32 %v8570, 0.0
  %v8583 = vmax.f32 %v8571, 0.0
  %v8584 = vmax.f32 %v8572, 0.0
  %v8585 = vmax.f32 %v8573, 0.0
  %v8586 = vmax.f32 %v8574, 0.0
  %v8587 = vmax.f32 %v8575, 0.0
  %v8588 = vmax.f32 %v8576, 0.0
  %v8589 = vmax.f32 %v8577, 0.0
  %v8590 = vmax.f32 %v8578, 0.0
  %8591 = vst.msk [vmem:[#allocation5 + $0x90] sm:$0xff] %vm104, %v8579
  %8592 = vst.msk [vmem:[#allocation5 + $0x98] sm:$0xff] %vm104, %v8580
  %8593 = vst.msk [vmem:[#allocation5 + $0xa0] sm:$0xff] %vm104, %v8581
  %8594 = vst.msk [vmem:[#allocation5 + $0xa8] sm:$0xff] %vm104, %v8582
  %8595 = vst.msk [vmem:[#allocation5 + $0xb0] sm:$0xff] %vm104, %v8583
  %8596 = vst.msk [vmem:[#allocation5 + $0xb8] sm:$0xff] %vm104, %v8584
  %8597 = vst.msk [vmem:[#allocation5 + $0xc0] sm:$0xff] %vm104, %v8585
  %8598 = vst.msk [vmem:[#allocation5 + $0xc8] sm:$0xff] %vm104, %v8586
  %8599 = vst.msk [vmem:[#allocation5 + $0xd0] sm:$0xff] %vm104, %v8587
  %8600 = vst.msk [vmem:[#allocation5 + $0xd8] sm:$0xff] %vm104, %v8588
  %8601 = vst.msk [vmem:[#allocation5 + $0xe0] sm:$0xff] %vm104, %v8589
  %8602 = vst.msk [vmem:[#allocation5 + $0xe8] sm:$0xff] %vm104, %v8590
  %v8603 = vld [vmem:[%s6] sm:$0xf]
  %v8604 = vld [vmem:[%s6 + $0x4] sm:$0xf]
  %v8605 = vld [vmem:[%s6 + $0x8] sm:$0xf]
  %v8606 = vld [vmem:[#allocation5] sm:$0xff]
  %v8607 = vld [vmem:[#allocation5 + $0x8] sm:$0xff]
  %v8608 = vld [vmem:[#allocation5 + $0x10] sm:$0xff]
  %v8609 = vld [vmem:[#allocation5 + $0x18] sm:$0xff]
  %v8610 = vld [vmem:[#allocation5 + $0x20] sm:$0xff]
  %v8611 = vld [vmem:[#allocation5 + $0x28] sm:$0xff]
  %v8612 = vld [vmem:[#allocation5 + $0x30] sm:$0xff]
  %v8613 = vld [vmem:[#allocation5 + $0x38] sm:$0xff]
  %v8614 = vld [vmem:[#allocation5 + $0x40] sm:$0xff]
  %v8615 = vld [vmem:[#allocation5 + $0x48] sm:$0xff]
  %v8616 = vld [vmem:[#allocation5 + $0x1] sm:$0xff]
  %v8617 = vld [vmem:[#allocation5 + $0x9] sm:$0xff]
  %v8618 = vld [vmem:[#allocation5 + $0x11] sm:$0xff]
  %v8619 = vld [vmem:[#allocation5 + $0x19] sm:$0xff]
  %v8620 = vld [vmem:[#allocation5 + $0x21] sm:$0xff]
  %v8621 = vld [vmem:[#allocation5 + $0x29] sm:$0xff]
  %v8622 = vld [vmem:[#allocation5 + $0x31] sm:$0xff]
  %v8623 = vld [vmem:[#allocation5 + $0x39] sm:$0xff]
  %v8624 = vld [vmem:[#allocation5 + $0x41] sm:$0xff]
  %v8625 = vld [vmem:[#allocation5 + $0x49] sm:$0xff]
  %v8626 = vmax.f32 %v8606, %v8616
  %v8627 = vmax.f32 %v8607, %v8617
  %v8628 = vmax.f32 %v8608, %v8618
  %v8629 = vmax.f32 %v8609, %v8619
  %v8630 = vmax.f32 %v8610, %v8620
  %v8631 = vmax.f32 %v8611, %v8621
  %v8632 = vmax.f32 %v8612, %v8622
  %v8633 = vmax.f32 %v8613, %v8623
  %v8634 = vmax.f32 %v8614, %v8624
  %v8635 = vmax.f32 %v8615, %v8625
  %v8636 = vld [vmem:[#allocation5 + $0x50] sm:$0xff]
  %v8637 = vld [vmem:[#allocation5 + $0x58] sm:$0xff]
  %v8638 = vmax.f32 %v8626, %v8608
  %v8639 = vmax.f32 %v8627, %v8609
  %v8640 = vmax.f32 %v8628, %v8610
  %v8641 = vmax.f32 %v8629, %v8611
  %v8642 = vmax.f32 %v8630, %v8612
  %v8643 = vmax.f32 %v8631, %v8613
  %v8644 = vmax.f32 %v8632, %v8614
  %v8645 = vmax.f32 %v8633, %v8615
  %v8646 = vmax.f32 %v8634, %v8636
  %v8647 = vmax.f32 %v8635, %v8637
  %v8648 = vld [vmem:[#allocation5 + $0x51] sm:$0xff]
  %v8649 = vld [vmem:[#allocation5 + $0x59] sm:$0xff]
  %v8650 = vmax.f32 %v8638, %v8618
  %v8651 = vmax.f32 %v8639, %v8619
  %v8652 = vmax.f32 %v8640, %v8620
  %v8653 = vmax.f32 %v8641, %v8621
  %v8654 = vmax.f32 %v8642, %v8622
  %v8655 = vmax.f32 %v8643, %v8623
  %v8656 = vmax.f32 %v8644, %v8624
  %v8657 = vmax.f32 %v8645, %v8625
  %v8658 = vmax.f32 %v8646, %v8648
  %v8659 = vmax.f32 %v8647, %v8649
  %v8660 = vpack.c.bf16 %v8651, %v8650
  %v8661 = vpack.c.bf16 %v8653, %v8652
  %v8662 = vpack.c.bf16 %v8655, %v8654
  %v8663 = vpack.c.bf16 %v8657, %v8656
  %v8664 = vpack.c.bf16 %v8659, %v8658
  %v8668 = vunpack.c.l.b16 %v8603
  %v8669 = vunpack.c.l.b16 %v8604
  %v8670 = vunpack.c.l.b16 %v8605
  %v8671 = vpack.c.b16 %v8669, %v8668
  %v8672 = vpack.c.b16 %v8670, %v8670
  %vm8673 = vcmask 654336
  %v8675 = vsel %vm8673, %v8671, 0
  %v8678 = vsel %vm8673, %v8672, 0
  %8680 = vmatprep.subr.bf16.mxu0 0
  %8681 = vmatpush1.bf16.msra.mxu0 %v8660
  %8682 = vmatprep.subr.bf16.mxu0 0
  %8683 = vmatpush1.bf16.msra.mxu0 %v8661
  %8684 = vmatprep.subr.bf16.mxu0 0
  %8685 = vmatpush1.bf16.msra.mxu0 %v8662
  %8686 = vmatprep.subr.bf16.mxu0 0
  %8687 = vmatpush1.bf16.msra.mxu0 %v8663
  %8688 = vmatprep.subr.bf16.mxu0 0
  %8689 = vmatpush1.bf16.msra.mxu0 %v8664
  %8690 = vmatprep.subr.bf16.mxu0 0
  %8691 = vmatpush1.bf16.msra.mxu0 0
  %8692 = vmatprep.subr.bf16.mxu0 0
  %8693 = vmatpush1.bf16.msra.mxu0 0
  %8694 = vmatprep.subr.bf16.mxu0 0
  %8695 = vmatpush1.bf16.msra.mxu0 0
  %8696 = vmatprep.subr.bf16.mxu0 0
  %8697 = vmatpush1.bf16.msra.mxu0 0
  %8698 = vmatprep.subr.bf16.mxu0 0
  %8699 = vmatpush1.bf16.msra.mxu0 0
  %8700 = vmatprep.subr.bf16.mxu0 0
  %8701 = vmatpush1.bf16.msra.mxu0 0
  %8702 = vmatprep.subr.bf16.mxu0 0
  %8703 = vmatpush1.bf16.msra.mxu0 0
  %8704 = vmatprep.subr.bf16.mxu0 0
  %8705 = vmatpush1.bf16.msra.mxu0 0
  %8706 = vmatprep.subr.bf16.mxu0 0
  %8707 = vmatpush1.bf16.msra.mxu0 0
  %8708 = vmatprep.subr.bf16.mxu0 0
  %8709 = vmatpush1.bf16.msra.mxu0 0
  %8710 = vmatprep.subr.bf16.mxu0 0
  %8711 = vmatpush1.bf16.msra.mxu0 0
  %8712 = vmatprep.mubr.bf16.mxu0 0
  %8713 = vmatmul.mubr.bf16.gmra.mrb[0].mxu0 %v8675
  %v8714 = vpop.f32.mrb[0].mxu0
  %v8715 = vadd.f32 0.0, %v8714
  %v8716 = vpop.f32.mrb[0].mxu0
  %v8717 = vpop.f32.mrb[0].mxu0
  %v8718 = vadd.f32 0.0, %v8717
  %v8719 = vpop.f32.mrb[0].mxu0
  %8720 = vmatprep.mubr.bf16.mxu0 0
  %8721 = vmatmul.mubr.bf16.gmra.mrb[0].mxu0 %v8678
  %v8722 = vpop.f32.mrb[0].mxu0
  %v8723 = vadd.f32 0.0, %v8722
  %v8724 = vpop.f32.mrb[0].mxu0
  %v8725 = vpop.f32.mrb[0].mxu0
  %v8726 = vpop.f32.mrb[0].mxu0
  %8727 = vdwg.mxu0
  %v8728 = vpack.c.bf16 %v8718, %v8715
  %v8729 = vpack.c.bf16 %v8723, %v8723
  %v8732 = vunpack.c.l.b16 %v8728
  %v8733 = vunpack.c.h.b16 %v8728
  %v8734 = vunpack.c.l.b16 %v8729
  %v8735 = vpack.c.b16 %v8732, %v8732
  %v8736 = vpack.c.b16 %v8733, %v8733
  %v8737 = vpack.c.b16 %v8734, %v8734
  %8741 = vst.msk [vmem:[#allocation6] sm:$0xf] %vm136, %v8735
  %8742 = vst.msk [vmem:[#allocation6 + $0x4] sm:$0xf] %vm136, %v8736
  %8743 = vst.msk [vmem:[#allocation6 + $0x8] sm:$0xf] %vm136, %v8737
  %v8744 = vld [vmem:[#allocation5 + $0x90] sm:$0xff]
  %v8745 = vld [vmem:[#allocation5 + $0x98] sm:$0xff]
  %v8746 = vld [vmem:[#allocation5 + $0xa0] sm:$0xff]
  %v8747 = vld [vmem:[#allocation5 + $0xa8] sm:$0xff]
  %v8748 = vld [vmem:[#allocation5 + $0xb0] sm:$0xff]
  %v8749 = vld [vmem:[#allocation5 + $0xb8] sm:$0xff]
  %v8750 = vld [vmem:[#allocation5 + $0xc0] sm:$0xff]
  %v8751 = vld [vmem:[#allocation5 + $0xc8] sm:$0xff]
  %v8752 = vld [vmem:[#allocation5 + $0xd0] sm:$0xff]
  %v8753 = vld [vmem:[#allocation5 + $0xd8] sm:$0xff]
  %v8754 = vld [vmem:[#allocation5 + $0x91] sm:$0xff]
  %v8755 = vld [vmem:[#allocation5 + $0x99] sm:$0xff]
  %v8756 = vld [vmem:[#allocation5 + $0xa1] sm:$0xff]
  %v8757 = vld [vmem:[#allocation5 + $0xa9] sm:$0xff]
  %v8758 = vld [vmem:[#allocation5 + $0xb1] sm:$0xff]
  %v8759 = vld [vmem:[#allocation5 + $0xb9] sm:$0xff]
  %v8760 = vld [vmem:[#allocation5 + $0xc1] sm:$0xff]
  %v8761 = vld [vmem:[#allocation5 + $0xc9] sm:$0xff]
  %v8762 = vld [vmem:[#allocation5 + $0xd1] sm:$0xff]
  %v8763 = vld [vmem:[#allocation5 + $0xd9] sm:$0xff]
  %v8764 = vmax.f32 %v8744, %v8754
  %v8765 = vmax.f32 %v8745, %v8755
  %v8766 = vmax.f32 %v8746, %v8756
  %v8767 = vmax.f32 %v8747, %v8757
  %v8768 = vmax.f32 %v8748, %v8758
  %v8769 = vmax.f32 %v8749, %v8759
  %v8770 = vmax.f32 %v8750, %v8760
  %v8771 = vmax.f32 %v8751, %v8761
  %v8772 = vmax.f32 %v8752, %v8762
  %v8773 = vmax.f32 %v8753, %v8763
  %v8774 = vld [vmem:[#allocation5 + $0xe0] sm:$0xff]
  %v8775 = vld [vmem:[#allocation5 + $0xe8] sm:$0xff]
  %v8776 = vmax.f32 %v8764, %v8746
  %v8777 = vmax.f32 %v8765, %v8747
  %v8778 = vmax.f32 %v8766, %v8748
  %v8779 = vmax.f32 %v8767, %v8749
  %v8780 = vmax.f32 %v8768, %v8750
  %v8781 = vmax.f32 %v8769, %v8751
  %v8782 = vmax.f32 %v8770, %v8752
  %v8783 = vmax.f32 %v8771, %v8753
  %v8784 = vmax.f32 %v8772, %v8774
  %v8785 = vmax.f32 %v8773, %v8775
  %v8786 = vld [vmem:[#allocation5 + $0xe1] sm:$0xff]
  %v8787 = vld [vmem:[#allocation5 + $0xe9] sm:$0xff]
  %v8788 = vmax.f32 %v8776, %v8756
  %v8789 = vmax.f32 %v8777, %v8757
  %v8790 = vmax.f32 %v8778, %v8758
  %v8791 = vmax.f32 %v8779, %v8759
  %v8792 = vmax.f32 %v8780, %v8760
  %v8793 = vmax.f32 %v8781, %v8761
  %v8794 = vmax.f32 %v8782, %v8762
  %v8795 = vmax.f32 %v8783, %v8763
  %v8796 = vmax.f32 %v8784, %v8786
  %v8797 = vmax.f32 %v8785, %v8787
  %v8798 = vpack.c.bf16 %v8789, %v8788
  %v8799 = vpack.c.bf16 %v8791, %v8790
  %v8800 = vpack.c.bf16 %v8793, %v8792
  %v8801 = vpack.c.bf16 %v8795, %v8794
  %v8802 = vpack.c.bf16 %v8797, %v8796
  %8803 = vmatprep.subr.bf16.mxu0 0
  %8804 = vmatpush1.bf16.msra.mxu0 %v8798
  %8805 = vmatprep.subr.bf16.mxu0 0
  %8806 = vmatpush1.bf16.msra.mxu0 %v8799
  %8807 = vmatprep.subr.bf16.mxu0 0
  %8808 = vmatpush1.bf16.msra.mxu0 %v8800
  %8809 = vmatprep.subr.bf16.mxu0 0
  %8810 = vmatpush1.bf16.msra.mxu0 %v8801
  %8811 = vmatprep.subr.bf16.mxu0 0
  %8812 = vmatpush1.bf16.msra.mxu0 %v8802
  %8813 = vmatprep.subr.bf16.mxu0 0
  %8814 = vmatpush1.bf16.msra.mxu0 0
  %8815 = vmatprep.subr.bf16.mxu0 0
  %8816 = vmatpush1.bf16.msra.mxu0 0
  %8817 = vmatprep.subr.bf16.mxu0 0
  %8818 = vmatpush1.bf16.msra.mxu0 0
  %8819 = vmatprep.subr.bf16.mxu0 0
  %8820 = vmatpush1.bf16.msra.mxu0 0
  %8821 = vmatprep.subr.bf16.mxu0 0
  %8822 = vmatpush1.bf16.msra.mxu0 0
  %8823 = vmatprep.subr.bf16.mxu0 0
  %8824 = vmatpush1.bf16.msra.mxu0 0
  %8825 = vmatprep.subr.bf16.mxu0 0
  %8826 = vmatpush1.bf16.msra.mxu0 0
  %8827 = vmatprep.subr.bf16.mxu0 0
  %8828 = vmatpush1.bf16.msra.mxu0 0
  %8829 = vmatprep.subr.bf16.mxu0 0
  %8830 = vmatpush1.bf16.msra.mxu0 0
  %8831 = vmatprep.subr.bf16.mxu0 0
  %8832 = vmatpush1.bf16.msra.mxu0 0
  %8833 = vmatprep.subr.bf16.mxu0 0
  %8834 = vmatpush1.bf16.msra.mxu0 0
  %8835 = vmatprep.mubr.bf16.mxu0 0
  %8836 = vmatmul.mubr.bf16.gmra.mrb[0].mxu0 %v8675
  %v8837 = vpop.f32.mrb[0].mxu0
  %v8838 = vadd.f32 0.0, %v8837
  %v8839 = vpop.f32.mrb[0].mxu0
  %v8840 = vpop.f32.mrb[0].mxu0
  %v8841 = vadd.f32 0.0, %v8840
  %v8842 = vpop.f32.mrb[0].mxu0
  %8843 = vmatprep.mubr.bf16.mxu0 0
  %8844 = vmatmul.mubr.bf16.gmra.mrb[0].mxu0 %v8678
  %v8845 = vpop.f32.mrb[0].mxu0
  %v8846 = vadd.f32 0.0, %v8845
  %v8847 = vpop.f32.mrb[0].mxu0
  %v8848 = vpop.f32.mrb[0].mxu0
  %v8849 = vpop.f32.mrb[0].mxu0
  %8850 = vdwg.mxu0
  %v8851 = vpack.c.bf16 %v8841, %v8838
  %v8852 = vpack.c.bf16 %v8846, %v8846
  %v8855 = vunpack.c.l.b16 %v8851
  %v8856 = vunpack.c.h.b16 %v8851
  %v8857 = vunpack.c.l.b16 %v8852
  %v8858 = vpack.c.b16 %v8855, %v8855
  %v8859 = vpack.c.b16 %v8856, %v8856
  %v8860 = vpack.c.b16 %v8857, %v8857
  %8864 = vst.msk [vmem:[#allocation6 + $0xc] sm:$0xf] %vm136, %v8858
  %8865 = vst.msk [vmem:[#allocation6 + $0x10] sm:$0xf] %vm136, %v8859
  %8866 = vst.msk [vmem:[#allocation6 + $0x14] sm:$0xf] %vm136, %v8860
  %v8867 = vld [vmem:[#allocation6] sm:$0xf]
  %v8868 = vld [vmem:[#allocation6 + $0x4] sm:$0xf]
  %v8869 = vld [vmem:[#allocation6 + $0x8] sm:$0xf]
  %v8870 = vld [vmem:[#allocation6 + $0xc] sm:$0xf]
  %v8871 = vld [vmem:[#allocation6 + $0x10] sm:$0xf]
  %v8872 = vld [vmem:[#allocation6 + $0x14] sm:$0xf]
  %v8873 = vld [vmem:[%s7] sm:$0xf]
  %v8874 = vld [vmem:[%s7 + $0x4] sm:$0xf]
  %v8875 = vld [vmem:[%s7 + $0x8] sm:$0xf]
  %v8876 = vld [vmem:[%s7 + $0xc] sm:$0xf]
  %v8877 = vld [vmem:[%s7 + $0x10] sm:$0xf]
  %v8878 = vld [vmem:[%s7 + $0x14] sm:$0xf]
  %v8879 = vld [vmem:[%s7 + $0x18] sm:$0x1]
  %v8880 = vld [vmem:[#allocation6 + $0x18] sm:$0x1]
  %s8881 = scalar_lea.vmem %s7, 28
  %v8882 = vld [vmem:[%s8881] sm:$0xf]
  %v8883 = vld [vmem:[%s8881 + $0x4] sm:$0xf]
  %v8884 = vld [vmem:[%s8881 + $0x8] sm:$0xf]
  %v8885 = vld [vmem:[%s8881 + $0xc] sm:$0xf]
  %v8886 = vld [vmem:[%s8881 + $0x10] sm:$0xf]
  %v8887 = vld [vmem:[%s8881 + $0x14] sm:$0xf]
  %v8888 = vld [vmem:[%s8881 + $0x18] sm:$0x1]
  %v8896 = vunpack.c.l.b16 %v8867
  %v8897 = vunpack.c.l.b16 %v8868
  %v8898 = vunpack.c.l.b16 %v8869
  %v8899 = vunpack.c.l.b16 %v8870
  %v8900 = vunpack.c.l.b16 %v8871
  %v8901 = vunpack.c.l.b16 %v8872
  %v8902 = vunpack.c.l.b16 %v8880
  %v8903 = vpack.c.b16 %v8897, %v8896
  %v8904 = vpack.c.b16 %v8899, %v8898
  %v8905 = vpack.c.b16 %v8901, %v8900
  %v8906 = vpack.c.b16 %v8902, %v8902
  %v8908 = vshrl.u32 %v8903, 16
  %v8910 = vshll.u32 %v8903, 16
  %v8912 = vrot.slane %v8910, 1
  %v8913 = vor.u32 %v8908, %v8912
  %v8915 = vshll.u32 %v8904, 16
  %v8917 = vrot.slane %v8915, 1
  %v8918 = vsel %vm4356, %v8913, %v8917
  %v8919 = vshrl.u32 %v8904, 16
  %v8921 = vor.u32 %v8919, %v8917
  %v8923 = vshll.u32 %v8905, 16
  %v8925 = vrot.slane %v8923, 1
  %v8926 = vsel %vm4356, %v8921, %v8925
  %v8927 = vshrl.u32 %v8905, 16
  %v8929 = vor.u32 %v8927, %v8925
  %v8931 = vshll.u32 %v8906, 16
  %v8933 = vrot.slane %v8931, 1
  %v8934 = vsel %vm4356, %v8929, %v8933
  %v8942 = vunpack.c.l.b16 %v8882
  %v8943 = vunpack.c.l.b16 %v8883
  %v8944 = vunpack.c.l.b16 %v8884
  %v8945 = vunpack.c.l.b16 %v8885
  %v8946 = vunpack.c.l.b16 %v8886
  %v8947 = vunpack.c.l.b16 %v8887
  %v8948 = vunpack.c.l.b16 %v8888
  %v8949 = vpack.c.b16 %v8943, %v8942
  %v8950 = vpack.c.b16 %v8945, %v8944
  %v8951 = vpack.c.b16 %v8947, %v8946
  %v8952 = vpack.c.b16 %v8948, %v8948
  %v8957 = vsel %vm104, %v8918, 0
  %v8960 = vsel %vm104, %v8926, 0
  %v8963 = vsel %vm104, %v8934, 0
  %vm8965 = vcmask 1040384
  %v8967 = vsel %vm8965, %v8952, 0
  %8969 = vmatprep.subr.bf16.mxu0 0
  %8970 = vmatpush1.bf16.msra.mxu0 %v8949
  %8971 = vmatprep.subr.bf16.mxu0 0
  %8972 = vmatpush1.bf16.msra.mxu0 %v8950
  %8973 = vmatprep.subr.bf16.mxu0 0
  %8974 = vmatpush1.bf16.msra.mxu0 %v8951
  %8975 = vmatprep.subr.bf16.mxu0 0
  %8976 = vmatpush1.bf16.msra.mxu0 %v8967
  %8977 = vmatprep.subr.bf16.mxu0 0
  %8978 = vmatpush1.bf16.msra.mxu0 0
  %8979 = vmatprep.subr.bf16.mxu0 0
  %8980 = vmatpush1.bf16.msra.mxu0 0
  %8981 = vmatprep.subr.bf16.mxu0 0
  %8982 = vmatpush1.bf16.msra.mxu0 0
  %8983 = vmatprep.subr.bf16.mxu0 0
  %8984 = vmatpush1.bf16.msra.mxu0 0
  %8985 = vmatprep.subr.bf16.mxu0 0
  %8986 = vmatpush1.bf16.msra.mxu0 0
  %8987 = vmatprep.subr.bf16.mxu0 0
  %8988 = vmatpush1.bf16.msra.mxu0 0
  %8989 = vmatprep.subr.bf16.mxu0 0
  %8990 = vmatpush1.bf16.msra.mxu0 0
  %8991 = vmatprep.subr.bf16.mxu0 0
  %8992 = vmatpush1.bf16.msra.mxu0 0
  %8993 = vmatprep.subr.bf16.mxu0 0
  %8994 = vmatpush1.bf16.msra.mxu0 0
  %8995 = vmatprep.subr.bf16.mxu0 0
  %8996 = vmatpush1.bf16.msra.mxu0 0
  %8997 = vmatprep.subr.bf16.mxu0 0
  %8998 = vmatpush1.bf16.msra.mxu0 0
  %8999 = vmatprep.subr.bf16.mxu0 0
  %9000 = vmatpush1.bf16.msra.mxu0 0
  %9001 = vmatprep.mubr.bf16.mxu0 0
  %9002 = vmatmul.mubr.bf16.gmra.mrb[0].mxu0 %v8957
  %v9003 = vpop.f32.mrb[0].mxu0
  %v9004 = vadd.f32 0.0, %v9003
  %v9005 = vpop.f32.mrb[0].mxu0
  %v9006 = vpop.f32.mrb[0].mxu0
  %v9007 = vadd.f32 0.0, %v9006
  %v9008 = vpop.f32.mrb[0].mxu0
  %9009 = vmatprep.mubr.bf16.mxu0 0
  %9010 = vmatmul.mubr.bf16.gmra.mrb[0].mxu0 %v8960
  %v9011 = vpop.f32.mrb[0].mxu0
  %v9012 = vadd.f32 0.0, %v9011
  %v9013 = vpop.f32.mrb[0].mxu0
  %v9014 = vpop.f32.mrb[0].mxu0
  %v9015 = vadd.f32 0.0, %v9014
  %v9016 = vpop.f32.mrb[0].mxu0
  %9017 = vmatprep.mubr.bf16.mxu0 0
  %9018 = vmatmul.mubr.bf16.gmra.mrb[0].mxu0 %v8963
  %v9019 = vpop.f32.mrb[0].mxu0
  %v9020 = vadd.f32 0.0, %v9019
  %v9021 = vpop.f32.mrb[0].mxu0
  %v9022 = vpop.f32.mrb[0].mxu0
  %v9023 = vadd.f32 0.0, %v9022
  %v9024 = vpop.f32.mrb[0].mxu0
  %9025 = vdwg.mxu0
  %v9033 = vunpack.c.l.b16 %v8873
  %v9034 = vunpack.c.l.b16 %v8874
  %v9035 = vunpack.c.l.b16 %v8875
  %v9036 = vunpack.c.l.b16 %v8876
  %v9037 = vunpack.c.l.b16 %v8877
  %v9038 = vunpack.c.l.b16 %v8878
  %v9039 = vunpack.c.l.b16 %v8879
  %v9040 = vpack.c.b16 %v9034, %v9033
  %v9041 = vpack.c.b16 %v9036, %v9035
  %v9042 = vpack.c.b16 %v9038, %v9037
  %v9043 = vpack.c.b16 %v9039, %v9039
  %v9047 = vsel %vm104, %v8903, 0
  %v9049 = vsel %vm104, %v8904, 0
  %v9051 = vsel %vm104, %v8905, 0
  %v9054 = vsel %vm8965, %v9043, 0
  %9056 = vmatprep.subr.bf16.mxu0 0
  %9057 = vmatpush1.bf16.msra.mxu0 %v9040
  %9058 = vmatprep.subr.bf16.mxu0 0
  %9059 = vmatpush1.bf16.msra.mxu0 %v9041
  %9060 = vmatprep.subr.bf16.mxu0 0
  %9061 = vmatpush1.bf16.msra.mxu0 %v9042
  %9062 = vmatprep.subr.bf16.mxu0 0
  %9063 = vmatpush1.bf16.msra.mxu0 %v9054
  %9064 = vmatprep.subr.bf16.mxu0 0
  %9065 = vmatpush1.bf16.msra.mxu0 0
  %9066 = vmatprep.subr.bf16.mxu0 0
  %9067 = vmatpush1.bf16.msra.mxu0 0
  %9068 = vmatprep.subr.bf16.mxu0 0
  %9069 = vmatpush1.bf16.msra.mxu0 0
  %9070 = vmatprep.subr.bf16.mxu0 0
  %9071 = vmatpush1.bf16.msra.mxu0 0
  %9072 = vmatprep.subr.bf16.mxu0 0
  %9073 = vmatpush1.bf16.msra.mxu0 0
  %9074 = vmatprep.subr.bf16.mxu0 0
  %9075 = vmatpush1.bf16.msra.mxu0 0
  %9076 = vmatprep.subr.bf16.mxu0 0
  %9077 = vmatpush1.bf16.msra.mxu0 0
  %9078 = vmatprep.subr.bf16.mxu0 0
  %9079 = vmatpush1.bf16.msra.mxu0 0
  %9080 = vmatprep.subr.bf16.mxu0 0
  %9081 = vmatpush1.bf16.msra.mxu0 0
  %9082 = vmatprep.subr.bf16.mxu0 0
  %9083 = vmatpush1.bf16.msra.mxu0 0
  %9084 = vmatprep.subr.bf16.mxu0 0
  %9085 = vmatpush1.bf16.msra.mxu0 0
  %9086 = vmatprep.subr.bf16.mxu0 0
  %9087 = vmatpush1.bf16.msra.mxu0 0
  %9088 = vmatprep.mubr.bf16.mxu0 0
  %9089 = vmatmul.mubr.bf16.gmra.mrb[0].mxu0 %v9047
  %v9090 = vpop.f32.mrb[0].mxu0
  %v9091 = vadd.f32 %v9004, %v9090
  %v9092 = vpop.f32.mrb[0].mxu0
  %v9093 = vpop.f32.mrb[0].mxu0
  %v9094 = vadd.f32 %v9007, %v9093
  %v9095 = vpop.f32.mrb[0].mxu0
  %9096 = vmatprep.mubr.bf16.mxu0 0
  %9097 = vmatmul.mubr.bf16.gmra.mrb[0].mxu0 %v9049
  %v9098 = vpop.f32.mrb[0].mxu0
  %v9099 = vadd.f32 %v9012, %v9098
  %v9100 = vpop.f32.mrb[0].mxu0
  %v9101 = vpop.f32.mrb[0].mxu0
  %v9102 = vadd.f32 %v9015, %v9101
  %v9103 = vpop.f32.mrb[0].mxu0
  %9104 = vmatprep.mubr.bf16.mxu0 0
  %9105 = vmatmul.mubr.bf16.gmra.mrb[0].mxu0 %v9051
  %v9106 = vpop.f32.mrb[0].mxu0
  %v9107 = vadd.f32 %v9020, %v9106
  %v9108 = vpop.f32.mrb[0].mxu0
  %v9109 = vpop.f32.mrb[0].mxu0
  %v9110 = vadd.f32 %v9023, %v9109
  %v9111 = vpop.f32.mrb[0].mxu0
  %9112 = vdwg.mxu0
  %v9113 = vld [vmem:[#allocation6] sm:$0xe]
  %s9114 = scalar_lea.vmem %s7, 56
  %v9115 = vld [vmem:[%s9114] sm:$0xf]
  %v9116 = vld [vmem:[%s9114 + $0x4] sm:$0xf]
  %v9117 = vld [vmem:[%s9114 + $0x8] sm:$0xf]
  %v9118 = vld [vmem:[%s9114 + $0xc] sm:$0xf]
  %v9119 = vld [vmem:[%s9114 + $0x10] sm:$0xf]
  %v9120 = vld [vmem:[%s9114 + $0x14] sm:$0xf]
  %v9121 = vld [vmem:[%s9114 + $0x18] sm:$0x1]
  %v9123 = vunpack.c.l.b16 %v9113
  %v9124 = vpack.c.b16 %v8897, %v9123
  %v9125 = vrot.slane %v9124, 1
  %v9126 = vrot.slane %v8904, 1
  %v9127 = vsel %vm4641, %v9125, %v9126
  %v9128 = vrot.slane %v8905, 1
  %v9129 = vsel %vm4641, %v9126, %v9128
  %v9130 = vrot.slane %v8906, 1
  %v9131 = vsel %vm4641, %v9128, %v9130
  %v9139 = vunpack.c.l.b16 %v9115
  %v9140 = vunpack.c.l.b16 %v9116
  %v9141 = vunpack.c.l.b16 %v9117
  %v9142 = vunpack.c.l.b16 %v9118
  %v9143 = vunpack.c.l.b16 %v9119
  %v9144 = vunpack.c.l.b16 %v9120
  %v9145 = vunpack.c.l.b16 %v9121
  %v9146 = vpack.c.b16 %v9140, %v9139
  %v9147 = vpack.c.b16 %v9142, %v9141
  %v9148 = vpack.c.b16 %v9144, %v9143
  %v9149 = vpack.c.b16 %v9145, %v9145
  %v9154 = vsel %vm104, %v9127, 0
  %v9157 = vsel %vm104, %v9129, 0
  %v9160 = vsel %vm104, %v9131, 0
  %v9163 = vsel %vm8965, %v9149, 0
  %9165 = vmatprep.subr.bf16.mxu0 0
  %9166 = vmatpush1.bf16.msra.mxu0 %v9146
  %9167 = vmatprep.subr.bf16.mxu0 0
  %9168 = vmatpush1.bf16.msra.mxu0 %v9147
  %9169 = vmatprep.subr.bf16.mxu0 0
  %9170 = vmatpush1.bf16.msra.mxu0 %v9148
  %9171 = vmatprep.subr.bf16.mxu0 0
  %9172 = vmatpush1.bf16.msra.mxu0 %v9163
  %9173 = vmatprep.subr.bf16.mxu0 0
  %9174 = vmatpush1.bf16.msra.mxu0 0
  %9175 = vmatprep.subr.bf16.mxu0 0
  %9176 = vmatpush1.bf16.msra.mxu0 0
  %9177 = vmatprep.subr.bf16.mxu0 0
  %9178 = vmatpush1.bf16.msra.mxu0 0
  %9179 = vmatprep.subr.bf16.mxu0 0
  %9180 = vmatpush1.bf16.msra.mxu0 0
  %9181 = vmatprep.subr.bf16.mxu0 0
  %9182 = vmatpush1.bf16.msra.mxu0 0
  %9183 = vmatprep.subr.bf16.mxu0 0
  %9184 = vmatpush1.bf16.msra.mxu0 0
  %9185 = vmatprep.subr.bf16.mxu0 0
  %9186 = vmatpush1.bf16.msra.mxu0 0
  %9187 = vmatprep.subr.bf16.mxu0 0
  %9188 = vmatpush1.bf16.msra.mxu0 0
  %9189 = vmatprep.subr.bf16.mxu0 0
  %9190 = vmatpush1.bf16.msra.mxu0 0
  %9191 = vmatprep.subr.bf16.mxu0 0
  %9192 = vmatpush1.bf16.msra.mxu0 0
  %9193 = vmatprep.subr.bf16.mxu0 0
  %9194 = vmatpush1.bf16.msra.mxu0 0
  %9195 = vmatprep.subr.bf16.mxu0 0
  %9196 = vmatpush1.bf16.msra.mxu0 0
  %9197 = vmatprep.mubr.bf16.mxu0 0
  %9198 = vmatmul.mubr.bf16.gmra.mrb[0].mxu0 %v9154
  %v9199 = vpop.f32.mrb[0].mxu0
  %v9200 = vadd.f32 0.0, %v9199
  %v9201 = vpop.f32.mrb[0].mxu0
  %v9202 = vpop.f32.mrb[0].mxu0
  %v9203 = vadd.f32 0.0, %v9202
  %v9204 = vpop.f32.mrb[0].mxu0
  %9205 = vmatprep.mubr.bf16.mxu0 0
  %9206 = vmatmul.mubr.bf16.gmra.mrb[0].mxu0 %v9157
  %v9207 = vpop.f32.mrb[0].mxu0
  %v9208 = vadd.f32 0.0, %v9207
  %v9209 = vpop.f32.mrb[0].mxu0
  %v9210 = vpop.f32.mrb[0].mxu0
  %v9211 = vadd.f32 0.0, %v9210
  %v9212 = vpop.f32.mrb[0].mxu0
  %9213 = vmatprep.mubr.bf16.mxu0 0
  %9214 = vmatmul.mubr.bf16.gmra.mrb[0].mxu0 %v9160
  %v9215 = vpop.f32.mrb[0].mxu0
  %v9216 = vadd.f32 0.0, %v9215
  %v9217 = vpop.f32.mrb[0].mxu0
  %v9218 = vpop.f32.mrb[0].mxu0
  %v9219 = vadd.f32 0.0, %v9218
  %v9220 = vpop.f32.mrb[0].mxu0
  %9221 = vdwg.mxu0
  %v9222 = vadd.f32 %v9091, %v9200
  %v9223 = vadd.f32 %v9094, %v9203
  %v9224 = vadd.f32 %v9099, %v9208
  %v9225 = vadd.f32 %v9102, %v9211
  %v9226 = vadd.f32 %v9107, %v9216
  %v9227 = vadd.f32 %v9110, %v9219
  %v9228 = vld [vmem:[#allocation6 + $0x18] sm:$0xf]
  %s9229 = scalar_lea.vmem %s7, 84
  %v9230 = vld [vmem:[%s9229] sm:$0xf]
  %v9231 = vld [vmem:[%s9229 + $0x4] sm:$0xf]
  %v9232 = vld [vmem:[%s9229 + $0x8] sm:$0xf]
  %v9233 = vld [vmem:[%s9229 + $0xc] sm:$0xf]
  %v9234 = vld [vmem:[%s9229 + $0x10] sm:$0xf]
  %v9235 = vld [vmem:[%s9229 + $0x14] sm:$0xf]
  %v9236 = vld [vmem:[%s9229 + $0x18] sm:$0x1]
  %v9238 = vunpack.c.l.b16 %v9228
  %v9239 = vpack.c.b16 %v8898, %v8897
  %v9240 = vpack.c.b16 %v8900, %v8899
  %v9241 = vpack.c.b16 %v9238, %v8901
  %v9249 = vunpack.c.l.b16 %v9230
  %v9250 = vunpack.c.l.b16 %v9231
  %v9251 = vunpack.c.l.b16 %v9232
  %v9252 = vunpack.c.l.b16 %v9233
  %v9253 = vunpack.c.l.b16 %v9234
  %v9254 = vunpack.c.l.b16 %v9235
  %v9255 = vunpack.c.l.b16 %v9236
  %v9256 = vpack.c.b16 %v9250, %v9249
  %v9257 = vpack.c.b16 %v9252, %v9251
  %v9258 = vpack.c.b16 %v9254, %v9253
  %v9259 = vpack.c.b16 %v9255, %v9255
  %v9264 = vsel %vm104, %v9239, 0
  %v9267 = vsel %vm104, %v9240, 0
  %v9270 = vsel %vm104, %v9241, 0
  %v9273 = vsel %vm8965, %v9259, 0
  %9275 = vmatprep.subr.bf16.mxu0 0
  %9276 = vmatpush1.bf16.msra.mxu0 %v9256
  %9277 = vmatprep.subr.bf16.mxu0 0
  %9278 = vmatpush1.bf16.msra.mxu0 %v9257
  %9279 = vmatprep.subr.bf16.mxu0 0
  %9280 = vmatpush1.bf16.msra.mxu0 %v9258
  %9281 = vmatprep.subr.bf16.mxu0 0
  %9282 = vmatpush1.bf16.msra.mxu0 %v9273
  %9283 = vmatprep.subr.bf16.mxu0 0
  %9284 = vmatpush1.bf16.msra.mxu0 0
  %9285 = vmatprep.subr.bf16.mxu0 0
  %9286 = vmatpush1.bf16.msra.mxu0 0
  %9287 = vmatprep.subr.bf16.mxu0 0
  %9288 = vmatpush1.bf16.msra.mxu0 0
  %9289 = vmatprep.subr.bf16.mxu0 0
  %9290 = vmatpush1.bf16.msra.mxu0 0
  %9291 = vmatprep.subr.bf16.mxu0 0
  %9292 = vmatpush1.bf16.msra.mxu0 0
  %9293 = vmatprep.subr.bf16.mxu0 0
  %9294 = vmatpush1.bf16.msra.mxu0 0
  %9295 = vmatprep.subr.bf16.mxu0 0
  %9296 = vmatpush1.bf16.msra.mxu0 0
  %9297 = vmatprep.subr.bf16.mxu0 0
  %9298 = vmatpush1.bf16.msra.mxu0 0
  %9299 = vmatprep.subr.bf16.mxu0 0
  %9300 = vmatpush1.bf16.msra.mxu0 0
  %9301 = vmatprep.subr.bf16.mxu0 0
  %9302 = vmatpush1.bf16.msra.mxu0 0
  %9303 = vmatprep.subr.bf16.mxu0 0
  %9304 = vmatpush1.bf16.msra.mxu0 0
  %9305 = vmatprep.subr.bf16.mxu0 0
  %9306 = vmatpush1.bf16.msra.mxu0 0
  %9307 = vmatprep.mubr.bf16.mxu0 0
  %9308 = vmatmul.mubr.bf16.gmra.mrb[0].mxu0 %v9264
  %v9309 = vpop.f32.mrb[0].mxu0
  %v9310 = vadd.f32 0.0, %v9309
  %v9311 = vpop.f32.mrb[0].mxu0
  %v9312 = vpop.f32.mrb[0].mxu0
  %v9313 = vadd.f32 0.0, %v9312
  %v9314 = vpop.f32.mrb[0].mxu0
  %9315 = vmatprep.mubr.bf16.mxu0 0
  %9316 = vmatmul.mubr.bf16.gmra.mrb[0].mxu0 %v9267
  %v9317 = vpop.f32.mrb[0].mxu0
  %v9318 = vadd.f32 0.0, %v9317
  %v9319 = vpop.f32.mrb[0].mxu0
  %v9320 = vpop.f32.mrb[0].mxu0
  %v9321 = vadd.f32 0.0, %v9320
  %v9322 = vpop.f32.mrb[0].mxu0
  %9323 = vmatprep.mubr.bf16.mxu0 0
  %9324 = vmatmul.mubr.bf16.gmra.mrb[0].mxu0 %v9270
  %v9325 = vpop.f32.mrb[0].mxu0
  %v9326 = vadd.f32 0.0, %v9325
  %v9327 = vpop.f32.mrb[0].mxu0
  %v9328 = vpop.f32.mrb[0].mxu0
  %v9329 = vadd.f32 0.0, %v9328
  %v9330 = vpop.f32.mrb[0].mxu0
  %9331 = vdwg.mxu0
  %v9332 = vadd.f32 %v9222, %v9310
  %v9333 = vadd.f32 %v9223, %v9313
  %v9334 = vadd.f32 %v9224, %v9318
  %v9335 = vadd.f32 %v9225, %v9321
  %v9336 = vadd.f32 %v9226, %v9326
  %v9337 = vadd.f32 %v9227, %v9329
  %v9338 = vld [vmem:[#allocation6 + $0x4] sm:$0xf]
  %v9339 = vld [vmem:[#allocation6 + $0x8] sm:$0xf]
  %v9340 = vld [vmem:[#allocation6 + $0xc] sm:$0xf]
  %v9341 = vld [vmem:[#allocation6 + $0x10] sm:$0xf]
  %v9342 = vld [vmem:[#allocation6 + $0x14] sm:$0xf]
  %v9343 = vld [vmem:[#allocation6 + $0x18] sm:$0xf]
  %v9344 = vld [vmem:[#allocation6 + $0x1c] sm:$0x1]
  %s9345 = scalar_lea.vmem %s7, 112
  %v9346 = vld [vmem:[%s9345] sm:$0xf]
  %v9347 = vld [vmem:[%s9345 + $0x4] sm:$0xf]
  %v9348 = vld [vmem:[%s9345 + $0x8] sm:$0xf]
  %v9349 = vld [vmem:[%s9345 + $0xc] sm:$0xf]
  %v9350 = vld [vmem:[%s9345 + $0x10] sm:$0xf]
  %v9351 = vld [vmem:[%s9345 + $0x14] sm:$0xf]
  %v9352 = vld [vmem:[%s9345 + $0x18] sm:$0x1]
  %v9360 = vunpack.c.l.b16 %v9338
  %v9361 = vunpack.c.l.b16 %v9339
  %v9362 = vunpack.c.l.b16 %v9340
  %v9363 = vunpack.c.l.b16 %v9341
  %v9364 = vunpack.c.l.b16 %v9342
  %v9365 = vunpack.c.l.b16 %v9343
  %v9366 = vunpack.c.l.b16 %v9344
  %v9367 = vpack.c.b16 %v9361, %v9360
  %v9368 = vpack.c.b16 %v9363, %v9362
  %v9369 = vpack.c.b16 %v9365, %v9364
  %v9370 = vpack.c.b16 %v9366, %v9366
  %v9372 = vshrl.u32 %v9367, 16
  %v9374 = vshll.u32 %v9367, 16
  %v9376 = vrot.slane %v9374, 1
  %v9377 = vor.u32 %v9372, %v9376
  %v9379 = vshll.u32 %v9368, 16
  %v9381 = vrot.slane %v9379, 1
  %v9382 = vsel %vm4356, %v9377, %v9381
  %v9383 = vshrl.u32 %v9368, 16
  %v9385 = vor.u32 %v9383, %v9381
  %v9387 = vshll.u32 %v9369, 16
  %v9389 = vrot.slane %v9387, 1
  %v9390 = vsel %vm4356, %v9385, %v9389
  %v9391 = vshrl.u32 %v9369, 16
  %v9393 = vor.u32 %v9391, %v9389
  %v9395 = vshll.u32 %v9370, 16
  %v9397 = vrot.slane %v9395, 1
  %v9398 = vsel %vm4356, %v9393, %v9397
  %v9406 = vunpack.c.l.b16 %v9346
  %v9407 = vunpack.c.l.b16 %v9347
  %v9408 = vunpack.c.l.b16 %v9348
  %v9409 = vunpack.c.l.b16 %v9349
  %v9410 = vunpack.c.l.b16 %v9350
  %v9411 = vunpack.c.l.b16 %v9351
  %v9412 = vunpack.c.l.b16 %v9352
  %v9413 = vpack.c.b16 %v9407, %v9406
  %v9414 = vpack.c.b16 %v9409, %v9408
  %v9415 = vpack.c.b16 %v9411, %v9410
  %v9416 = vpack.c.b16 %v9412, %v9412
  %v9421 = vsel %vm104, %v9382, 0
  %v9424 = vsel %vm104, %v9390, 0
  %v9427 = vsel %vm104, %v9398, 0
  %v9430 = vsel %vm8965, %v9416, 0
  %9432 = vmatprep.subr.bf16.mxu0 0
  %9433 = vmatpush1.bf16.msra.mxu0 %v9413
  %9434 = vmatprep.subr.bf16.mxu0 0
  %9435 = vmatpush1.bf16.msra.mxu0 %v9414
  %9436 = vmatprep.subr.bf16.mxu0 0
  %9437 = vmatpush1.bf16.msra.mxu0 %v9415
  %9438 = vmatprep.subr.bf16.mxu0 0
  %9439 = vmatpush1.bf16.msra.mxu0 %v9430
  %9440 = vmatprep.subr.bf16.mxu0 0
  %9441 = vmatpush1.bf16.msra.mxu0 0
  %9442 = vmatprep.subr.bf16.mxu0 0
  %9443 = vmatpush1.bf16.msra.mxu0 0
  %9444 = vmatprep.subr.bf16.mxu0 0
  %9445 = vmatpush1.bf16.msra.mxu0 0
  %9446 = vmatprep.subr.bf16.mxu0 0
  %9447 = vmatpush1.bf16.msra.mxu0 0
  %9448 = vmatprep.subr.bf16.mxu0 0
  %9449 = vmatpush1.bf16.msra.mxu0 0
  %9450 = vmatprep.subr.bf16.mxu0 0
  %9451 = vmatpush1.bf16.msra.mxu0 0
  %9452 = vmatprep.subr.bf16.mxu0 0
  %9453 = vmatpush1.bf16.msra.mxu0 0
  %9454 = vmatprep.subr.bf16.mxu0 0
  %9455 = vmatpush1.bf16.msra.mxu0 0
  %9456 = vmatprep.subr.bf16.mxu0 0
  %9457 = vmatpush1.bf16.msra.mxu0 0
  %9458 = vmatprep.subr.bf16.mxu0 0
  %9459 = vmatpush1.bf16.msra.mxu0 0
  %9460 = vmatprep.subr.bf16.mxu0 0
  %9461 = vmatpush1.bf16.msra.mxu0 0
  %9462 = vmatprep.subr.bf16.mxu0 0
  %9463 = vmatpush1.bf16.msra.mxu0 0
  %9464 = vmatprep.mubr.bf16.mxu0 0
  %9465 = vmatmul.mubr.bf16.gmra.mrb[0].mxu0 %v9421
  %v9466 = vpop.f32.mrb[0].mxu0
  %v9467 = vadd.f32 0.0, %v9466
  %v9468 = vpop.f32.mrb[0].mxu0
  %v9469 = vpop.f32.mrb[0].mxu0
  %v9470 = vadd.f32 0.0, %v9469
  %v9471 = vpop.f32.mrb[0].mxu0
  %9472 = vmatprep.mubr.bf16.mxu0 0
  %9473 = vmatmul.mubr.bf16.gmra.mrb[0].mxu0 %v9424
  %v9474 = vpop.f32.mrb[0].mxu0
  %v9475 = vadd.f32 0.0, %v9474
  %v9476 = vpop.f32.mrb[0].mxu0
  %v9477 = vpop.f32.mrb[0].mxu0
  %v9478 = vadd.f32 0.0, %v9477
  %v9479 = vpop.f32.mrb[0].mxu0
  %9480 = vmatprep.mubr.bf16.mxu0 0
  %9481 = vmatmul.mubr.bf16.gmra.mrb[0].mxu0 %v9427
  %v9482 = vpop.f32.mrb[0].mxu0
  %v9483 = vadd.f32 0.0, %v9482
  %v9484 = vpop.f32.mrb[0].mxu0
  %v9485 = vpop.f32.mrb[0].mxu0
  %v9486 = vadd.f32 0.0, %v9485
  %v9487 = vpop.f32.mrb[0].mxu0
  %9488 = vdwg.mxu0
  %v9489 = vadd.f32 %v9332, %v9467
  %v9490 = vadd.f32 %v9333, %v9470
  %v9491 = vadd.f32 %v9334, %v9475
  %v9492 = vadd.f32 %v9335, %v9478
  %v9493 = vadd.f32 %v9336, %v9483
  %v9494 = vadd.f32 %v9337, %v9486
  %v9495 = vld [vmem:[#allocation6 + $0x4] sm:$0xe]
  %s9496 = scalar_lea.vmem %s7, 140
  %v9497 = vld [vmem:[%s9496] sm:$0xf]
  %v9498 = vld [vmem:[%s9496 + $0x4] sm:$0xf]
  %v9499 = vld [vmem:[%s9496 + $0x8] sm:$0xf]
  %v9500 = vld [vmem:[%s9496 + $0xc] sm:$0xf]
  %v9501 = vld [vmem:[%s9496 + $0x10] sm:$0xf]
  %v9502 = vld [vmem:[%s9496 + $0x14] sm:$0xf]
  %v9503 = vld [vmem:[%s9496 + $0x18] sm:$0x1]
  %v9505 = vunpack.c.l.b16 %v9495
  %v9506 = vpack.c.b16 %v9361, %v9505
  %v9507 = vrot.slane %v9506, 1
  %v9508 = vrot.slane %v9368, 1
  %v9509 = vsel %vm4641, %v9507, %v9508
  %v9510 = vrot.slane %v9369, 1
  %v9511 = vsel %vm4641, %v9508, %v9510
  %v9512 = vrot.slane %v9370, 1
  %v9513 = vsel %vm4641, %v9510, %v9512
  %v9521 = vunpack.c.l.b16 %v9497
  %v9522 = vunpack.c.l.b16 %v9498
  %v9523 = vunpack.c.l.b16 %v9499
  %v9524 = vunpack.c.l.b16 %v9500
  %v9525 = vunpack.c.l.b16 %v9501
  %v9526 = vunpack.c.l.b16 %v9502
  %v9527 = vunpack.c.l.b16 %v9503
  %v9528 = vpack.c.b16 %v9522, %v9521
  %v9529 = vpack.c.b16 %v9524, %v9523
  %v9530 = vpack.c.b16 %v9526, %v9525
  %v9531 = vpack.c.b16 %v9527, %v9527
  %v9536 = vsel %vm104, %v9509, 0
  %v9539 = vsel %vm104, %v9511, 0
  %v9542 = vsel %vm104, %v9513, 0
  %v9545 = vsel %vm8965, %v9531, 0
  %9547 = vmatprep.subr.bf16.mxu0 0
  %9548 = vmatpush1.bf16.msra.mxu0 %v9528
  %9549 = vmatprep.subr.bf16.mxu0 0
  %9550 = vmatpush1.bf16.msra.mxu0 %v9529
  %9551 = vmatprep.subr.bf16.mxu0 0
  %9552 = vmatpush1.bf16.msra.mxu0 %v9530
  %9553 = vmatprep.subr.bf16.mxu0 0
  %9554 = vmatpush1.bf16.msra.mxu0 %v9545
  %9555 = vmatprep.subr.bf16.mxu0 0
  %9556 = vmatpush1.bf16.msra.mxu0 0
  %9557 = vmatprep.subr.bf16.mxu0 0
  %9558 = vmatpush1.bf16.msra.mxu0 0
  %9559 = vmatprep.subr.bf16.mxu0 0
  %9560 = vmatpush1.bf16.msra.mxu0 0
  %9561 = vmatprep.subr.bf16.mxu0 0
  %9562 = vmatpush1.bf16.msra.mxu0 0
  %9563 = vmatprep.subr.bf16.mxu0 0
  %9564 = vmatpush1.bf16.msra.mxu0 0
  %9565 = vmatprep.subr.bf16.mxu0 0
  %9566 = vmatpush1.bf16.msra.mxu0 0
  %9567 = vmatprep.subr.bf16.mxu0 0
  %9568 = vmatpush1.bf16.msra.mxu0 0
  %9569 = vmatprep.subr.bf16.mxu0 0
  %9570 = vmatpush1.bf16.msra.mxu0 0
  %9571 = vmatprep.subr.bf16.mxu0 0
  %9572 = vmatpush1.bf16.msra.mxu0 0
  %9573 = vmatprep.subr.bf16.mxu0 0
  %9574 = vmatpush1.bf16.msra.mxu0 0
  %9575 = vmatprep.subr.bf16.mxu0 0
  %9576 = vmatpush1.bf16.msra.mxu0 0
  %9577 = vmatprep.subr.bf16.mxu0 0
  %9578 = vmatpush1.bf16.msra.mxu0 0
  %9579 = vmatprep.mubr.bf16.mxu0 0
  %9580 = vmatmul.mubr.bf16.gmra.mrb[0].mxu0 %v9536
  %v9581 = vpop.f32.mrb[0].mxu0
  %v9582 = vadd.f32 0.0, %v9581
  %v9583 = vpop.f32.mrb[0].mxu0
  %v9584 = vpop.f32.mrb[0].mxu0
  %v9585 = vadd.f32 0.0, %v9584
  %v9586 = vpop.f32.mrb[0].mxu0
  %9587 = vmatprep.mubr.bf16.mxu0 0
  %9588 = vmatmul.mubr.bf16.gmra.mrb[0].mxu0 %v9539
  %v9589 = vpop.f32.mrb[0].mxu0
  %v9590 = vadd.f32 0.0, %v9589
  %v9591 = vpop.f32.mrb[0].mxu0
  %v9592 = vpop.f32.mrb[0].mxu0
  %v9593 = vadd.f32 0.0, %v9592
  %v9594 = vpop.f32.mrb[0].mxu0
  %9595 = vmatprep.mubr.bf16.mxu0 0
  %9596 = vmatmul.mubr.bf16.gmra.mrb[0].mxu0 %v9542
  %v9597 = vpop.f32.mrb[0].mxu0
  %v9598 = vadd.f32 0.0, %v9597
  %v9599 = vpop.f32.mrb[0].mxu0
  %v9600 = vpop.f32.mrb[0].mxu0
  %v9601 = vadd.f32 0.0, %v9600
  %v9602 = vpop.f32.mrb[0].mxu0
  %9603 = vdwg.mxu0
  %v9604 = vadd.f32 %v9489, %v9582
  %v9605 = vadd.f32 %v9490, %v9585
  %v9606 = vadd.f32 %v9491, %v9590
  %v9607 = vadd.f32 %v9492, %v9593
  %v9608 = vadd.f32 %v9493, %v9598
  %v9609 = vadd.f32 %v9494, %v9601
  %v9610 = vld [vmem:[#allocation6 + $0x1c] sm:$0xf]
  %s9611 = scalar_lea.vmem %s7, 168
  %v9612 = vld [vmem:[%s9611] sm:$0xf]
  %v9613 = vld [vmem:[%s9611 + $0x4] sm:$0xf]
  %v9614 = vld [vmem:[%s9611 + $0x8] sm:$0xf]
  %v9615 = vld [vmem:[%s9611 + $0xc] sm:$0xf]
  %v9616 = vld [vmem:[%s9611 + $0x10] sm:$0xf]
  %v9617 = vld [vmem:[%s9611 + $0x14] sm:$0xf]
  %v9618 = vld [vmem:[%s9611 + $0x18] sm:$0x1]
  %v9620 = vunpack.c.l.b16 %v9610
  %v9621 = vpack.c.b16 %v9362, %v9361
  %v9622 = vpack.c.b16 %v9364, %v9363
  %v9623 = vpack.c.b16 %v9620, %v9365
  %v9631 = vunpack.c.l.b16 %v9612
  %v9632 = vunpack.c.l.b16 %v9613
  %v9633 = vunpack.c.l.b16 %v9614
  %v9634 = vunpack.c.l.b16 %v9615
  %v9635 = vunpack.c.l.b16 %v9616
  %v9636 = vunpack.c.l.b16 %v9617
  %v9637 = vunpack.c.l.b16 %v9618
  %v9638 = vpack.c.b16 %v9632, %v9631
  %v9639 = vpack.c.b16 %v9634, %v9633
  %v9640 = vpack.c.b16 %v9636, %v9635
  %v9641 = vpack.c.b16 %v9637, %v9637
  %v9646 = vsel %vm104, %v9621, 0
  %v9649 = vsel %vm104, %v9622, 0
  %v9652 = vsel %vm104, %v9623, 0
  %v9655 = vsel %vm8965, %v9641, 0
  %9657 = vmatprep.subr.bf16.mxu0 0
  %9658 = vmatpush1.bf16.msra.mxu0 %v9638
  %9659 = vmatprep.subr.bf16.mxu0 0
  %9660 = vmatpush1.bf16.msra.mxu0 %v9639
  %9661 = vmatprep.subr.bf16.mxu0 0
  %9662 = vmatpush1.bf16.msra.mxu0 %v9640
  %9663 = vmatprep.subr.bf16.mxu0 0
  %9664 = vmatpush1.bf16.msra.mxu0 %v9655
  %9665 = vmatprep.subr.bf16.mxu0 0
  %9666 = vmatpush1.bf16.msra.mxu0 0
  %9667 = vmatprep.subr.bf16.mxu0 0
  %9668 = vmatpush1.bf16.msra.mxu0 0
  %9669 = vmatprep.subr.bf16.mxu0 0
  %9670 = vmatpush1.bf16.msra.mxu0 0
  %9671 = vmatprep.subr.bf16.mxu0 0
  %9672 = vmatpush1.bf16.msra.mxu0 0
  %9673 = vmatprep.subr.bf16.mxu0 0
  %9674 = vmatpush1.bf16.msra.mxu0 0
  %9675 = vmatprep.subr.bf16.mxu0 0
  %9676 = vmatpush1.bf16.msra.mxu0 0
  %9677 = vmatprep.subr.bf16.mxu0 0
  %9678 = vmatpush1.bf16.msra.mxu0 0
  %9679 = vmatprep.subr.bf16.mxu0 0
  %9680 = vmatpush1.bf16.msra.mxu0 0
  %9681 = vmatprep.subr.bf16.mxu0 0
  %9682 = vmatpush1.bf16.msra.mxu0 0
  %9683 = vmatprep.subr.bf16.mxu0 0
  %9684 = vmatpush1.bf16.msra.mxu0 0
  %9685 = vmatprep.subr.bf16.mxu0 0
  %9686 = vmatpush1.bf16.msra.mxu0 0
  %9687 = vmatprep.subr.bf16.mxu0 0
  %9688 = vmatpush1.bf16.msra.mxu0 0
  %9689 = vmatprep.mubr.bf16.mxu0 0
  %9690 = vmatmul.mubr.bf16.gmra.mrb[0].mxu0 %v9646
  %v9691 = vpop.f32.mrb[0].mxu0
  %v9692 = vadd.f32 0.0, %v9691
  %v9693 = vpop.f32.mrb[0].mxu0
  %v9694 = vpop.f32.mrb[0].mxu0
  %v9695 = vadd.f32 0.0, %v9694
  %v9696 = vpop.f32.mrb[0].mxu0
  %9697 = vmatprep.mubr.bf16.mxu0 0
  %9698 = vmatmul.mubr.bf16.gmra.mrb[0].mxu0 %v9649
  %v9699 = vpop.f32.mrb[0].mxu0
  %v9700 = vadd.f32 0.0, %v9699
  %v9701 = vpop.f32.mrb[0].mxu0
  %v9702 = vpop.f32.mrb[0].mxu0
  %v9703 = vadd.f32 0.0, %v9702
  %v9704 = vpop.f32.mrb[0].mxu0
  %9705 = vmatprep.mubr.bf16.mxu0 0
  %9706 = vmatmul.mubr.bf16.gmra.mrb[0].mxu0 %v9652
  %v9707 = vpop.f32.mrb[0].mxu0
  %v9708 = vadd.f32 0.0, %v9707
  %v9709 = vpop.f32.mrb[0].mxu0
  %v9710 = vpop.f32.mrb[0].mxu0
  %v9711 = vadd.f32 0.0, %v9710
  %v9712 = vpop.f32.mrb[0].mxu0
  %9713 = vdwg.mxu0
  %v9714 = vadd.f32 %v9604, %v9692
  %v9715 = vadd.f32 %v9605, %v9695
  %v9716 = vadd.f32 %v9606, %v9700
  %v9717 = vadd.f32 %v9607, %v9703
  %v9718 = vadd.f32 %v9608, %v9708
  %v9719 = vadd.f32 %v9609, %v9711
  %v9720 = vld [vmem:[#allocation6 + $0x8] sm:$0xf]
  %v9721 = vld [vmem:[#allocation6 + $0xc] sm:$0xf]
  %v9722 = vld [vmem:[#allocation6 + $0x10] sm:$0xf]
  %v9723 = vld [vmem:[#allocation6 + $0x14] sm:$0xf]
  %v9724 = vld [vmem:[#allocation6 + $0x18] sm:$0xf]
  %v9725 = vld [vmem:[#allocation6 + $0x1c] sm:$0xf]
  %v9726 = vld [vmem:[#allocation6 + $0x20] sm:$0x1]
  %s9727 = scalar_lea.vmem %s7, 196
  %v9728 = vld [vmem:[%s9727] sm:$0xf]
  %v9729 = vld [vmem:[%s9727 + $0x4] sm:$0xf]
  %v9730 = vld [vmem:[%s9727 + $0x8] sm:$0xf]
  %v9731 = vld [vmem:[%s9727 + $0xc] sm:$0xf]
  %v9732 = vld [vmem:[%s9727 + $0x10] sm:$0xf]
  %v9733 = vld [vmem:[%s9727 + $0x14] sm:$0xf]
  %v9734 = vld [vmem:[%s9727 + $0x18] sm:$0x1]
  %v9742 = vunpack.c.l.b16 %v9720
  %v9743 = vunpack.c.l.b16 %v9721
  %v9744 = vunpack.c.l.b16 %v9722
  %v9745 = vunpack.c.l.b16 %v9723
  %v9746 = vunpack.c.l.b16 %v9724
  %v9747 = vunpack.c.l.b16 %v9725
  %v9748 = vunpack.c.l.b16 %v9726
  %v9749 = vpack.c.b16 %v9743, %v9742
  %v9750 = vpack.c.b16 %v9745, %v9744
  %v9751 = vpack.c.b16 %v9747, %v9746
  %v9752 = vpack.c.b16 %v9748, %v9748
  %v9754 = vshrl.u32 %v9749, 16
  %v9756 = vshll.u32 %v9749, 16
  %v9758 = vrot.slane %v9756, 1
  %v9759 = vor.u32 %v9754, %v9758
  %v9761 = vshll.u32 %v9750, 16
  %v9763 = vrot.slane %v9761, 1
  %v9764 = vsel %vm4356, %v9759, %v9763
  %v9765 = vshrl.u32 %v9750, 16
  %v9767 = vor.u32 %v9765, %v9763
  %v9769 = vshll.u32 %v9751, 16
  %v9771 = vrot.slane %v9769, 1
  %v9772 = vsel %vm4356, %v9767, %v9771
  %v9773 = vshrl.u32 %v9751, 16
  %v9775 = vor.u32 %v9773, %v9771
  %v9777 = vshll.u32 %v9752, 16
  %v9779 = vrot.slane %v9777, 1
  %v9780 = vsel %vm4356, %v9775, %v9779
  %v9788 = vunpack.c.l.b16 %v9728
  %v9789 = vunpack.c.l.b16 %v9729
  %v9790 = vunpack.c.l.b16 %v9730
  %v9791 = vunpack.c.l.b16 %v9731
  %v9792 = vunpack.c.l.b16 %v9732
  %v9793 = vunpack.c.l.b16 %v9733
  %v9794 = vunpack.c.l.b16 %v9734
  %v9795 = vpack.c.b16 %v9789, %v9788
  %v9796 = vpack.c.b16 %v9791, %v9790
  %v9797 = vpack.c.b16 %v9793, %v9792
  %v9798 = vpack.c.b16 %v9794, %v9794
  %v9803 = vsel %vm104, %v9764, 0
  %v9806 = vsel %vm104, %v9772, 0
  %v9809 = vsel %vm104, %v9780, 0
  %v9812 = vsel %vm8965, %v9798, 0
  %9814 = vmatprep.subr.bf16.mxu0 0
  %9815 = vmatpush1.bf16.msra.mxu0 %v9795
  %9816 = vmatprep.subr.bf16.mxu0 0
  %9817 = vmatpush1.bf16.msra.mxu0 %v9796
  %9818 = vmatprep.subr.bf16.mxu0 0
  %9819 = vmatpush1.bf16.msra.mxu0 %v9797
  %9820 = vmatprep.subr.bf16.mxu0 0
  %9821 = vmatpush1.bf16.msra.mxu0 %v9812
  %9822 = vmatprep.subr.bf16.mxu0 0
  %9823 = vmatpush1.bf16.msra.mxu0 0
  %9824 = vmatprep.subr.bf16.mxu0 0
  %9825 = vmatpush1.bf16.msra.mxu0 0
  %9826 = vmatprep.subr.bf16.mxu0 0
  %9827 = vmatpush1.bf16.msra.mxu0 0
  %9828 = vmatprep.subr.bf16.mxu0 0
  %9829 = vmatpush1.bf16.msra.mxu0 0
  %9830 = vmatprep.subr.bf16.mxu0 0
  %9831 = vmatpush1.bf16.msra.mxu0 0
  %9832 = vmatprep.subr.bf16.mxu0 0
  %9833 = vmatpush1.bf16.msra.mxu0 0
  %9834 = vmatprep.subr.bf16.mxu0 0
  %9835 = vmatpush1.bf16.msra.mxu0 0
  %9836 = vmatprep.subr.bf16.mxu0 0
  %9837 = vmatpush1.bf16.msra.mxu0 0
  %9838 = vmatprep.subr.bf16.mxu0 0
  %9839 = vmatpush1.bf16.msra.mxu0 0
  %9840 = vmatprep.subr.bf16.mxu0 0
  %9841 = vmatpush1.bf16.msra.mxu0 0
  %9842 = vmatprep.subr.bf16.mxu0 0
  %9843 = vmatpush1.bf16.msra.mxu0 0
  %9844 = vmatprep.subr.bf16.mxu0 0
  %9845 = vmatpush1.bf16.msra.mxu0 0
  %9846 = vmatprep.mubr.bf16.mxu0 0
  %9847 = vmatmul.mubr.bf16.gmra.mrb[0].mxu0 %v9803
  %v9848 = vpop.f32.mrb[0].mxu0
  %v9849 = vadd.f32 0.0, %v9848
  %v9850 = vpop.f32.mrb[0].mxu0
  %v9851 = vpop.f32.mrb[0].mxu0
  %v9852 = vadd.f32 0.0, %v9851
  %v9853 = vpop.f32.mrb[0].mxu0
  %9854 = vmatprep.mubr.bf16.mxu0 0
  %9855 = vmatmul.mubr.bf16.gmra.mrb[0].mxu0 %v9806
  %v9856 = vpop.f32.mrb[0].mxu0
  %v9857 = vadd.f32 0.0, %v9856
  %v9858 = vpop.f32.mrb[0].mxu0
  %v9859 = vpop.f32.mrb[0].mxu0
  %v9860 = vadd.f32 0.0, %v9859
  %v9861 = vpop.f32.mrb[0].mxu0
  %9862 = vmatprep.mubr.bf16.mxu0 0
  %9863 = vmatmul.mubr.bf16.gmra.mrb[0].mxu0 %v9809
  %v9864 = vpop.f32.mrb[0].mxu0
  %v9865 = vadd.f32 0.0, %v9864
  %v9866 = vpop.f32.mrb[0].mxu0
  %v9867 = vpop.f32.mrb[0].mxu0
  %v9868 = vadd.f32 0.0, %v9867
  %v9869 = vpop.f32.mrb[0].mxu0
  %9870 = vdwg.mxu0
  %v9871 = vadd.f32 %v9714, %v9849
  %v9872 = vadd.f32 %v9715, %v9852
  %v9873 = vadd.f32 %v9716, %v9857
  %v9874 = vadd.f32 %v9717, %v9860
  %v9875 = vadd.f32 %v9718, %v9865
  %v9876 = vadd.f32 %v9719, %v9868
  %v9877 = vld [vmem:[#allocation6 + $0x8] sm:$0xe]
  %s9878 = scalar_lea.vmem %s7, 224
  %v9879 = vld [vmem:[%s9878] sm:$0xf]
  %v9880 = vld [vmem:[%s9878 + $0x4] sm:$0xf]
  %v9881 = vld [vmem:[%s9878 + $0x8] sm:$0xf]
  %v9882 = vld [vmem:[%s9878 + $0xc] sm:$0xf]
  %v9883 = vld [vmem:[%s9878 + $0x10] sm:$0xf]
  %v9884 = vld [vmem:[%s9878 + $0x14] sm:$0xf]
  %v9885 = vld [vmem:[%s9878 + $0x18] sm:$0x1]
  %v9887 = vunpack.c.l.b16 %v9877
  %v9888 = vpack.c.b16 %v9743, %v9887
  %v9889 = vrot.slane %v9888, 1
  %v9890 = vrot.slane %v9750, 1
  %v9891 = vsel %vm4641, %v9889, %v9890
  %v9892 = vrot.slane %v9751, 1
  %v9893 = vsel %vm4641, %v9890, %v9892
  %v9894 = vrot.slane %v9752, 1
  %v9895 = vsel %vm4641, %v9892, %v9894
  %v9903 = vunpack.c.l.b16 %v9879
  %v9904 = vunpack.c.l.b16 %v9880
  %v9905 = vunpack.c.l.b16 %v9881
  %v9906 = vunpack.c.l.b16 %v9882
  %v9907 = vunpack.c.l.b16 %v9883
  %v9908 = vunpack.c.l.b16 %v9884
  %v9909 = vunpack.c.l.b16 %v9885
  %v9910 = vpack.c.b16 %v9904, %v9903
  %v9911 = vpack.c.b16 %v9906, %v9905
  %v9912 = vpack.c.b16 %v9908, %v9907
  %v9913 = vpack.c.b16 %v9909, %v9909
  %v9918 = vsel %vm104, %v9891, 0
  %v9921 = vsel %vm104, %v9893, 0
  %v9924 = vsel %vm104, %v9895, 0
  %v9927 = vsel %vm8965, %v9913, 0
  %9929 = vmatprep.subr.bf16.mxu0 0
  %9930 = vmatpush1.bf16.msra.mxu0 %v9910
  %9931 = vmatprep.subr.bf16.mxu0 0
  %9932 = vmatpush1.bf16.msra.mxu0 %v9911
  %9933 = vmatprep.subr.bf16.mxu0 0
  %9934 = vmatpush1.bf16.msra.mxu0 %v9912
  %9935 = vmatprep.subr.bf16.mxu0 0
  %9936 = vmatpush1.bf16.msra.mxu0 %v9927
  %9937 = vmatprep.subr.bf16.mxu0 0
  %9938 = vmatpush1.bf16.msra.mxu0 0
  %9939 = vmatprep.subr.bf16.mxu0 0
  %9940 = vmatpush1.bf16.msra.mxu0 0
  %9941 = vmatprep.subr.bf16.mxu0 0
  %9942 = vmatpush1.bf16.msra.mxu0 0
  %9943 = vmatprep.subr.bf16.mxu0 0
  %9944 = vmatpush1.bf16.msra.mxu0 0
  %9945 = vmatprep.subr.bf16.mxu0 0
  %9946 = vmatpush1.bf16.msra.mxu0 0
  %9947 = vmatprep.subr.bf16.mxu0 0
  %9948 = vmatpush1.bf16.msra.mxu0 0
  %9949 = vmatprep.subr.bf16.mxu0 0
  %9950 = vmatpush1.bf16.msra.mxu0 0
  %9951 = vmatprep.subr.bf16.mxu0 0
  %9952 = vmatpush1.bf16.msra.mxu0 0
  %9953 = vmatprep.subr.bf16.mxu0 0
  %9954 = vmatpush1.bf16.msra.mxu0 0
  %9955 = vmatprep.subr.bf16.mxu0 0
  %9956 = vmatpush1.bf16.msra.mxu0 0
  %9957 = vmatprep.subr.bf16.mxu0 0
  %9958 = vmatpush1.bf16.msra.mxu0 0
  %9959 = vmatprep.subr.bf16.mxu0 0
  %9960 = vmatpush1.bf16.msra.mxu0 0
  %9961 = vmatprep.mubr.bf16.mxu0 0
  %9962 = vmatmul.mubr.bf16.gmra.mrb[0].mxu0 %v9918
  %v9963 = vpop.f32.mrb[0].mxu0
  %v9964 = vadd.f32 0.0, %v9963
  %v9965 = vpop.f32.mrb[0].mxu0
  %v9966 = vpop.f32.mrb[0].mxu0
  %v9967 = vadd.f32 0.0, %v9966
  %v9968 = vpop.f32.mrb[0].mxu0
  %9969 = vmatprep.mubr.bf16.mxu0 0
  %9970 = vmatmul.mubr.bf16.gmra.mrb[0].mxu0 %v9921
  %v9971 = vpop.f32.mrb[0].mxu0
  %v9972 = vadd.f32 0.0, %v9971
  %v9973 = vpop.f32.mrb[0].mxu0
  %v9974 = vpop.f32.mrb[0].mxu0
  %v9975 = vadd.f32 0.0, %v9974
  %v9976 = vpop.f32.mrb[0].mxu0
  %9977 = vmatprep.mubr.bf16.mxu0 0
  %9978 = vmatmul.mubr.bf16.gmra.mrb[0].mxu0 %v9924
  %v9979 = vpop.f32.mrb[0].mxu0
  %v9980 = vadd.f32 0.0, %v9979
  %v9981 = vpop.f32.mrb[0].mxu0
  %v9982 = vpop.f32.mrb[0].mxu0
  %v9983 = vadd.f32 0.0, %v9982
  %v9984 = vpop.f32.mrb[0].mxu0
  %9985 = vdwg.mxu0
  %v9986 = vadd.f32 %v9871, %v9964
  %v9987 = vadd.f32 %v9872, %v9967
  %v9988 = vadd.f32 %v9873, %v9972
  %v9989 = vadd.f32 %v9874, %v9975
  %v9990 = vadd.f32 %v9875, %v9980
  %v9991 = vadd.f32 %v9876, %v9983
  %v9992 = vld [vmem:[%s8] sm:$0x1]
  %v9994 = vlaneseq
  %v9995 = vshrl.u32 %v9994, 7
  %v9996 = vsub.s32 0, %v9995
  %v9997 = vrot.slane %v9992, %v9996
  %v9999 = vmul.f32 %v9986, %v9997
  %v10000 = vmul.f32 %v9987, %v9997
  %v10001 = vmul.f32 %v9988, %v9997
  %v10002 = vmul.f32 %v9989, %v9997
  %v10003 = vmul.f32 %v9990, %v9997
  %v10004 = vmul.f32 %v9991, %v9997
  %v10005 = vld [vmem:[%s9] sm:$0x1]
  %v10007 = vlaneseq
  %v10008 = vshrl.u32 %v10007, 7
  %v10009 = vsub.s32 0, %v10008
  %v10010 = vrot.slane %v10005, %v10009
  %v10012 = vadd.f32 %v9999, %v10010
  %v10013 = vadd.f32 %v10000, %v10010
  %v10014 = vadd.f32 %v10001, %v10010
  %v10015 = vadd.f32 %v10002, %v10010
  %v10016 = vadd.f32 %v10003, %v10010
  %v10017 = vadd.f32 %v10004, %v10010
  %v10018 = vmax.f32 %v10012, 0.0
  %v10019 = vmax.f32 %v10013, 0.0
  %v10020 = vmax.f32 %v10014, 0.0
  %v10021 = vmax.f32 %v10015, 0.0
  %v10022 = vmax.f32 %v10016, 0.0
  %v10023 = vmax.f32 %v10017, 0.0
  %v10024 = vpack.c.bf16 %v10019, %v10018
  %v10025 = vpack.c.bf16 %v10021, %v10020
  %v10026 = vpack.c.bf16 %v10023, %v10022
  %v10027 = vld [vmem:[%s10] sm:$0xf]
  %v10028 = vld [vmem:[%s10 + $0x4] sm:$0xf]
  %v10029 = vld [vmem:[%s10 + $0x8] sm:$0xf]
  %v10030 = vld [vmem:[%s10 + $0xc] sm:$0xf]
  %v10031 = vld [vmem:[%s10 + $0x10] sm:$0xf]
  %v10032 = vld [vmem:[%s10 + $0x14] sm:$0xf]
  %v10033 = vld [vmem:[%s10 + $0x18] sm:$0xf]
  %v10034 = vld [vmem:[%s10 + $0x1c] sm:$0xf]
  %v10035 = vld [vmem:[%s10 + $0x20] sm:$0xf]
  %v10036 = vld [vmem:[%s10 + $0x24] sm:$0xf]
  %v10037 = vld [vmem:[%s10 + $0x28] sm:$0xf]
  %v10038 = vld [vmem:[%s10 + $0x2c] sm:$0xf]
  %v10039 = vld [vmem:[%s10 + $0x30] sm:$0x3]
  %v10040 = vld [vmem:[%s12] sm:$0x1]
  %v10042 = vlaneseq
  %v10043 = vshrl.u32 %v10042, 7
  %v10044 = vsub.s32 0, %v10043
  %v10045 = vrot.slane %v10040, %v10044
  %v10060 = vunpack.c.l.b16 %v10027
  %v10061 = vunpack.c.l.b16 %v10028
  %v10062 = vunpack.c.l.b16 %v10029
  %v10063 = vunpack.c.l.b16 %v10030
  %v10064 = vunpack.c.l.b16 %v10031
  %v10065 = vunpack.c.l.b16 %v10032
  %v10066 = vunpack.c.l.b16 %v10033
  %v10067 = vunpack.c.l.b16 %v10034
  %v10068 = vunpack.c.l.b16 %v10035
  %v10069 = vunpack.c.l.b16 %v10036
  %v10070 = vunpack.c.l.b16 %v10037
  %v10071 = vunpack.c.l.b16 %v10038
  %v10072 = vunpack.c.l.b16 %v10039
  %v10073 = vpack.c.b16 %v10061, %v10060
  %v10074 = vpack.c.b16 %v10063, %v10062
  %v10075 = vpack.c.b16 %v10065, %v10064
  %v10076 = vpack.c.b16 %v10067, %v10066
  %v10077 = vpack.c.b16 %v10069, %v10068
  %v10078 = vpack.c.b16 %v10071, %v10070
  %v10079 = vpack.c.b16 %v10072, %v10072
  %vm10086 = vcmask 818176
  %v10088 = vsel %vm10086, %v10024, 0
  %v10091 = vsel %vm10086, %v10025, 0
  %v10094 = vsel %vm10086, %v10026, 0
  %vm10096 = vcmask 1041408
  %v10098 = vsel %vm10096, %v10079, 0
  %10100 = vmatprep.subr.bf16.mxu0 0
  %10101 = vmatpush1.bf16.msra.mxu0 %v10073
  %10102 = vmatprep.subr.bf16.mxu0 0
  %10103 = vmatpush1.bf16.msra.mxu0 %v10074
  %10104 = vmatprep.subr.bf16.mxu0 0
  %10105 = vmatpush1.bf16.msra.mxu0 %v10075
  %10106 = vmatprep.subr.bf16.mxu0 0
  %10107 = vmatpush1.bf16.msra.mxu0 %v10076
  %10108 = vmatprep.subr.bf16.mxu0 0
  %10109 = vmatpush1.bf16.msra.mxu0 %v10077
  %10110 = vmatprep.subr.bf16.mxu0 0
  %10111 = vmatpush1.bf16.msra.mxu0 %v10078
  %10112 = vmatprep.subr.bf16.mxu0 0
  %10113 = vmatpush1.bf16.msra.mxu0 %v10098
  %10114 = vmatprep.subr.bf16.mxu0 0
  %10115 = vmatpush1.bf16.msra.mxu0 0
  %10116 = vmatprep.subr.bf16.mxu0 0
  %10117 = vmatpush1.bf16.msra.mxu0 0
  %10118 = vmatprep.subr.bf16.mxu0 0
  %10119 = vmatpush1.bf16.msra.mxu0 0
  %10120 = vmatprep.subr.bf16.mxu0 0
  %10121 = vmatpush1.bf16.msra.mxu0 0
  %10122 = vmatprep.subr.bf16.mxu0 0
  %10123 = vmatpush1.bf16.msra.mxu0 0
  %10124 = vmatprep.subr.bf16.mxu0 0
  %10125 = vmatpush1.bf16.msra.mxu0 0
  %10126 = vmatprep.subr.bf16.mxu0 0
  %10127 = vmatpush1.bf16.msra.mxu0 0
  %10128 = vmatprep.subr.bf16.mxu0 0
  %10129 = vmatpush1.bf16.msra.mxu0 0
  %10130 = vmatprep.subr.bf16.mxu0 0
  %10131 = vmatpush1.bf16.msra.mxu0 0
  %10132 = vmatprep.mubr.bf16.mxu0 0
  %10133 = vmatmul.mubr.bf16.gmra.mrb[0].mxu0 %v10088
  %v10134 = vpop.f32.mrb[0].mxu0
  %v10135 = vadd.f32 %v10045, %v10134
  %v10136 = vpop.f32.mrb[0].mxu0
  %v10137 = vpop.f32.mrb[0].mxu0
  %v10138 = vpop.f32.mrb[0].mxu0
  %10139 = vmatprep.mubr.bf16.mxu0 0
  %10140 = vmatmul.mubr.bf16.gmra.mrb[0].mxu0 %v10091
  %v10141 = vpop.f32.mrb[0].mxu0
  %v10142 = vpop.f32.mrb[0].mxu0
  %v10143 = vpop.f32.mrb[0].mxu0
  %v10144 = vadd.f32 %v10045, %v10143
  %v10145 = vpop.f32.mrb[0].mxu0
  %10146 = vmatprep.mubr.bf16.mxu0 0
  %10147 = vmatmul.mubr.bf16.gmra.mrb[0].mxu0 %v10094
  %v10148 = vpop.f32.mrb[0].mxu0
  %v10149 = vpop.f32.mrb[0].mxu0
  %v10150 = vpop.f32.mrb[0].mxu0
  %v10151 = vpop.f32.mrb[0].mxu0
  %10152 = vdwg.mxu0
  %v10153 = vld [vmem:[%s11] sm:$0xf]
  %v10154 = vld [vmem:[%s11 + $0x4] sm:$0xf]
  %v10155 = vld [vmem:[%s11 + $0x8] sm:$0xf]
  %v10156 = vld [vmem:[%s11 + $0xc] sm:$0xf]
  %v10157 = vld [vmem:[%s14] sm:$0xf]
  %v10158 = vld [vmem:[%s14 + $0x4] sm:$0xf]
  %v10159 = vld [vmem:[%s14 + $0x8] sm:$0xf]
  %v10160 = vld [vmem:[%s14 + $0xc] sm:$0xf]
  %v10161 = vld [vmem:[%s15] sm:$0xf]
  %v10162 = vld [vmem:[%s15 + $0x4] sm:$0xf]
  %v10163 = vld [vmem:[%s15 + $0x8] sm:$0xf]
  %v10164 = vld [vmem:[%s15 + $0xc] sm:$0xf]
  %v10165 = vld [vmem:[%s16] sm:$0x1]
  %v10166 = vld [vmem:[%s13] sm:$0x1]
  %v10167 = vld [vmem:[%s17] sm:$0x1]
  %v10169 = vrot.slane %v10144, 7
  %v10171 = vsel %vm8965, %v10135, %v10169
  %v10172 = vadd.f32 %v10171, 0.0
  %v10173 = vxor.u32 %v10172, 2147483648
  %v10174 = vmul.f32 %v10173, 1.442695
  %v10175 = vpow.pop %v10174
  %v10176 = vadd.f32 %v10175, 1.0
  %v10177 = vrcp.pop %v10176
  %v10178 = vmul.f32 1.0, %v10177
  %v10180 = vlaneseq
  %v10181 = vshrl.u32 %v10180, 7
  %v10182 = vsub.s32 0, %v10181
  %v10183 = vrot.slane %v10166, %v10182
  %v10185 = vadd.f32 %v10183, 0.0
  %v10186 = vmul.f32 %v10178, %v10185
  %10188 = vrot.lane.b32.xlu0 %v10186, 64
  %v10189 = vpop.permute.xlu0 %10188
  %v10191 = vadd.f32 %v10171, %v10189
  %v10192 = vtanh.pop %v10191
  %v10193 = vsub.f32 1.0, %v10178
  %10195 = vrot.lane.b32.xlu0 %v10192, 96
  %v10196 = vpop.permute.xlu0 %10195
  %v10198 = vmul.f32 %v10193, %v10196
  %v10199 = vmul.f32 %v10178, 0.0
  %v10200 = vadd.f32 %v10198, %v10199
  %v10201 = vpack.c.bf16 %v10200, %v10200
  %v10203 = vlaneseq
  %v10204 = vshrl.u32 %v10203, 7
  %v10205 = vsub.s32 0, %v10204
  %v10206 = vrot.slane %v10165, %v10205
  %10209 = vrot.lane.b32.xlu0 %v10201, 96
  %v10210 = vpop.permute.xlu0 %10209
  %v10215 = vunpack.c.l.b16 %v10157
  %v10216 = vunpack.c.l.b16 %v10158
  %v10217 = vunpack.c.l.b16 %v10159
  %v10218 = vunpack.c.l.b16 %v10160
  %v10219 = vpack.c.b16 %v10216, %v10215
  %v10220 = vpack.c.b16 %v10218, %v10217
  %v10224 = vsel %vm3428, %v10210, 0
  %10226 = vmatprep.subr.bf16.mxu0 0
  %10227 = vmatpush1.bf16.msra.mxu0 %v10219
  %10228 = vmatprep.subr.bf16.mxu0 0
  %10229 = vmatpush1.bf16.msra.mxu0 %v10220
  %10230 = vmatprep.subr.bf16.mxu0 0
  %10231 = vmatpush1.bf16.msra.mxu0 0
  %10232 = vmatprep.subr.bf16.mxu0 0
  %10233 = vmatpush1.bf16.msra.mxu0 0
  %10234 = vmatprep.subr.bf16.mxu0 0
  %10235 = vmatpush1.bf16.msra.mxu0 0
  %10236 = vmatprep.subr.bf16.mxu0 0
  %10237 = vmatpush1.bf16.msra.mxu0 0
  %10238 = vmatprep.subr.bf16.mxu0 0
  %10239 = vmatpush1.bf16.msra.mxu0 0
  %10240 = vmatprep.subr.bf16.mxu0 0
  %10241 = vmatpush1.bf16.msra.mxu0 0
  %10242 = vmatprep.subr.bf16.mxu0 0
  %10243 = vmatpush1.bf16.msra.mxu0 0
  %10244 = vmatprep.subr.bf16.mxu0 0
  %10245 = vmatpush1.bf16.msra.mxu0 0
  %10246 = vmatprep.subr.bf16.mxu0 0
  %10247 = vmatpush1.bf16.msra.mxu0 0
  %10248 = vmatprep.subr.bf16.mxu0 0
  %10249 = vmatpush1.bf16.msra.mxu0 0
  %10250 = vmatprep.subr.bf16.mxu0 0
  %10251 = vmatpush1.bf16.msra.mxu0 0
  %10252 = vmatprep.subr.bf16.mxu0 0
  %10253 = vmatpush1.bf16.msra.mxu0 0
  %10254 = vmatprep.subr.bf16.mxu0 0
  %10255 = vmatpush1.bf16.msra.mxu0 0
  %10256 = vmatprep.subr.bf16.mxu0 0
  %10257 = vmatpush1.bf16.msra.mxu0 0
  %10258 = vmatprep.mubr.bf16.mxu0 0
  %10259 = vmatmul.mubr.bf16.gmra.mrb[0].mxu0 %v10224
  %v10260 = vpop.f32.mrb[0].mxu0
  %v10261 = vadd.f32 %v10206, %v10260
  %v10262 = vpop.f32.mrb[0].mxu0
  %v10263 = vpop.f32.mrb[0].mxu0
  %v10264 = vpop.f32.mrb[0].mxu0
  %10265 = vdwg.mxu0
  %v10266 = vadd.f32 %v10261, 0.0
  %v10267 = vxor.u32 %v10266, 2147483648
  %v10268 = vmul.f32 %v10267, 1.442695
  %v10269 = vpow.pop %v10268
  %v10270 = vadd.f32 %v10269, 1.0
  %v10271 = vrcp.pop %v10270
  %v10272 = vmul.f32 1.0, %v10271
  %v10274 = vlaneseq
  %v10275 = vshrl.u32 %v10274, 7
  %v10276 = vsub.s32 0, %v10275
  %v10277 = vrot.slane %v10167, %v10276
  %v10279 = vadd.f32 %v10277, 0.0
  %v10280 = vmul.f32 %v10272, %v10279
  %10282 = vrot.lane.b32.xlu0 %v10280, 64
  %v10283 = vpop.permute.xlu0 %10282
  %v10285 = vadd.f32 %v10261, %v10283
  %v10286 = vtanh.pop %v10285
  %v10287 = vsub.f32 1.0, %v10272
  %10289 = vrot.lane.b32.xlu0 %v10286, 96
  %v10290 = vpop.permute.xlu0 %10289
  %v10292 = vmul.f32 %v10287, %v10290
  %v10293 = vmul.f32 %v10272, 0.0
  %v10294 = vadd.f32 %v10292, %v10293
  %v10296 = vrot.slane %v10135, 1
  %v10298 = vsel %vm8965, %v10296, %v10144
  %v10303 = vunpack.c.l.b16 %v10153
  %v10304 = vunpack.c.l.b16 %v10154
  %v10305 = vunpack.c.l.b16 %v10155
  %v10306 = vunpack.c.l.b16 %v10156
  %v10307 = vpack.c.b16 %v10304, %v10303
  %v10308 = vpack.c.b16 %v10306, %v10305
  %10311 = vmatprep.subr.bf16.mxu0 0
  %10312 = vmatpush1.bf16.msra.mxu0 %v10307
  %10313 = vmatprep.subr.bf16.mxu0 0
  %10314 = vmatpush1.bf16.msra.mxu0 %v10308
  %10315 = vmatprep.subr.bf16.mxu0 0
  %10316 = vmatpush1.bf16.msra.mxu0 0
  %10317 = vmatprep.subr.bf16.mxu0 0
  %10318 = vmatpush1.bf16.msra.mxu0 0
  %10319 = vmatprep.subr.bf16.mxu0 0
  %10320 = vmatpush1.bf16.msra.mxu0 0
  %10321 = vmatprep.subr.bf16.mxu0 0
  %10322 = vmatpush1.bf16.msra.mxu0 0
  %10323 = vmatprep.subr.bf16.mxu0 0
  %10324 = vmatpush1.bf16.msra.mxu0 0
  %10325 = vmatprep.subr.bf16.mxu0 0
  %10326 = vmatpush1.bf16.msra.mxu0 0
  %10327 = vmatprep.subr.bf16.mxu0 0
  %10328 = vmatpush1.bf16.msra.mxu0 0
  %10329 = vmatprep.subr.bf16.mxu0 0
  %10330 = vmatpush1.bf16.msra.mxu0 0
  %10331 = vmatprep.subr.bf16.mxu0 0
  %10332 = vmatpush1.bf16.msra.mxu0 0
  %10333 = vmatprep.subr.bf16.mxu0 0
  %10334 = vmatpush1.bf16.msra.mxu0 0
  %10335 = vmatprep.subr.bf16.mxu0 0
  %10336 = vmatpush1.bf16.msra.mxu0 0
  %10337 = vmatprep.subr.bf16.mxu0 0
  %10338 = vmatpush1.bf16.msra.mxu0 0
  %10339 = vmatprep.subr.bf16.mxu0 0
  %10340 = vmatpush1.bf16.msra.mxu0 0
  %10341 = vmatprep.subr.bf16.mxu0 0
  %10342 = vmatpush1.bf16.msra.mxu0 0
  %10343 = vmatprep.mubr.bf16.mxu0 0
  %10344 = vmatmul.mubr.bf16.gmra.mrb[0].mxu0 %v10224
  %v10345 = vpop.f32.mrb[0].mxu0
  %v10346 = vadd.f32 0.0, %v10345
  %v10347 = vpop.f32.mrb[0].mxu0
  %v10348 = vpop.f32.mrb[0].mxu0
  %v10349 = vpop.f32.mrb[0].mxu0
  %10350 = vdwg.mxu0
  %v10351 = vadd.f32 %v10298, %v10346
  %v10352 = vxor.u32 %v10351, 2147483648
  %v10353 = vmul.f32 %v10352, 1.442695
  %v10354 = vpow.pop %v10353
  %v10355 = vadd.f32 %v10354, 1.0
  %v10356 = vrcp.pop %v10355
  %v10357 = vmul.f32 1.0, %v10356
  %10358 = vrot.lane.b32.xlu0 %v10183, 64
  %v10359 = vpop.permute.xlu0 %10358
  %v10361 = vadd.f32 %v10346, %v10359
  %10363 = vrot.lane.b32.xlu0 %v10361, 64
  %v10364 = vpop.permute.xlu0 %10363
  %v10366 = vmul.f32 %v10357, %v10364
  %10368 = vrot.lane.b32.xlu0 %v10366, 64
  %v10369 = vpop.permute.xlu0 %10368
  %v10371 = vadd.f32 %v10298, %v10369
  %v10372 = vtanh.pop %v10371
  %v10373 = vsub.f32 1.0, %v10357
  %10375 = vrot.lane.b32.xlu0 %v10372, 96
  %v10376 = vpop.permute.xlu0 %10375
  %v10378 = vmul.f32 %v10373, %v10376
  %v10379 = vmul.f32 %v10357, %v10200
  %v10380 = vadd.f32 %v10378, %v10379
  %v10381 = vpack.c.bf16 %v10380, %v10380
  %10383 = vrot.lane.b32.xlu0 %v10381, 96
  %v10384 = vpop.permute.xlu0 %10383
  %v10386 = vsel %vm3428, %v10384, 0
  %10388 = vmatprep.subr.bf16.mxu0 0
  %10389 = vmatpush1.bf16.msra.mxu0 %v10219
  %10390 = vmatprep.subr.bf16.mxu0 0
  %10391 = vmatpush1.bf16.msra.mxu0 %v10220
  %10392 = vmatprep.subr.bf16.mxu0 0
  %10393 = vmatpush1.bf16.msra.mxu0 0
  %10394 = vmatprep.subr.bf16.mxu0 0
  %10395 = vmatpush1.bf16.msra.mxu0 0
  %10396 = vmatprep.subr.bf16.mxu0 0
  %10397 = vmatpush1.bf16.msra.mxu0 0
  %10398 = vmatprep.subr.bf16.mxu0 0
  %10399 = vmatpush1.bf16.msra.mxu0 0
  %10400 = vmatprep.subr.bf16.mxu0 0
  %10401 = vmatpush1.bf16.msra.mxu0 0
  %10402 = vmatprep.subr.bf16.mxu0 0
  %10403 = vmatpush1.bf16.msra.mxu0 0
  %10404 = vmatprep.subr.bf16.mxu0 0
  %10405 = vmatpush1.bf16.msra.mxu0 0
  %10406 = vmatprep.subr.bf16.mxu0 0
  %10407 = vmatpush1.bf16.msra.mxu0 0
  %10408 = vmatprep.subr.bf16.mxu0 0
  %10409 = vmatpush1.bf16.msra.mxu0 0
  %10410 = vmatprep.subr.bf16.mxu0 0
  %10411 = vmatpush1.bf16.msra.mxu0 0
  %10412 = vmatprep.subr.bf16.mxu0 0
  %10413 = vmatpush1.bf16.msra.mxu0 0
  %10414 = vmatprep.subr.bf16.mxu0 0
  %10415 = vmatpush1.bf16.msra.mxu0 0
  %10416 = vmatprep.subr.bf16.mxu0 0
  %10417 = vmatpush1.bf16.msra.mxu0 0
  %10418 = vmatprep.subr.bf16.mxu0 0
  %10419 = vmatpush1.bf16.msra.mxu0 0
  %10420 = vmatprep.mubr.bf16.mxu0 0
  %10421 = vmatmul.mubr.bf16.gmra.mrb[0].mxu0 %v10386
  %v10422 = vpop.f32.mrb[0].mxu0
  %v10423 = vadd.f32 %v10206, %v10422
  %v10424 = vpop.f32.mrb[0].mxu0
  %v10425 = vpop.f32.mrb[0].mxu0
  %v10426 = vpop.f32.mrb[0].mxu0
  %10427 = vdwg.mxu0
  %v10428 = vpack.c.bf16 %v10294, %v10294
  %10430 = vrot.lane.b32.xlu0 %v10428, 96
  %v10431 = vpop.permute.xlu0 %10430
  %v10436 = vunpack.c.l.b16 %v10161
  %v10437 = vunpack.c.l.b16 %v10162
  %v10438 = vunpack.c.l.b16 %v10163
  %v10439 = vunpack.c.l.b16 %v10164
  %v10440 = vpack.c.b16 %v10437, %v10436
  %v10441 = vpack.c.b16 %v10439, %v10438
  %v10445 = vsel %vm3428, %v10431, 0
  %10447 = vmatprep.subr.bf16.mxu0 0
  %10448 = vmatpush1.bf16.msra.mxu0 %v10440
  %10449 = vmatprep.subr.bf16.mxu0 0
  %10450 = vmatpush1.bf16.msra.mxu0 %v10441
  %10451 = vmatprep.subr.bf16.mxu0 0
  %10452 = vmatpush1.bf16.msra.mxu0 0
  %10453 = vmatprep.subr.bf16.mxu0 0
  %10454 = vmatpush1.bf16.msra.mxu0 0
  %10455 = vmatprep.subr.bf16.mxu0 0
  %10456 = vmatpush1.bf16.msra.mxu0 0
  %10457 = vmatprep.subr.bf16.mxu0 0
  %10458 = vmatpush1.bf16.msra.mxu0 0
  %10459 = vmatprep.subr.bf16.mxu0 0
  %10460 = vmatpush1.bf16.msra.mxu0 0
  %10461 = vmatprep.subr.bf16.mxu0 0
  %10462 = vmatpush1.bf16.msra.mxu0 0
  %10463 = vmatprep.subr.bf16.mxu0 0
  %10464 = vmatpush1.bf16.msra.mxu0 0
  %10465 = vmatprep.subr.bf16.mxu0 0
  %10466 = vmatpush1.bf16.msra.mxu0 0
  %10467 = vmatprep.subr.bf16.mxu0 0
  %10468 = vmatpush1.bf16.msra.mxu0 0
  %10469 = vmatprep.subr.bf16.mxu0 0
  %10470 = vmatpush1.bf16.msra.mxu0 0
  %10471 = vmatprep.subr.bf16.mxu0 0
  %10472 = vmatpush1.bf16.msra.mxu0 0
  %10473 = vmatprep.subr.bf16.mxu0 0
  %10474 = vmatpush1.bf16.msra.mxu0 0
  %10475 = vmatprep.subr.bf16.mxu0 0
  %10476 = vmatpush1.bf16.msra.mxu0 0
  %10477 = vmatprep.subr.bf16.mxu0 0
  %10478 = vmatpush1.bf16.msra.mxu0 0
  %10479 = vmatprep.mubr.bf16.mxu0 0
  %10480 = vmatmul.mubr.bf16.gmra.mrb[0].mxu0 %v10445
  %v10481 = vpop.f32.mrb[0].mxu0
  %v10482 = vadd.f32 0.0, %v10481
  %v10483 = vpop.f32.mrb[0].mxu0
  %v10484 = vpop.f32.mrb[0].mxu0
  %v10485 = vpop.f32.mrb[0].mxu0
  %10486 = vdwg.mxu0
  %v10487 = vadd.f32 %v10423, %v10482
  %v10488 = vxor.u32 %v10487, 2147483648
  %v10489 = vmul.f32 %v10488, 1.442695
  %v10490 = vpow.pop %v10489
  %v10491 = vadd.f32 %v10490, 1.0
  %v10492 = vrcp.pop %v10491
  %v10493 = vmul.f32 1.0, %v10492
  %10494 = vrot.lane.b32.xlu0 %v10277, 64
  %v10495 = vpop.permute.xlu0 %10494
  %v10497 = vadd.f32 %v10482, %v10495
  %10499 = vrot.lane.b32.xlu0 %v10497, 64
  %v10500 = vpop.permute.xlu0 %10499
  %v10502 = vmul.f32 %v10493, %v10500
  %10504 = vrot.lane.b32.xlu0 %v10502, 64
  %v10505 = vpop.permute.xlu0 %10504
  %v10507 = vadd.f32 %v10423, %v10505
  %v10508 = vtanh.pop %v10507
  %v10509 = vsub.f32 1.0, %v10493
  %10511 = vrot.lane.b32.xlu0 %v10508, 96
  %v10512 = vpop.permute.xlu0 %10511
  %v10514 = vmul.f32 %v10509, %v10512
  %v10515 = vmul.f32 %v10493, %v10294
  %v10516 = vadd.f32 %v10514, %v10515
  %v10517 = vmax.f32 %v10294, %v10516
  %v10518 = vrot.slane %v10135, 2
  %v10520 = vrot.slane %v10144, 1
  %v10522 = vsel %vm8965, %v10518, %v10520
  %10523 = vmatprep.subr.bf16.mxu0 0
  %10524 = vmatpush1.bf16.msra.mxu0 %v10307
  %10525 = vmatprep.subr.bf16.mxu0 0
  %10526 = vmatpush1.bf16.msra.mxu0 %v10308
  %10527 = vmatprep.subr.bf16.mxu0 0
  %10528 = vmatpush1.bf16.msra.mxu0 0
  %10529 = vmatprep.subr.bf16.mxu0 0
  %10530 = vmatpush1.bf16.msra.mxu0 0
  %10531 = vmatprep.subr.bf16.mxu0 0
  %10532 = vmatpush1.bf16.msra.mxu0 0
  %10533 = vmatprep.subr.bf16.mxu0 0
  %10534 = vmatpush1.bf16.msra.mxu0 0
  %10535 = vmatprep.subr.bf16.mxu0 0
  %10536 = vmatpush1.bf16.msra.mxu0 0
  %10537 = vmatprep.subr.bf16.mxu0 0
  %10538 = vmatpush1.bf16.msra.mxu0 0
  %10539 = vmatprep.subr.bf16.mxu0 0
  %10540 = vmatpush1.bf16.msra.mxu0 0
  %10541 = vmatprep.subr.bf16.mxu0 0
  %10542 = vmatpush1.bf16.msra.mxu0 0
  %10543 = vmatprep.subr.bf16.mxu0 0
  %10544 = vmatpush1.bf16.msra.mxu0 0
  %10545 = vmatprep.subr.bf16.mxu0 0
  %10546 = vmatpush1.bf16.msra.mxu0 0
  %10547 = vmatprep.subr.bf16.mxu0 0
  %10548 = vmatpush1.bf16.msra.mxu0 0
  %10549 = vmatprep.subr.bf16.mxu0 0
  %10550 = vmatpush1.bf16.msra.mxu0 0
  %10551 = vmatprep.subr.bf16.mxu0 0
  %10552 = vmatpush1.bf16.msra.mxu0 0
  %10553 = vmatprep.subr.bf16.mxu0 0
  %10554 = vmatpush1.bf16.msra.mxu0 0
  %10555 = vmatprep.mubr.bf16.mxu0 0
  %10556 = vmatmul.mubr.bf16.gmra.mrb[0].mxu0 %v10386
  %v10557 = vpop.f32.mrb[0].mxu0
  %v10558 = vadd.f32 0.0, %v10557
  %v10559 = vpop.f32.mrb[0].mxu0
  %v10560 = vpop.f32.mrb[0].mxu0
  %v10561 = vpop.f32.mrb[0].mxu0
  %10562 = vdwg.mxu0
  %v10563 = vadd.f32 %v10522, %v10558
  %v10564 = vxor.u32 %v10563, 2147483648
  %v10565 = vmul.f32 %v10564, 1.442695
  %v10566 = vpow.pop %v10565
  %v10567 = vadd.f32 %v10566, 1.0
  %v10568 = vrcp.pop %v10567
  %v10569 = vmul.f32 1.0, %v10568
  %v10570 = vadd.f32 %v10558, %v10359
  %10572 = vrot.lane.b32.xlu0 %v10570, 64
  %v10573 = vpop.permute.xlu0 %10572
  %v10575 = vmul.f32 %v10569, %v10573
  %10577 = vrot.lane.b32.xlu0 %v10575, 64
  %v10578 = vpop.permute.xlu0 %10577
  %v10580 = vadd.f32 %v10522, %v10578
  %v10581 = vtanh.pop %v10580
  %v10582 = vsub.f32 1.0, %v10569
  %10584 = vrot.lane.b32.xlu0 %v10581, 96
  %v10585 = vpop.permute.xlu0 %10584
  %v10587 = vmul.f32 %v10582, %v10585
  %v10588 = vmul.f32 %v10569, %v10380
  %v10589 = vadd.f32 %v10587, %v10588
  %v10590 = vpack.c.bf16 %v10589, %v10589
  %10592 = vrot.lane.b32.xlu0 %v10590, 96
  %v10593 = vpop.permute.xlu0 %10592
  %v10595 = vsel %vm3428, %v10593, 0
  %10597 = vmatprep.subr.bf16.mxu0 0
  %10598 = vmatpush1.bf16.msra.mxu0 %v10219
  %10599 = vmatprep.subr.bf16.mxu0 0
  %10600 = vmatpush1.bf16.msra.mxu0 %v10220
  %10601 = vmatprep.subr.bf16.mxu0 0
  %10602 = vmatpush1.bf16.msra.mxu0 0
  %10603 = vmatprep.subr.bf16.mxu0 0
  %10604 = vmatpush1.bf16.msra.mxu0 0
  %10605 = vmatprep.subr.bf16.mxu0 0
  %10606 = vmatpush1.bf16.msra.mxu0 0
  %10607 = vmatprep.subr.bf16.mxu0 0
  %10608 = vmatpush1.bf16.msra.mxu0 0
  %10609 = vmatprep.subr.bf16.mxu0 0
  %10610 = vmatpush1.bf16.msra.mxu0 0
  %10611 = vmatprep.subr.bf16.mxu0 0
  %10612 = vmatpush1.bf16.msra.mxu0 0
  %10613 = vmatprep.subr.bf16.mxu0 0
  %10614 = vmatpush1.bf16.msra.mxu0 0
  %10615 = vmatprep.subr.bf16.mxu0 0
  %10616 = vmatpush1.bf16.msra.mxu0 0
  %10617 = vmatprep.subr.bf16.mxu0 0
  %10618 = vmatpush1.bf16.msra.mxu0 0
  %10619 = vmatprep.subr.bf16.mxu0 0
  %10620 = vmatpush1.bf16.msra.mxu0 0
  %10621 = vmatprep.subr.bf16.mxu0 0
  %10622 = vmatpush1.bf16.msra.mxu0 0
  %10623 = vmatprep.subr.bf16.mxu0 0
  %10624 = vmatpush1.bf16.msra.mxu0 0
  %10625 = vmatprep.subr.bf16.mxu0 0
  %10626 = vmatpush1.bf16.msra.mxu0 0
  %10627 = vmatprep.subr.bf16.mxu0 0
  %10628 = vmatpush1.bf16.msra.mxu0 0
  %10629 = vmatprep.mubr.bf16.mxu0 0
  %10630 = vmatmul.mubr.bf16.gmra.mrb[0].mxu0 %v10595
  %v10631 = vpop.f32.mrb[0].mxu0
  %v10632 = vadd.f32 %v10206, %v10631
  %v10633 = vpop.f32.mrb[0].mxu0
  %v10634 = vpop.f32.mrb[0].mxu0
  %v10635 = vpop.f32.mrb[0].mxu0
  %10636 = vdwg.mxu0
  %v10637 = vpack.c.bf16 %v10516, %v10516
  %10639 = vrot.lane.b32.xlu0 %v10637, 96
  %v10640 = vpop.permute.xlu0 %10639
  %v10642 = vsel %vm3428, %v10640, 0
  %10644 = vmatprep.subr.bf16.mxu0 0
  %10645 = vmatpush1.bf16.msra.mxu0 %v10440
  %10646 = vmatprep.subr.bf16.mxu0 0
  %10647 = vmatpush1.bf16.msra.mxu0 %v10441
  %10648 = vmatprep.subr.bf16.mxu0 0
  %10649 = vmatpush1.bf16.msra.mxu0 0
  %10650 = vmatprep.subr.bf16.mxu0 0
  %10651 = vmatpush1.bf16.msra.mxu0 0
  %10652 = vmatprep.subr.bf16.mxu0 0
  %10653 = vmatpush1.bf16.msra.mxu0 0
  %10654 = vmatprep.subr.bf16.mxu0 0
  %10655 = vmatpush1.bf16.msra.mxu0 0
  %10656 = vmatprep.subr.bf16.mxu0 0
  %10657 = vmatpush1.bf16.msra.mxu0 0
  %10658 = vmatprep.subr.bf16.mxu0 0
  %10659 = vmatpush1.bf16.msra.mxu0 0
  %10660 = vmatprep.subr.bf16.mxu0 0
  %10661 = vmatpush1.bf16.msra.mxu0 0
  %10662 = vmatprep.subr.bf16.mxu0 0
  %10663 = vmatpush1.bf16.msra.mxu0 0
  %10664 = vmatprep.subr.bf16.mxu0 0
  %10665 = vmatpush1.bf16.msra.mxu0 0
  %10666 = vmatprep.subr.bf16.mxu0 0
  %10667 = vmatpush1.bf16.msra.mxu0 0
  %10668 = vmatprep.subr.bf16.mxu0 0
  %10669 = vmatpush1.bf16.msra.mxu0 0
  %10670 = vmatprep.subr.bf16.mxu0 0
  %10671 = vmatpush1.bf16.msra.mxu0 0
  %10672 = vmatprep.subr.bf16.mxu0 0
  %10673 = vmatpush1.bf16.msra.mxu0 0
  %10674 = vmatprep.subr.bf16.mxu0 0
  %10675 = vmatpush1.bf16.msra.mxu0 0
  %10676 = vmatprep.mubr.bf16.mxu0 0
  %10677 = vmatmul.mubr.bf16.gmra.mrb[0].mxu0 %v10642
  %v10678 = vpop.f32.mrb[0].mxu0
  %v10679 = vadd.f32 0.0, %v10678
  %v10680 = vpop.f32.mrb[0].mxu0
  %v10681 = vpop.f32.mrb[0].mxu0
  %v10682 = vpop.f32.mrb[0].mxu0
  %10683 = vdwg.mxu0
  %v10684 = vadd.f32 %v10632, %v10679
  %v10685 = vxor.u32 %v10684, 2147483648
  %v10686 = vmul.f32 %v10685, 1.442695
  %v10687 = vpow.pop %v10686
  %v10688 = vadd.f32 %v10687, 1.0
  %v10689 = vrcp.pop %v10688
  %v10690 = vmul.f32 1.0, %v10689
  %v10691 = vadd.f32 %v10679, %v10495
  %10693 = vrot.lane.b32.xlu0 %v10691, 64
  %v10694 = vpop.permute.xlu0 %10693
  %v10696 = vmul.f32 %v10690, %v10694
  %10698 = vrot.lane.b32.xlu0 %v10696, 64
  %v10699 = vpop.permute.xlu0 %10698
  %v10701 = vadd.f32 %v10632, %v10699
  %v10702 = vtanh.pop %v10701
  %v10703 = vsub.f32 1.0, %v10690
  %10705 = vrot.lane.b32.xlu0 %v10702, 96
  %v10706 = vpop.permute.xlu0 %10705
  %v10708 = vmul.f32 %v10703, %v10706
  %v10709 = vmul.f32 %v10690, %v10516
  %v10710 = vadd.f32 %v10708, %v10709
  %v10711 = vmax.f32 %v10517, %v10710
  %v10712 = vrot.slane %v10135, 3
  %v10714 = vrot.slane %v10144, 2
  %v10716 = vsel %vm8965, %v10712, %v10714
  %10717 = vmatprep.subr.bf16.mxu0 0
  %10718 = vmatpush1.bf16.msra.mxu0 %v10307
  %10719 = vmatprep.subr.bf16.mxu0 0
  %10720 = vmatpush1.bf16.msra.mxu0 %v10308
  %10721 = vmatprep.subr.bf16.mxu0 0
  %10722 = vmatpush1.bf16.msra.mxu0 0
  %10723 = vmatprep.subr.bf16.mxu0 0
  %10724 = vmatpush1.bf16.msra.mxu0 0
  %10725 = vmatprep.subr.bf16.mxu0 0
  %10726 = vmatpush1.bf16.msra.mxu0 0
  %10727 = vmatprep.subr.bf16.mxu0 0
  %10728 = vmatpush1.bf16.msra.mxu0 0
  %10729 = vmatprep.subr.bf16.mxu0 0
  %10730 = vmatpush1.bf16.msra.mxu0 0
  %10731 = vmatprep.subr.bf16.mxu0 0
  %10732 = vmatpush1.bf16.msra.mxu0 0
  %10733 = vmatprep.subr.bf16.mxu0 0
  %10734 = vmatpush1.bf16.msra.mxu0 0
  %10735 = vmatprep.subr.bf16.mxu0 0
  %10736 = vmatpush1.bf16.msra.mxu0 0
  %10737 = vmatprep.subr.bf16.mxu0 0
  %10738 = vmatpush1.bf16.msra.mxu0 0
  %10739 = vmatprep.subr.bf16.mxu0 0
  %10740 = vmatpush1.bf16.msra.mxu0 0
  %10741 = vmatprep.subr.bf16.mxu0 0
  %10742 = vmatpush1.bf16.msra.mxu0 0
  %10743 = vmatprep.subr.bf16.mxu0 0
  %10744 = vmatpush1.bf16.msra.mxu0 0
  %10745 = vmatprep.subr.bf16.mxu0 0
  %10746 = vmatpush1.bf16.msra.mxu0 0
  %10747 = vmatprep.subr.bf16.mxu0 0
  %10748 = vmatpush1.bf16.msra.mxu0 0
  %10749 = vmatprep.mubr.bf16.mxu0 0
  %10750 = vmatmul.mubr.bf16.gmra.mrb[0].mxu0 %v10595
  %v10751 = vpop.f32.mrb[0].mxu0
  %v10752 = vadd.f32 0.0, %v10751
  %v10753 = vpop.f32.mrb[0].mxu0
  %v10754 = vpop.f32.mrb[0].mxu0
  %v10755 = vpop.f32.mrb[0].mxu0
  %10756 = vdwg.mxu0
  %v10757 = vadd.f32 %v10716, %v10752
  %v10758 = vxor.u32 %v10757, 2147483648
  %v10759 = vmul.f32 %v10758, 1.442695
  %v10760 = vpow.pop %v10759
  %v10761 = vadd.f32 %v10760, 1.0
  %v10762 = vrcp.pop %v10761
  %v10763 = vmul.f32 1.0, %v10762
  %v10764 = vadd.f32 %v10752, %v10359
  %10766 = vrot.lane.b32.xlu0 %v10764, 64
  %v10767 = vpop.permute.xlu0 %10766
  %v10769 = vmul.f32 %v10763, %v10767
  %10771 = vrot.lane.b32.xlu0 %v10769, 64
  %v10772 = vpop.permute.xlu0 %10771
  %v10774 = vadd.f32 %v10716, %v10772
  %v10775 = vtanh.pop %v10774
  %v10776 = vsub.f32 1.0, %v10763
  %10778 = vrot.lane.b32.xlu0 %v10775, 96
  %v10779 = vpop.permute.xlu0 %10778
  %v10781 = vmul.f32 %v10776, %v10779
  %v10782 = vmul.f32 %v10763, %v10589
  %v10783 = vadd.f32 %v10781, %v10782
  %v10784 = vpack.c.bf16 %v10783, %v10783
  %10786 = vrot.lane.b32.xlu0 %v10784, 96
  %v10787 = vpop.permute.xlu0 %10786
  %v10789 = vsel %vm3428, %v10787, 0
  %10791 = vmatprep.subr.bf16.mxu0 0
  %10792 = vmatpush1.bf16.msra.mxu0 %v10219
  %10793 = vmatprep.subr.bf16.mxu0 0
  %10794 = vmatpush1.bf16.msra.mxu0 %v10220
  %10795 = vmatprep.subr.bf16.mxu0 0
  %10796 = vmatpush1.bf16.msra.mxu0 0
  %10797 = vmatprep.subr.bf16.mxu0 0
  %10798 = vmatpush1.bf16.msra.mxu0 0
  %10799 = vmatprep.subr.bf16.mxu0 0
  %10800 = vmatpush1.bf16.msra.mxu0 0
  %10801 = vmatprep.subr.bf16.mxu0 0
  %10802 = vmatpush1.bf16.msra.mxu0 0
  %10803 = vmatprep.subr.bf16.mxu0 0
  %10804 = vmatpush1.bf16.msra.mxu0 0
  %10805 = vmatprep.subr.bf16.mxu0 0
  %10806 = vmatpush1.bf16.msra.mxu0 0
  %10807 = vmatprep.subr.bf16.mxu0 0
  %10808 = vmatpush1.bf16.msra.mxu0 0
  %10809 = vmatprep.subr.bf16.mxu0 0
  %10810 = vmatpush1.bf16.msra.mxu0 0
  %10811 = vmatprep.subr.bf16.mxu0 0
  %10812 = vmatpush1.bf16.msra.mxu0 0
  %10813 = vmatprep.subr.bf16.mxu0 0
  %10814 = vmatpush1.bf16.msra.mxu0 0
  %10815 = vmatprep.subr.bf16.mxu0 0
  %10816 = vmatpush1.bf16.msra.mxu0 0
  %10817 = vmatprep.subr.bf16.mxu0 0
  %10818 = vmatpush1.bf16.msra.mxu0 0
  %10819 = vmatprep.subr.bf16.mxu0 0
  %10820 = vmatpush1.bf16.msra.mxu0 0
  %10821 = vmatprep.subr.bf16.mxu0 0
  %10822 = vmatpush1.bf16.msra.mxu0 0
  %10823 = vmatprep.mubr.bf16.mxu0 0
  %10824 = vmatmul.mubr.bf16.gmra.mrb[0].mxu0 %v10789
  %v10825 = vpop.f32.mrb[0].mxu0
  %v10826 = vadd.f32 %v10206, %v10825
  %v10827 = vpop.f32.mrb[0].mxu0
  %v10828 = vpop.f32.mrb[0].mxu0
  %v10829 = vpop.f32.mrb[0].mxu0
  %10830 = vdwg.mxu0
  %v10831 = vpack.c.bf16 %v10710, %v10710
  %10833 = vrot.lane.b32.xlu0 %v10831, 96
  %v10834 = vpop.permute.xlu0 %10833
  %v10836 = vsel %vm3428, %v10834, 0
  %10838 = vmatprep.subr.bf16.mxu0 0
  %10839 = vmatpush1.bf16.msra.mxu0 %v10440
  %10840 = vmatprep.subr.bf16.mxu0 0
  %10841 = vmatpush1.bf16.msra.mxu0 %v10441
  %10842 = vmatprep.subr.bf16.mxu0 0
  %10843 = vmatpush1.bf16.msra.mxu0 0
  %10844 = vmatprep.subr.bf16.mxu0 0
  %10845 = vmatpush1.bf16.msra.mxu0 0
  %10846 = vmatprep.subr.bf16.mxu0 0
  %10847 = vmatpush1.bf16.msra.mxu0 0
  %10848 = vmatprep.subr.bf16.mxu0 0
  %10849 = vmatpush1.bf16.msra.mxu0 0
  %10850 = vmatprep.subr.bf16.mxu0 0
  %10851 = vmatpush1.bf16.msra.mxu0 0
  %10852 = vmatprep.subr.bf16.mxu0 0
  %10853 = vmatpush1.bf16.msra.mxu0 0
  %10854 = vmatprep.subr.bf16.mxu0 0
  %10855 = vmatpush1.bf16.msra.mxu0 0
  %10856 = vmatprep.subr.bf16.mxu0 0
  %10857 = vmatpush1.bf16.msra.mxu0 0
  %10858 = vmatprep.subr.bf16.mxu0 0
  %10859 = vmatpush1.bf16.msra.mxu0 0
  %10860 = vmatprep.subr.bf16.mxu0 0
  %10861 = vmatpush1.bf16.msra.mxu0 0
  %10862 = vmatprep.subr.bf16.mxu0 0
  %10863 = vmatpush1.bf16.msra.mxu0 0
  %10864 = vmatprep.subr.bf16.mxu0 0
  %10865 = vmatpush1.bf16.msra.mxu0 0
  %10866 = vmatprep.subr.bf16.mxu0 0
  %10867 = vmatpush1.bf16.msra.mxu0 0
  %10868 = vmatprep.subr.bf16.mxu0 0
  %10869 = vmatpush1.bf16.msra.mxu0 0
  %10870 = vmatprep.mubr.bf16.mxu0 0
  %10871 = vmatmul.mubr.bf16.gmra.mrb[0].mxu0 %v10836
  %v10872 = vpop.f32.mrb[0].mxu0
  %v10873 = vadd.f32 0.0, %v10872
  %v10874 = vpop.f32.mrb[0].mxu0
  %v10875 = vpop.f32.mrb[0].mxu0
  %v10876 = vpop.f32.mrb[0].mxu0
  %10877 = vdwg.mxu0
  %v10878 = vadd.f32 %v10826, %v10873
  %v10879 = vxor.u32 %v10878, 2147483648
  %v10880 = vmul.f32 %v10879, 1.442695
  %v10881 = vpow.pop %v10880
  %v10882 = vadd.f32 %v10881, 1.0
  %v10883 = vrcp.pop %v10882
  %v10884 = vmul.f32 1.0, %v10883
  %v10885 = vadd.f32 %v10873, %v10495
  %10887 = vrot.lane.b32.xlu0 %v10885, 64
  %v10888 = vpop.permute.xlu0 %10887
  %v10890 = vmul.f32 %v10884, %v10888
  %10892 = vrot.lane.b32.xlu0 %v10890, 64
  %v10893 = vpop.permute.xlu0 %10892
  %v10895 = vadd.f32 %v10826, %v10893
  %v10896 = vtanh.pop %v10895
  %v10897 = vsub.f32 1.0, %v10884
  %10899 = vrot.lane.b32.xlu0 %v10896, 96
  %v10900 = vpop.permute.xlu0 %10899
  %v10902 = vmul.f32 %v10897, %v10900
  %v10903 = vmul.f32 %v10884, %v10710
  %v10904 = vadd.f32 %v10902, %v10903
  %v10905 = vmax.f32 %v10711, %v10904
  %v10906 = vsel %vm10096, %v10905, 0.0
  %v10907 = vld [vmem:[%s18] sm:$0xff]
  %v10908 = vld [vmem:[%s18 + $0x8] sm:$0xff]
  %v10909 = vld [vmem:[%s18 + $0x10] sm:$0xff]
  %v10910 = vld [vmem:[%s18 + $0x18] sm:$0xff]
  %v10911 = vld [vmem:[%s19] sm:$0x1]
  %v10913 = vlaneseq
  %v10914 = vshrl.u32 %v10913, 7
  %v10915 = vsub.s32 0, %v10914
  %v10916 = vrot.slane %v10911, %v10915
  %10919 = vrot.lane.b32.xlu0 %v10906, 96
  %v10920 = vpop.permute.xlu0 %10919
  %v10921 = vsel %vm3428, %v10920, 0
  %10923 = vmatprep.subr.mxu0 0.0
  %10924 = vmatpush1.msra.mxu0 %v10907
  %10925 = vmatprep.subr.mxu0 0.0
  %10926 = vmatpush1.msra.mxu0 %v10908
  %10927 = vmatprep.subr.mxu0 0.0
  %10928 = vmatpush1.msra.mxu0 %v10909
  %10929 = vmatprep.subr.mxu0 0.0
  %10930 = vmatpush1.msra.mxu0 %v10910
  %10931 = vmatprep.subr.mxu0 0.0
  %10932 = vmatpush1.msra.mxu0 0.0
  %10933 = vmatprep.subr.mxu0 0.0
  %10934 = vmatpush1.msra.mxu0 0.0
  %10935 = vmatprep.subr.mxu0 0.0
  %10936 = vmatpush1.msra.mxu0 0.0
  %10937 = vmatprep.subr.mxu0 0.0
  %10938 = vmatpush1.msra.mxu0 0.0
  %10939 = vmatprep.subr.mxu0 0.0
  %10940 = vmatpush1.msra.mxu0 0.0
  %10941 = vmatprep.subr.mxu0 0.0
  %10942 = vmatpush1.msra.mxu0 0.0
  %10943 = vmatprep.subr.mxu0 0.0
  %10944 = vmatpush1.msra.mxu0 0.0
  %10945 = vmatprep.subr.mxu0 0.0
  %10946 = vmatpush1.msra.mxu0 0.0
  %10947 = vmatprep.subr.mxu0 0.0
  %10948 = vmatpush1.msra.mxu0 0.0
  %10949 = vmatprep.subr.mxu0 0.0
  %10950 = vmatpush1.msra.mxu0 0.0
  %10951 = vmatprep.subr.mxu0 0.0
  %10952 = vmatpush1.msra.mxu0 0.0
  %10953 = vmatprep.subr.mxu0 0.0
  %10954 = vmatpush1.msra.mxu0 0.0
  %10955 = vmatprep.subr.mxu0 0.0
  %10956 = vmatpush1.msra.mxu0 0.0
  %10957 = vmatprep.subr.mxu0 0.0
  %10958 = vmatpush1.msra.mxu0 0.0
  %10959 = vmatprep.subr.mxu0 0.0
  %10960 = vmatpush1.msra.mxu0 0.0
  %10961 = vmatprep.subr.mxu0 0.0
  %10962 = vmatpush1.msra.mxu0 0.0
  %10963 = vmatprep.subr.mxu0 0.0
  %10964 = vmatpush1.msra.mxu0 0.0
  %10965 = vmatprep.subr.mxu0 0.0
  %10966 = vmatpush1.msra.mxu0 0.0
  %10967 = vmatprep.subr.mxu0 0.0
  %10968 = vmatpush1.msra.mxu0 0.0
  %10969 = vmatprep.subr.mxu0 0.0
  %10970 = vmatpush1.msra.mxu0 0.0
  %10971 = vmatprep.subr.mxu0 0.0
  %10972 = vmatpush1.msra.mxu0 0.0
  %10973 = vmatprep.subr.mxu0 0.0
  %10974 = vmatpush1.msra.mxu0 0.0
  %10975 = vmatprep.subr.mxu0 0.0
  %10976 = vmatpush1.msra.mxu0 0.0
  %10977 = vmatprep.subr.mxu0 0.0
  %10978 = vmatpush1.msra.mxu0 0.0
  %10979 = vmatprep.subr.mxu0 0.0
  %10980 = vmatpush1.msra.mxu0 0.0
  %10981 = vmatprep.subr.mxu0 0.0
  %10982 = vmatpush1.msra.mxu0 0.0
  %10983 = vmatprep.subr.mxu0 0.0
  %10984 = vmatpush1.msra.mxu0 0.0
  %10985 = vmatprep.subr.mxu0 0.0
  %10986 = vmatpush1.msra.mxu0 0.0
  %10987 = vmatprep.mubr.f32.mxu0 0.0
  %10988 = vmatmul.mubr.f32.gmra.mrb[0].mxu0 %v10921
  %v10989 = vpop.f32.mrb[0].mxu0
  %v10990 = vadd.f32 %v10916, %v10989
  %v10991 = vpop.f32.mrb[0].mxu0
  %10992 = vdwg.mxu0
  %10993 = vst [vmem:[%s20] sm:$0xff] %v10990
  // Predicated region
  $region82: #{crnn_forward.1} parent=0 // pred_check
    _
  $region83: #{crnn_forward.1} parent=0 // pred_check_branch
    %10995 = sbr.rel (0) target = $region85
  $region84: #{crnn_forward.1} parent=0 // pred_region
    _
  $region85: #{crnn_forward.1} parent=0 // pred_fallthru
    _
  // Predicated region
  $region86: #{crnn_forward.1} parent=0 // pred_check
    _
  $region87: #{crnn_forward.1} parent=0 // pred_check_branch
    %10997 = sbr.rel (0) target = $region89
  $region88: #{crnn_forward.1} parent=0 // pred_region
    _
  $region89: #{crnn_forward.1} parent=0 // pred_fallthru
    _

</llo_original>
